<compile_context>
chip_gen: v7x
topology: tpu7x:2x2x1
jax: 0.10.0
libtpu: 0.0.40
codegen_flags: <defaults>
</compile_context>

<pallas_src>
import numpy as np
import jax
import jax.numpy as jnp
from jax.experimental import pallas as pl
from jax.experimental.pallas import tpu as pltpu

# Make both the in-kernel dots and the pure-JAX reference run at full f32 matmul
# precision so the numerical comparison is meaningful on TPU.
jax.config.update("jax_default_matmul_precision", "highest")


def _make_kernel(N, L0):
    """All sizes closed over as Python ints (avoids TypedInt indexing issues)."""
    L1 = L0 - 2              # after conv1 (k=3, valid)
    P1 = L1 // 2             # after pool1
    L2 = P1 - 2              # after conv2
    P2 = L2 // 2             # after pool2
    R0, R1, R2 = N * L0, N * L1, N * L2
    eps = 1e-5

    def kernel(x_ref, w1_ref, b1_ref, gm1_ref, bt1_ref,
               w2_ref, b2_ref, gm2_ref, bt2_ref, wf_ref, bf_ref,
               v1_ref, eo1_ref, g2_ref, eo2_ref, sel_ref, out_ref):
        # ---------------- conv1: one full-batch matmul per tap ----------------
        conv1_all = jnp.dot(x_ref[0:R0 - 2, :], w1_ref[0],
                            preferred_element_type=jnp.float32)
        for k in (1, 2):
            conv1_all = conv1_all + jnp.dot(x_ref[k:k + R0 - 2, :], w1_ref[k],
                                            preferred_element_type=jnp.float32)
        # drop windows that straddle a sample boundary, add bias -> (N*L1, 32)
        h1 = jnp.dot(v1_ref[...], conv1_all,
                     preferred_element_type=jnp.float32) + b1_ref[...]

        # ---------------- bn1 (training-mode batch stats, two-pass) + relu ----------------
        mean1 = jnp.sum(h1, axis=0, keepdims=True) * (1.0 / R1)
        d1 = h1 - mean1
        var1 = jnp.sum(d1 * d1, axis=0, keepdims=True) * (1.0 / R1)
        a1 = jnp.maximum(d1 * (gm1_ref[...] * jax.lax.rsqrt(var1 + eps))
                         + bt1_ref[...], 0.0)
        # TODO(synk): BatchNorm running_mean/running_var side-effect updates are not materialized.

        # ---------------- pool1: even/odd row-selection matmuls ----------------
        p1 = jnp.maximum(
            jnp.dot(eo1_ref[0], a1, preferred_element_type=jnp.float32),
            jnp.dot(eo1_ref[1], a1, preferred_element_type=jnp.float32))   # (N*P1, 32)

        # ---------------- conv2: per-tap window gather + full-batch matmul ----------------
        acc2 = None
        for k in range(3):
            win = jnp.dot(g2_ref[k], p1, preferred_element_type=jnp.float32)    # (N*L2, 32)
            term = jnp.dot(win, w2_ref[k], preferred_element_type=jnp.float32)  # (N*L2, 64)
            acc2 = term if acc2 is None else acc2 + term
        h2 = acc2 + b2_ref[...]

        # ---------------- bn2 + relu ----------------
        mean2 = jnp.sum(h2, axis=0, keepdims=True) * (1.0 / R2)
        d2 = h2 - mean2
        var2 = jnp.sum(d2 * d2, axis=0, keepdims=True) * (1.0 / R2)
        a2 = jnp.maximum(d2 * (gm2_ref[...] * jax.lax.rsqrt(var2 + eps))
                         + bt2_ref[...], 0.0)

        # ---------------- pool2 ----------------
        p2 = jnp.maximum(
            jnp.dot(eo2_ref[0], a2, preferred_element_type=jnp.float32),
            jnp.dot(eo2_ref[1], a2, preferred_element_type=jnp.float32))   # (N*P2, 64)

        # ------ fc (PyTorch channel-major flatten) + relu, single full store ------
        o = None
        for l in range(P2):
            rows = jnp.dot(sel_ref[l], p2, preferred_element_type=jnp.float32)   # (N, 64)
            term = jnp.dot(rows, wf_ref[l], preferred_element_type=jnp.float32)  # (N, 16)
            o = term if o is None else o + term
        out_ref[...] = jnp.maximum(o + bf_ref[...], 0.0)

    return kernel


def _selection_matrices(N, L0):
    """Tiny constant 0/1 gather / selection matrices (built host-side with numpy)."""
    L1 = L0 - 2
    P1 = L1 // 2
    L2 = P1 - 2
    P2 = L2 // 2
    R0, R1, Rp1, R2, Rp2 = N * L0, N * L1, N * P1, N * L2, N * P2

    # conv1 valid-window selector: output row j=(n,t) <- full-conv row n*L0 + t
    v1 = np.zeros((R1, R0 - 2), np.float32)
    for j in range(R1):
        v1[j, (j // L1) * L0 + (j % L1)] = 1.0

    # pool selectors: even/odd rows (pairs never straddle a sample: L1, L2 are even)
    eo1 = np.zeros((2, Rp1, R1), np.float32)
    for j in range(Rp1):
        eo1[0, j, 2 * j] = 1.0
        eo1[1, j, 2 * j + 1] = 1.0
    eo2 = np.zeros((2, Rp2, R2), np.float32)
    for j in range(Rp2):
        eo2[0, j, 2 * j] = 1.0
        eo2[1, j, 2 * j + 1] = 1.0

    # conv2 per-tap window gather: output row j=(n,t) <- pooled row n*P1 + t + k
    g2 = np.zeros((3, R2, Rp1), np.float32)
    for k in range(3):
        for j in range(R2):
            g2[k, j, (j // L2) * P1 + (j % L2) + k] = 1.0

    # fc position selector: sel[l, n] picks pooled row n*P2 + l
    sel = np.zeros((P2, N, Rp2), np.float32)
    for l in range(P2):
        for n in range(N):
            sel[l, n, n * P2 + l] = 1.0

    return v1, eo1, g2, eo2, sel


def player_stats_forward(x, params):
    """x: (N, L, input_size) float32, channels-last. Returns (N, 16) float32."""
    (w1, b1, gm1, bt1, w2, b2, gm2, bt2, wf, bf) = params
    N, L0, Cin = (int(d) for d in x.shape)
    v1, eo1, g2, eo2, sel = _selection_matrices(N, L0)

    x_flat = x.reshape(N * L0, Cin)            # host-side reshape, free
    kernel = _make_kernel(N, L0)
    vmem = lambda: pl.BlockSpec(memory_space=pltpu.MemorySpace.VMEM)
    return pl.pallas_call(
        kernel,
        out_shape=jax.ShapeDtypeStruct((N, 16), jnp.float32),
        in_specs=[vmem() for _ in range(16)],
        out_specs=vmem(),
    )(x_flat, w1, b1, gm1, bt1, w2, b2, gm2, bt2, wf, bf,
      jnp.asarray(v1), jnp.asarray(eo1), jnp.asarray(g2),
      jnp.asarray(eo2), jnp.asarray(sel))


def reference_forward(x, params):
    """Pure-JAX reference with identical (PyTorch) semantics, for verification."""
    (w1, b1, gm1, bt1, w2, b2, gm2, bt2, wf, bf) = params
    eps = 1e-5

    def conv(h, w, b):
        k = w.shape[0]
        Lout = h.shape[1] - k + 1
        acc = sum(jnp.einsum('nlc,co->nlo', h[:, i:i + Lout, :], w[i]) for i in range(k))
        return acc + b[None]

    def bn_relu(h, g, bt):
        mean = h.mean(axis=(0, 1), keepdims=True)
        var = ((h - mean) ** 2).mean(axis=(0, 1), keepdims=True)
        return jnp.maximum((h - mean) * jax.lax.rsqrt(var + eps) * g[None] + bt[None], 0.0)

    def pool(h):
        N, L, C = h.shape
        return h.reshape(N, L // 2, 2, C).max(axis=2)

    h = pool(bn_relu(conv(x, w1, b1), gm1, bt1))
    h = pool(bn_relu(conv(h, w2, b2), gm2, bt2))
    o = jnp.einsum('nlc,lco->no', h, wf) + bf
    return jnp.maximum(o, 0.0)


if __name__ == "__main__":
    # Small shapes consistent with the module: input_size = seq_len = 14 so that
    # 64 * ((input_size - 4) // 4) == 64 * final_length (= 128).
    N, L, input_size = 2, 14, 14

    key = jax.random.PRNGKey(0)
    kx, k1, k1b, k2, k2b, kf, kfb = jax.random.split(key, 7)

    x = jax.random.normal(kx, (N, L, input_size), dtype=jnp.float32)

    # Deterministic synthetic parameters in PyTorch layouts, then mapped to kernel layouts.
    conv1_w_pt = 0.1 * jax.random.normal(k1, (32, input_size, 3), dtype=jnp.float32)  # (out,in,k)
    conv1_b_pt = 0.1 * jax.random.normal(k1b, (32,), dtype=jnp.float32)
    conv2_w_pt = 0.1 * jax.random.normal(k2, (64, 32, 3), dtype=jnp.float32)
    conv2_b_pt = 0.1 * jax.random.normal(k2b, (64,), dtype=jnp.float32)
    L_final = ((L - 2) // 2 - 2) // 2                      # == (input_size - 4) // 4 == 2
    fc_w_pt = 0.1 * jax.random.normal(kf, (16, 64 * L_final), dtype=jnp.float32)  # (out,in)
    fc_b_pt = 0.1 * jax.random.normal(kfb, (16,), dtype=jnp.float32)

    params = (
        jnp.transpose(conv1_w_pt, (2, 1, 0)),              # w1: (k, Cin, 32)
        conv1_b_pt.reshape(1, 32),                         # b1
        jnp.ones((1, 32), jnp.float32),                    # bn1 gamma (PyTorch default init)
        jnp.zeros((1, 32), jnp.float32),                   # bn1 beta
        jnp.transpose(conv2_w_pt, (2, 1, 0)),              # w2: (k, 32, 64)
        conv2_b_pt.reshape(1, 64),                         # b2
        jnp.ones((1, 64), jnp.float32),                    # bn2 gamma
        jnp.zeros((1, 64), jnp.float32),                   # bn2 beta
        jnp.transpose(fc_w_pt.reshape(16, 64, L_final), (2, 1, 0)),  # wf: (L_final, 64, 16)
        fc_b_pt.reshape(1, 16),                            # bf
    )

    out = player_stats_forward(x, params)
    out = jax.block_until_ready(out)

    ref = jax.block_until_ready(reference_forward(x, params))
    np.testing.assert_allclose(np.asarray(out), np.asarray(ref), rtol=2e-4, atol=2e-4)

    print("KERNEL_OK")
</pallas_src>

<mosaic_0001>
module attributes {stable_mosaic.version = 11 : i64} {
  func.func @kernel(%arg0: memref<28x14xf32, #tpu.memory_space<vmem>>, %arg1: memref<3x14x32xf32, #tpu.memory_space<vmem>>, %arg2: memref<1x32xf32, #tpu.memory_space<vmem>>, %arg3: memref<1x32xf32, #tpu.memory_space<vmem>>, %arg4: memref<1x32xf32, #tpu.memory_space<vmem>>, %arg5: memref<3x32x64xf32, #tpu.memory_space<vmem>>, %arg6: memref<1x64xf32, #tpu.memory_space<vmem>>, %arg7: memref<1x64xf32, #tpu.memory_space<vmem>>, %arg8: memref<1x64xf32, #tpu.memory_space<vmem>>, %arg9: memref<2x64x16xf32, #tpu.memory_space<vmem>>, %arg10: memref<1x16xf32, #tpu.memory_space<vmem>>, %arg11: memref<24x26xf32, #tpu.memory_space<vmem>>, %arg12: memref<2x12x24xf32, #tpu.memory_space<vmem>>, %arg13: memref<3x8x12xf32, #tpu.memory_space<vmem>>, %arg14: memref<2x4x8xf32, #tpu.memory_space<vmem>>, %arg15: memref<2x2x4xf32, #tpu.memory_space<vmem>>, %arg16: memref<2x16xf32, #tpu.memory_space<vmem>>) attributes {dimension_semantics = [], scalar_prefetch = 0 : i64, scratch_operands = 0 : i64, tpu.core_type = #tpu.core_type<tc>} {
    %c0 = arith.constant 0 : index
    %c0_0 = arith.constant 0 : index
    %0 = vector.load %arg0[%c0, %c0_0] : memref<28x14xf32, #tpu.memory_space<vmem>>, vector<26x14xf32>
    %c0_1 = arith.constant 0 : index
    %c0_2 = arith.constant 0 : index
    %c0_3 = arith.constant 0 : index
    %1 = vector.load %arg1[%c0_1, %c0_2, %c0_3] : memref<3x14x32xf32, #tpu.memory_space<vmem>>, vector<1x14x32xf32>
    %2 = vector.shape_cast %1 : vector<1x14x32xf32> to vector<14x32xf32>
    %cst = arith.constant dense<0.000000e+00> : vector<26x32xf32>
    %3 = tpu.matmul %0, %2, %cst {dimension_numbers = #tpu.dot_dimension_numbers<[1], [0], [0], [1], [0, 0, 1, 1], [], []>, precision = #tpu.contract_precision<fp32>} : vector<26x14xf32>, vector<14x32xf32>, vector<26x32xf32> -> vector<26x32xf32>
    %c1 = arith.constant 1 : index
    %c0_4 = arith.constant 0 : index
    %4 = vector.load %arg0[%c1, %c0_4] : memref<28x14xf32, #tpu.memory_space<vmem>>, vector<26x14xf32>
    %c1_5 = arith.constant 1 : index
    %c0_6 = arith.constant 0 : index
    %c0_7 = arith.constant 0 : index
    %5 = vector.load %arg1[%c1_5, %c0_6, %c0_7] : memref<3x14x32xf32, #tpu.memory_space<vmem>>, vector<1x14x32xf32>
    %6 = vector.shape_cast %5 : vector<1x14x32xf32> to vector<14x32xf32>
    %cst_8 = arith.constant dense<0.000000e+00> : vector<26x32xf32>
    %7 = tpu.matmul %4, %6, %cst_8 {dimension_numbers = #tpu.dot_dimension_numbers<[1], [0], [0], [1], [0, 0, 1, 1], [], []>, precision = #tpu.contract_precision<fp32>} : vector<26x14xf32>, vector<14x32xf32>, vector<26x32xf32> -> vector<26x32xf32>
    %8 = arith.addf %3, %7 : vector<26x32xf32>
    %c2 = arith.constant 2 : index
    %c0_9 = arith.constant 0 : index
    %9 = vector.load %arg0[%c2, %c0_9] : memref<28x14xf32, #tpu.memory_space<vmem>>, vector<26x14xf32>
    %c2_10 = arith.constant 2 : index
    %c0_11 = arith.constant 0 : index
    %c0_12 = arith.constant 0 : index
    %10 = vector.load %arg1[%c2_10, %c0_11, %c0_12] : memref<3x14x32xf32, #tpu.memory_space<vmem>>, vector<1x14x32xf32>
    %11 = vector.shape_cast %10 : vector<1x14x32xf32> to vector<14x32xf32>
    %cst_13 = arith.constant dense<0.000000e+00> : vector<26x32xf32>
    %12 = tpu.matmul %9, %11, %cst_13 {dimension_numbers = #tpu.dot_dimension_numbers<[1], [0], [0], [1], [0, 0, 1, 1], [], []>, precision = #tpu.contract_precision<fp32>} : vector<26x14xf32>, vector<14x32xf32>, vector<26x32xf32> -> vector<26x32xf32>
    %13 = arith.addf %8, %12 : vector<26x32xf32>
    %c0_14 = arith.constant 0 : index
    %c0_15 = arith.constant 0 : index
    %14 = vector.load %arg11[%c0_14, %c0_15] : memref<24x26xf32, #tpu.memory_space<vmem>>, vector<24x26xf32>
    %cst_16 = arith.constant dense<0.000000e+00> : vector<24x32xf32>
    %15 = tpu.matmul %14, %13, %cst_16 {dimension_numbers = #tpu.dot_dimension_numbers<[1], [0], [0], [1], [0, 0, 1, 1], [], []>, precision = #tpu.contract_precision<fp32>} : vector<24x26xf32>, vector<26x32xf32>, vector<24x32xf32> -> vector<24x32xf32>
    %c0_17 = arith.constant 0 : index
    %c0_18 = arith.constant 0 : index
    %16 = vector.load %arg2[%c0_17, %c0_18] : memref<1x32xf32, #tpu.memory_space<vmem>>, vector<1x32xf32>
    %17 = vector.broadcast %16 : vector<1x32xf32> to vector<24x32xf32>
    %18 = arith.addf %15, %17 : vector<24x32xf32>
    %cst_19 = arith.constant dense<0.000000e+00> : vector<32xf32>
    %19 = vector.multi_reduction <add>, %18, %cst_19 [0] : vector<24x32xf32> to vector<32xf32>
    %20 = vector.shape_cast %19 : vector<32xf32> to vector<1x32xf32>
    %cst_20 = arith.constant 0.0416666679 : f32
    %21 = vector.broadcast %cst_20 : f32 to vector<1x32xf32>
    %22 = arith.mulf %20, %21 : vector<1x32xf32>
    %23 = vector.broadcast %22 : vector<1x32xf32> to vector<24x32xf32>
    %24 = arith.subf %18, %23 : vector<24x32xf32>
    %25 = arith.mulf %24, %24 : vector<24x32xf32>
    %cst_21 = arith.constant dense<0.000000e+00> : vector<32xf32>
    %26 = vector.multi_reduction <add>, %25, %cst_21 [0] : vector<24x32xf32> to vector<32xf32>
    %27 = vector.shape_cast %26 : vector<32xf32> to vector<1x32xf32>
    %cst_22 = arith.constant 0.0416666679 : f32
    %28 = vector.broadcast %cst_22 : f32 to vector<1x32xf32>
    %29 = arith.mulf %27, %28 : vector<1x32xf32>
    %c0_23 = arith.constant 0 : index
    %c0_24 = arith.constant 0 : index
    %30 = vector.load %arg3[%c0_23, %c0_24] : memref<1x32xf32, #tpu.memory_space<vmem>>, vector<1x32xf32>
    %cst_25 = arith.constant 9.99999974E-6 : f32
    %31 = vector.broadcast %cst_25 : f32 to vector<1x32xf32>
    %32 = arith.addf %29, %31 : vector<1x32xf32>
    %33 = math.rsqrt %32 : vector<1x32xf32>
    %34 = arith.mulf %30, %33 : vector<1x32xf32>
    %35 = vector.broadcast %34 : vector<1x32xf32> to vector<24x32xf32>
    %36 = arith.mulf %24, %35 : vector<24x32xf32>
    %c0_26 = arith.constant 0 : index
    %c0_27 = arith.constant 0 : index
    %37 = vector.load %arg4[%c0_26, %c0_27] : memref<1x32xf32, #tpu.memory_space<vmem>>, vector<1x32xf32>
    %38 = vector.broadcast %37 : vector<1x32xf32> to vector<24x32xf32>
    %39 = arith.addf %36, %38 : vector<24x32xf32>
    %cst_28 = arith.constant 0.000000e+00 : f32
    %40 = vector.broadcast %cst_28 : f32 to vector<24x32xf32>
    %41 = arith.maximumf %39, %40 : vector<24x32xf32>
    %c0_29 = arith.constant 0 : index
    %c0_30 = arith.constant 0 : index
    %c0_31 = arith.constant 0 : index
    %42 = vector.load %arg12[%c0_29, %c0_30, %c0_31] : memref<2x12x24xf32, #tpu.memory_space<vmem>>, vector<1x12x24xf32>
    %43 = vector.shape_cast %42 : vector<1x12x24xf32> to vector<12x24xf32>
    %cst_32 = arith.constant dense<0.000000e+00> : vector<12x32xf32>
    %44 = tpu.matmul %43, %41, %cst_32 {dimension_numbers = #tpu.dot_dimension_numbers<[1], [0], [0], [1], [0, 0, 1, 1], [], []>, precision = #tpu.contract_precision<fp32>} : vector<12x24xf32>, vector<24x32xf32>, vector<12x32xf32> -> vector<12x32xf32>
    %c1_33 = arith.constant 1 : index
    %c0_34 = arith.constant 0 : index
    %c0_35 = arith.constant 0 : index
    %45 = vector.load %arg12[%c1_33, %c0_34, %c0_35] : memref<2x12x24xf32, #tpu.memory_space<vmem>>, vector<1x12x24xf32>
    %46 = vector.shape_cast %45 : vector<1x12x24xf32> to vector<12x24xf32>
    %cst_36 = arith.constant dense<0.000000e+00> : vector<12x32xf32>
    %47 = tpu.matmul %46, %41, %cst_36 {dimension_numbers = #tpu.dot_dimension_numbers<[1], [0], [0], [1], [0, 0, 1, 1], [], []>, precision = #tpu.contract_precision<fp32>} : vector<12x24xf32>, vector<24x32xf32>, vector<12x32xf32> -> vector<12x32xf32>
    %48 = arith.maximumf %44, %47 : vector<12x32xf32>
    %c0_37 = arith.constant 0 : index
    %c0_38 = arith.constant 0 : index
    %c0_39 = arith.constant 0 : index
    %49 = vector.load %arg13[%c0_37, %c0_38, %c0_39] : memref<3x8x12xf32, #tpu.memory_space<vmem>>, vector<1x8x12xf32>
    %50 = vector.shape_cast %49 : vector<1x8x12xf32> to vector<8x12xf32>
    %cst_40 = arith.constant dense<0.000000e+00> : vector<8x32xf32>
    %51 = tpu.matmul %50, %48, %cst_40 {dimension_numbers = #tpu.dot_dimension_numbers<[1], [0], [0], [1], [0, 0, 1, 1], [], []>, precision = #tpu.contract_precision<fp32>} : vector<8x12xf32>, vector<12x32xf32>, vector<8x32xf32> -> vector<8x32xf32>
    %c0_41 = arith.constant 0 : index
    %c0_42 = arith.constant 0 : index
    %c0_43 = arith.constant 0 : index
    %52 = vector.load %arg5[%c0_41, %c0_42, %c0_43] : memref<3x32x64xf32, #tpu.memory_space<vmem>>, vector<1x32x64xf32>
    %53 = vector.shape_cast %52 : vector<1x32x64xf32> to vector<32x64xf32>
    %cst_44 = arith.constant dense<0.000000e+00> : vector<8x64xf32>
    %54 = tpu.matmul %51, %53, %cst_44 {dimension_numbers = #tpu.dot_dimension_numbers<[1], [0], [0], [1], [0, 0, 1, 1], [], []>, precision = #tpu.contract_precision<fp32>} : vector<8x32xf32>, vector<32x64xf32>, vector<8x64xf32> -> vector<8x64xf32>
    %c1_45 = arith.constant 1 : index
    %c0_46 = arith.constant 0 : index
    %c0_47 = arith.constant 0 : index
    %55 = vector.load %arg13[%c1_45, %c0_46, %c0_47] : memref<3x8x12xf32, #tpu.memory_space<vmem>>, vector<1x8x12xf32>
    %56 = vector.shape_cast %55 : vector<1x8x12xf32> to vector<8x12xf32>
    %cst_48 = arith.constant dense<0.000000e+00> : vector<8x32xf32>
    %57 = tpu.matmul %56, %48, %cst_48 {dimension_numbers = #tpu.dot_dimension_numbers<[1], [0], [0], [1], [0, 0, 1, 1], [], []>, precision = #tpu.contract_precision<fp32>} : vector<8x12xf32>, vector<12x32xf32>, vector<8x32xf32> -> vector<8x32xf32>
    %c1_49 = arith.constant 1 : index
    %c0_50 = arith.constant 0 : index
    %c0_51 = arith.constant 0 : index
    %58 = vector.load %arg5[%c1_49, %c0_50, %c0_51] : memref<3x32x64xf32, #tpu.memory_space<vmem>>, vector<1x32x64xf32>
    %59 = vector.shape_cast %58 : vector<1x32x64xf32> to vector<32x64xf32>
    %cst_52 = arith.constant dense<0.000000e+00> : vector<8x64xf32>
    %60 = tpu.matmul %57, %59, %cst_52 {dimension_numbers = #tpu.dot_dimension_numbers<[1], [0], [0], [1], [0, 0, 1, 1], [], []>, precision = #tpu.contract_precision<fp32>} : vector<8x32xf32>, vector<32x64xf32>, vector<8x64xf32> -> vector<8x64xf32>
    %61 = arith.addf %54, %60 : vector<8x64xf32>
    %c2_53 = arith.constant 2 : index
    %c0_54 = arith.constant 0 : index
    %c0_55 = arith.constant 0 : index
    %62 = vector.load %arg13[%c2_53, %c0_54, %c0_55] : memref<3x8x12xf32, #tpu.memory_space<vmem>>, vector<1x8x12xf32>
    %63 = vector.shape_cast %62 : vector<1x8x12xf32> to vector<8x12xf32>
    %cst_56 = arith.constant dense<0.000000e+00> : vector<8x32xf32>
    %64 = tpu.matmul %63, %48, %cst_56 {dimension_numbers = #tpu.dot_dimension_numbers<[1], [0], [0], [1], [0, 0, 1, 1], [], []>, precision = #tpu.contract_precision<fp32>} : vector<8x12xf32>, vector<12x32xf32>, vector<8x32xf32> -> vector<8x32xf32>
    %c2_57 = arith.constant 2 : index
    %c0_58 = arith.constant 0 : index
    %c0_59 = arith.constant 0 : index
    %65 = vector.load %arg5[%c2_57, %c0_58, %c0_59] : memref<3x32x64xf32, #tpu.memory_space<vmem>>, vector<1x32x64xf32>
    %66 = vector.shape_cast %65 : vector<1x32x64xf32> to vector<32x64xf32>
    %cst_60 = arith.constant dense<0.000000e+00> : vector<8x64xf32>
    %67 = tpu.matmul %64, %66, %cst_60 {dimension_numbers = #tpu.dot_dimension_numbers<[1], [0], [0], [1], [0, 0, 1, 1], [], []>, precision = #tpu.contract_precision<fp32>} : vector<8x32xf32>, vector<32x64xf32>, vector<8x64xf32> -> vector<8x64xf32>
    %68 = arith.addf %61, %67 : vector<8x64xf32>
    %c0_61 = arith.constant 0 : index
    %c0_62 = arith.constant 0 : index
    %69 = vector.load %arg6[%c0_61, %c0_62] : memref<1x64xf32, #tpu.memory_space<vmem>>, vector<1x64xf32>
    %70 = vector.broadcast %69 : vector<1x64xf32> to vector<8x64xf32>
    %71 = arith.addf %68, %70 : vector<8x64xf32>
    %cst_63 = arith.constant dense<0.000000e+00> : vector<64xf32>
    %72 = vector.multi_reduction <add>, %71, %cst_63 [0] : vector<8x64xf32> to vector<64xf32>
    %73 = vector.shape_cast %72 : vector<64xf32> to vector<1x64xf32>
    %cst_64 = arith.constant 1.250000e-01 : f32
    %74 = vector.broadcast %cst_64 : f32 to vector<1x64xf32>
    %75 = arith.mulf %73, %74 : vector<1x64xf32>
    %76 = vector.broadcast %75 : vector<1x64xf32> to vector<8x64xf32>
    %77 = arith.subf %71, %76 : vector<8x64xf32>
    %78 = arith.mulf %77, %77 : vector<8x64xf32>
    %cst_65 = arith.constant dense<0.000000e+00> : vector<64xf32>
    %79 = vector.multi_reduction <add>, %78, %cst_65 [0] : vector<8x64xf32> to vector<64xf32>
    %80 = vector.shape_cast %79 : vector<64xf32> to vector<1x64xf32>
    %cst_66 = arith.constant 1.250000e-01 : f32
    %81 = vector.broadcast %cst_66 : f32 to vector<1x64xf32>
    %82 = arith.mulf %80, %81 : vector<1x64xf32>
    %c0_67 = arith.constant 0 : index
    %c0_68 = arith.constant 0 : index
    %83 = vector.load %arg7[%c0_67, %c0_68] : memref<1x64xf32, #tpu.memory_space<vmem>>, vector<1x64xf32>
    %cst_69 = arith.constant 9.99999974E-6 : f32
    %84 = vector.broadcast %cst_69 : f32 to vector<1x64xf32>
    %85 = arith.addf %82, %84 : vector<1x64xf32>
    %86 = math.rsqrt %85 : vector<1x64xf32>
    %87 = arith.mulf %83, %86 : vector<1x64xf32>
    %88 = vector.broadcast %87 : vector<1x64xf32> to vector<8x64xf32>
    %89 = arith.mulf %77, %88 : vector<8x64xf32>
    %c0_70 = arith.constant 0 : index
    %c0_71 = arith.constant 0 : index
    %90 = vector.load %arg8[%c0_70, %c0_71] : memref<1x64xf32, #tpu.memory_space<vmem>>, vector<1x64xf32>
    %91 = vector.broadcast %90 : vector<1x64xf32> to vector<8x64xf32>
    %92 = arith.addf %89, %91 : vector<8x64xf32>
    %cst_72 = arith.constant 0.000000e+00 : f32
    %93 = vector.broadcast %cst_72 : f32 to vector<8x64xf32>
    %94 = arith.maximumf %92, %93 : vector<8x64xf32>
    %c0_73 = arith.constant 0 : index
    %c0_74 = arith.constant 0 : index
    %c0_75 = arith.constant 0 : index
    %95 = vector.load %arg14[%c0_73, %c0_74, %c0_75] : memref<2x4x8xf32, #tpu.memory_space<vmem>>, vector<1x4x8xf32>
    %96 = vector.shape_cast %95 : vector<1x4x8xf32> to vector<4x8xf32>
    %cst_76 = arith.constant dense<0.000000e+00> : vector<4x64xf32>
    %97 = tpu.matmul %96, %94, %cst_76 {dimension_numbers = #tpu.dot_dimension_numbers<[1], [0], [0], [1], [0, 0, 1, 1], [], []>, precision = #tpu.contract_precision<fp32>} : vector<4x8xf32>, vector<8x64xf32>, vector<4x64xf32> -> vector<4x64xf32>
    %c1_77 = arith.constant 1 : index
    %c0_78 = arith.constant 0 : index
    %c0_79 = arith.constant 0 : index
    %98 = vector.load %arg14[%c1_77, %c0_78, %c0_79] : memref<2x4x8xf32, #tpu.memory_space<vmem>>, vector<1x4x8xf32>
    %99 = vector.shape_cast %98 : vector<1x4x8xf32> to vector<4x8xf32>
    %cst_80 = arith.constant dense<0.000000e+00> : vector<4x64xf32>
    %100 = tpu.matmul %99, %94, %cst_80 {dimension_numbers = #tpu.dot_dimension_numbers<[1], [0], [0], [1], [0, 0, 1, 1], [], []>, precision = #tpu.contract_precision<fp32>} : vector<4x8xf32>, vector<8x64xf32>, vector<4x64xf32> -> vector<4x64xf32>
    %101 = arith.maximumf %97, %100 : vector<4x64xf32>
    %c0_81 = arith.constant 0 : index
    %c0_82 = arith.constant 0 : index
    %c0_83 = arith.constant 0 : index
    %102 = vector.load %arg15[%c0_81, %c0_82, %c0_83] : memref<2x2x4xf32, #tpu.memory_space<vmem>>, vector<1x2x4xf32>
    %103 = vector.shape_cast %102 : vector<1x2x4xf32> to vector<2x4xf32>
    %cst_84 = arith.constant dense<0.000000e+00> : vector<2x64xf32>
    %104 = tpu.matmul %103, %101, %cst_84 {dimension_numbers = #tpu.dot_dimension_numbers<[1], [0], [0], [1], [0, 0, 1, 1], [], []>, precision = #tpu.contract_precision<fp32>} : vector<2x4xf32>, vector<4x64xf32>, vector<2x64xf32> -> vector<2x64xf32>
    %c0_85 = arith.constant 0 : index
    %c0_86 = arith.constant 0 : index
    %c0_87 = arith.constant 0 : index
    %105 = vector.load %arg9[%c0_85, %c0_86, %c0_87] : memref<2x64x16xf32, #tpu.memory_space<vmem>>, vector<1x64x16xf32>
    %106 = vector.shape_cast %105 : vector<1x64x16xf32> to vector<64x16xf32>
    %cst_88 = arith.constant dense<0.000000e+00> : vector<2x16xf32>
    %107 = tpu.matmul %104, %106, %cst_88 {dimension_numbers = #tpu.dot_dimension_numbers<[1], [0], [0], [1], [0, 0, 1, 1], [], []>, precision = #tpu.contract_precision<fp32>} : vector<2x64xf32>, vector<64x16xf32>, vector<2x16xf32> -> vector<2x16xf32>
    %c1_89 = arith.constant 1 : index
    %c0_90 = arith.constant 0 : index
    %c0_91 = arith.constant 0 : index
    %108 = vector.load %arg15[%c1_89, %c0_90, %c0_91] : memref<2x2x4xf32, #tpu.memory_space<vmem>>, vector<1x2x4xf32>
    %109 = vector.shape_cast %108 : vector<1x2x4xf32> to vector<2x4xf32>
    %cst_92 = arith.constant dense<0.000000e+00> : vector<2x64xf32>
    %110 = tpu.matmul %109, %101, %cst_92 {dimension_numbers = #tpu.dot_dimension_numbers<[1], [0], [0], [1], [0, 0, 1, 1], [], []>, precision = #tpu.contract_precision<fp32>} : vector<2x4xf32>, vector<4x64xf32>, vector<2x64xf32> -> vector<2x64xf32>
    %c1_93 = arith.constant 1 : index
    %c0_94 = arith.constant 0 : index
    %c0_95 = arith.constant 0 : index
    %111 = vector.load %arg9[%c1_93, %c0_94, %c0_95] : memref<2x64x16xf32, #tpu.memory_space<vmem>>, vector<1x64x16xf32>
    %112 = vector.shape_cast %111 : vector<1x64x16xf32> to vector<64x16xf32>
    %cst_96 = arith.constant dense<0.000000e+00> : vector<2x16xf32>
    %113 = tpu.matmul %110, %112, %cst_96 {dimension_numbers = #tpu.dot_dimension_numbers<[1], [0], [0], [1], [0, 0, 1, 1], [], []>, precision = #tpu.contract_precision<fp32>} : vector<2x64xf32>, vector<64x16xf32>, vector<2x16xf32> -> vector<2x16xf32>
    %114 = arith.addf %107, %113 : vector<2x16xf32>
    %c0_97 = arith.constant 0 : index
    %c0_98 = arith.constant 0 : index
    %115 = vector.load %arg10[%c0_97, %c0_98] : memref<1x16xf32, #tpu.memory_space<vmem>>, vector<1x16xf32>
    %116 = vector.broadcast %115 : vector<1x16xf32> to vector<2x16xf32>
    %117 = arith.addf %114, %116 : vector<2x16xf32>
    %cst_99 = arith.constant 0.000000e+00 : f32
    %118 = vector.broadcast %cst_99 : f32 to vector<2x16xf32>
    %119 = arith.maximumf %117, %118 : vector<2x16xf32>
    %c0_100 = arith.constant 0 : index
    %c0_101 = arith.constant 0 : index
    %120 = vector.load %arg16[%c0_100, %c0_101] : memref<2x16xf32, #tpu.memory_space<vmem>>, vector<2x16xf32>
    tpu.vector_store %arg16[%c0_100, %c0_101], %119 {strides = array<i32>} : memref<2x16xf32, #tpu.memory_space<vmem>>, vector<2x16xf32>,
    return
  }
}

</mosaic_0001>

<llo_original>
// kernel: tpu_custom_call.1
$region0: #{tpu_custom_call.1}
  #allocation0 [shape = 'u32[]', space=smem, size = 0x4, offset = 0x4, fixed_abs, tag = 'smem constant byte address 0x4 - core index']
  #allocation1 [shape = 'u32[144,128]{1,0:T(1,128)}', space=vmem, size = 0x12000, scoped, tag = 'internal scratch']
  %s0 = inlined_call_operand.vmem [shape: f32[28,14], index: 0, kind: input, shape index: {}]
  %s1 = inlined_call_operand.vmem [shape: f32[3,14,32], index: 1, kind: input, shape index: {}]
  %s2 = inlined_call_operand.vmem [shape: f32[1,32], index: 2, kind: input, shape index: {}]
  %s3 = inlined_call_operand.vmem [shape: f32[1,32], index: 3, kind: input, shape index: {}]
  %s4 = inlined_call_operand.vmem [shape: f32[1,32], index: 4, kind: input, shape index: {}]
  %s5 = inlined_call_operand.vmem [shape: f32[3,32,64], index: 5, kind: input, shape index: {}]
  %s6 = inlined_call_operand.vmem [shape: f32[1,64], index: 6, kind: input, shape index: {}]
  %s7 = inlined_call_operand.vmem [shape: f32[1,64], index: 7, kind: input, shape index: {}]
  %s8 = inlined_call_operand.vmem [shape: f32[1,64], index: 8, kind: input, shape index: {}]
  %s9 = inlined_call_operand.vmem [shape: f32[2,64,16], index: 9, kind: input, shape index: {}]
  %s10 = inlined_call_operand.vmem [shape: f32[1,16], index: 10, kind: input, shape index: {}]
  %s11 = inlined_call_operand.vmem [shape: f32[24,26], index: 11, kind: input, shape index: {}]
  %s12 = inlined_call_operand.vmem [shape: f32[2,12,24], index: 12, kind: input, shape index: {}]
  %s13 = inlined_call_operand.vmem [shape: f32[3,8,12], index: 13, kind: input, shape index: {}]
  %s14 = inlined_call_operand.vmem [shape: f32[2,4,8], index: 14, kind: input, shape index: {}]
  %s15 = inlined_call_operand.vmem [shape: f32[2,2,4], index: 15, kind: input, shape index: {}]
  %s16 = inlined_call_operand.hbm [shape: f32[2,16], index: 16, kind: output, shape index: {}]
  %s17 = sld [smem:[#allocation0]]
  $region74: #{tpu_custom_call.1} parent=0
    _
  %s19 = ssub.s32 1, %s17
  %s20 = scalar_select 0, %s19, %s17
  $region1: #{tpu_custom_call.1} parent=0
    #allocation2 [shape = 'u8[1024]{0}', space=vmem, size = 0x400, scoped, tag = 'output window, operand 0, single buffered']
    #allocation3 [shape = 's32[1]{0}', space=sflag, size = 0x4, scoped, tag = 'scoped memory for tpu_custom_call.1']
    %21 = vsyncpa [#allocation3], 0
    // Predicated region
    $region2: #{tpu_custom_call.1} parent=1 // pred_check
      _
    $region3: #{tpu_custom_call.1} parent=1 // pred_check_branch
      %23 = sbr.rel (0) target = $region5
    $region4: #{tpu_custom_call.1} parent=1 // pred_region
      _
    $region5: #{tpu_custom_call.1} parent=1 // pred_fallthru
      _
    // Predicated region
    $region6: #{tpu_custom_call.1} parent=1 // pred_check
      _
    $region7: #{tpu_custom_call.1} parent=1 // pred_check_branch
      %25 = sbr.rel (0) target = $region9
    $region8: #{tpu_custom_call.1} parent=1 // pred_region
      _
    $region9: #{tpu_custom_call.1} parent=1 // pred_fallthru
      _
    // Predicated region
    $region10: #{tpu_custom_call.1} parent=1 // pred_check
      _
    $region11: #{tpu_custom_call.1} parent=1 // pred_check_branch
      %27 = sbr.rel (0) target = $region13
    $region12: #{tpu_custom_call.1} parent=1 // pred_region
      _
    $region13: #{tpu_custom_call.1} parent=1 // pred_fallthru
      _
    // Predicated region
    $region14: #{tpu_custom_call.1} parent=1 // pred_check
      _
    $region15: #{tpu_custom_call.1} parent=1 // pred_check_branch
      %29 = sbr.rel (0) target = $region17
    $region16: #{tpu_custom_call.1} parent=1 // pred_region
      _
    $region17: #{tpu_custom_call.1} parent=1 // pred_fallthru
      _
    // Predicated region
    $region18: #{tpu_custom_call.1} parent=1 // pred_check
      _
    $region19: #{tpu_custom_call.1} parent=1 // pred_check_branch
      %31 = sbr.rel (0) target = $region21
    $region20: #{tpu_custom_call.1} parent=1 // pred_region
      _
    $region21: #{tpu_custom_call.1} parent=1 // pred_fallthru
      _
    // Predicated region
    $region22: #{tpu_custom_call.1} parent=1 // pred_check
      _
    $region23: #{tpu_custom_call.1} parent=1 // pred_check_branch
      %33 = sbr.rel (0) target = $region25
    $region24: #{tpu_custom_call.1} parent=1 // pred_region
      _
    $region25: #{tpu_custom_call.1} parent=1 // pred_fallthru
      _
    // Predicated region
    $region26: #{tpu_custom_call.1} parent=1 // pred_check
      _
    $region27: #{tpu_custom_call.1} parent=1 // pred_check_branch
      %35 = sbr.rel (0) target = $region29
    $region28: #{tpu_custom_call.1} parent=1 // pred_region
      _
    $region29: #{tpu_custom_call.1} parent=1 // pred_fallthru
      _
    // Predicated region
    $region30: #{tpu_custom_call.1} parent=1 // pred_check
      _
    $region31: #{tpu_custom_call.1} parent=1 // pred_check_branch
      %37 = sbr.rel (0) target = $region33
    $region32: #{tpu_custom_call.1} parent=1 // pred_region
      _
    $region33: #{tpu_custom_call.1} parent=1 // pred_fallthru
      _
    // Predicated region
    $region34: #{tpu_custom_call.1} parent=1 // pred_check
      _
    $region35: #{tpu_custom_call.1} parent=1 // pred_check_branch
      %39 = sbr.rel (0) target = $region37
    $region36: #{tpu_custom_call.1} parent=1 // pred_region
      _
    $region37: #{tpu_custom_call.1} parent=1 // pred_fallthru
      _
    // Predicated region
    $region38: #{tpu_custom_call.1} parent=1 // pred_check
      _
    $region39: #{tpu_custom_call.1} parent=1 // pred_check_branch
      %41 = sbr.rel (0) target = $region41
    $region40: #{tpu_custom_call.1} parent=1 // pred_region
      _
    $region41: #{tpu_custom_call.1} parent=1 // pred_fallthru
      _
    // Predicated region
    $region42: #{tpu_custom_call.1} parent=1 // pred_check
      _
    $region43: #{tpu_custom_call.1} parent=1 // pred_check_branch
      %43 = sbr.rel (0) target = $region45
    $region44: #{tpu_custom_call.1} parent=1 // pred_region
      _
    $region45: #{tpu_custom_call.1} parent=1 // pred_fallthru
      _
    // Predicated region
    $region46: #{tpu_custom_call.1} parent=1 // pred_check
      _
    $region47: #{tpu_custom_call.1} parent=1 // pred_check_branch
      %45 = sbr.rel (0) target = $region49
    $region48: #{tpu_custom_call.1} parent=1 // pred_region
      _
    $region49: #{tpu_custom_call.1} parent=1 // pred_fallthru
      _
    // Predicated region
    $region50: #{tpu_custom_call.1} parent=1 // pred_check
      _
    $region51: #{tpu_custom_call.1} parent=1 // pred_check_branch
      %47 = sbr.rel (0) target = $region53
    $region52: #{tpu_custom_call.1} parent=1 // pred_region
      _
    $region53: #{tpu_custom_call.1} parent=1 // pred_fallthru
      _
    // Predicated region
    $region54: #{tpu_custom_call.1} parent=1 // pred_check
      _
    $region55: #{tpu_custom_call.1} parent=1 // pred_check_branch
      %49 = sbr.rel (0) target = $region57
    $region56: #{tpu_custom_call.1} parent=1 // pred_region
      _
    $region57: #{tpu_custom_call.1} parent=1 // pred_fallthru
      _
    // Predicated region
    $region58: #{tpu_custom_call.1} parent=1 // pred_check
      _
    $region59: #{tpu_custom_call.1} parent=1 // pred_check_branch
      %51 = sbr.rel (0) target = $region61
    $region60: #{tpu_custom_call.1} parent=1 // pred_region
      _
    $region61: #{tpu_custom_call.1} parent=1 // pred_fallthru
      _
    // Predicated region
    $region62: #{tpu_custom_call.1} parent=1 // pred_check
      _
    $region63: #{tpu_custom_call.1} parent=1 // pred_check_branch
      %53 = sbr.rel (0) target = $region65
    $region64: #{tpu_custom_call.1} parent=1 // pred_region
      _
    $region65: #{tpu_custom_call.1} parent=1 // pred_fallthru
      _
    %v54 = vld [vmem:[%s0] sm:$0xff]
    %v55 = vld [vmem:[%s0 + $0x8] sm:$0xff]
    %v56 = vld [vmem:[%s0 + $0x10] sm:$0xff]
    %v57 = vld [vmem:[%s0 + $0x18] sm:$0x3]
    %v58 = vld [vmem:[%s1] sm:$0xff]
    %v59 = vld [vmem:[%s1 + $0x8] sm:$0x3f]
    %v60 = vld [vmem:[%s0 + $0x1] sm:$0xff]
    %v61 = vld [vmem:[%s0 + $0x9] sm:$0xff]
    %v62 = vld [vmem:[%s0 + $0x11] sm:$0xff]
    %v63 = vld [vmem:[%s0 + $0x19] sm:$0x3]
    %s64 = scalar_lea.vmem %s1, 16
    %v65 = vld [vmem:[%s64] sm:$0xff]
    %v66 = vld [vmem:[%s64 + $0x8] sm:$0x3f]
    %vm67 = vcmask 113664
    %v69 = vsel %vm67, %v60, 0
    %v72 = vsel %vm67, %v61, 0
    %v75 = vsel %vm67, %v62, 0
    %v78 = vsel %vm67, %v63, 0
    %vm80 = vcmask 1045504
    %v82 = vsel %vm80, %v66, 0
    %84 = vmatprep.subr.mxu0 0.0
    %v85 = vand.u32 %v65, 4294901760
    %86 = vmatpush1.msra.mxu0 %v85
    %87 = vmatprep.subr.mxu0 0.0
    %v88 = vand.u32 %v82, 4294901760
    %89 = vmatpush1.msra.mxu0 %v88
    %90 = vmatprep.subr.mxu0 0.0
    %91 = vmatpush1.msra.mxu0 0.0
    %92 = vmatprep.subr.mxu0 0.0
    %93 = vmatpush1.msra.mxu0 0.0
    %94 = vmatprep.subr.mxu0 0.0
    %95 = vmatpush1.msra.mxu0 0.0
    %96 = vmatprep.subr.mxu0 0.0
    %97 = vmatpush1.msra.mxu0 0.0
    %98 = vmatprep.subr.mxu0 0.0
    %99 = vmatpush1.msra.mxu0 0.0
    %100 = vmatprep.subr.mxu0 0.0
    %101 = vmatpush1.msra.mxu0 0.0
    %102 = vmatprep.subr.mxu0 0.0
    %103 = vmatpush1.msra.mxu0 0.0
    %104 = vmatprep.subr.mxu0 0.0
    %105 = vmatpush1.msra.mxu0 0.0
    %106 = vmatprep.subr.mxu0 0.0
    %107 = vmatpush1.msra.mxu0 0.0
    %108 = vmatprep.subr.mxu0 0.0
    %109 = vmatpush1.msra.mxu0 0.0
    %110 = vmatprep.subr.mxu0 0.0
    %111 = vmatpush1.msra.mxu0 0.0
    %112 = vmatprep.subr.mxu0 0.0
    %113 = vmatpush1.msra.mxu0 0.0
    %114 = vmatprep.subr.mxu0 0.0
    %115 = vmatpush1.msra.mxu0 0.0
    %116 = vmatprep.subr.mxu0 0.0
    %117 = vmatpush1.msra.mxu0 0.0
    %118 = vmatprep.subr.mxu0 0.0
    %119 = vmatpush1.msra.mxu0 0.0
    %120 = vmatprep.subr.mxu0 0.0
    %121 = vmatpush1.msra.mxu0 0.0
    %122 = vmatprep.subr.mxu0 0.0
    %123 = vmatpush1.msra.mxu0 0.0
    %124 = vmatprep.subr.mxu0 0.0
    %125 = vmatpush1.msra.mxu0 0.0
    %126 = vmatprep.subr.mxu0 0.0
    %127 = vmatpush1.msra.mxu0 0.0
    %128 = vmatprep.subr.mxu0 0.0
    %129 = vmatpush1.msra.mxu0 0.0
    %130 = vmatprep.subr.mxu0 0.0
    %131 = vmatpush1.msra.mxu0 0.0
    %132 = vmatprep.subr.mxu0 0.0
    %133 = vmatpush1.msra.mxu0 0.0
    %134 = vmatprep.subr.mxu0 0.0
    %135 = vmatpush1.msra.mxu0 0.0
    %136 = vmatprep.subr.mxu0 0.0
    %137 = vmatpush1.msra.mxu0 0.0
    %138 = vmatprep.subr.mxu0 0.0
    %139 = vmatpush1.msra.mxu0 0.0
    %140 = vmatprep.subr.mxu0 0.0
    %141 = vmatpush1.msra.mxu0 0.0
    %142 = vmatprep.subr.mxu0 0.0
    %143 = vmatpush1.msra.mxu0 0.0
    %144 = vmatprep.subr.mxu0 0.0
    %145 = vmatpush1.msra.mxu0 0.0
    %146 = vmatprep.subr.mxu0 0.0
    %147 = vmatpush1.msra.mxu0 0.0
    %148 = vmatprep.subr.mxu0 0.0
    %149 = vmatpush1.msra.mxu0 0.0
    %150 = vmatprep.mubr.f32.mxu0 0.0
    %v151 = vand.u32 %v69, 4294901760
    %v152 = vsub.f32 %v69, %v151
    %v153 = vand.u32 %v152, 4294901760
    %v154 = vsub.f32 %v152, %v153
    %v155 = vand.u32 %v154, 4294901760
    %156 = vmatmul.mubr.f32.gmra.mrb[0].mxu0 %v155
    %v157 = vpop.f32.mrb[0].mxu0
    %v158 = vadd.f32 0.0, %v157
    %v159 = vpop.f32.mrb[0].mxu0
    %160 = vmatprep.mubr.f32.mxu0 0.0
    %v161 = vand.u32 %v72, 4294901760
    %v162 = vsub.f32 %v72, %v161
    %v163 = vand.u32 %v162, 4294901760
    %v164 = vsub.f32 %v162, %v163
    %v165 = vand.u32 %v164, 4294901760
    %166 = vmatmul.mubr.f32.gmra.mrb[0].mxu0 %v165
    %v167 = vpop.f32.mrb[0].mxu0
    %v168 = vadd.f32 0.0, %v167
    %v169 = vpop.f32.mrb[0].mxu0
    %170 = vmatprep.mubr.f32.mxu0 0.0
    %v171 = vand.u32 %v75, 4294901760
    %v172 = vsub.f32 %v75, %v171
    %v173 = vand.u32 %v172, 4294901760
    %v174 = vsub.f32 %v172, %v173
    %v175 = vand.u32 %v174, 4294901760
    %176 = vmatmul.mubr.f32.gmra.mrb[0].mxu0 %v175
    %v177 = vpop.f32.mrb[0].mxu0
    %v178 = vadd.f32 0.0, %v177
    %v179 = vpop.f32.mrb[0].mxu0
    %180 = vmatprep.mubr.f32.mxu0 0.0
    %v181 = vand.u32 %v78, 4294901760
    %v182 = vsub.f32 %v78, %v181
    %v183 = vand.u32 %v182, 4294901760
    %v184 = vsub.f32 %v182, %v183
    %v185 = vand.u32 %v184, 4294901760
    %186 = vmatmul.mubr.f32.gmra.mrb[0].mxu0 %v185
    %v187 = vpop.f32.mrb[0].mxu0
    %v188 = vadd.f32 0.0, %v187
    %v189 = vpop.f32.mrb[0].mxu0
    %190 = vdwg.mxu0
    %191 = vmatprep.subr.mxu0 0.0
    %v192 = vand.u32 %v65, 4294901760
    %v193 = vsub.f32 %v65, %v192
    %v194 = vand.u32 %v193, 4294901760
    %v195 = vsub.f32 %v193, %v194
    %v196 = vand.u32 %v195, 4294901760
    %197 = vmatpush1.msra.mxu0 %v196
    %198 = vmatprep.subr.mxu0 0.0
    %v199 = vand.u32 %v82, 4294901760
    %v200 = vsub.f32 %v82, %v199
    %v201 = vand.u32 %v200, 4294901760
    %v202 = vsub.f32 %v200, %v201
    %v203 = vand.u32 %v202, 4294901760
    %204 = vmatpush1.msra.mxu0 %v203
    %205 = vmatprep.subr.mxu0 0.0
    %206 = vmatpush1.msra.mxu0 0.0
    %207 = vmatprep.subr.mxu0 0.0
    %208 = vmatpush1.msra.mxu0 0.0
    %209 = vmatprep.subr.mxu0 0.0
    %210 = vmatpush1.msra.mxu0 0.0
    %211 = vmatprep.subr.mxu0 0.0
    %212 = vmatpush1.msra.mxu0 0.0
    %213 = vmatprep.subr.mxu0 0.0
    %214 = vmatpush1.msra.mxu0 0.0
    %215 = vmatprep.subr.mxu0 0.0
    %216 = vmatpush1.msra.mxu0 0.0
    %217 = vmatprep.subr.mxu0 0.0
    %218 = vmatpush1.msra.mxu0 0.0
    %219 = vmatprep.subr.mxu0 0.0
    %220 = vmatpush1.msra.mxu0 0.0
    %221 = vmatprep.subr.mxu0 0.0
    %222 = vmatpush1.msra.mxu0 0.0
    %223 = vmatprep.subr.mxu0 0.0
    %224 = vmatpush1.msra.mxu0 0.0
    %225 = vmatprep.subr.mxu0 0.0
    %226 = vmatpush1.msra.mxu0 0.0
    %227 = vmatprep.subr.mxu0 0.0
    %228 = vmatpush1.msra.mxu0 0.0
    %229 = vmatprep.subr.mxu0 0.0
    %230 = vmatpush1.msra.mxu0 0.0
    %231 = vmatprep.subr.mxu0 0.0
    %232 = vmatpush1.msra.mxu0 0.0
    %233 = vmatprep.subr.mxu0 0.0
    %234 = vmatpush1.msra.mxu0 0.0
    %235 = vmatprep.subr.mxu0 0.0
    %236 = vmatpush1.msra.mxu0 0.0
    %237 = vmatprep.subr.mxu0 0.0
    %238 = vmatpush1.msra.mxu0 0.0
    %239 = vmatprep.subr.mxu0 0.0
    %240 = vmatpush1.msra.mxu0 0.0
    %241 = vmatprep.subr.mxu0 0.0
    %242 = vmatpush1.msra.mxu0 0.0
    %243 = vmatprep.subr.mxu0 0.0
    %244 = vmatpush1.msra.mxu0 0.0
    %245 = vmatprep.subr.mxu0 0.0
    %246 = vmatpush1.msra.mxu0 0.0
    %247 = vmatprep.subr.mxu0 0.0
    %248 = vmatpush1.msra.mxu0 0.0
    %249 = vmatprep.subr.mxu0 0.0
    %250 = vmatpush1.msra.mxu0 0.0
    %251 = vmatprep.subr.mxu0 0.0
    %252 = vmatpush1.msra.mxu0 0.0
    %253 = vmatprep.subr.mxu0 0.0
    %254 = vmatpush1.msra.mxu0 0.0
    %255 = vmatprep.subr.mxu0 0.0
    %256 = vmatpush1.msra.mxu0 0.0
    %257 = vmatprep.subr.mxu0 0.0
    %258 = vmatpush1.msra.mxu0 0.0
    %259 = vmatprep.subr.mxu0 0.0
    %260 = vmatpush1.msra.mxu0 0.0
    %261 = vmatprep.subr.mxu0 0.0
    %262 = vmatpush1.msra.mxu0 0.0
    %263 = vmatprep.subr.mxu0 0.0
    %264 = vmatpush1.msra.mxu0 0.0
    %265 = vmatprep.mubr.f32.mxu0 0.0
    %v266 = vand.u32 %v69, 4294901760
    %267 = vmatmul.mubr.f32.gmra.mrb[0].mxu0 %v266
    %v268 = vpop.f32.mrb[0].mxu0
    %v269 = vadd.f32 %v158, %v268
    %v270 = vpop.f32.mrb[0].mxu0
    %271 = vmatprep.mubr.f32.mxu0 0.0
    %v272 = vand.u32 %v72, 4294901760
    %273 = vmatmul.mubr.f32.gmra.mrb[0].mxu0 %v272
    %v274 = vpop.f32.mrb[0].mxu0
    %v275 = vadd.f32 %v168, %v274
    %v276 = vpop.f32.mrb[0].mxu0
    %277 = vmatprep.mubr.f32.mxu0 0.0
    %v278 = vand.u32 %v75, 4294901760
    %279 = vmatmul.mubr.f32.gmra.mrb[0].mxu0 %v278
    %v280 = vpop.f32.mrb[0].mxu0
    %v281 = vadd.f32 %v178, %v280
    %v282 = vpop.f32.mrb[0].mxu0
    %283 = vmatprep.mubr.f32.mxu0 0.0
    %v284 = vand.u32 %v78, 4294901760
    %285 = vmatmul.mubr.f32.gmra.mrb[0].mxu0 %v284
    %v286 = vpop.f32.mrb[0].mxu0
    %v287 = vadd.f32 %v188, %v286
    %v288 = vpop.f32.mrb[0].mxu0
    %289 = vdwg.mxu0
    %290 = vmatprep.subr.mxu0 0.0
    %v291 = vand.u32 %v65, 4294901760
    %v292 = vsub.f32 %v65, %v291
    %293 = vmatpush1.msra.mxu0 %v292
    %294 = vmatprep.subr.mxu0 0.0
    %v295 = vand.u32 %v82, 4294901760
    %v296 = vsub.f32 %v82, %v295
    %297 = vmatpush1.msra.mxu0 %v296
    %298 = vmatprep.subr.mxu0 0.0
    %299 = vmatpush1.msra.mxu0 0.0
    %300 = vmatprep.subr.mxu0 0.0
    %301 = vmatpush1.msra.mxu0 0.0
    %302 = vmatprep.subr.mxu0 0.0
    %303 = vmatpush1.msra.mxu0 0.0
    %304 = vmatprep.subr.mxu0 0.0
    %305 = vmatpush1.msra.mxu0 0.0
    %306 = vmatprep.subr.mxu0 0.0
    %307 = vmatpush1.msra.mxu0 0.0
    %308 = vmatprep.subr.mxu0 0.0
    %309 = vmatpush1.msra.mxu0 0.0
    %310 = vmatprep.subr.mxu0 0.0
    %311 = vmatpush1.msra.mxu0 0.0
    %312 = vmatprep.subr.mxu0 0.0
    %313 = vmatpush1.msra.mxu0 0.0
    %314 = vmatprep.subr.mxu0 0.0
    %315 = vmatpush1.msra.mxu0 0.0
    %316 = vmatprep.subr.mxu0 0.0
    %317 = vmatpush1.msra.mxu0 0.0
    %318 = vmatprep.subr.mxu0 0.0
    %319 = vmatpush1.msra.mxu0 0.0
    %320 = vmatprep.subr.mxu0 0.0
    %321 = vmatpush1.msra.mxu0 0.0
    %322 = vmatprep.subr.mxu0 0.0
    %323 = vmatpush1.msra.mxu0 0.0
    %324 = vmatprep.subr.mxu0 0.0
    %325 = vmatpush1.msra.mxu0 0.0
    %326 = vmatprep.subr.mxu0 0.0
    %327 = vmatpush1.msra.mxu0 0.0
    %328 = vmatprep.subr.mxu0 0.0
    %329 = vmatpush1.msra.mxu0 0.0
    %330 = vmatprep.subr.mxu0 0.0
    %331 = vmatpush1.msra.mxu0 0.0
    %332 = vmatprep.subr.mxu0 0.0
    %333 = vmatpush1.msra.mxu0 0.0
    %334 = vmatprep.subr.mxu0 0.0
    %335 = vmatpush1.msra.mxu0 0.0
    %336 = vmatprep.subr.mxu0 0.0
    %337 = vmatpush1.msra.mxu0 0.0
    %338 = vmatprep.subr.mxu0 0.0
    %339 = vmatpush1.msra.mxu0 0.0
    %340 = vmatprep.subr.mxu0 0.0
    %341 = vmatpush1.msra.mxu0 0.0
    %342 = vmatprep.subr.mxu0 0.0
    %343 = vmatpush1.msra.mxu0 0.0
    %344 = vmatprep.subr.mxu0 0.0
    %345 = vmatpush1.msra.mxu0 0.0
    %346 = vmatprep.subr.mxu0 0.0
    %347 = vmatpush1.msra.mxu0 0.0
    %348 = vmatprep.subr.mxu0 0.0
    %349 = vmatpush1.msra.mxu0 0.0
    %350 = vmatprep.subr.mxu0 0.0
    %351 = vmatpush1.msra.mxu0 0.0
    %352 = vmatprep.subr.mxu0 0.0
    %353 = vmatpush1.msra.mxu0 0.0
    %354 = vmatprep.subr.mxu0 0.0
    %355 = vmatpush1.msra.mxu0 0.0
    %356 = vmatprep.subr.mxu0 0.0
    %357 = vmatpush1.msra.mxu0 0.0
    %358 = vmatprep.mubr.f32.mxu0 0.0
    %v359 = vand.u32 %v69, 4294901760
    %v360 = vsub.f32 %v69, %v359
    %361 = vmatmul.mubr.f32.gmra.mrb[0].mxu0 %v360
    %v362 = vpop.f32.mrb[0].mxu0
    %v363 = vadd.f32 %v269, %v362
    %v364 = vpop.f32.mrb[0].mxu0
    %365 = vmatprep.mubr.f32.mxu0 0.0
    %v366 = vand.u32 %v72, 4294901760
    %v367 = vsub.f32 %v72, %v366
    %368 = vmatmul.mubr.f32.gmra.mrb[0].mxu0 %v367
    %v369 = vpop.f32.mrb[0].mxu0
    %v370 = vadd.f32 %v275, %v369
    %v371 = vpop.f32.mrb[0].mxu0
    %372 = vmatprep.mubr.f32.mxu0 0.0
    %v373 = vand.u32 %v75, 4294901760
    %v374 = vsub.f32 %v75, %v373
    %375 = vmatmul.mubr.f32.gmra.mrb[0].mxu0 %v374
    %v376 = vpop.f32.mrb[0].mxu0
    %v377 = vadd.f32 %v281, %v376
    %v378 = vpop.f32.mrb[0].mxu0
    %379 = vmatprep.mubr.f32.mxu0 0.0
    %v380 = vand.u32 %v78, 4294901760
    %v381 = vsub.f32 %v78, %v380
    %382 = vmatmul.mubr.f32.gmra.mrb[0].mxu0 %v381
    %v383 = vpop.f32.mrb[0].mxu0
    %v384 = vadd.f32 %v287, %v383
    %v385 = vpop.f32.mrb[0].mxu0
    %386 = vdwg.mxu0
    %387 = vmatprep.subr.mxu0 0.0
    %v388 = vand.u32 %v65, 4294901760
    %389 = vmatpush1.msra.mxu0 %v388
    %390 = vmatprep.subr.mxu0 0.0
    %v391 = vand.u32 %v82, 4294901760
    %392 = vmatpush1.msra.mxu0 %v391
    %393 = vmatprep.subr.mxu0 0.0
    %394 = vmatpush1.msra.mxu0 0.0
    %395 = vmatprep.subr.mxu0 0.0
    %396 = vmatpush1.msra.mxu0 0.0
    %397 = vmatprep.subr.mxu0 0.0
    %398 = vmatpush1.msra.mxu0 0.0
    %399 = vmatprep.subr.mxu0 0.0
    %400 = vmatpush1.msra.mxu0 0.0
    %401 = vmatprep.subr.mxu0 0.0
    %402 = vmatpush1.msra.mxu0 0.0
    %403 = vmatprep.subr.mxu0 0.0
    %404 = vmatpush1.msra.mxu0 0.0
    %405 = vmatprep.subr.mxu0 0.0
    %406 = vmatpush1.msra.mxu0 0.0
    %407 = vmatprep.subr.mxu0 0.0
    %408 = vmatpush1.msra.mxu0 0.0
    %409 = vmatprep.subr.mxu0 0.0
    %410 = vmatpush1.msra.mxu0 0.0
    %411 = vmatprep.subr.mxu0 0.0
    %412 = vmatpush1.msra.mxu0 0.0
    %413 = vmatprep.subr.mxu0 0.0
    %414 = vmatpush1.msra.mxu0 0.0
    %415 = vmatprep.subr.mxu0 0.0
    %416 = vmatpush1.msra.mxu0 0.0
    %417 = vmatprep.subr.mxu0 0.0
    %418 = vmatpush1.msra.mxu0 0.0
    %419 = vmatprep.subr.mxu0 0.0
    %420 = vmatpush1.msra.mxu0 0.0
    %421 = vmatprep.subr.mxu0 0.0
    %422 = vmatpush1.msra.mxu0 0.0
    %423 = vmatprep.subr.mxu0 0.0
    %424 = vmatpush1.msra.mxu0 0.0
    %425 = vmatprep.subr.mxu0 0.0
    %426 = vmatpush1.msra.mxu0 0.0
    %427 = vmatprep.subr.mxu0 0.0
    %428 = vmatpush1.msra.mxu0 0.0
    %429 = vmatprep.subr.mxu0 0.0
    %430 = vmatpush1.msra.mxu0 0.0
    %431 = vmatprep.subr.mxu0 0.0
    %432 = vmatpush1.msra.mxu0 0.0
    %433 = vmatprep.subr.mxu0 0.0
    %434 = vmatpush1.msra.mxu0 0.0
    %435 = vmatprep.subr.mxu0 0.0
    %436 = vmatpush1.msra.mxu0 0.0
    %437 = vmatprep.subr.mxu0 0.0
    %438 = vmatpush1.msra.mxu0 0.0
    %439 = vmatprep.subr.mxu0 0.0
    %440 = vmatpush1.msra.mxu0 0.0
    %441 = vmatprep.subr.mxu0 0.0
    %442 = vmatpush1.msra.mxu0 0.0
    %443 = vmatprep.subr.mxu0 0.0
    %444 = vmatpush1.msra.mxu0 0.0
    %445 = vmatprep.subr.mxu0 0.0
    %446 = vmatpush1.msra.mxu0 0.0
    %447 = vmatprep.subr.mxu0 0.0
    %448 = vmatpush1.msra.mxu0 0.0
    %449 = vmatprep.subr.mxu0 0.0
    %450 = vmatpush1.msra.mxu0 0.0
    %451 = vmatprep.subr.mxu0 0.0
    %452 = vmatpush1.msra.mxu0 0.0
    %453 = vmatprep.mubr.f32.mxu0 0.0
    %v454 = vand.u32 %v69, 4294901760
    %v455 = vsub.f32 %v69, %v454
    %v456 = vand.u32 %v455, 4294901760
    %457 = vmatmul.mubr.f32.gmra.mrb[0].mxu0 %v456
    %v458 = vpop.f32.mrb[0].mxu0
    %v459 = vadd.f32 %v363, %v458
    %v460 = vpop.f32.mrb[0].mxu0
    %461 = vmatprep.mubr.f32.mxu0 0.0
    %v462 = vand.u32 %v72, 4294901760
    %v463 = vsub.f32 %v72, %v462
    %v464 = vand.u32 %v463, 4294901760
    %465 = vmatmul.mubr.f32.gmra.mrb[0].mxu0 %v464
    %v466 = vpop.f32.mrb[0].mxu0
    %v467 = vadd.f32 %v370, %v466
    %v468 = vpop.f32.mrb[0].mxu0
    %469 = vmatprep.mubr.f32.mxu0 0.0
    %v470 = vand.u32 %v75, 4294901760
    %v471 = vsub.f32 %v75, %v470
    %v472 = vand.u32 %v471, 4294901760
    %473 = vmatmul.mubr.f32.gmra.mrb[0].mxu0 %v472
    %v474 = vpop.f32.mrb[0].mxu0
    %v475 = vadd.f32 %v377, %v474
    %v476 = vpop.f32.mrb[0].mxu0
    %477 = vmatprep.mubr.f32.mxu0 0.0
    %v478 = vand.u32 %v78, 4294901760
    %v479 = vsub.f32 %v78, %v478
    %v480 = vand.u32 %v479, 4294901760
    %481 = vmatmul.mubr.f32.gmra.mrb[0].mxu0 %v480
    %v482 = vpop.f32.mrb[0].mxu0
    %v483 = vadd.f32 %v384, %v482
    %v484 = vpop.f32.mrb[0].mxu0
    %485 = vdwg.mxu0
    %486 = vmatprep.subr.mxu0 0.0
    %v487 = vand.u32 %v65, 4294901760
    %v488 = vsub.f32 %v65, %v487
    %v489 = vand.u32 %v488, 4294901760
    %490 = vmatpush1.msra.mxu0 %v489
    %491 = vmatprep.subr.mxu0 0.0
    %v492 = vand.u32 %v82, 4294901760
    %v493 = vsub.f32 %v82, %v492
    %v494 = vand.u32 %v493, 4294901760
    %495 = vmatpush1.msra.mxu0 %v494
    %496 = vmatprep.subr.mxu0 0.0
    %497 = vmatpush1.msra.mxu0 0.0
    %498 = vmatprep.subr.mxu0 0.0
    %499 = vmatpush1.msra.mxu0 0.0
    %500 = vmatprep.subr.mxu0 0.0
    %501 = vmatpush1.msra.mxu0 0.0
    %502 = vmatprep.subr.mxu0 0.0
    %503 = vmatpush1.msra.mxu0 0.0
    %504 = vmatprep.subr.mxu0 0.0
    %505 = vmatpush1.msra.mxu0 0.0
    %506 = vmatprep.subr.mxu0 0.0
    %507 = vmatpush1.msra.mxu0 0.0
    %508 = vmatprep.subr.mxu0 0.0
    %509 = vmatpush1.msra.mxu0 0.0
    %510 = vmatprep.subr.mxu0 0.0
    %511 = vmatpush1.msra.mxu0 0.0
    %512 = vmatprep.subr.mxu0 0.0
    %513 = vmatpush1.msra.mxu0 0.0
    %514 = vmatprep.subr.mxu0 0.0
    %515 = vmatpush1.msra.mxu0 0.0
    %516 = vmatprep.subr.mxu0 0.0
    %517 = vmatpush1.msra.mxu0 0.0
    %518 = vmatprep.subr.mxu0 0.0
    %519 = vmatpush1.msra.mxu0 0.0
    %520 = vmatprep.subr.mxu0 0.0
    %521 = vmatpush1.msra.mxu0 0.0
    %522 = vmatprep.subr.mxu0 0.0
    %523 = vmatpush1.msra.mxu0 0.0
    %524 = vmatprep.subr.mxu0 0.0
    %525 = vmatpush1.msra.mxu0 0.0
    %526 = vmatprep.subr.mxu0 0.0
    %527 = vmatpush1.msra.mxu0 0.0
    %528 = vmatprep.subr.mxu0 0.0
    %529 = vmatpush1.msra.mxu0 0.0
    %530 = vmatprep.subr.mxu0 0.0
    %531 = vmatpush1.msra.mxu0 0.0
    %532 = vmatprep.subr.mxu0 0.0
    %533 = vmatpush1.msra.mxu0 0.0
    %534 = vmatprep.subr.mxu0 0.0
    %535 = vmatpush1.msra.mxu0 0.0
    %536 = vmatprep.subr.mxu0 0.0
    %537 = vmatpush1.msra.mxu0 0.0
    %538 = vmatprep.subr.mxu0 0.0
    %539 = vmatpush1.msra.mxu0 0.0
    %540 = vmatprep.subr.mxu0 0.0
    %541 = vmatpush1.msra.mxu0 0.0
    %542 = vmatprep.subr.mxu0 0.0
    %543 = vmatpush1.msra.mxu0 0.0
    %544 = vmatprep.subr.mxu0 0.0
    %545 = vmatpush1.msra.mxu0 0.0
    %546 = vmatprep.subr.mxu0 0.0
    %547 = vmatpush1.msra.mxu0 0.0
    %548 = vmatprep.subr.mxu0 0.0
    %549 = vmatpush1.msra.mxu0 0.0
    %550 = vmatprep.subr.mxu0 0.0
    %551 = vmatpush1.msra.mxu0 0.0
    %552 = vmatprep.subr.mxu0 0.0
    %553 = vmatpush1.msra.mxu0 0.0
    %554 = vmatprep.subr.mxu0 0.0
    %555 = vmatpush1.msra.mxu0 0.0
    %556 = vmatprep.mubr.f32.mxu0 0.0
    %v557 = vand.u32 %v69, 4294901760
    %558 = vmatmul.mubr.f32.gmra.mrb[0].mxu0 %v557
    %v559 = vpop.f32.mrb[0].mxu0
    %v560 = vadd.f32 %v459, %v559
    %v561 = vpop.f32.mrb[0].mxu0
    %562 = vmatprep.mubr.f32.mxu0 0.0
    %v563 = vand.u32 %v72, 4294901760
    %564 = vmatmul.mubr.f32.gmra.mrb[0].mxu0 %v563
    %v565 = vpop.f32.mrb[0].mxu0
    %v566 = vadd.f32 %v467, %v565
    %v567 = vpop.f32.mrb[0].mxu0
    %568 = vmatprep.mubr.f32.mxu0 0.0
    %v569 = vand.u32 %v75, 4294901760
    %570 = vmatmul.mubr.f32.gmra.mrb[0].mxu0 %v569
    %v571 = vpop.f32.mrb[0].mxu0
    %v572 = vadd.f32 %v475, %v571
    %v573 = vpop.f32.mrb[0].mxu0
    %574 = vmatprep.mubr.f32.mxu0 0.0
    %v575 = vand.u32 %v78, 4294901760
    %576 = vmatmul.mubr.f32.gmra.mrb[0].mxu0 %v575
    %v577 = vpop.f32.mrb[0].mxu0
    %v578 = vadd.f32 %v483, %v577
    %v579 = vpop.f32.mrb[0].mxu0
    %580 = vdwg.mxu0
    %581 = vmatprep.subr.mxu0 0.0
    %v582 = vand.u32 %v65, 4294901760
    %583 = vmatpush1.msra.mxu0 %v582
    %584 = vmatprep.subr.mxu0 0.0
    %v585 = vand.u32 %v82, 4294901760
    %586 = vmatpush1.msra.mxu0 %v585
    %587 = vmatprep.subr.mxu0 0.0
    %588 = vmatpush1.msra.mxu0 0.0
    %589 = vmatprep.subr.mxu0 0.0
    %590 = vmatpush1.msra.mxu0 0.0
    %591 = vmatprep.subr.mxu0 0.0
    %592 = vmatpush1.msra.mxu0 0.0
    %593 = vmatprep.subr.mxu0 0.0
    %594 = vmatpush1.msra.mxu0 0.0
    %595 = vmatprep.subr.mxu0 0.0
    %596 = vmatpush1.msra.mxu0 0.0
    %597 = vmatprep.subr.mxu0 0.0
    %598 = vmatpush1.msra.mxu0 0.0
    %599 = vmatprep.subr.mxu0 0.0
    %600 = vmatpush1.msra.mxu0 0.0
    %601 = vmatprep.subr.mxu0 0.0
    %602 = vmatpush1.msra.mxu0 0.0
    %603 = vmatprep.subr.mxu0 0.0
    %604 = vmatpush1.msra.mxu0 0.0
    %605 = vmatprep.subr.mxu0 0.0
    %606 = vmatpush1.msra.mxu0 0.0
    %607 = vmatprep.subr.mxu0 0.0
    %608 = vmatpush1.msra.mxu0 0.0
    %609 = vmatprep.subr.mxu0 0.0
    %610 = vmatpush1.msra.mxu0 0.0
    %611 = vmatprep.subr.mxu0 0.0
    %612 = vmatpush1.msra.mxu0 0.0
    %613 = vmatprep.subr.mxu0 0.0
    %614 = vmatpush1.msra.mxu0 0.0
    %615 = vmatprep.subr.mxu0 0.0
    %616 = vmatpush1.msra.mxu0 0.0
    %617 = vmatprep.subr.mxu0 0.0
    %618 = vmatpush1.msra.mxu0 0.0
    %619 = vmatprep.subr.mxu0 0.0
    %620 = vmatpush1.msra.mxu0 0.0
    %621 = vmatprep.subr.mxu0 0.0
    %622 = vmatpush1.msra.mxu0 0.0
    %623 = vmatprep.subr.mxu0 0.0
    %624 = vmatpush1.msra.mxu0 0.0
    %625 = vmatprep.subr.mxu0 0.0
    %626 = vmatpush1.msra.mxu0 0.0
    %627 = vmatprep.subr.mxu0 0.0
    %628 = vmatpush1.msra.mxu0 0.0
    %629 = vmatprep.subr.mxu0 0.0
    %630 = vmatpush1.msra.mxu0 0.0
    %631 = vmatprep.subr.mxu0 0.0
    %632 = vmatpush1.msra.mxu0 0.0
    %633 = vmatprep.subr.mxu0 0.0
    %634 = vmatpush1.msra.mxu0 0.0
    %635 = vmatprep.subr.mxu0 0.0
    %636 = vmatpush1.msra.mxu0 0.0
    %637 = vmatprep.subr.mxu0 0.0
    %638 = vmatpush1.msra.mxu0 0.0
    %639 = vmatprep.subr.mxu0 0.0
    %640 = vmatpush1.msra.mxu0 0.0
    %641 = vmatprep.subr.mxu0 0.0
    %642 = vmatpush1.msra.mxu0 0.0
    %643 = vmatprep.subr.mxu0 0.0
    %644 = vmatpush1.msra.mxu0 0.0
    %645 = vmatprep.subr.mxu0 0.0
    %646 = vmatpush1.msra.mxu0 0.0
    %647 = vmatprep.mubr.f32.mxu0 0.0
    %v648 = vand.u32 %v69, 4294901760
    %649 = vmatmul.mubr.f32.gmra.mrb[0].mxu0 %v648
    %v650 = vpop.f32.mrb[0].mxu0
    %v651 = vadd.f32 %v560, %v650
    %v652 = vpop.f32.mrb[0].mxu0
    %653 = vmatprep.mubr.f32.mxu0 0.0
    %v654 = vand.u32 %v72, 4294901760
    %655 = vmatmul.mubr.f32.gmra.mrb[0].mxu0 %v654
    %v656 = vpop.f32.mrb[0].mxu0
    %v657 = vadd.f32 %v566, %v656
    %v658 = vpop.f32.mrb[0].mxu0
    %659 = vmatprep.mubr.f32.mxu0 0.0
    %v660 = vand.u32 %v75, 4294901760
    %661 = vmatmul.mubr.f32.gmra.mrb[0].mxu0 %v660
    %v662 = vpop.f32.mrb[0].mxu0
    %v663 = vadd.f32 %v572, %v662
    %v664 = vpop.f32.mrb[0].mxu0
    %665 = vmatprep.mubr.f32.mxu0 0.0
    %v666 = vand.u32 %v78, 4294901760
    %667 = vmatmul.mubr.f32.gmra.mrb[0].mxu0 %v666
    %v668 = vpop.f32.mrb[0].mxu0
    %v669 = vadd.f32 %v578, %v668
    %v670 = vpop.f32.mrb[0].mxu0
    %671 = vdwg.mxu0
    %v673 = vsel %vm67, %v54, 0
    %v676 = vsel %vm67, %v55, 0
    %v679 = vsel %vm67, %v56, 0
    %v682 = vsel %vm67, %v57, 0
    %v685 = vsel %vm80, %v59, 0
    %687 = vmatprep.subr.mxu0 0.0
    %v688 = vand.u32 %v58, 4294901760
    %689 = vmatpush1.msra.mxu0 %v688
    %690 = vmatprep.subr.mxu0 0.0
    %v691 = vand.u32 %v685, 4294901760
    %692 = vmatpush1.msra.mxu0 %v691
    %693 = vmatprep.subr.mxu0 0.0
    %694 = vmatpush1.msra.mxu0 0.0
    %695 = vmatprep.subr.mxu0 0.0
    %696 = vmatpush1.msra.mxu0 0.0
    %697 = vmatprep.subr.mxu0 0.0
    %698 = vmatpush1.msra.mxu0 0.0
    %699 = vmatprep.subr.mxu0 0.0
    %700 = vmatpush1.msra.mxu0 0.0
    %701 = vmatprep.subr.mxu0 0.0
    %702 = vmatpush1.msra.mxu0 0.0
    %703 = vmatprep.subr.mxu0 0.0
    %704 = vmatpush1.msra.mxu0 0.0
    %705 = vmatprep.subr.mxu0 0.0
    %706 = vmatpush1.msra.mxu0 0.0
    %707 = vmatprep.subr.mxu0 0.0
    %708 = vmatpush1.msra.mxu0 0.0
    %709 = vmatprep.subr.mxu0 0.0
    %710 = vmatpush1.msra.mxu0 0.0
    %711 = vmatprep.subr.mxu0 0.0
    %712 = vmatpush1.msra.mxu0 0.0
    %713 = vmatprep.subr.mxu0 0.0
    %714 = vmatpush1.msra.mxu0 0.0
    %715 = vmatprep.subr.mxu0 0.0
    %716 = vmatpush1.msra.mxu0 0.0
    %717 = vmatprep.subr.mxu0 0.0
    %718 = vmatpush1.msra.mxu0 0.0
    %719 = vmatprep.subr.mxu0 0.0
    %720 = vmatpush1.msra.mxu0 0.0
    %721 = vmatprep.subr.mxu0 0.0
    %722 = vmatpush1.msra.mxu0 0.0
    %723 = vmatprep.subr.mxu0 0.0
    %724 = vmatpush1.msra.mxu0 0.0
    %725 = vmatprep.subr.mxu0 0.0
    %726 = vmatpush1.msra.mxu0 0.0
    %727 = vmatprep.subr.mxu0 0.0
    %728 = vmatpush1.msra.mxu0 0.0
    %729 = vmatprep.subr.mxu0 0.0
    %730 = vmatpush1.msra.mxu0 0.0
    %731 = vmatprep.subr.mxu0 0.0
    %732 = vmatpush1.msra.mxu0 0.0
    %733 = vmatprep.subr.mxu0 0.0
    %734 = vmatpush1.msra.mxu0 0.0
    %735 = vmatprep.subr.mxu0 0.0
    %736 = vmatpush1.msra.mxu0 0.0
    %737 = vmatprep.subr.mxu0 0.0
    %738 = vmatpush1.msra.mxu0 0.0
    %739 = vmatprep.subr.mxu0 0.0
    %740 = vmatpush1.msra.mxu0 0.0
    %741 = vmatprep.subr.mxu0 0.0
    %742 = vmatpush1.msra.mxu0 0.0
    %743 = vmatprep.subr.mxu0 0.0
    %744 = vmatpush1.msra.mxu0 0.0
    %745 = vmatprep.subr.mxu0 0.0
    %746 = vmatpush1.msra.mxu0 0.0
    %747 = vmatprep.subr.mxu0 0.0
    %748 = vmatpush1.msra.mxu0 0.0
    %749 = vmatprep.subr.mxu0 0.0
    %750 = vmatpush1.msra.mxu0 0.0
    %751 = vmatprep.subr.mxu0 0.0
    %752 = vmatpush1.msra.mxu0 0.0
    %753 = vmatprep.mubr.f32.mxu0 0.0
    %v754 = vand.u32 %v673, 4294901760
    %v755 = vsub.f32 %v673, %v754
    %v756 = vand.u32 %v755, 4294901760
    %v757 = vsub.f32 %v755, %v756
    %v758 = vand.u32 %v757, 4294901760
    %759 = vmatmul.mubr.f32.gmra.mrb[0].mxu0 %v758
    %v760 = vpop.f32.mrb[0].mxu0
    %v761 = vadd.f32 %v651, %v760
    %v762 = vpop.f32.mrb[0].mxu0
    %763 = vmatprep.mubr.f32.mxu0 0.0
    %v764 = vand.u32 %v676, 4294901760
    %v765 = vsub.f32 %v676, %v764
    %v766 = vand.u32 %v765, 4294901760
    %v767 = vsub.f32 %v765, %v766
    %v768 = vand.u32 %v767, 4294901760
    %769 = vmatmul.mubr.f32.gmra.mrb[0].mxu0 %v768
    %v770 = vpop.f32.mrb[0].mxu0
    %v771 = vadd.f32 %v657, %v770
    %v772 = vpop.f32.mrb[0].mxu0
    %773 = vmatprep.mubr.f32.mxu0 0.0
    %v774 = vand.u32 %v679, 4294901760
    %v775 = vsub.f32 %v679, %v774
    %v776 = vand.u32 %v775, 4294901760
    %v777 = vsub.f32 %v775, %v776
    %v778 = vand.u32 %v777, 4294901760
    %779 = vmatmul.mubr.f32.gmra.mrb[0].mxu0 %v778
    %v780 = vpop.f32.mrb[0].mxu0
    %v781 = vadd.f32 %v663, %v780
    %v782 = vpop.f32.mrb[0].mxu0
    %783 = vmatprep.mubr.f32.mxu0 0.0
    %v784 = vand.u32 %v682, 4294901760
    %v785 = vsub.f32 %v682, %v784
    %v786 = vand.u32 %v785, 4294901760
    %v787 = vsub.f32 %v785, %v786
    %v788 = vand.u32 %v787, 4294901760
    %789 = vmatmul.mubr.f32.gmra.mrb[0].mxu0 %v788
    %v790 = vpop.f32.mrb[0].mxu0
    %v791 = vadd.f32 %v669, %v790
    %v792 = vpop.f32.mrb[0].mxu0
    %793 = vdwg.mxu0
    %794 = vmatprep.subr.mxu0 0.0
    %v795 = vand.u32 %v58, 4294901760
    %v796 = vsub.f32 %v58, %v795
    %v797 = vand.u32 %v796, 4294901760
    %v798 = vsub.f32 %v796, %v797
    %v799 = vand.u32 %v798, 4294901760
    %800 = vmatpush1.msra.mxu0 %v799
    %801 = vmatprep.subr.mxu0 0.0
    %v802 = vand.u32 %v685, 4294901760
    %v803 = vsub.f32 %v685, %v802
    %v804 = vand.u32 %v803, 4294901760
    %v805 = vsub.f32 %v803, %v804
    %v806 = vand.u32 %v805, 4294901760
    %807 = vmatpush1.msra.mxu0 %v806
    %808 = vmatprep.subr.mxu0 0.0
    %809 = vmatpush1.msra.mxu0 0.0
    %810 = vmatprep.subr.mxu0 0.0
    %811 = vmatpush1.msra.mxu0 0.0
    %812 = vmatprep.subr.mxu0 0.0
    %813 = vmatpush1.msra.mxu0 0.0
    %814 = vmatprep.subr.mxu0 0.0
    %815 = vmatpush1.msra.mxu0 0.0
    %816 = vmatprep.subr.mxu0 0.0
    %817 = vmatpush1.msra.mxu0 0.0
    %818 = vmatprep.subr.mxu0 0.0
    %819 = vmatpush1.msra.mxu0 0.0
    %820 = vmatprep.subr.mxu0 0.0
    %821 = vmatpush1.msra.mxu0 0.0
    %822 = vmatprep.subr.mxu0 0.0
    %823 = vmatpush1.msra.mxu0 0.0
    %824 = vmatprep.subr.mxu0 0.0
    %825 = vmatpush1.msra.mxu0 0.0
    %826 = vmatprep.subr.mxu0 0.0
    %827 = vmatpush1.msra.mxu0 0.0
    %828 = vmatprep.subr.mxu0 0.0
    %829 = vmatpush1.msra.mxu0 0.0
    %830 = vmatprep.subr.mxu0 0.0
    %831 = vmatpush1.msra.mxu0 0.0
    %832 = vmatprep.subr.mxu0 0.0
    %833 = vmatpush1.msra.mxu0 0.0
    %834 = vmatprep.subr.mxu0 0.0
    %835 = vmatpush1.msra.mxu0 0.0
    %836 = vmatprep.subr.mxu0 0.0
    %837 = vmatpush1.msra.mxu0 0.0
    %838 = vmatprep.subr.mxu0 0.0
    %839 = vmatpush1.msra.mxu0 0.0
    %840 = vmatprep.subr.mxu0 0.0
    %841 = vmatpush1.msra.mxu0 0.0
    %842 = vmatprep.subr.mxu0 0.0
    %843 = vmatpush1.msra.mxu0 0.0
    %844 = vmatprep.subr.mxu0 0.0
    %845 = vmatpush1.msra.mxu0 0.0
    %846 = vmatprep.subr.mxu0 0.0
    %847 = vmatpush1.msra.mxu0 0.0
    %848 = vmatprep.subr.mxu0 0.0
    %849 = vmatpush1.msra.mxu0 0.0
    %850 = vmatprep.subr.mxu0 0.0
    %851 = vmatpush1.msra.mxu0 0.0
    %852 = vmatprep.subr.mxu0 0.0
    %853 = vmatpush1.msra.mxu0 0.0
    %854 = vmatprep.subr.mxu0 0.0
    %855 = vmatpush1.msra.mxu0 0.0
    %856 = vmatprep.subr.mxu0 0.0
    %857 = vmatpush1.msra.mxu0 0.0
    %858 = vmatprep.subr.mxu0 0.0
    %859 = vmatpush1.msra.mxu0 0.0
    %860 = vmatprep.subr.mxu0 0.0
    %861 = vmatpush1.msra.mxu0 0.0
    %862 = vmatprep.subr.mxu0 0.0
    %863 = vmatpush1.msra.mxu0 0.0
    %864 = vmatprep.subr.mxu0 0.0
    %865 = vmatpush1.msra.mxu0 0.0
    %866 = vmatprep.subr.mxu0 0.0
    %867 = vmatpush1.msra.mxu0 0.0
    %868 = vmatprep.mubr.f32.mxu0 0.0
    %v869 = vand.u32 %v673, 4294901760
    %870 = vmatmul.mubr.f32.gmra.mrb[0].mxu0 %v869
    %v871 = vpop.f32.mrb[0].mxu0
    %v872 = vadd.f32 %v761, %v871
    %v873 = vpop.f32.mrb[0].mxu0
    %874 = vmatprep.mubr.f32.mxu0 0.0
    %v875 = vand.u32 %v676, 4294901760
    %876 = vmatmul.mubr.f32.gmra.mrb[0].mxu0 %v875
    %v877 = vpop.f32.mrb[0].mxu0
    %v878 = vadd.f32 %v771, %v877
    %v879 = vpop.f32.mrb[0].mxu0
    %880 = vmatprep.mubr.f32.mxu0 0.0
    %v881 = vand.u32 %v679, 4294901760
    %882 = vmatmul.mubr.f32.gmra.mrb[0].mxu0 %v881
    %v883 = vpop.f32.mrb[0].mxu0
    %v884 = vadd.f32 %v781, %v883
    %v885 = vpop.f32.mrb[0].mxu0
    %886 = vmatprep.mubr.f32.mxu0 0.0
    %v887 = vand.u32 %v682, 4294901760
    %888 = vmatmul.mubr.f32.gmra.mrb[0].mxu0 %v887
    %v889 = vpop.f32.mrb[0].mxu0
    %v890 = vadd.f32 %v791, %v889
    %v891 = vpop.f32.mrb[0].mxu0
    %892 = vdwg.mxu0
    %893 = vmatprep.subr.mxu0 0.0
    %v894 = vand.u32 %v58, 4294901760
    %v895 = vsub.f32 %v58, %v894
    %896 = vmatpush1.msra.mxu0 %v895
    %897 = vmatprep.subr.mxu0 0.0
    %v898 = vand.u32 %v685, 4294901760
    %v899 = vsub.f32 %v685, %v898
    %900 = vmatpush1.msra.mxu0 %v899
    %901 = vmatprep.subr.mxu0 0.0
    %902 = vmatpush1.msra.mxu0 0.0
    %903 = vmatprep.subr.mxu0 0.0
    %904 = vmatpush1.msra.mxu0 0.0
    %905 = vmatprep.subr.mxu0 0.0
    %906 = vmatpush1.msra.mxu0 0.0
    %907 = vmatprep.subr.mxu0 0.0
    %908 = vmatpush1.msra.mxu0 0.0
    %909 = vmatprep.subr.mxu0 0.0
    %910 = vmatpush1.msra.mxu0 0.0
    %911 = vmatprep.subr.mxu0 0.0
    %912 = vmatpush1.msra.mxu0 0.0
    %913 = vmatprep.subr.mxu0 0.0
    %914 = vmatpush1.msra.mxu0 0.0
    %915 = vmatprep.subr.mxu0 0.0
    %916 = vmatpush1.msra.mxu0 0.0
    %917 = vmatprep.subr.mxu0 0.0
    %918 = vmatpush1.msra.mxu0 0.0
    %919 = vmatprep.subr.mxu0 0.0
    %920 = vmatpush1.msra.mxu0 0.0
    %921 = vmatprep.subr.mxu0 0.0
    %922 = vmatpush1.msra.mxu0 0.0
    %923 = vmatprep.subr.mxu0 0.0
    %924 = vmatpush1.msra.mxu0 0.0
    %925 = vmatprep.subr.mxu0 0.0
    %926 = vmatpush1.msra.mxu0 0.0
    %927 = vmatprep.subr.mxu0 0.0
    %928 = vmatpush1.msra.mxu0 0.0
    %929 = vmatprep.subr.mxu0 0.0
    %930 = vmatpush1.msra.mxu0 0.0
    %931 = vmatprep.subr.mxu0 0.0
    %932 = vmatpush1.msra.mxu0 0.0
    %933 = vmatprep.subr.mxu0 0.0
    %934 = vmatpush1.msra.mxu0 0.0
    %935 = vmatprep.subr.mxu0 0.0
    %936 = vmatpush1.msra.mxu0 0.0
    %937 = vmatprep.subr.mxu0 0.0
    %938 = vmatpush1.msra.mxu0 0.0
    %939 = vmatprep.subr.mxu0 0.0
    %940 = vmatpush1.msra.mxu0 0.0
    %941 = vmatprep.subr.mxu0 0.0
    %942 = vmatpush1.msra.mxu0 0.0
    %943 = vmatprep.subr.mxu0 0.0
    %944 = vmatpush1.msra.mxu0 0.0
    %945 = vmatprep.subr.mxu0 0.0
    %946 = vmatpush1.msra.mxu0 0.0
    %947 = vmatprep.subr.mxu0 0.0
    %948 = vmatpush1.msra.mxu0 0.0
    %949 = vmatprep.subr.mxu0 0.0
    %950 = vmatpush1.msra.mxu0 0.0
    %951 = vmatprep.subr.mxu0 0.0
    %952 = vmatpush1.msra.mxu0 0.0
    %953 = vmatprep.subr.mxu0 0.0
    %954 = vmatpush1.msra.mxu0 0.0
    %955 = vmatprep.subr.mxu0 0.0
    %956 = vmatpush1.msra.mxu0 0.0
    %957 = vmatprep.subr.mxu0 0.0
    %958 = vmatpush1.msra.mxu0 0.0
    %959 = vmatprep.subr.mxu0 0.0
    %960 = vmatpush1.msra.mxu0 0.0
    %961 = vmatprep.mubr.f32.mxu0 0.0
    %v962 = vand.u32 %v673, 4294901760
    %v963 = vsub.f32 %v673, %v962
    %964 = vmatmul.mubr.f32.gmra.mrb[0].mxu0 %v963
    %v965 = vpop.f32.mrb[0].mxu0
    %v966 = vadd.f32 %v872, %v965
    %v967 = vpop.f32.mrb[0].mxu0
    %968 = vmatprep.mubr.f32.mxu0 0.0
    %v969 = vand.u32 %v676, 4294901760
    %v970 = vsub.f32 %v676, %v969
    %971 = vmatmul.mubr.f32.gmra.mrb[0].mxu0 %v970
    %v972 = vpop.f32.mrb[0].mxu0
    %v973 = vadd.f32 %v878, %v972
    %v974 = vpop.f32.mrb[0].mxu0
    %975 = vmatprep.mubr.f32.mxu0 0.0
    %v976 = vand.u32 %v679, 4294901760
    %v977 = vsub.f32 %v679, %v976
    %978 = vmatmul.mubr.f32.gmra.mrb[0].mxu0 %v977
    %v979 = vpop.f32.mrb[0].mxu0
    %v980 = vadd.f32 %v884, %v979
    %v981 = vpop.f32.mrb[0].mxu0
    %982 = vmatprep.mubr.f32.mxu0 0.0
    %v983 = vand.u32 %v682, 4294901760
    %v984 = vsub.f32 %v682, %v983
    %985 = vmatmul.mubr.f32.gmra.mrb[0].mxu0 %v984
    %v986 = vpop.f32.mrb[0].mxu0
    %v987 = vadd.f32 %v890, %v986
    %v988 = vpop.f32.mrb[0].mxu0
    %989 = vdwg.mxu0
    %990 = vmatprep.subr.mxu0 0.0
    %v991 = vand.u32 %v58, 4294901760
    %992 = vmatpush1.msra.mxu0 %v991
    %993 = vmatprep.subr.mxu0 0.0
    %v994 = vand.u32 %v685, 4294901760
    %995 = vmatpush1.msra.mxu0 %v994
    %996 = vmatprep.subr.mxu0 0.0
    %997 = vmatpush1.msra.mxu0 0.0
    %998 = vmatprep.subr.mxu0 0.0
    %999 = vmatpush1.msra.mxu0 0.0
    %1000 = vmatprep.subr.mxu0 0.0
    %1001 = vmatpush1.msra.mxu0 0.0
    %1002 = vmatprep.subr.mxu0 0.0
    %1003 = vmatpush1.msra.mxu0 0.0
    %1004 = vmatprep.subr.mxu0 0.0
    %1005 = vmatpush1.msra.mxu0 0.0
    %1006 = vmatprep.subr.mxu0 0.0
    %1007 = vmatpush1.msra.mxu0 0.0
    %1008 = vmatprep.subr.mxu0 0.0
    %1009 = vmatpush1.msra.mxu0 0.0
    %1010 = vmatprep.subr.mxu0 0.0
    %1011 = vmatpush1.msra.mxu0 0.0
    %1012 = vmatprep.subr.mxu0 0.0
    %1013 = vmatpush1.msra.mxu0 0.0
    %1014 = vmatprep.subr.mxu0 0.0
    %1015 = vmatpush1.msra.mxu0 0.0
    %1016 = vmatprep.subr.mxu0 0.0
    %1017 = vmatpush1.msra.mxu0 0.0
    %1018 = vmatprep.subr.mxu0 0.0
    %1019 = vmatpush1.msra.mxu0 0.0
    %1020 = vmatprep.subr.mxu0 0.0
    %1021 = vmatpush1.msra.mxu0 0.0
    %1022 = vmatprep.subr.mxu0 0.0
    %1023 = vmatpush1.msra.mxu0 0.0
    %1024 = vmatprep.subr.mxu0 0.0
    %1025 = vmatpush1.msra.mxu0 0.0
    %1026 = vmatprep.subr.mxu0 0.0
    %1027 = vmatpush1.msra.mxu0 0.0
    %1028 = vmatprep.subr.mxu0 0.0
    %1029 = vmatpush1.msra.mxu0 0.0
    %1030 = vmatprep.subr.mxu0 0.0
    %1031 = vmatpush1.msra.mxu0 0.0
    %1032 = vmatprep.subr.mxu0 0.0
    %1033 = vmatpush1.msra.mxu0 0.0
    %1034 = vmatprep.subr.mxu0 0.0
    %1035 = vmatpush1.msra.mxu0 0.0
    %1036 = vmatprep.subr.mxu0 0.0
    %1037 = vmatpush1.msra.mxu0 0.0
    %1038 = vmatprep.subr.mxu0 0.0
    %1039 = vmatpush1.msra.mxu0 0.0
    %1040 = vmatprep.subr.mxu0 0.0
    %1041 = vmatpush1.msra.mxu0 0.0
    %1042 = vmatprep.subr.mxu0 0.0
    %1043 = vmatpush1.msra.mxu0 0.0
    %1044 = vmatprep.subr.mxu0 0.0
    %1045 = vmatpush1.msra.mxu0 0.0
    %1046 = vmatprep.subr.mxu0 0.0
    %1047 = vmatpush1.msra.mxu0 0.0
    %1048 = vmatprep.subr.mxu0 0.0
    %1049 = vmatpush1.msra.mxu0 0.0
    %1050 = vmatprep.subr.mxu0 0.0
    %1051 = vmatpush1.msra.mxu0 0.0
    %1052 = vmatprep.subr.mxu0 0.0
    %1053 = vmatpush1.msra.mxu0 0.0
    %1054 = vmatprep.subr.mxu0 0.0
    %1055 = vmatpush1.msra.mxu0 0.0
    %1056 = vmatprep.mubr.f32.mxu0 0.0
    %v1057 = vand.u32 %v673, 4294901760
    %v1058 = vsub.f32 %v673, %v1057
    %v1059 = vand.u32 %v1058, 4294901760
    %1060 = vmatmul.mubr.f32.gmra.mrb[0].mxu0 %v1059
    %v1061 = vpop.f32.mrb[0].mxu0
    %v1062 = vadd.f32 %v966, %v1061
    %v1063 = vpop.f32.mrb[0].mxu0
    %1064 = vmatprep.mubr.f32.mxu0 0.0
    %v1065 = vand.u32 %v676, 4294901760
    %v1066 = vsub.f32 %v676, %v1065
    %v1067 = vand.u32 %v1066, 4294901760
    %1068 = vmatmul.mubr.f32.gmra.mrb[0].mxu0 %v1067
    %v1069 = vpop.f32.mrb[0].mxu0
    %v1070 = vadd.f32 %v973, %v1069
    %v1071 = vpop.f32.mrb[0].mxu0
    %1072 = vmatprep.mubr.f32.mxu0 0.0
    %v1073 = vand.u32 %v679, 4294901760
    %v1074 = vsub.f32 %v679, %v1073
    %v1075 = vand.u32 %v1074, 4294901760
    %1076 = vmatmul.mubr.f32.gmra.mrb[0].mxu0 %v1075
    %v1077 = vpop.f32.mrb[0].mxu0
    %v1078 = vadd.f32 %v980, %v1077
    %v1079 = vpop.f32.mrb[0].mxu0
    %1080 = vmatprep.mubr.f32.mxu0 0.0
    %v1081 = vand.u32 %v682, 4294901760
    %v1082 = vsub.f32 %v682, %v1081
    %v1083 = vand.u32 %v1082, 4294901760
    %1084 = vmatmul.mubr.f32.gmra.mrb[0].mxu0 %v1083
    %v1085 = vpop.f32.mrb[0].mxu0
    %v1086 = vadd.f32 %v987, %v1085
    %v1087 = vpop.f32.mrb[0].mxu0
    %1088 = vdwg.mxu0
    %1089 = vmatprep.subr.mxu0 0.0
    %v1090 = vand.u32 %v58, 4294901760
    %v1091 = vsub.f32 %v58, %v1090
    %v1092 = vand.u32 %v1091, 4294901760
    %1093 = vmatpush1.msra.mxu0 %v1092
    %1094 = vmatprep.subr.mxu0 0.0
    %v1095 = vand.u32 %v685, 4294901760
    %v1096 = vsub.f32 %v685, %v1095
    %v1097 = vand.u32 %v1096, 4294901760
    %1098 = vmatpush1.msra.mxu0 %v1097
    %1099 = vmatprep.subr.mxu0 0.0
    %1100 = vmatpush1.msra.mxu0 0.0
    %1101 = vmatprep.subr.mxu0 0.0
    %1102 = vmatpush1.msra.mxu0 0.0
    %1103 = vmatprep.subr.mxu0 0.0
    %1104 = vmatpush1.msra.mxu0 0.0
    %1105 = vmatprep.subr.mxu0 0.0
    %1106 = vmatpush1.msra.mxu0 0.0
    %1107 = vmatprep.subr.mxu0 0.0
    %1108 = vmatpush1.msra.mxu0 0.0
    %1109 = vmatprep.subr.mxu0 0.0
    %1110 = vmatpush1.msra.mxu0 0.0
    %1111 = vmatprep.subr.mxu0 0.0
    %1112 = vmatpush1.msra.mxu0 0.0
    %1113 = vmatprep.subr.mxu0 0.0
    %1114 = vmatpush1.msra.mxu0 0.0
    %1115 = vmatprep.subr.mxu0 0.0
    %1116 = vmatpush1.msra.mxu0 0.0
    %1117 = vmatprep.subr.mxu0 0.0
    %1118 = vmatpush1.msra.mxu0 0.0
    %1119 = vmatprep.subr.mxu0 0.0
    %1120 = vmatpush1.msra.mxu0 0.0
    %1121 = vmatprep.subr.mxu0 0.0
    %1122 = vmatpush1.msra.mxu0 0.0
    %1123 = vmatprep.subr.mxu0 0.0
    %1124 = vmatpush1.msra.mxu0 0.0
    %1125 = vmatprep.subr.mxu0 0.0
    %1126 = vmatpush1.msra.mxu0 0.0
    %1127 = vmatprep.subr.mxu0 0.0
    %1128 = vmatpush1.msra.mxu0 0.0
    %1129 = vmatprep.subr.mxu0 0.0
    %1130 = vmatpush1.msra.mxu0 0.0
    %1131 = vmatprep.subr.mxu0 0.0
    %1132 = vmatpush1.msra.mxu0 0.0
    %1133 = vmatprep.subr.mxu0 0.0
    %1134 = vmatpush1.msra.mxu0 0.0
    %1135 = vmatprep.subr.mxu0 0.0
    %1136 = vmatpush1.msra.mxu0 0.0
    %1137 = vmatprep.subr.mxu0 0.0
    %1138 = vmatpush1.msra.mxu0 0.0
    %1139 = vmatprep.subr.mxu0 0.0
    %1140 = vmatpush1.msra.mxu0 0.0
    %1141 = vmatprep.subr.mxu0 0.0
    %1142 = vmatpush1.msra.mxu0 0.0
    %1143 = vmatprep.subr.mxu0 0.0
    %1144 = vmatpush1.msra.mxu0 0.0
    %1145 = vmatprep.subr.mxu0 0.0
    %1146 = vmatpush1.msra.mxu0 0.0
    %1147 = vmatprep.subr.mxu0 0.0
    %1148 = vmatpush1.msra.mxu0 0.0
    %1149 = vmatprep.subr.mxu0 0.0
    %1150 = vmatpush1.msra.mxu0 0.0
    %1151 = vmatprep.subr.mxu0 0.0
    %1152 = vmatpush1.msra.mxu0 0.0
    %1153 = vmatprep.subr.mxu0 0.0
    %1154 = vmatpush1.msra.mxu0 0.0
    %1155 = vmatprep.subr.mxu0 0.0
    %1156 = vmatpush1.msra.mxu0 0.0
    %1157 = vmatprep.subr.mxu0 0.0
    %1158 = vmatpush1.msra.mxu0 0.0
    %1159 = vmatprep.mubr.f32.mxu0 0.0
    %v1160 = vand.u32 %v673, 4294901760
    %1161 = vmatmul.mubr.f32.gmra.mrb[0].mxu0 %v1160
    %v1162 = vpop.f32.mrb[0].mxu0
    %v1163 = vadd.f32 %v1062, %v1162
    %v1164 = vpop.f32.mrb[0].mxu0
    %1165 = vmatprep.mubr.f32.mxu0 0.0
    %v1166 = vand.u32 %v676, 4294901760
    %1167 = vmatmul.mubr.f32.gmra.mrb[0].mxu0 %v1166
    %v1168 = vpop.f32.mrb[0].mxu0
    %v1169 = vadd.f32 %v1070, %v1168
    %v1170 = vpop.f32.mrb[0].mxu0
    %1171 = vmatprep.mubr.f32.mxu0 0.0
    %v1172 = vand.u32 %v679, 4294901760
    %1173 = vmatmul.mubr.f32.gmra.mrb[0].mxu0 %v1172
    %v1174 = vpop.f32.mrb[0].mxu0
    %v1175 = vadd.f32 %v1078, %v1174
    %v1176 = vpop.f32.mrb[0].mxu0
    %1177 = vmatprep.mubr.f32.mxu0 0.0
    %v1178 = vand.u32 %v682, 4294901760
    %1179 = vmatmul.mubr.f32.gmra.mrb[0].mxu0 %v1178
    %v1180 = vpop.f32.mrb[0].mxu0
    %v1181 = vadd.f32 %v1086, %v1180
    %v1182 = vpop.f32.mrb[0].mxu0
    %1183 = vdwg.mxu0
    %1184 = vmatprep.subr.mxu0 0.0
    %v1185 = vand.u32 %v58, 4294901760
    %1186 = vmatpush1.msra.mxu0 %v1185
    %1187 = vmatprep.subr.mxu0 0.0
    %v1188 = vand.u32 %v685, 4294901760
    %1189 = vmatpush1.msra.mxu0 %v1188
    %1190 = vmatprep.subr.mxu0 0.0
    %1191 = vmatpush1.msra.mxu0 0.0
    %1192 = vmatprep.subr.mxu0 0.0
    %1193 = vmatpush1.msra.mxu0 0.0
    %1194 = vmatprep.subr.mxu0 0.0
    %1195 = vmatpush1.msra.mxu0 0.0
    %1196 = vmatprep.subr.mxu0 0.0
    %1197 = vmatpush1.msra.mxu0 0.0
    %1198 = vmatprep.subr.mxu0 0.0
    %1199 = vmatpush1.msra.mxu0 0.0
    %1200 = vmatprep.subr.mxu0 0.0
    %1201 = vmatpush1.msra.mxu0 0.0
    %1202 = vmatprep.subr.mxu0 0.0
    %1203 = vmatpush1.msra.mxu0 0.0
    %1204 = vmatprep.subr.mxu0 0.0
    %1205 = vmatpush1.msra.mxu0 0.0
    %1206 = vmatprep.subr.mxu0 0.0
    %1207 = vmatpush1.msra.mxu0 0.0
    %1208 = vmatprep.subr.mxu0 0.0
    %1209 = vmatpush1.msra.mxu0 0.0
    %1210 = vmatprep.subr.mxu0 0.0
    %1211 = vmatpush1.msra.mxu0 0.0
    %1212 = vmatprep.subr.mxu0 0.0
    %1213 = vmatpush1.msra.mxu0 0.0
    %1214 = vmatprep.subr.mxu0 0.0
    %1215 = vmatpush1.msra.mxu0 0.0
    %1216 = vmatprep.subr.mxu0 0.0
    %1217 = vmatpush1.msra.mxu0 0.0
    %1218 = vmatprep.subr.mxu0 0.0
    %1219 = vmatpush1.msra.mxu0 0.0
    %1220 = vmatprep.subr.mxu0 0.0
    %1221 = vmatpush1.msra.mxu0 0.0
    %1222 = vmatprep.subr.mxu0 0.0
    %1223 = vmatpush1.msra.mxu0 0.0
    %1224 = vmatprep.subr.mxu0 0.0
    %1225 = vmatpush1.msra.mxu0 0.0
    %1226 = vmatprep.subr.mxu0 0.0
    %1227 = vmatpush1.msra.mxu0 0.0
    %1228 = vmatprep.subr.mxu0 0.0
    %1229 = vmatpush1.msra.mxu0 0.0
    %1230 = vmatprep.subr.mxu0 0.0
    %1231 = vmatpush1.msra.mxu0 0.0
    %1232 = vmatprep.subr.mxu0 0.0
    %1233 = vmatpush1.msra.mxu0 0.0
    %1234 = vmatprep.subr.mxu0 0.0
    %1235 = vmatpush1.msra.mxu0 0.0
    %1236 = vmatprep.subr.mxu0 0.0
    %1237 = vmatpush1.msra.mxu0 0.0
    %1238 = vmatprep.subr.mxu0 0.0
    %1239 = vmatpush1.msra.mxu0 0.0
    %1240 = vmatprep.subr.mxu0 0.0
    %1241 = vmatpush1.msra.mxu0 0.0
    %1242 = vmatprep.subr.mxu0 0.0
    %1243 = vmatpush1.msra.mxu0 0.0
    %1244 = vmatprep.subr.mxu0 0.0
    %1245 = vmatpush1.msra.mxu0 0.0
    %1246 = vmatprep.subr.mxu0 0.0
    %1247 = vmatpush1.msra.mxu0 0.0
    %1248 = vmatprep.subr.mxu0 0.0
    %1249 = vmatpush1.msra.mxu0 0.0
    %1250 = vmatprep.mubr.f32.mxu0 0.0
    %v1251 = vand.u32 %v673, 4294901760
    %1252 = vmatmul.mubr.f32.gmra.mrb[0].mxu0 %v1251
    %v1253 = vpop.f32.mrb[0].mxu0
    %v1254 = vadd.f32 %v1163, %v1253
    %v1255 = vpop.f32.mrb[0].mxu0
    %1256 = vmatprep.mubr.f32.mxu0 0.0
    %v1257 = vand.u32 %v676, 4294901760
    %1258 = vmatmul.mubr.f32.gmra.mrb[0].mxu0 %v1257
    %v1259 = vpop.f32.mrb[0].mxu0
    %v1260 = vadd.f32 %v1169, %v1259
    %v1261 = vpop.f32.mrb[0].mxu0
    %1262 = vmatprep.mubr.f32.mxu0 0.0
    %v1263 = vand.u32 %v679, 4294901760
    %1264 = vmatmul.mubr.f32.gmra.mrb[0].mxu0 %v1263
    %v1265 = vpop.f32.mrb[0].mxu0
    %v1266 = vadd.f32 %v1175, %v1265
    %v1267 = vpop.f32.mrb[0].mxu0
    %1268 = vmatprep.mubr.f32.mxu0 0.0
    %v1269 = vand.u32 %v682, 4294901760
    %1270 = vmatmul.mubr.f32.gmra.mrb[0].mxu0 %v1269
    %v1271 = vpop.f32.mrb[0].mxu0
    %v1272 = vadd.f32 %v1181, %v1271
    %v1273 = vpop.f32.mrb[0].mxu0
    %1274 = vdwg.mxu0
    %v1275 = vld [vmem:[%s0 + $0x2] sm:$0xff]
    %v1276 = vld [vmem:[%s0 + $0xa] sm:$0xff]
    %v1277 = vld [vmem:[%s0 + $0x12] sm:$0xff]
    %v1278 = vld [vmem:[%s0 + $0x1a] sm:$0x3]
    %s1279 = scalar_lea.vmem %s1, 32
    %v1280 = vld [vmem:[%s1279] sm:$0xff]
    %v1281 = vld [vmem:[%s1279 + $0x8] sm:$0x3f]
    %v1283 = vsel %vm67, %v1275, 0
    %v1286 = vsel %vm67, %v1276, 0
    %v1289 = vsel %vm67, %v1277, 0
    %v1292 = vsel %vm67, %v1278, 0
    %v1295 = vsel %vm80, %v1281, 0
    %1297 = vmatprep.subr.mxu0 0.0
    %v1298 = vand.u32 %v1280, 4294901760
    %1299 = vmatpush1.msra.mxu0 %v1298
    %1300 = vmatprep.subr.mxu0 0.0
    %v1301 = vand.u32 %v1295, 4294901760
    %1302 = vmatpush1.msra.mxu0 %v1301
    %1303 = vmatprep.subr.mxu0 0.0
    %1304 = vmatpush1.msra.mxu0 0.0
    %1305 = vmatprep.subr.mxu0 0.0
    %1306 = vmatpush1.msra.mxu0 0.0
    %1307 = vmatprep.subr.mxu0 0.0
    %1308 = vmatpush1.msra.mxu0 0.0
    %1309 = vmatprep.subr.mxu0 0.0
    %1310 = vmatpush1.msra.mxu0 0.0
    %1311 = vmatprep.subr.mxu0 0.0
    %1312 = vmatpush1.msra.mxu0 0.0
    %1313 = vmatprep.subr.mxu0 0.0
    %1314 = vmatpush1.msra.mxu0 0.0
    %1315 = vmatprep.subr.mxu0 0.0
    %1316 = vmatpush1.msra.mxu0 0.0
    %1317 = vmatprep.subr.mxu0 0.0
    %1318 = vmatpush1.msra.mxu0 0.0
    %1319 = vmatprep.subr.mxu0 0.0
    %1320 = vmatpush1.msra.mxu0 0.0
    %1321 = vmatprep.subr.mxu0 0.0
    %1322 = vmatpush1.msra.mxu0 0.0
    %1323 = vmatprep.subr.mxu0 0.0
    %1324 = vmatpush1.msra.mxu0 0.0
    %1325 = vmatprep.subr.mxu0 0.0
    %1326 = vmatpush1.msra.mxu0 0.0
    %1327 = vmatprep.subr.mxu0 0.0
    %1328 = vmatpush1.msra.mxu0 0.0
    %1329 = vmatprep.subr.mxu0 0.0
    %1330 = vmatpush1.msra.mxu0 0.0
    %1331 = vmatprep.subr.mxu0 0.0
    %1332 = vmatpush1.msra.mxu0 0.0
    %1333 = vmatprep.subr.mxu0 0.0
    %1334 = vmatpush1.msra.mxu0 0.0
    %1335 = vmatprep.subr.mxu0 0.0
    %1336 = vmatpush1.msra.mxu0 0.0
    %1337 = vmatprep.subr.mxu0 0.0
    %1338 = vmatpush1.msra.mxu0 0.0
    %1339 = vmatprep.subr.mxu0 0.0
    %1340 = vmatpush1.msra.mxu0 0.0
    %1341 = vmatprep.subr.mxu0 0.0
    %1342 = vmatpush1.msra.mxu0 0.0
    %1343 = vmatprep.subr.mxu0 0.0
    %1344 = vmatpush1.msra.mxu0 0.0
    %1345 = vmatprep.subr.mxu0 0.0
    %1346 = vmatpush1.msra.mxu0 0.0
    %1347 = vmatprep.subr.mxu0 0.0
    %1348 = vmatpush1.msra.mxu0 0.0
    %1349 = vmatprep.subr.mxu0 0.0
    %1350 = vmatpush1.msra.mxu0 0.0
    %1351 = vmatprep.subr.mxu0 0.0
    %1352 = vmatpush1.msra.mxu0 0.0
    %1353 = vmatprep.subr.mxu0 0.0
    %1354 = vmatpush1.msra.mxu0 0.0
    %1355 = vmatprep.subr.mxu0 0.0
    %1356 = vmatpush1.msra.mxu0 0.0
    %1357 = vmatprep.subr.mxu0 0.0
    %1358 = vmatpush1.msra.mxu0 0.0
    %1359 = vmatprep.subr.mxu0 0.0
    %1360 = vmatpush1.msra.mxu0 0.0
    %1361 = vmatprep.subr.mxu0 0.0
    %1362 = vmatpush1.msra.mxu0 0.0
    %1363 = vmatprep.mubr.f32.mxu0 0.0
    %v1364 = vand.u32 %v1283, 4294901760
    %v1365 = vsub.f32 %v1283, %v1364
    %v1366 = vand.u32 %v1365, 4294901760
    %v1367 = vsub.f32 %v1365, %v1366
    %v1368 = vand.u32 %v1367, 4294901760
    %1369 = vmatmul.mubr.f32.gmra.mrb[0].mxu0 %v1368
    %v1370 = vpop.f32.mrb[0].mxu0
    %v1371 = vadd.f32 0.0, %v1370
    %v1372 = vpop.f32.mrb[0].mxu0
    %1373 = vmatprep.mubr.f32.mxu0 0.0
    %v1374 = vand.u32 %v1286, 4294901760
    %v1375 = vsub.f32 %v1286, %v1374
    %v1376 = vand.u32 %v1375, 4294901760
    %v1377 = vsub.f32 %v1375, %v1376
    %v1378 = vand.u32 %v1377, 4294901760
    %1379 = vmatmul.mubr.f32.gmra.mrb[0].mxu0 %v1378
    %v1380 = vpop.f32.mrb[0].mxu0
    %v1381 = vadd.f32 0.0, %v1380
    %v1382 = vpop.f32.mrb[0].mxu0
    %1383 = vmatprep.mubr.f32.mxu0 0.0
    %v1384 = vand.u32 %v1289, 4294901760
    %v1385 = vsub.f32 %v1289, %v1384
    %v1386 = vand.u32 %v1385, 4294901760
    %v1387 = vsub.f32 %v1385, %v1386
    %v1388 = vand.u32 %v1387, 4294901760
    %1389 = vmatmul.mubr.f32.gmra.mrb[0].mxu0 %v1388
    %v1390 = vpop.f32.mrb[0].mxu0
    %v1391 = vadd.f32 0.0, %v1390
    %v1392 = vpop.f32.mrb[0].mxu0
    %1393 = vmatprep.mubr.f32.mxu0 0.0
    %v1394 = vand.u32 %v1292, 4294901760
    %v1395 = vsub.f32 %v1292, %v1394
    %v1396 = vand.u32 %v1395, 4294901760
    %v1397 = vsub.f32 %v1395, %v1396
    %v1398 = vand.u32 %v1397, 4294901760
    %1399 = vmatmul.mubr.f32.gmra.mrb[0].mxu0 %v1398
    %v1400 = vpop.f32.mrb[0].mxu0
    %v1401 = vadd.f32 0.0, %v1400
    %v1402 = vpop.f32.mrb[0].mxu0
    %1403 = vdwg.mxu0
    %1404 = vmatprep.subr.mxu0 0.0
    %v1405 = vand.u32 %v1280, 4294901760
    %v1406 = vsub.f32 %v1280, %v1405
    %v1407 = vand.u32 %v1406, 4294901760
    %v1408 = vsub.f32 %v1406, %v1407
    %v1409 = vand.u32 %v1408, 4294901760
    %1410 = vmatpush1.msra.mxu0 %v1409
    %1411 = vmatprep.subr.mxu0 0.0
    %v1412 = vand.u32 %v1295, 4294901760
    %v1413 = vsub.f32 %v1295, %v1412
    %v1414 = vand.u32 %v1413, 4294901760
    %v1415 = vsub.f32 %v1413, %v1414
    %v1416 = vand.u32 %v1415, 4294901760
    %1417 = vmatpush1.msra.mxu0 %v1416
    %1418 = vmatprep.subr.mxu0 0.0
    %1419 = vmatpush1.msra.mxu0 0.0
    %1420 = vmatprep.subr.mxu0 0.0
    %1421 = vmatpush1.msra.mxu0 0.0
    %1422 = vmatprep.subr.mxu0 0.0
    %1423 = vmatpush1.msra.mxu0 0.0
    %1424 = vmatprep.subr.mxu0 0.0
    %1425 = vmatpush1.msra.mxu0 0.0
    %1426 = vmatprep.subr.mxu0 0.0
    %1427 = vmatpush1.msra.mxu0 0.0
    %1428 = vmatprep.subr.mxu0 0.0
    %1429 = vmatpush1.msra.mxu0 0.0
    %1430 = vmatprep.subr.mxu0 0.0
    %1431 = vmatpush1.msra.mxu0 0.0
    %1432 = vmatprep.subr.mxu0 0.0
    %1433 = vmatpush1.msra.mxu0 0.0
    %1434 = vmatprep.subr.mxu0 0.0
    %1435 = vmatpush1.msra.mxu0 0.0
    %1436 = vmatprep.subr.mxu0 0.0
    %1437 = vmatpush1.msra.mxu0 0.0
    %1438 = vmatprep.subr.mxu0 0.0
    %1439 = vmatpush1.msra.mxu0 0.0
    %1440 = vmatprep.subr.mxu0 0.0
    %1441 = vmatpush1.msra.mxu0 0.0
    %1442 = vmatprep.subr.mxu0 0.0
    %1443 = vmatpush1.msra.mxu0 0.0
    %1444 = vmatprep.subr.mxu0 0.0
    %1445 = vmatpush1.msra.mxu0 0.0
    %1446 = vmatprep.subr.mxu0 0.0
    %1447 = vmatpush1.msra.mxu0 0.0
    %1448 = vmatprep.subr.mxu0 0.0
    %1449 = vmatpush1.msra.mxu0 0.0
    %1450 = vmatprep.subr.mxu0 0.0
    %1451 = vmatpush1.msra.mxu0 0.0
    %1452 = vmatprep.subr.mxu0 0.0
    %1453 = vmatpush1.msra.mxu0 0.0
    %1454 = vmatprep.subr.mxu0 0.0
    %1455 = vmatpush1.msra.mxu0 0.0
    %1456 = vmatprep.subr.mxu0 0.0
    %1457 = vmatpush1.msra.mxu0 0.0
    %1458 = vmatprep.subr.mxu0 0.0
    %1459 = vmatpush1.msra.mxu0 0.0
    %1460 = vmatprep.subr.mxu0 0.0
    %1461 = vmatpush1.msra.mxu0 0.0
    %1462 = vmatprep.subr.mxu0 0.0
    %1463 = vmatpush1.msra.mxu0 0.0
    %1464 = vmatprep.subr.mxu0 0.0
    %1465 = vmatpush1.msra.mxu0 0.0
    %1466 = vmatprep.subr.mxu0 0.0
    %1467 = vmatpush1.msra.mxu0 0.0
    %1468 = vmatprep.subr.mxu0 0.0
    %1469 = vmatpush1.msra.mxu0 0.0
    %1470 = vmatprep.subr.mxu0 0.0
    %1471 = vmatpush1.msra.mxu0 0.0
    %1472 = vmatprep.subr.mxu0 0.0
    %1473 = vmatpush1.msra.mxu0 0.0
    %1474 = vmatprep.subr.mxu0 0.0
    %1475 = vmatpush1.msra.mxu0 0.0
    %1476 = vmatprep.subr.mxu0 0.0
    %1477 = vmatpush1.msra.mxu0 0.0
    %1478 = vmatprep.mubr.f32.mxu0 0.0
    %v1479 = vand.u32 %v1283, 4294901760
    %1480 = vmatmul.mubr.f32.gmra.mrb[0].mxu0 %v1479
    %v1481 = vpop.f32.mrb[0].mxu0
    %v1482 = vadd.f32 %v1371, %v1481
    %v1483 = vpop.f32.mrb[0].mxu0
    %1484 = vmatprep.mubr.f32.mxu0 0.0
    %v1485 = vand.u32 %v1286, 4294901760
    %1486 = vmatmul.mubr.f32.gmra.mrb[0].mxu0 %v1485
    %v1487 = vpop.f32.mrb[0].mxu0
    %v1488 = vadd.f32 %v1381, %v1487
    %v1489 = vpop.f32.mrb[0].mxu0
    %1490 = vmatprep.mubr.f32.mxu0 0.0
    %v1491 = vand.u32 %v1289, 4294901760
    %1492 = vmatmul.mubr.f32.gmra.mrb[0].mxu0 %v1491
    %v1493 = vpop.f32.mrb[0].mxu0
    %v1494 = vadd.f32 %v1391, %v1493
    %v1495 = vpop.f32.mrb[0].mxu0
    %1496 = vmatprep.mubr.f32.mxu0 0.0
    %v1497 = vand.u32 %v1292, 4294901760
    %1498 = vmatmul.mubr.f32.gmra.mrb[0].mxu0 %v1497
    %v1499 = vpop.f32.mrb[0].mxu0
    %v1500 = vadd.f32 %v1401, %v1499
    %v1501 = vpop.f32.mrb[0].mxu0
    %1502 = vdwg.mxu0
    %1503 = vmatprep.subr.mxu0 0.0
    %v1504 = vand.u32 %v1280, 4294901760
    %v1505 = vsub.f32 %v1280, %v1504
    %1506 = vmatpush1.msra.mxu0 %v1505
    %1507 = vmatprep.subr.mxu0 0.0
    %v1508 = vand.u32 %v1295, 4294901760
    %v1509 = vsub.f32 %v1295, %v1508
    %1510 = vmatpush1.msra.mxu0 %v1509
    %1511 = vmatprep.subr.mxu0 0.0
    %1512 = vmatpush1.msra.mxu0 0.0
    %1513 = vmatprep.subr.mxu0 0.0
    %1514 = vmatpush1.msra.mxu0 0.0
    %1515 = vmatprep.subr.mxu0 0.0
    %1516 = vmatpush1.msra.mxu0 0.0
    %1517 = vmatprep.subr.mxu0 0.0
    %1518 = vmatpush1.msra.mxu0 0.0
    %1519 = vmatprep.subr.mxu0 0.0
    %1520 = vmatpush1.msra.mxu0 0.0
    %1521 = vmatprep.subr.mxu0 0.0
    %1522 = vmatpush1.msra.mxu0 0.0
    %1523 = vmatprep.subr.mxu0 0.0
    %1524 = vmatpush1.msra.mxu0 0.0
    %1525 = vmatprep.subr.mxu0 0.0
    %1526 = vmatpush1.msra.mxu0 0.0
    %1527 = vmatprep.subr.mxu0 0.0
    %1528 = vmatpush1.msra.mxu0 0.0
    %1529 = vmatprep.subr.mxu0 0.0
    %1530 = vmatpush1.msra.mxu0 0.0
    %1531 = vmatprep.subr.mxu0 0.0
    %1532 = vmatpush1.msra.mxu0 0.0
    %1533 = vmatprep.subr.mxu0 0.0
    %1534 = vmatpush1.msra.mxu0 0.0
    %1535 = vmatprep.subr.mxu0 0.0
    %1536 = vmatpush1.msra.mxu0 0.0
    %1537 = vmatprep.subr.mxu0 0.0
    %1538 = vmatpush1.msra.mxu0 0.0
    %1539 = vmatprep.subr.mxu0 0.0
    %1540 = vmatpush1.msra.mxu0 0.0
    %1541 = vmatprep.subr.mxu0 0.0
    %1542 = vmatpush1.msra.mxu0 0.0
    %1543 = vmatprep.subr.mxu0 0.0
    %1544 = vmatpush1.msra.mxu0 0.0
    %1545 = vmatprep.subr.mxu0 0.0
    %1546 = vmatpush1.msra.mxu0 0.0
    %1547 = vmatprep.subr.mxu0 0.0
    %1548 = vmatpush1.msra.mxu0 0.0
    %1549 = vmatprep.subr.mxu0 0.0
    %1550 = vmatpush1.msra.mxu0 0.0
    %1551 = vmatprep.subr.mxu0 0.0
    %1552 = vmatpush1.msra.mxu0 0.0
    %1553 = vmatprep.subr.mxu0 0.0
    %1554 = vmatpush1.msra.mxu0 0.0
    %1555 = vmatprep.subr.mxu0 0.0
    %1556 = vmatpush1.msra.mxu0 0.0
    %1557 = vmatprep.subr.mxu0 0.0
    %1558 = vmatpush1.msra.mxu0 0.0
    %1559 = vmatprep.subr.mxu0 0.0
    %1560 = vmatpush1.msra.mxu0 0.0
    %1561 = vmatprep.subr.mxu0 0.0
    %1562 = vmatpush1.msra.mxu0 0.0
    %1563 = vmatprep.subr.mxu0 0.0
    %1564 = vmatpush1.msra.mxu0 0.0
    %1565 = vmatprep.subr.mxu0 0.0
    %1566 = vmatpush1.msra.mxu0 0.0
    %1567 = vmatprep.subr.mxu0 0.0
    %1568 = vmatpush1.msra.mxu0 0.0
    %1569 = vmatprep.subr.mxu0 0.0
    %1570 = vmatpush1.msra.mxu0 0.0
    %1571 = vmatprep.mubr.f32.mxu0 0.0
    %v1572 = vand.u32 %v1283, 4294901760
    %v1573 = vsub.f32 %v1283, %v1572
    %1574 = vmatmul.mubr.f32.gmra.mrb[0].mxu0 %v1573
    %v1575 = vpop.f32.mrb[0].mxu0
    %v1576 = vadd.f32 %v1482, %v1575
    %v1577 = vpop.f32.mrb[0].mxu0
    %1578 = vmatprep.mubr.f32.mxu0 0.0
    %v1579 = vand.u32 %v1286, 4294901760
    %v1580 = vsub.f32 %v1286, %v1579
    %1581 = vmatmul.mubr.f32.gmra.mrb[0].mxu0 %v1580
    %v1582 = vpop.f32.mrb[0].mxu0
    %v1583 = vadd.f32 %v1488, %v1582
    %v1584 = vpop.f32.mrb[0].mxu0
    %1585 = vmatprep.mubr.f32.mxu0 0.0
    %v1586 = vand.u32 %v1289, 4294901760
    %v1587 = vsub.f32 %v1289, %v1586
    %1588 = vmatmul.mubr.f32.gmra.mrb[0].mxu0 %v1587
    %v1589 = vpop.f32.mrb[0].mxu0
    %v1590 = vadd.f32 %v1494, %v1589
    %v1591 = vpop.f32.mrb[0].mxu0
    %1592 = vmatprep.mubr.f32.mxu0 0.0
    %v1593 = vand.u32 %v1292, 4294901760
    %v1594 = vsub.f32 %v1292, %v1593
    %1595 = vmatmul.mubr.f32.gmra.mrb[0].mxu0 %v1594
    %v1596 = vpop.f32.mrb[0].mxu0
    %v1597 = vadd.f32 %v1500, %v1596
    %v1598 = vpop.f32.mrb[0].mxu0
    %1599 = vdwg.mxu0
    %1600 = vmatprep.subr.mxu0 0.0
    %v1601 = vand.u32 %v1280, 4294901760
    %1602 = vmatpush1.msra.mxu0 %v1601
    %1603 = vmatprep.subr.mxu0 0.0
    %v1604 = vand.u32 %v1295, 4294901760
    %1605 = vmatpush1.msra.mxu0 %v1604
    %1606 = vmatprep.subr.mxu0 0.0
    %1607 = vmatpush1.msra.mxu0 0.0
    %1608 = vmatprep.subr.mxu0 0.0
    %1609 = vmatpush1.msra.mxu0 0.0
    %1610 = vmatprep.subr.mxu0 0.0
    %1611 = vmatpush1.msra.mxu0 0.0
    %1612 = vmatprep.subr.mxu0 0.0
    %1613 = vmatpush1.msra.mxu0 0.0
    %1614 = vmatprep.subr.mxu0 0.0
    %1615 = vmatpush1.msra.mxu0 0.0
    %1616 = vmatprep.subr.mxu0 0.0
    %1617 = vmatpush1.msra.mxu0 0.0
    %1618 = vmatprep.subr.mxu0 0.0
    %1619 = vmatpush1.msra.mxu0 0.0
    %1620 = vmatprep.subr.mxu0 0.0
    %1621 = vmatpush1.msra.mxu0 0.0
    %1622 = vmatprep.subr.mxu0 0.0
    %1623 = vmatpush1.msra.mxu0 0.0
    %1624 = vmatprep.subr.mxu0 0.0
    %1625 = vmatpush1.msra.mxu0 0.0
    %1626 = vmatprep.subr.mxu0 0.0
    %1627 = vmatpush1.msra.mxu0 0.0
    %1628 = vmatprep.subr.mxu0 0.0
    %1629 = vmatpush1.msra.mxu0 0.0
    %1630 = vmatprep.subr.mxu0 0.0
    %1631 = vmatpush1.msra.mxu0 0.0
    %1632 = vmatprep.subr.mxu0 0.0
    %1633 = vmatpush1.msra.mxu0 0.0
    %1634 = vmatprep.subr.mxu0 0.0
    %1635 = vmatpush1.msra.mxu0 0.0
    %1636 = vmatprep.subr.mxu0 0.0
    %1637 = vmatpush1.msra.mxu0 0.0
    %1638 = vmatprep.subr.mxu0 0.0
    %1639 = vmatpush1.msra.mxu0 0.0
    %1640 = vmatprep.subr.mxu0 0.0
    %1641 = vmatpush1.msra.mxu0 0.0
    %1642 = vmatprep.subr.mxu0 0.0
    %1643 = vmatpush1.msra.mxu0 0.0
    %1644 = vmatprep.subr.mxu0 0.0
    %1645 = vmatpush1.msra.mxu0 0.0
    %1646 = vmatprep.subr.mxu0 0.0
    %1647 = vmatpush1.msra.mxu0 0.0
    %1648 = vmatprep.subr.mxu0 0.0
    %1649 = vmatpush1.msra.mxu0 0.0
    %1650 = vmatprep.subr.mxu0 0.0
    %1651 = vmatpush1.msra.mxu0 0.0
    %1652 = vmatprep.subr.mxu0 0.0
    %1653 = vmatpush1.msra.mxu0 0.0
    %1654 = vmatprep.subr.mxu0 0.0
    %1655 = vmatpush1.msra.mxu0 0.0
    %1656 = vmatprep.subr.mxu0 0.0
    %1657 = vmatpush1.msra.mxu0 0.0
    %1658 = vmatprep.subr.mxu0 0.0
    %1659 = vmatpush1.msra.mxu0 0.0
    %1660 = vmatprep.subr.mxu0 0.0
    %1661 = vmatpush1.msra.mxu0 0.0
    %1662 = vmatprep.subr.mxu0 0.0
    %1663 = vmatpush1.msra.mxu0 0.0
    %1664 = vmatprep.subr.mxu0 0.0
    %1665 = vmatpush1.msra.mxu0 0.0
    %1666 = vmatprep.mubr.f32.mxu0 0.0
    %v1667 = vand.u32 %v1283, 4294901760
    %v1668 = vsub.f32 %v1283, %v1667
    %v1669 = vand.u32 %v1668, 4294901760
    %1670 = vmatmul.mubr.f32.gmra.mrb[0].mxu0 %v1669
    %v1671 = vpop.f32.mrb[0].mxu0
    %v1672 = vadd.f32 %v1576, %v1671
    %v1673 = vpop.f32.mrb[0].mxu0
    %1674 = vmatprep.mubr.f32.mxu0 0.0
    %v1675 = vand.u32 %v1286, 4294901760
    %v1676 = vsub.f32 %v1286, %v1675
    %v1677 = vand.u32 %v1676, 4294901760
    %1678 = vmatmul.mubr.f32.gmra.mrb[0].mxu0 %v1677
    %v1679 = vpop.f32.mrb[0].mxu0
    %v1680 = vadd.f32 %v1583, %v1679
    %v1681 = vpop.f32.mrb[0].mxu0
    %1682 = vmatprep.mubr.f32.mxu0 0.0
    %v1683 = vand.u32 %v1289, 4294901760
    %v1684 = vsub.f32 %v1289, %v1683
    %v1685 = vand.u32 %v1684, 4294901760
    %1686 = vmatmul.mubr.f32.gmra.mrb[0].mxu0 %v1685
    %v1687 = vpop.f32.mrb[0].mxu0
    %v1688 = vadd.f32 %v1590, %v1687
    %v1689 = vpop.f32.mrb[0].mxu0
    %1690 = vmatprep.mubr.f32.mxu0 0.0
    %v1691 = vand.u32 %v1292, 4294901760
    %v1692 = vsub.f32 %v1292, %v1691
    %v1693 = vand.u32 %v1692, 4294901760
    %1694 = vmatmul.mubr.f32.gmra.mrb[0].mxu0 %v1693
    %v1695 = vpop.f32.mrb[0].mxu0
    %v1696 = vadd.f32 %v1597, %v1695
    %v1697 = vpop.f32.mrb[0].mxu0
    %1698 = vdwg.mxu0
    %1699 = vmatprep.subr.mxu0 0.0
    %v1700 = vand.u32 %v1280, 4294901760
    %v1701 = vsub.f32 %v1280, %v1700
    %v1702 = vand.u32 %v1701, 4294901760
    %1703 = vmatpush1.msra.mxu0 %v1702
    %1704 = vmatprep.subr.mxu0 0.0
    %v1705 = vand.u32 %v1295, 4294901760
    %v1706 = vsub.f32 %v1295, %v1705
    %v1707 = vand.u32 %v1706, 4294901760
    %1708 = vmatpush1.msra.mxu0 %v1707
    %1709 = vmatprep.subr.mxu0 0.0
    %1710 = vmatpush1.msra.mxu0 0.0
    %1711 = vmatprep.subr.mxu0 0.0
    %1712 = vmatpush1.msra.mxu0 0.0
    %1713 = vmatprep.subr.mxu0 0.0
    %1714 = vmatpush1.msra.mxu0 0.0
    %1715 = vmatprep.subr.mxu0 0.0
    %1716 = vmatpush1.msra.mxu0 0.0
    %1717 = vmatprep.subr.mxu0 0.0
    %1718 = vmatpush1.msra.mxu0 0.0
    %1719 = vmatprep.subr.mxu0 0.0
    %1720 = vmatpush1.msra.mxu0 0.0
    %1721 = vmatprep.subr.mxu0 0.0
    %1722 = vmatpush1.msra.mxu0 0.0
    %1723 = vmatprep.subr.mxu0 0.0
    %1724 = vmatpush1.msra.mxu0 0.0
    %1725 = vmatprep.subr.mxu0 0.0
    %1726 = vmatpush1.msra.mxu0 0.0
    %1727 = vmatprep.subr.mxu0 0.0
    %1728 = vmatpush1.msra.mxu0 0.0
    %1729 = vmatprep.subr.mxu0 0.0
    %1730 = vmatpush1.msra.mxu0 0.0
    %1731 = vmatprep.subr.mxu0 0.0
    %1732 = vmatpush1.msra.mxu0 0.0
    %1733 = vmatprep.subr.mxu0 0.0
    %1734 = vmatpush1.msra.mxu0 0.0
    %1735 = vmatprep.subr.mxu0 0.0
    %1736 = vmatpush1.msra.mxu0 0.0
    %1737 = vmatprep.subr.mxu0 0.0
    %1738 = vmatpush1.msra.mxu0 0.0
    %1739 = vmatprep.subr.mxu0 0.0
    %1740 = vmatpush1.msra.mxu0 0.0
    %1741 = vmatprep.subr.mxu0 0.0
    %1742 = vmatpush1.msra.mxu0 0.0
    %1743 = vmatprep.subr.mxu0 0.0
    %1744 = vmatpush1.msra.mxu0 0.0
    %1745 = vmatprep.subr.mxu0 0.0
    %1746 = vmatpush1.msra.mxu0 0.0
    %1747 = vmatprep.subr.mxu0 0.0
    %1748 = vmatpush1.msra.mxu0 0.0
    %1749 = vmatprep.subr.mxu0 0.0
    %1750 = vmatpush1.msra.mxu0 0.0
    %1751 = vmatprep.subr.mxu0 0.0
    %1752 = vmatpush1.msra.mxu0 0.0
    %1753 = vmatprep.subr.mxu0 0.0
    %1754 = vmatpush1.msra.mxu0 0.0
    %1755 = vmatprep.subr.mxu0 0.0
    %1756 = vmatpush1.msra.mxu0 0.0
    %1757 = vmatprep.subr.mxu0 0.0
    %1758 = vmatpush1.msra.mxu0 0.0
    %1759 = vmatprep.subr.mxu0 0.0
    %1760 = vmatpush1.msra.mxu0 0.0
    %1761 = vmatprep.subr.mxu0 0.0
    %1762 = vmatpush1.msra.mxu0 0.0
    %1763 = vmatprep.subr.mxu0 0.0
    %1764 = vmatpush1.msra.mxu0 0.0
    %1765 = vmatprep.subr.mxu0 0.0
    %1766 = vmatpush1.msra.mxu0 0.0
    %1767 = vmatprep.subr.mxu0 0.0
    %1768 = vmatpush1.msra.mxu0 0.0
    %1769 = vmatprep.mubr.f32.mxu0 0.0
    %v1770 = vand.u32 %v1283, 4294901760
    %1771 = vmatmul.mubr.f32.gmra.mrb[0].mxu0 %v1770
    %v1772 = vpop.f32.mrb[0].mxu0
    %v1773 = vadd.f32 %v1672, %v1772
    %v1774 = vpop.f32.mrb[0].mxu0
    %1775 = vmatprep.mubr.f32.mxu0 0.0
    %v1776 = vand.u32 %v1286, 4294901760
    %1777 = vmatmul.mubr.f32.gmra.mrb[0].mxu0 %v1776
    %v1778 = vpop.f32.mrb[0].mxu0
    %v1779 = vadd.f32 %v1680, %v1778
    %v1780 = vpop.f32.mrb[0].mxu0
    %1781 = vmatprep.mubr.f32.mxu0 0.0
    %v1782 = vand.u32 %v1289, 4294901760
    %1783 = vmatmul.mubr.f32.gmra.mrb[0].mxu0 %v1782
    %v1784 = vpop.f32.mrb[0].mxu0
    %v1785 = vadd.f32 %v1688, %v1784
    %v1786 = vpop.f32.mrb[0].mxu0
    %1787 = vmatprep.mubr.f32.mxu0 0.0
    %v1788 = vand.u32 %v1292, 4294901760
    %1789 = vmatmul.mubr.f32.gmra.mrb[0].mxu0 %v1788
    %v1790 = vpop.f32.mrb[0].mxu0
    %v1791 = vadd.f32 %v1696, %v1790
    %v1792 = vpop.f32.mrb[0].mxu0
    %1793 = vdwg.mxu0
    %1794 = vmatprep.subr.mxu0 0.0
    %v1795 = vand.u32 %v1280, 4294901760
    %1796 = vmatpush1.msra.mxu0 %v1795
    %1797 = vmatprep.subr.mxu0 0.0
    %v1798 = vand.u32 %v1295, 4294901760
    %1799 = vmatpush1.msra.mxu0 %v1798
    %1800 = vmatprep.subr.mxu0 0.0
    %1801 = vmatpush1.msra.mxu0 0.0
    %1802 = vmatprep.subr.mxu0 0.0
    %1803 = vmatpush1.msra.mxu0 0.0
    %1804 = vmatprep.subr.mxu0 0.0
    %1805 = vmatpush1.msra.mxu0 0.0
    %1806 = vmatprep.subr.mxu0 0.0
    %1807 = vmatpush1.msra.mxu0 0.0
    %1808 = vmatprep.subr.mxu0 0.0
    %1809 = vmatpush1.msra.mxu0 0.0
    %1810 = vmatprep.subr.mxu0 0.0
    %1811 = vmatpush1.msra.mxu0 0.0
    %1812 = vmatprep.subr.mxu0 0.0
    %1813 = vmatpush1.msra.mxu0 0.0
    %1814 = vmatprep.subr.mxu0 0.0
    %1815 = vmatpush1.msra.mxu0 0.0
    %1816 = vmatprep.subr.mxu0 0.0
    %1817 = vmatpush1.msra.mxu0 0.0
    %1818 = vmatprep.subr.mxu0 0.0
    %1819 = vmatpush1.msra.mxu0 0.0
    %1820 = vmatprep.subr.mxu0 0.0
    %1821 = vmatpush1.msra.mxu0 0.0
    %1822 = vmatprep.subr.mxu0 0.0
    %1823 = vmatpush1.msra.mxu0 0.0
    %1824 = vmatprep.subr.mxu0 0.0
    %1825 = vmatpush1.msra.mxu0 0.0
    %1826 = vmatprep.subr.mxu0 0.0
    %1827 = vmatpush1.msra.mxu0 0.0
    %1828 = vmatprep.subr.mxu0 0.0
    %1829 = vmatpush1.msra.mxu0 0.0
    %1830 = vmatprep.subr.mxu0 0.0
    %1831 = vmatpush1.msra.mxu0 0.0
    %1832 = vmatprep.subr.mxu0 0.0
    %1833 = vmatpush1.msra.mxu0 0.0
    %1834 = vmatprep.subr.mxu0 0.0
    %1835 = vmatpush1.msra.mxu0 0.0
    %1836 = vmatprep.subr.mxu0 0.0
    %1837 = vmatpush1.msra.mxu0 0.0
    %1838 = vmatprep.subr.mxu0 0.0
    %1839 = vmatpush1.msra.mxu0 0.0
    %1840 = vmatprep.subr.mxu0 0.0
    %1841 = vmatpush1.msra.mxu0 0.0
    %1842 = vmatprep.subr.mxu0 0.0
    %1843 = vmatpush1.msra.mxu0 0.0
    %1844 = vmatprep.subr.mxu0 0.0
    %1845 = vmatpush1.msra.mxu0 0.0
    %1846 = vmatprep.subr.mxu0 0.0
    %1847 = vmatpush1.msra.mxu0 0.0
    %1848 = vmatprep.subr.mxu0 0.0
    %1849 = vmatpush1.msra.mxu0 0.0
    %1850 = vmatprep.subr.mxu0 0.0
    %1851 = vmatpush1.msra.mxu0 0.0
    %1852 = vmatprep.subr.mxu0 0.0
    %1853 = vmatpush1.msra.mxu0 0.0
    %1854 = vmatprep.subr.mxu0 0.0
    %1855 = vmatpush1.msra.mxu0 0.0
    %1856 = vmatprep.subr.mxu0 0.0
    %1857 = vmatpush1.msra.mxu0 0.0
    %1858 = vmatprep.subr.mxu0 0.0
    %1859 = vmatpush1.msra.mxu0 0.0
    %1860 = vmatprep.mubr.f32.mxu0 0.0
    %v1861 = vand.u32 %v1283, 4294901760
    %1862 = vmatmul.mubr.f32.gmra.mrb[0].mxu0 %v1861
    %v1863 = vpop.f32.mrb[0].mxu0
    %v1864 = vadd.f32 %v1773, %v1863
    %v1865 = vpop.f32.mrb[0].mxu0
    %1866 = vmatprep.mubr.f32.mxu0 0.0
    %v1867 = vand.u32 %v1286, 4294901760
    %1868 = vmatmul.mubr.f32.gmra.mrb[0].mxu0 %v1867
    %v1869 = vpop.f32.mrb[0].mxu0
    %v1870 = vadd.f32 %v1779, %v1869
    %v1871 = vpop.f32.mrb[0].mxu0
    %1872 = vmatprep.mubr.f32.mxu0 0.0
    %v1873 = vand.u32 %v1289, 4294901760
    %1874 = vmatmul.mubr.f32.gmra.mrb[0].mxu0 %v1873
    %v1875 = vpop.f32.mrb[0].mxu0
    %v1876 = vadd.f32 %v1785, %v1875
    %v1877 = vpop.f32.mrb[0].mxu0
    %1878 = vmatprep.mubr.f32.mxu0 0.0
    %v1879 = vand.u32 %v1292, 4294901760
    %1880 = vmatmul.mubr.f32.gmra.mrb[0].mxu0 %v1879
    %v1881 = vpop.f32.mrb[0].mxu0
    %v1882 = vadd.f32 %v1791, %v1881
    %v1883 = vpop.f32.mrb[0].mxu0
    %1884 = vdwg.mxu0
    %v1885 = vadd.f32 %v1254, %v1864
    %v1886 = vadd.f32 %v1260, %v1870
    %v1887 = vadd.f32 %v1266, %v1876
    %v1888 = vadd.f32 %v1272, %v1882
    %v1889 = vld [vmem:[%s11] sm:$0xff]
    %v1890 = vld [vmem:[%s11 + $0x8] sm:$0xff]
    %v1891 = vld [vmem:[%s11 + $0x10] sm:$0xff]
    %v1892 = vld [vmem:[%s2] sm:$0x1]
    %v1894 = vlaneseq
    %v1895 = vshrl.u32 %v1894, 7
    %v1896 = vsub.s32 0, %v1895
    %v1897 = vrot.slane %v1892, %v1896
    %vm1899 = vcmask 211968
    %v1901 = vsel %vm1899, %v1889, 0
    %v1904 = vsel %vm1899, %v1890, 0
    %v1907 = vsel %vm1899, %v1891, 0
    %vm1909 = vcmask 1041408
    %v1911 = vsel %vm1909, %v1888, 0
    %1913 = vmatprep.subr.mxu0 0.0
    %v1914 = vand.u32 %v1885, 4294901760
    %1915 = vmatpush1.msra.mxu0 %v1914
    %1916 = vmatprep.subr.mxu0 0.0
    %v1917 = vand.u32 %v1886, 4294901760
    %1918 = vmatpush1.msra.mxu0 %v1917
    %1919 = vmatprep.subr.mxu0 0.0
    %v1920 = vand.u32 %v1887, 4294901760
    %1921 = vmatpush1.msra.mxu0 %v1920
    %1922 = vmatprep.subr.mxu0 0.0
    %v1923 = vand.u32 %v1911, 4294901760
    %1924 = vmatpush1.msra.mxu0 %v1923
    %1925 = vmatprep.subr.mxu0 0.0
    %1926 = vmatpush1.msra.mxu0 0.0
    %1927 = vmatprep.subr.mxu0 0.0
    %1928 = vmatpush1.msra.mxu0 0.0
    %1929 = vmatprep.subr.mxu0 0.0
    %1930 = vmatpush1.msra.mxu0 0.0
    %1931 = vmatprep.subr.mxu0 0.0
    %1932 = vmatpush1.msra.mxu0 0.0
    %1933 = vmatprep.subr.mxu0 0.0
    %1934 = vmatpush1.msra.mxu0 0.0
    %1935 = vmatprep.subr.mxu0 0.0
    %1936 = vmatpush1.msra.mxu0 0.0
    %1937 = vmatprep.subr.mxu0 0.0
    %1938 = vmatpush1.msra.mxu0 0.0
    %1939 = vmatprep.subr.mxu0 0.0
    %1940 = vmatpush1.msra.mxu0 0.0
    %1941 = vmatprep.subr.mxu0 0.0
    %1942 = vmatpush1.msra.mxu0 0.0
    %1943 = vmatprep.subr.mxu0 0.0
    %1944 = vmatpush1.msra.mxu0 0.0
    %1945 = vmatprep.subr.mxu0 0.0
    %1946 = vmatpush1.msra.mxu0 0.0
    %1947 = vmatprep.subr.mxu0 0.0
    %1948 = vmatpush1.msra.mxu0 0.0
    %1949 = vmatprep.subr.mxu0 0.0
    %1950 = vmatpush1.msra.mxu0 0.0
    %1951 = vmatprep.subr.mxu0 0.0
    %1952 = vmatpush1.msra.mxu0 0.0
    %1953 = vmatprep.subr.mxu0 0.0
    %1954 = vmatpush1.msra.mxu0 0.0
    %1955 = vmatprep.subr.mxu0 0.0
    %1956 = vmatpush1.msra.mxu0 0.0
    %1957 = vmatprep.subr.mxu0 0.0
    %1958 = vmatpush1.msra.mxu0 0.0
    %1959 = vmatprep.subr.mxu0 0.0
    %1960 = vmatpush1.msra.mxu0 0.0
    %1961 = vmatprep.subr.mxu0 0.0
    %1962 = vmatpush1.msra.mxu0 0.0
    %1963 = vmatprep.subr.mxu0 0.0
    %1964 = vmatpush1.msra.mxu0 0.0
    %1965 = vmatprep.subr.mxu0 0.0
    %1966 = vmatpush1.msra.mxu0 0.0
    %1967 = vmatprep.subr.mxu0 0.0
    %1968 = vmatpush1.msra.mxu0 0.0
    %1969 = vmatprep.subr.mxu0 0.0
    %1970 = vmatpush1.msra.mxu0 0.0
    %1971 = vmatprep.subr.mxu0 0.0
    %1972 = vmatpush1.msra.mxu0 0.0
    %1973 = vmatprep.subr.mxu0 0.0
    %1974 = vmatpush1.msra.mxu0 0.0
    %1975 = vmatprep.subr.mxu0 0.0
    %1976 = vmatpush1.msra.mxu0 0.0
    %1977 = vmatprep.subr.mxu0 0.0
    %1978 = vmatpush1.msra.mxu0 0.0
    %1979 = vmatprep.subr.mxu0 0.0
    %1980 = vmatpush1.msra.mxu0 0.0
    %1981 = vmatprep.mubr.f32.mxu0 0.0
    %v1982 = vand.u32 %v1901, 4294901760
    %v1983 = vsub.f32 %v1901, %v1982
    %v1984 = vand.u32 %v1983, 4294901760
    %v1985 = vsub.f32 %v1983, %v1984
    %v1986 = vand.u32 %v1985, 4294901760
    %1987 = vmatmul.mubr.f32.gmra.mrb[0].mxu0 %v1986
    %v1988 = vpop.f32.mrb[0].mxu0
    %v1989 = vadd.f32 %v1897, %v1988
    %v1990 = vpop.f32.mrb[0].mxu0
    %1991 = vmatprep.mubr.f32.mxu0 0.0
    %v1992 = vand.u32 %v1904, 4294901760
    %v1993 = vsub.f32 %v1904, %v1992
    %v1994 = vand.u32 %v1993, 4294901760
    %v1995 = vsub.f32 %v1993, %v1994
    %v1996 = vand.u32 %v1995, 4294901760
    %1997 = vmatmul.mubr.f32.gmra.mrb[0].mxu0 %v1996
    %v1998 = vpop.f32.mrb[0].mxu0
    %v1999 = vadd.f32 %v1897, %v1998
    %v2000 = vpop.f32.mrb[0].mxu0
    %2001 = vmatprep.mubr.f32.mxu0 0.0
    %v2002 = vand.u32 %v1907, 4294901760
    %v2003 = vsub.f32 %v1907, %v2002
    %v2004 = vand.u32 %v2003, 4294901760
    %v2005 = vsub.f32 %v2003, %v2004
    %v2006 = vand.u32 %v2005, 4294901760
    %2007 = vmatmul.mubr.f32.gmra.mrb[0].mxu0 %v2006
    %v2008 = vpop.f32.mrb[0].mxu0
    %v2009 = vadd.f32 %v1897, %v2008
    %v2010 = vpop.f32.mrb[0].mxu0
    %2011 = vdwg.mxu0
    %2012 = vmatprep.subr.mxu0 0.0
    %v2013 = vand.u32 %v1885, 4294901760
    %v2014 = vsub.f32 %v1885, %v2013
    %v2015 = vand.u32 %v2014, 4294901760
    %v2016 = vsub.f32 %v2014, %v2015
    %v2017 = vand.u32 %v2016, 4294901760
    %2018 = vmatpush1.msra.mxu0 %v2017
    %2019 = vmatprep.subr.mxu0 0.0
    %v2020 = vand.u32 %v1886, 4294901760
    %v2021 = vsub.f32 %v1886, %v2020
    %v2022 = vand.u32 %v2021, 4294901760
    %v2023 = vsub.f32 %v2021, %v2022
    %v2024 = vand.u32 %v2023, 4294901760
    %2025 = vmatpush1.msra.mxu0 %v2024
    %2026 = vmatprep.subr.mxu0 0.0
    %v2027 = vand.u32 %v1887, 4294901760
    %v2028 = vsub.f32 %v1887, %v2027
    %v2029 = vand.u32 %v2028, 4294901760
    %v2030 = vsub.f32 %v2028, %v2029
    %v2031 = vand.u32 %v2030, 4294901760
    %2032 = vmatpush1.msra.mxu0 %v2031
    %2033 = vmatprep.subr.mxu0 0.0
    %v2034 = vand.u32 %v1911, 4294901760
    %v2035 = vsub.f32 %v1911, %v2034
    %v2036 = vand.u32 %v2035, 4294901760
    %v2037 = vsub.f32 %v2035, %v2036
    %v2038 = vand.u32 %v2037, 4294901760
    %2039 = vmatpush1.msra.mxu0 %v2038
    %2040 = vmatprep.subr.mxu0 0.0
    %2041 = vmatpush1.msra.mxu0 0.0
    %2042 = vmatprep.subr.mxu0 0.0
    %2043 = vmatpush1.msra.mxu0 0.0
    %2044 = vmatprep.subr.mxu0 0.0
    %2045 = vmatpush1.msra.mxu0 0.0
    %2046 = vmatprep.subr.mxu0 0.0
    %2047 = vmatpush1.msra.mxu0 0.0
    %2048 = vmatprep.subr.mxu0 0.0
    %2049 = vmatpush1.msra.mxu0 0.0
    %2050 = vmatprep.subr.mxu0 0.0
    %2051 = vmatpush1.msra.mxu0 0.0
    %2052 = vmatprep.subr.mxu0 0.0
    %2053 = vmatpush1.msra.mxu0 0.0
    %2054 = vmatprep.subr.mxu0 0.0
    %2055 = vmatpush1.msra.mxu0 0.0
    %2056 = vmatprep.subr.mxu0 0.0
    %2057 = vmatpush1.msra.mxu0 0.0
    %2058 = vmatprep.subr.mxu0 0.0
    %2059 = vmatpush1.msra.mxu0 0.0
    %2060 = vmatprep.subr.mxu0 0.0
    %2061 = vmatpush1.msra.mxu0 0.0
    %2062 = vmatprep.subr.mxu0 0.0
    %2063 = vmatpush1.msra.mxu0 0.0
    %2064 = vmatprep.subr.mxu0 0.0
    %2065 = vmatpush1.msra.mxu0 0.0
    %2066 = vmatprep.subr.mxu0 0.0
    %2067 = vmatpush1.msra.mxu0 0.0
    %2068 = vmatprep.subr.mxu0 0.0
    %2069 = vmatpush1.msra.mxu0 0.0
    %2070 = vmatprep.subr.mxu0 0.0
    %2071 = vmatpush1.msra.mxu0 0.0
    %2072 = vmatprep.subr.mxu0 0.0
    %2073 = vmatpush1.msra.mxu0 0.0
    %2074 = vmatprep.subr.mxu0 0.0
    %2075 = vmatpush1.msra.mxu0 0.0
    %2076 = vmatprep.subr.mxu0 0.0
    %2077 = vmatpush1.msra.mxu0 0.0
    %2078 = vmatprep.subr.mxu0 0.0
    %2079 = vmatpush1.msra.mxu0 0.0
    %2080 = vmatprep.subr.mxu0 0.0
    %2081 = vmatpush1.msra.mxu0 0.0
    %2082 = vmatprep.subr.mxu0 0.0
    %2083 = vmatpush1.msra.mxu0 0.0
    %2084 = vmatprep.subr.mxu0 0.0
    %2085 = vmatpush1.msra.mxu0 0.0
    %2086 = vmatprep.subr.mxu0 0.0
    %2087 = vmatpush1.msra.mxu0 0.0
    %2088 = vmatprep.subr.mxu0 0.0
    %2089 = vmatpush1.msra.mxu0 0.0
    %2090 = vmatprep.subr.mxu0 0.0
    %2091 = vmatpush1.msra.mxu0 0.0
    %2092 = vmatprep.subr.mxu0 0.0
    %2093 = vmatpush1.msra.mxu0 0.0
    %2094 = vmatprep.subr.mxu0 0.0
    %2095 = vmatpush1.msra.mxu0 0.0
    %2096 = vmatprep.mubr.f32.mxu0 0.0
    %v2097 = vand.u32 %v1901, 4294901760
    %2098 = vmatmul.mubr.f32.gmra.mrb[0].mxu0 %v2097
    %v2099 = vpop.f32.mrb[0].mxu0
    %v2100 = vadd.f32 %v1989, %v2099
    %v2101 = vpop.f32.mrb[0].mxu0
    %2102 = vmatprep.mubr.f32.mxu0 0.0
    %v2103 = vand.u32 %v1904, 4294901760
    %2104 = vmatmul.mubr.f32.gmra.mrb[0].mxu0 %v2103
    %v2105 = vpop.f32.mrb[0].mxu0
    %v2106 = vadd.f32 %v1999, %v2105
    %v2107 = vpop.f32.mrb[0].mxu0
    %2108 = vmatprep.mubr.f32.mxu0 0.0
    %v2109 = vand.u32 %v1907, 4294901760
    %2110 = vmatmul.mubr.f32.gmra.mrb[0].mxu0 %v2109
    %v2111 = vpop.f32.mrb[0].mxu0
    %v2112 = vadd.f32 %v2009, %v2111
    %v2113 = vpop.f32.mrb[0].mxu0
    %2114 = vdwg.mxu0
    %2115 = vmatprep.subr.mxu0 0.0
    %v2116 = vand.u32 %v1885, 4294901760
    %v2117 = vsub.f32 %v1885, %v2116
    %2118 = vmatpush1.msra.mxu0 %v2117
    %2119 = vmatprep.subr.mxu0 0.0
    %v2120 = vand.u32 %v1886, 4294901760
    %v2121 = vsub.f32 %v1886, %v2120
    %2122 = vmatpush1.msra.mxu0 %v2121
    %2123 = vmatprep.subr.mxu0 0.0
    %v2124 = vand.u32 %v1887, 4294901760
    %v2125 = vsub.f32 %v1887, %v2124
    %2126 = vmatpush1.msra.mxu0 %v2125
    %2127 = vmatprep.subr.mxu0 0.0
    %v2128 = vand.u32 %v1911, 4294901760
    %v2129 = vsub.f32 %v1911, %v2128
    %2130 = vmatpush1.msra.mxu0 %v2129
    %2131 = vmatprep.subr.mxu0 0.0
    %2132 = vmatpush1.msra.mxu0 0.0
    %2133 = vmatprep.subr.mxu0 0.0
    %2134 = vmatpush1.msra.mxu0 0.0
    %2135 = vmatprep.subr.mxu0 0.0
    %2136 = vmatpush1.msra.mxu0 0.0
    %2137 = vmatprep.subr.mxu0 0.0
    %2138 = vmatpush1.msra.mxu0 0.0
    %2139 = vmatprep.subr.mxu0 0.0
    %2140 = vmatpush1.msra.mxu0 0.0
    %2141 = vmatprep.subr.mxu0 0.0
    %2142 = vmatpush1.msra.mxu0 0.0
    %2143 = vmatprep.subr.mxu0 0.0
    %2144 = vmatpush1.msra.mxu0 0.0
    %2145 = vmatprep.subr.mxu0 0.0
    %2146 = vmatpush1.msra.mxu0 0.0
    %2147 = vmatprep.subr.mxu0 0.0
    %2148 = vmatpush1.msra.mxu0 0.0
    %2149 = vmatprep.subr.mxu0 0.0
    %2150 = vmatpush1.msra.mxu0 0.0
    %2151 = vmatprep.subr.mxu0 0.0
    %2152 = vmatpush1.msra.mxu0 0.0
    %2153 = vmatprep.subr.mxu0 0.0
    %2154 = vmatpush1.msra.mxu0 0.0
    %2155 = vmatprep.subr.mxu0 0.0
    %2156 = vmatpush1.msra.mxu0 0.0
    %2157 = vmatprep.subr.mxu0 0.0
    %2158 = vmatpush1.msra.mxu0 0.0
    %2159 = vmatprep.subr.mxu0 0.0
    %2160 = vmatpush1.msra.mxu0 0.0
    %2161 = vmatprep.subr.mxu0 0.0
    %2162 = vmatpush1.msra.mxu0 0.0
    %2163 = vmatprep.subr.mxu0 0.0
    %2164 = vmatpush1.msra.mxu0 0.0
    %2165 = vmatprep.subr.mxu0 0.0
    %2166 = vmatpush1.msra.mxu0 0.0
    %2167 = vmatprep.subr.mxu0 0.0
    %2168 = vmatpush1.msra.mxu0 0.0
    %2169 = vmatprep.subr.mxu0 0.0
    %2170 = vmatpush1.msra.mxu0 0.0
    %2171 = vmatprep.subr.mxu0 0.0
    %2172 = vmatpush1.msra.mxu0 0.0
    %2173 = vmatprep.subr.mxu0 0.0
    %2174 = vmatpush1.msra.mxu0 0.0
    %2175 = vmatprep.subr.mxu0 0.0
    %2176 = vmatpush1.msra.mxu0 0.0
    %2177 = vmatprep.subr.mxu0 0.0
    %2178 = vmatpush1.msra.mxu0 0.0
    %2179 = vmatprep.subr.mxu0 0.0
    %2180 = vmatpush1.msra.mxu0 0.0
    %2181 = vmatprep.subr.mxu0 0.0
    %2182 = vmatpush1.msra.mxu0 0.0
    %2183 = vmatprep.subr.mxu0 0.0
    %2184 = vmatpush1.msra.mxu0 0.0
    %2185 = vmatprep.subr.mxu0 0.0
    %2186 = vmatpush1.msra.mxu0 0.0
    %2187 = vmatprep.mubr.f32.mxu0 0.0
    %v2188 = vand.u32 %v1901, 4294901760
    %v2189 = vsub.f32 %v1901, %v2188
    %2190 = vmatmul.mubr.f32.gmra.mrb[0].mxu0 %v2189
    %v2191 = vpop.f32.mrb[0].mxu0
    %v2192 = vadd.f32 %v2100, %v2191
    %v2193 = vpop.f32.mrb[0].mxu0
    %2194 = vmatprep.mubr.f32.mxu0 0.0
    %v2195 = vand.u32 %v1904, 4294901760
    %v2196 = vsub.f32 %v1904, %v2195
    %2197 = vmatmul.mubr.f32.gmra.mrb[0].mxu0 %v2196
    %v2198 = vpop.f32.mrb[0].mxu0
    %v2199 = vadd.f32 %v2106, %v2198
    %v2200 = vpop.f32.mrb[0].mxu0
    %2201 = vmatprep.mubr.f32.mxu0 0.0
    %v2202 = vand.u32 %v1907, 4294901760
    %v2203 = vsub.f32 %v1907, %v2202
    %2204 = vmatmul.mubr.f32.gmra.mrb[0].mxu0 %v2203
    %v2205 = vpop.f32.mrb[0].mxu0
    %v2206 = vadd.f32 %v2112, %v2205
    %v2207 = vpop.f32.mrb[0].mxu0
    %2208 = vdwg.mxu0
    %2209 = vmatprep.subr.mxu0 0.0
    %v2210 = vand.u32 %v1885, 4294901760
    %2211 = vmatpush1.msra.mxu0 %v2210
    %2212 = vmatprep.subr.mxu0 0.0
    %v2213 = vand.u32 %v1886, 4294901760
    %2214 = vmatpush1.msra.mxu0 %v2213
    %2215 = vmatprep.subr.mxu0 0.0
    %v2216 = vand.u32 %v1887, 4294901760
    %2217 = vmatpush1.msra.mxu0 %v2216
    %2218 = vmatprep.subr.mxu0 0.0
    %v2219 = vand.u32 %v1911, 4294901760
    %2220 = vmatpush1.msra.mxu0 %v2219
    %2221 = vmatprep.subr.mxu0 0.0
    %2222 = vmatpush1.msra.mxu0 0.0
    %2223 = vmatprep.subr.mxu0 0.0
    %2224 = vmatpush1.msra.mxu0 0.0
    %2225 = vmatprep.subr.mxu0 0.0
    %2226 = vmatpush1.msra.mxu0 0.0
    %2227 = vmatprep.subr.mxu0 0.0
    %2228 = vmatpush1.msra.mxu0 0.0
    %2229 = vmatprep.subr.mxu0 0.0
    %2230 = vmatpush1.msra.mxu0 0.0
    %2231 = vmatprep.subr.mxu0 0.0
    %2232 = vmatpush1.msra.mxu0 0.0
    %2233 = vmatprep.subr.mxu0 0.0
    %2234 = vmatpush1.msra.mxu0 0.0
    %2235 = vmatprep.subr.mxu0 0.0
    %2236 = vmatpush1.msra.mxu0 0.0
    %2237 = vmatprep.subr.mxu0 0.0
    %2238 = vmatpush1.msra.mxu0 0.0
    %2239 = vmatprep.subr.mxu0 0.0
    %2240 = vmatpush1.msra.mxu0 0.0
    %2241 = vmatprep.subr.mxu0 0.0
    %2242 = vmatpush1.msra.mxu0 0.0
    %2243 = vmatprep.subr.mxu0 0.0
    %2244 = vmatpush1.msra.mxu0 0.0
    %2245 = vmatprep.subr.mxu0 0.0
    %2246 = vmatpush1.msra.mxu0 0.0
    %2247 = vmatprep.subr.mxu0 0.0
    %2248 = vmatpush1.msra.mxu0 0.0
    %2249 = vmatprep.subr.mxu0 0.0
    %2250 = vmatpush1.msra.mxu0 0.0
    %2251 = vmatprep.subr.mxu0 0.0
    %2252 = vmatpush1.msra.mxu0 0.0
    %2253 = vmatprep.subr.mxu0 0.0
    %2254 = vmatpush1.msra.mxu0 0.0
    %2255 = vmatprep.subr.mxu0 0.0
    %2256 = vmatpush1.msra.mxu0 0.0
    %2257 = vmatprep.subr.mxu0 0.0
    %2258 = vmatpush1.msra.mxu0 0.0
    %2259 = vmatprep.subr.mxu0 0.0
    %2260 = vmatpush1.msra.mxu0 0.0
    %2261 = vmatprep.subr.mxu0 0.0
    %2262 = vmatpush1.msra.mxu0 0.0
    %2263 = vmatprep.subr.mxu0 0.0
    %2264 = vmatpush1.msra.mxu0 0.0
    %2265 = vmatprep.subr.mxu0 0.0
    %2266 = vmatpush1.msra.mxu0 0.0
    %2267 = vmatprep.subr.mxu0 0.0
    %2268 = vmatpush1.msra.mxu0 0.0
    %2269 = vmatprep.subr.mxu0 0.0
    %2270 = vmatpush1.msra.mxu0 0.0
    %2271 = vmatprep.subr.mxu0 0.0
    %2272 = vmatpush1.msra.mxu0 0.0
    %2273 = vmatprep.subr.mxu0 0.0
    %2274 = vmatpush1.msra.mxu0 0.0
    %2275 = vmatprep.subr.mxu0 0.0
    %2276 = vmatpush1.msra.mxu0 0.0
    %2277 = vmatprep.mubr.f32.mxu0 0.0
    %v2278 = vand.u32 %v1901, 4294901760
    %v2279 = vsub.f32 %v1901, %v2278
    %v2280 = vand.u32 %v2279, 4294901760
    %2281 = vmatmul.mubr.f32.gmra.mrb[0].mxu0 %v2280
    %v2282 = vpop.f32.mrb[0].mxu0
    %v2283 = vadd.f32 %v2192, %v2282
    %v2284 = vpop.f32.mrb[0].mxu0
    %2285 = vmatprep.mubr.f32.mxu0 0.0
    %v2286 = vand.u32 %v1904, 4294901760
    %v2287 = vsub.f32 %v1904, %v2286
    %v2288 = vand.u32 %v2287, 4294901760
    %2289 = vmatmul.mubr.f32.gmra.mrb[0].mxu0 %v2288
    %v2290 = vpop.f32.mrb[0].mxu0
    %v2291 = vadd.f32 %v2199, %v2290
    %v2292 = vpop.f32.mrb[0].mxu0
    %2293 = vmatprep.mubr.f32.mxu0 0.0
    %v2294 = vand.u32 %v1907, 4294901760
    %v2295 = vsub.f32 %v1907, %v2294
    %v2296 = vand.u32 %v2295, 4294901760
    %2297 = vmatmul.mubr.f32.gmra.mrb[0].mxu0 %v2296
    %v2298 = vpop.f32.mrb[0].mxu0
    %v2299 = vadd.f32 %v2206, %v2298
    %v2300 = vpop.f32.mrb[0].mxu0
    %2301 = vdwg.mxu0
    %2302 = vmatprep.subr.mxu0 0.0
    %v2303 = vand.u32 %v1885, 4294901760
    %v2304 = vsub.f32 %v1885, %v2303
    %v2305 = vand.u32 %v2304, 4294901760
    %2306 = vmatpush1.msra.mxu0 %v2305
    %2307 = vmatprep.subr.mxu0 0.0
    %v2308 = vand.u32 %v1886, 4294901760
    %v2309 = vsub.f32 %v1886, %v2308
    %v2310 = vand.u32 %v2309, 4294901760
    %2311 = vmatpush1.msra.mxu0 %v2310
    %2312 = vmatprep.subr.mxu0 0.0
    %v2313 = vand.u32 %v1887, 4294901760
    %v2314 = vsub.f32 %v1887, %v2313
    %v2315 = vand.u32 %v2314, 4294901760
    %2316 = vmatpush1.msra.mxu0 %v2315
    %2317 = vmatprep.subr.mxu0 0.0
    %v2318 = vand.u32 %v1911, 4294901760
    %v2319 = vsub.f32 %v1911, %v2318
    %v2320 = vand.u32 %v2319, 4294901760
    %2321 = vmatpush1.msra.mxu0 %v2320
    %2322 = vmatprep.subr.mxu0 0.0
    %2323 = vmatpush1.msra.mxu0 0.0
    %2324 = vmatprep.subr.mxu0 0.0
    %2325 = vmatpush1.msra.mxu0 0.0
    %2326 = vmatprep.subr.mxu0 0.0
    %2327 = vmatpush1.msra.mxu0 0.0
    %2328 = vmatprep.subr.mxu0 0.0
    %2329 = vmatpush1.msra.mxu0 0.0
    %2330 = vmatprep.subr.mxu0 0.0
    %2331 = vmatpush1.msra.mxu0 0.0
    %2332 = vmatprep.subr.mxu0 0.0
    %2333 = vmatpush1.msra.mxu0 0.0
    %2334 = vmatprep.subr.mxu0 0.0
    %2335 = vmatpush1.msra.mxu0 0.0
    %2336 = vmatprep.subr.mxu0 0.0
    %2337 = vmatpush1.msra.mxu0 0.0
    %2338 = vmatprep.subr.mxu0 0.0
    %2339 = vmatpush1.msra.mxu0 0.0
    %2340 = vmatprep.subr.mxu0 0.0
    %2341 = vmatpush1.msra.mxu0 0.0
    %2342 = vmatprep.subr.mxu0 0.0
    %2343 = vmatpush1.msra.mxu0 0.0
    %2344 = vmatprep.subr.mxu0 0.0
    %2345 = vmatpush1.msra.mxu0 0.0
    %2346 = vmatprep.subr.mxu0 0.0
    %2347 = vmatpush1.msra.mxu0 0.0
    %2348 = vmatprep.subr.mxu0 0.0
    %2349 = vmatpush1.msra.mxu0 0.0
    %2350 = vmatprep.subr.mxu0 0.0
    %2351 = vmatpush1.msra.mxu0 0.0
    %2352 = vmatprep.subr.mxu0 0.0
    %2353 = vmatpush1.msra.mxu0 0.0
    %2354 = vmatprep.subr.mxu0 0.0
    %2355 = vmatpush1.msra.mxu0 0.0
    %2356 = vmatprep.subr.mxu0 0.0
    %2357 = vmatpush1.msra.mxu0 0.0
    %2358 = vmatprep.subr.mxu0 0.0
    %2359 = vmatpush1.msra.mxu0 0.0
    %2360 = vmatprep.subr.mxu0 0.0
    %2361 = vmatpush1.msra.mxu0 0.0
    %2362 = vmatprep.subr.mxu0 0.0
    %2363 = vmatpush1.msra.mxu0 0.0
    %2364 = vmatprep.subr.mxu0 0.0
    %2365 = vmatpush1.msra.mxu0 0.0
    %2366 = vmatprep.subr.mxu0 0.0
    %2367 = vmatpush1.msra.mxu0 0.0
    %2368 = vmatprep.subr.mxu0 0.0
    %2369 = vmatpush1.msra.mxu0 0.0
    %2370 = vmatprep.subr.mxu0 0.0
    %2371 = vmatpush1.msra.mxu0 0.0
    %2372 = vmatprep.subr.mxu0 0.0
    %2373 = vmatpush1.msra.mxu0 0.0
    %2374 = vmatprep.subr.mxu0 0.0
    %2375 = vmatpush1.msra.mxu0 0.0
    %2376 = vmatprep.subr.mxu0 0.0
    %2377 = vmatpush1.msra.mxu0 0.0
    %2378 = vmatprep.mubr.f32.mxu0 0.0
    %v2379 = vand.u32 %v1901, 4294901760
    %2380 = vmatmul.mubr.f32.gmra.mrb[0].mxu0 %v2379
    %v2381 = vpop.f32.mrb[0].mxu0
    %v2382 = vadd.f32 %v2283, %v2381
    %v2383 = vpop.f32.mrb[0].mxu0
    %2384 = vmatprep.mubr.f32.mxu0 0.0
    %v2385 = vand.u32 %v1904, 4294901760
    %2386 = vmatmul.mubr.f32.gmra.mrb[0].mxu0 %v2385
    %v2387 = vpop.f32.mrb[0].mxu0
    %v2388 = vadd.f32 %v2291, %v2387
    %v2389 = vpop.f32.mrb[0].mxu0
    %2390 = vmatprep.mubr.f32.mxu0 0.0
    %v2391 = vand.u32 %v1907, 4294901760
    %2392 = vmatmul.mubr.f32.gmra.mrb[0].mxu0 %v2391
    %v2393 = vpop.f32.mrb[0].mxu0
    %v2394 = vadd.f32 %v2299, %v2393
    %v2395 = vpop.f32.mrb[0].mxu0
    %2396 = vdwg.mxu0
    %2397 = vmatprep.subr.mxu0 0.0
    %v2398 = vand.u32 %v1885, 4294901760
    %2399 = vmatpush1.msra.mxu0 %v2398
    %2400 = vmatprep.subr.mxu0 0.0
    %v2401 = vand.u32 %v1886, 4294901760
    %2402 = vmatpush1.msra.mxu0 %v2401
    %2403 = vmatprep.subr.mxu0 0.0
    %v2404 = vand.u32 %v1887, 4294901760
    %2405 = vmatpush1.msra.mxu0 %v2404
    %2406 = vmatprep.subr.mxu0 0.0
    %v2407 = vand.u32 %v1911, 4294901760
    %2408 = vmatpush1.msra.mxu0 %v2407
    %2409 = vmatprep.subr.mxu0 0.0
    %2410 = vmatpush1.msra.mxu0 0.0
    %2411 = vmatprep.subr.mxu0 0.0
    %2412 = vmatpush1.msra.mxu0 0.0
    %2413 = vmatprep.subr.mxu0 0.0
    %2414 = vmatpush1.msra.mxu0 0.0
    %2415 = vmatprep.subr.mxu0 0.0
    %2416 = vmatpush1.msra.mxu0 0.0
    %2417 = vmatprep.subr.mxu0 0.0
    %2418 = vmatpush1.msra.mxu0 0.0
    %2419 = vmatprep.subr.mxu0 0.0
    %2420 = vmatpush1.msra.mxu0 0.0
    %2421 = vmatprep.subr.mxu0 0.0
    %2422 = vmatpush1.msra.mxu0 0.0
    %2423 = vmatprep.subr.mxu0 0.0
    %2424 = vmatpush1.msra.mxu0 0.0
    %2425 = vmatprep.subr.mxu0 0.0
    %2426 = vmatpush1.msra.mxu0 0.0
    %2427 = vmatprep.subr.mxu0 0.0
    %2428 = vmatpush1.msra.mxu0 0.0
    %2429 = vmatprep.subr.mxu0 0.0
    %2430 = vmatpush1.msra.mxu0 0.0
    %2431 = vmatprep.subr.mxu0 0.0
    %2432 = vmatpush1.msra.mxu0 0.0
    %2433 = vmatprep.subr.mxu0 0.0
    %2434 = vmatpush1.msra.mxu0 0.0
    %2435 = vmatprep.subr.mxu0 0.0
    %2436 = vmatpush1.msra.mxu0 0.0
    %2437 = vmatprep.subr.mxu0 0.0
    %2438 = vmatpush1.msra.mxu0 0.0
    %2439 = vmatprep.subr.mxu0 0.0
    %2440 = vmatpush1.msra.mxu0 0.0
    %2441 = vmatprep.subr.mxu0 0.0
    %2442 = vmatpush1.msra.mxu0 0.0
    %2443 = vmatprep.subr.mxu0 0.0
    %2444 = vmatpush1.msra.mxu0 0.0
    %2445 = vmatprep.subr.mxu0 0.0
    %2446 = vmatpush1.msra.mxu0 0.0
    %2447 = vmatprep.subr.mxu0 0.0
    %2448 = vmatpush1.msra.mxu0 0.0
    %2449 = vmatprep.subr.mxu0 0.0
    %2450 = vmatpush1.msra.mxu0 0.0
    %2451 = vmatprep.subr.mxu0 0.0
    %2452 = vmatpush1.msra.mxu0 0.0
    %2453 = vmatprep.subr.mxu0 0.0
    %2454 = vmatpush1.msra.mxu0 0.0
    %2455 = vmatprep.subr.mxu0 0.0
    %2456 = vmatpush1.msra.mxu0 0.0
    %2457 = vmatprep.subr.mxu0 0.0
    %2458 = vmatpush1.msra.mxu0 0.0
    %2459 = vmatprep.subr.mxu0 0.0
    %2460 = vmatpush1.msra.mxu0 0.0
    %2461 = vmatprep.subr.mxu0 0.0
    %2462 = vmatpush1.msra.mxu0 0.0
    %2463 = vmatprep.subr.mxu0 0.0
    %2464 = vmatpush1.msra.mxu0 0.0
    %2465 = vmatprep.mubr.f32.mxu0 0.0
    %v2466 = vand.u32 %v1901, 4294901760
    %2467 = vmatmul.mubr.f32.gmra.mrb[0].mxu0 %v2466
    %v2468 = vpop.f32.mrb[0].mxu0
    %v2469 = vadd.f32 %v2382, %v2468
    %v2470 = vpop.f32.mrb[0].mxu0
    %2471 = vmatprep.mubr.f32.mxu0 0.0
    %v2472 = vand.u32 %v1904, 4294901760
    %2473 = vmatmul.mubr.f32.gmra.mrb[0].mxu0 %v2472
    %v2474 = vpop.f32.mrb[0].mxu0
    %v2475 = vadd.f32 %v2388, %v2474
    %v2476 = vpop.f32.mrb[0].mxu0
    %2477 = vmatprep.mubr.f32.mxu0 0.0
    %v2478 = vand.u32 %v1907, 4294901760
    %2479 = vmatmul.mubr.f32.gmra.mrb[0].mxu0 %v2478
    %v2480 = vpop.f32.mrb[0].mxu0
    %v2481 = vadd.f32 %v2394, %v2480
    %v2482 = vpop.f32.mrb[0].mxu0
    %2483 = vdwg.mxu0
    %vm2484 = vcmask 261120
    %v2485 = vsel %vm2484, %v2469, 0.0
    %v2486 = vsel %vm2484, %v2475, 0.0
    %v2487 = vadd.f32 %v2485, %v2486
    %v2488 = vsel %vm2484, %v2481, 0.0
    %v2489 = vadd.f32 %v2487, %v2488
    %v2490 = vrot.slane %v2489, 4
    %v2491 = vadd.f32 %v2489, %v2490
    %v2492 = vrot.slane %v2491, 2
    %v2493 = vadd.f32 %v2491, %v2492
    %v2494 = vrot.slane %v2493, 1
    %v2495 = vadd.f32 %v2493, %v2494
    %v2496 = vmul.f32 %v2495, 0.041666668
    %v2497 = vsub.f32 %v2469, %v2496
    %v2498 = vsub.f32 %v2475, %v2496
    %v2499 = vsub.f32 %v2481, %v2496
    %v2500 = vmul.f32 %v2497, %v2497
    %v2501 = vmul.f32 %v2498, %v2498
    %v2502 = vmul.f32 %v2499, %v2499
    %v2503 = vsel %vm2484, %v2500, 0.0
    %v2504 = vsel %vm2484, %v2501, 0.0
    %v2505 = vadd.f32 %v2503, %v2504
    %v2506 = vsel %vm2484, %v2502, 0.0
    %v2507 = vadd.f32 %v2505, %v2506
    %v2508 = vrot.slane %v2507, 4
    %v2509 = vadd.f32 %v2507, %v2508
    %v2510 = vrot.slane %v2509, 2
    %v2511 = vadd.f32 %v2509, %v2510
    %v2512 = vrot.slane %v2511, 1
    %v2513 = vadd.f32 %v2511, %v2512
    %v2514 = vmul.f32 %v2513, 0.041666668
    %v2515 = vld [vmem:[%s3] sm:$0x1]
    %v2516 = vadd.f32 %v2514, 1e-05
    %v2517 = vrsqrt.pop %v2516
    %v2518 = vmul.f32 %v2515, %v2517
    %v2520 = vlaneseq
    %v2521 = vshrl.u32 %v2520, 7
    %v2522 = vsub.s32 0, %v2521
    %v2523 = vrot.slane %v2518, %v2522
    %v2525 = vmul.f32 %v2497, %v2523
    %v2526 = vmul.f32 %v2498, %v2523
    %v2527 = vmul.f32 %v2499, %v2523
    %v2528 = vld [vmem:[%s4] sm:$0x1]
    %v2530 = vlaneseq
    %v2531 = vshrl.u32 %v2530, 7
    %v2532 = vsub.s32 0, %v2531
    %v2533 = vrot.slane %v2528, %v2532
    %v2535 = vadd.f32 %v2525, %v2533
    %v2536 = vadd.f32 %v2526, %v2533
    %v2537 = vadd.f32 %v2527, %v2533
    %v2538 = vmax.f32 %v2535, 0.0
    %v2539 = vmax.f32 %v2536, 0.0
    %v2540 = vmax.f32 %v2537, 0.0
    %v2541 = vld [vmem:[%s12] sm:$0xff]
    %v2542 = vld [vmem:[%s12 + $0x8] sm:$0xf]
    %vm2543 = vcmask 195584
    %v2545 = vsel %vm2543, %v2541, 0
    %v2548 = vsel %vm2543, %v2542, 0
    %2550 = vmatprep.subr.mxu0 0.0
    %v2551 = vand.u32 %v2538, 4294901760
    %2552 = vmatpush1.msra.mxu0 %v2551
    %2553 = vmatprep.subr.mxu0 0.0
    %v2554 = vand.u32 %v2539, 4294901760
    %2555 = vmatpush1.msra.mxu0 %v2554
    %2556 = vmatprep.subr.mxu0 0.0
    %v2557 = vand.u32 %v2540, 4294901760
    %2558 = vmatpush1.msra.mxu0 %v2557
    %2559 = vmatprep.subr.mxu0 0.0
    %2560 = vmatpush1.msra.mxu0 0.0
    %2561 = vmatprep.subr.mxu0 0.0
    %2562 = vmatpush1.msra.mxu0 0.0
    %2563 = vmatprep.subr.mxu0 0.0
    %2564 = vmatpush1.msra.mxu0 0.0
    %2565 = vmatprep.subr.mxu0 0.0
    %2566 = vmatpush1.msra.mxu0 0.0
    %2567 = vmatprep.subr.mxu0 0.0
    %2568 = vmatpush1.msra.mxu0 0.0
    %2569 = vmatprep.subr.mxu0 0.0
    %2570 = vmatpush1.msra.mxu0 0.0
    %2571 = vmatprep.subr.mxu0 0.0
    %2572 = vmatpush1.msra.mxu0 0.0
    %2573 = vmatprep.subr.mxu0 0.0
    %2574 = vmatpush1.msra.mxu0 0.0
    %2575 = vmatprep.subr.mxu0 0.0
    %2576 = vmatpush1.msra.mxu0 0.0
    %2577 = vmatprep.subr.mxu0 0.0
    %2578 = vmatpush1.msra.mxu0 0.0
    %2579 = vmatprep.subr.mxu0 0.0
    %2580 = vmatpush1.msra.mxu0 0.0
    %2581 = vmatprep.subr.mxu0 0.0
    %2582 = vmatpush1.msra.mxu0 0.0
    %2583 = vmatprep.subr.mxu0 0.0
    %2584 = vmatpush1.msra.mxu0 0.0
    %2585 = vmatprep.subr.mxu0 0.0
    %2586 = vmatpush1.msra.mxu0 0.0
    %2587 = vmatprep.subr.mxu0 0.0
    %2588 = vmatpush1.msra.mxu0 0.0
    %2589 = vmatprep.subr.mxu0 0.0
    %2590 = vmatpush1.msra.mxu0 0.0
    %2591 = vmatprep.subr.mxu0 0.0
    %2592 = vmatpush1.msra.mxu0 0.0
    %2593 = vmatprep.subr.mxu0 0.0
    %2594 = vmatpush1.msra.mxu0 0.0
    %2595 = vmatprep.subr.mxu0 0.0
    %2596 = vmatpush1.msra.mxu0 0.0
    %2597 = vmatprep.subr.mxu0 0.0
    %2598 = vmatpush1.msra.mxu0 0.0
    %2599 = vmatprep.subr.mxu0 0.0
    %2600 = vmatpush1.msra.mxu0 0.0
    %2601 = vmatprep.subr.mxu0 0.0
    %2602 = vmatpush1.msra.mxu0 0.0
    %2603 = vmatprep.subr.mxu0 0.0
    %2604 = vmatpush1.msra.mxu0 0.0
    %2605 = vmatprep.subr.mxu0 0.0
    %2606 = vmatpush1.msra.mxu0 0.0
    %2607 = vmatprep.subr.mxu0 0.0
    %2608 = vmatpush1.msra.mxu0 0.0
    %2609 = vmatprep.subr.mxu0 0.0
    %2610 = vmatpush1.msra.mxu0 0.0
    %2611 = vmatprep.subr.mxu0 0.0
    %2612 = vmatpush1.msra.mxu0 0.0
    %2613 = vmatprep.subr.mxu0 0.0
    %2614 = vmatpush1.msra.mxu0 0.0
    %2615 = vmatprep.subr.mxu0 0.0
    %2616 = vmatpush1.msra.mxu0 0.0
    %2617 = vmatprep.mubr.f32.mxu0 0.0
    %v2618 = vand.u32 %v2545, 4294901760
    %v2619 = vsub.f32 %v2545, %v2618
    %v2620 = vand.u32 %v2619, 4294901760
    %v2621 = vsub.f32 %v2619, %v2620
    %v2622 = vand.u32 %v2621, 4294901760
    %2623 = vmatmul.mubr.f32.gmra.mrb[0].mxu0 %v2622
    %v2624 = vpop.f32.mrb[0].mxu0
    %v2625 = vadd.f32 0.0, %v2624
    %v2626 = vpop.f32.mrb[0].mxu0
    %2627 = vmatprep.mubr.f32.mxu0 0.0
    %v2628 = vand.u32 %v2548, 4294901760
    %v2629 = vsub.f32 %v2548, %v2628
    %v2630 = vand.u32 %v2629, 4294901760
    %v2631 = vsub.f32 %v2629, %v2630
    %v2632 = vand.u32 %v2631, 4294901760
    %2633 = vmatmul.mubr.f32.gmra.mrb[0].mxu0 %v2632
    %v2634 = vpop.f32.mrb[0].mxu0
    %v2635 = vadd.f32 0.0, %v2634
    %v2636 = vpop.f32.mrb[0].mxu0
    %2637 = vdwg.mxu0
    %2638 = vmatprep.subr.mxu0 0.0
    %v2639 = vand.u32 %v2538, 4294901760
    %v2640 = vsub.f32 %v2538, %v2639
    %v2641 = vand.u32 %v2640, 4294901760
    %v2642 = vsub.f32 %v2640, %v2641
    %v2643 = vand.u32 %v2642, 4294901760
    %2644 = vmatpush1.msra.mxu0 %v2643
    %2645 = vmatprep.subr.mxu0 0.0
    %v2646 = vand.u32 %v2539, 4294901760
    %v2647 = vsub.f32 %v2539, %v2646
    %v2648 = vand.u32 %v2647, 4294901760
    %v2649 = vsub.f32 %v2647, %v2648
    %v2650 = vand.u32 %v2649, 4294901760
    %2651 = vmatpush1.msra.mxu0 %v2650
    %2652 = vmatprep.subr.mxu0 0.0
    %v2653 = vand.u32 %v2540, 4294901760
    %v2654 = vsub.f32 %v2540, %v2653
    %v2655 = vand.u32 %v2654, 4294901760
    %v2656 = vsub.f32 %v2654, %v2655
    %v2657 = vand.u32 %v2656, 4294901760
    %2658 = vmatpush1.msra.mxu0 %v2657
    %2659 = vmatprep.subr.mxu0 0.0
    %2660 = vmatpush1.msra.mxu0 0.0
    %2661 = vmatprep.subr.mxu0 0.0
    %2662 = vmatpush1.msra.mxu0 0.0
    %2663 = vmatprep.subr.mxu0 0.0
    %2664 = vmatpush1.msra.mxu0 0.0
    %2665 = vmatprep.subr.mxu0 0.0
    %2666 = vmatpush1.msra.mxu0 0.0
    %2667 = vmatprep.subr.mxu0 0.0
    %2668 = vmatpush1.msra.mxu0 0.0
    %2669 = vmatprep.subr.mxu0 0.0
    %2670 = vmatpush1.msra.mxu0 0.0
    %2671 = vmatprep.subr.mxu0 0.0
    %2672 = vmatpush1.msra.mxu0 0.0
    %2673 = vmatprep.subr.mxu0 0.0
    %2674 = vmatpush1.msra.mxu0 0.0
    %2675 = vmatprep.subr.mxu0 0.0
    %2676 = vmatpush1.msra.mxu0 0.0
    %2677 = vmatprep.subr.mxu0 0.0
    %2678 = vmatpush1.msra.mxu0 0.0
    %2679 = vmatprep.subr.mxu0 0.0
    %2680 = vmatpush1.msra.mxu0 0.0
    %2681 = vmatprep.subr.mxu0 0.0
    %2682 = vmatpush1.msra.mxu0 0.0
    %2683 = vmatprep.subr.mxu0 0.0
    %2684 = vmatpush1.msra.mxu0 0.0
    %2685 = vmatprep.subr.mxu0 0.0
    %2686 = vmatpush1.msra.mxu0 0.0
    %2687 = vmatprep.subr.mxu0 0.0
    %2688 = vmatpush1.msra.mxu0 0.0
    %2689 = vmatprep.subr.mxu0 0.0
    %2690 = vmatpush1.msra.mxu0 0.0
    %2691 = vmatprep.subr.mxu0 0.0
    %2692 = vmatpush1.msra.mxu0 0.0
    %2693 = vmatprep.subr.mxu0 0.0
    %2694 = vmatpush1.msra.mxu0 0.0
    %2695 = vmatprep.subr.mxu0 0.0
    %2696 = vmatpush1.msra.mxu0 0.0
    %2697 = vmatprep.subr.mxu0 0.0
    %2698 = vmatpush1.msra.mxu0 0.0
    %2699 = vmatprep.subr.mxu0 0.0
    %2700 = vmatpush1.msra.mxu0 0.0
    %2701 = vmatprep.subr.mxu0 0.0
    %2702 = vmatpush1.msra.mxu0 0.0
    %2703 = vmatprep.subr.mxu0 0.0
    %2704 = vmatpush1.msra.mxu0 0.0
    %2705 = vmatprep.subr.mxu0 0.0
    %2706 = vmatpush1.msra.mxu0 0.0
    %2707 = vmatprep.subr.mxu0 0.0
    %2708 = vmatpush1.msra.mxu0 0.0
    %2709 = vmatprep.subr.mxu0 0.0
    %2710 = vmatpush1.msra.mxu0 0.0
    %2711 = vmatprep.subr.mxu0 0.0
    %2712 = vmatpush1.msra.mxu0 0.0
    %2713 = vmatprep.subr.mxu0 0.0
    %2714 = vmatpush1.msra.mxu0 0.0
    %2715 = vmatprep.subr.mxu0 0.0
    %2716 = vmatpush1.msra.mxu0 0.0
    %2717 = vmatprep.mubr.f32.mxu0 0.0
    %v2718 = vand.u32 %v2545, 4294901760
    %2719 = vmatmul.mubr.f32.gmra.mrb[0].mxu0 %v2718
    %v2720 = vpop.f32.mrb[0].mxu0
    %v2721 = vadd.f32 %v2625, %v2720
    %v2722 = vpop.f32.mrb[0].mxu0
    %2723 = vmatprep.mubr.f32.mxu0 0.0
    %v2724 = vand.u32 %v2548, 4294901760
    %2725 = vmatmul.mubr.f32.gmra.mrb[0].mxu0 %v2724
    %v2726 = vpop.f32.mrb[0].mxu0
    %v2727 = vadd.f32 %v2635, %v2726
    %v2728 = vpop.f32.mrb[0].mxu0
    %2729 = vdwg.mxu0
    %2730 = vmatprep.subr.mxu0 0.0
    %v2731 = vand.u32 %v2538, 4294901760
    %v2732 = vsub.f32 %v2538, %v2731
    %2733 = vmatpush1.msra.mxu0 %v2732
    %2734 = vmatprep.subr.mxu0 0.0
    %v2735 = vand.u32 %v2539, 4294901760
    %v2736 = vsub.f32 %v2539, %v2735
    %2737 = vmatpush1.msra.mxu0 %v2736
    %2738 = vmatprep.subr.mxu0 0.0
    %v2739 = vand.u32 %v2540, 4294901760
    %v2740 = vsub.f32 %v2540, %v2739
    %2741 = vmatpush1.msra.mxu0 %v2740
    %2742 = vmatprep.subr.mxu0 0.0
    %2743 = vmatpush1.msra.mxu0 0.0
    %2744 = vmatprep.subr.mxu0 0.0
    %2745 = vmatpush1.msra.mxu0 0.0
    %2746 = vmatprep.subr.mxu0 0.0
    %2747 = vmatpush1.msra.mxu0 0.0
    %2748 = vmatprep.subr.mxu0 0.0
    %2749 = vmatpush1.msra.mxu0 0.0
    %2750 = vmatprep.subr.mxu0 0.0
    %2751 = vmatpush1.msra.mxu0 0.0
    %2752 = vmatprep.subr.mxu0 0.0
    %2753 = vmatpush1.msra.mxu0 0.0
    %2754 = vmatprep.subr.mxu0 0.0
    %2755 = vmatpush1.msra.mxu0 0.0
    %2756 = vmatprep.subr.mxu0 0.0
    %2757 = vmatpush1.msra.mxu0 0.0
    %2758 = vmatprep.subr.mxu0 0.0
    %2759 = vmatpush1.msra.mxu0 0.0
    %2760 = vmatprep.subr.mxu0 0.0
    %2761 = vmatpush1.msra.mxu0 0.0
    %2762 = vmatprep.subr.mxu0 0.0
    %2763 = vmatpush1.msra.mxu0 0.0
    %2764 = vmatprep.subr.mxu0 0.0
    %2765 = vmatpush1.msra.mxu0 0.0
    %2766 = vmatprep.subr.mxu0 0.0
    %2767 = vmatpush1.msra.mxu0 0.0
    %2768 = vmatprep.subr.mxu0 0.0
    %2769 = vmatpush1.msra.mxu0 0.0
    %2770 = vmatprep.subr.mxu0 0.0
    %2771 = vmatpush1.msra.mxu0 0.0
    %2772 = vmatprep.subr.mxu0 0.0
    %2773 = vmatpush1.msra.mxu0 0.0
    %2774 = vmatprep.subr.mxu0 0.0
    %2775 = vmatpush1.msra.mxu0 0.0
    %2776 = vmatprep.subr.mxu0 0.0
    %2777 = vmatpush1.msra.mxu0 0.0
    %2778 = vmatprep.subr.mxu0 0.0
    %2779 = vmatpush1.msra.mxu0 0.0
    %2780 = vmatprep.subr.mxu0 0.0
    %2781 = vmatpush1.msra.mxu0 0.0
    %2782 = vmatprep.subr.mxu0 0.0
    %2783 = vmatpush1.msra.mxu0 0.0
    %2784 = vmatprep.subr.mxu0 0.0
    %2785 = vmatpush1.msra.mxu0 0.0
    %2786 = vmatprep.subr.mxu0 0.0
    %2787 = vmatpush1.msra.mxu0 0.0
    %2788 = vmatprep.subr.mxu0 0.0
    %2789 = vmatpush1.msra.mxu0 0.0
    %2790 = vmatprep.subr.mxu0 0.0
    %2791 = vmatpush1.msra.mxu0 0.0
    %2792 = vmatprep.subr.mxu0 0.0
    %2793 = vmatpush1.msra.mxu0 0.0
    %2794 = vmatprep.subr.mxu0 0.0
    %2795 = vmatpush1.msra.mxu0 0.0
    %2796 = vmatprep.subr.mxu0 0.0
    %2797 = vmatpush1.msra.mxu0 0.0
    %2798 = vmatprep.subr.mxu0 0.0
    %2799 = vmatpush1.msra.mxu0 0.0
    %2800 = vmatprep.mubr.f32.mxu0 0.0
    %v2801 = vand.u32 %v2545, 4294901760
    %v2802 = vsub.f32 %v2545, %v2801
    %2803 = vmatmul.mubr.f32.gmra.mrb[0].mxu0 %v2802
    %v2804 = vpop.f32.mrb[0].mxu0
    %v2805 = vadd.f32 %v2721, %v2804
    %v2806 = vpop.f32.mrb[0].mxu0
    %2807 = vmatprep.mubr.f32.mxu0 0.0
    %v2808 = vand.u32 %v2548, 4294901760
    %v2809 = vsub.f32 %v2548, %v2808
    %2810 = vmatmul.mubr.f32.gmra.mrb[0].mxu0 %v2809
    %v2811 = vpop.f32.mrb[0].mxu0
    %v2812 = vadd.f32 %v2727, %v2811
    %v2813 = vpop.f32.mrb[0].mxu0
    %2814 = vdwg.mxu0
    %2815 = vmatprep.subr.mxu0 0.0
    %v2816 = vand.u32 %v2538, 4294901760
    %2817 = vmatpush1.msra.mxu0 %v2816
    %2818 = vmatprep.subr.mxu0 0.0
    %v2819 = vand.u32 %v2539, 4294901760
    %2820 = vmatpush1.msra.mxu0 %v2819
    %2821 = vmatprep.subr.mxu0 0.0
    %v2822 = vand.u32 %v2540, 4294901760
    %2823 = vmatpush1.msra.mxu0 %v2822
    %2824 = vmatprep.subr.mxu0 0.0
    %2825 = vmatpush1.msra.mxu0 0.0
    %2826 = vmatprep.subr.mxu0 0.0
    %2827 = vmatpush1.msra.mxu0 0.0
    %2828 = vmatprep.subr.mxu0 0.0
    %2829 = vmatpush1.msra.mxu0 0.0
    %2830 = vmatprep.subr.mxu0 0.0
    %2831 = vmatpush1.msra.mxu0 0.0
    %2832 = vmatprep.subr.mxu0 0.0
    %2833 = vmatpush1.msra.mxu0 0.0
    %2834 = vmatprep.subr.mxu0 0.0
    %2835 = vmatpush1.msra.mxu0 0.0
    %2836 = vmatprep.subr.mxu0 0.0
    %2837 = vmatpush1.msra.mxu0 0.0
    %2838 = vmatprep.subr.mxu0 0.0
    %2839 = vmatpush1.msra.mxu0 0.0
    %2840 = vmatprep.subr.mxu0 0.0
    %2841 = vmatpush1.msra.mxu0 0.0
    %2842 = vmatprep.subr.mxu0 0.0
    %2843 = vmatpush1.msra.mxu0 0.0
    %2844 = vmatprep.subr.mxu0 0.0
    %2845 = vmatpush1.msra.mxu0 0.0
    %2846 = vmatprep.subr.mxu0 0.0
    %2847 = vmatpush1.msra.mxu0 0.0
    %2848 = vmatprep.subr.mxu0 0.0
    %2849 = vmatpush1.msra.mxu0 0.0
    %2850 = vmatprep.subr.mxu0 0.0
    %2851 = vmatpush1.msra.mxu0 0.0
    %2852 = vmatprep.subr.mxu0 0.0
    %2853 = vmatpush1.msra.mxu0 0.0
    %2854 = vmatprep.subr.mxu0 0.0
    %2855 = vmatpush1.msra.mxu0 0.0
    %2856 = vmatprep.subr.mxu0 0.0
    %2857 = vmatpush1.msra.mxu0 0.0
    %2858 = vmatprep.subr.mxu0 0.0
    %2859 = vmatpush1.msra.mxu0 0.0
    %2860 = vmatprep.subr.mxu0 0.0
    %2861 = vmatpush1.msra.mxu0 0.0
    %2862 = vmatprep.subr.mxu0 0.0
    %2863 = vmatpush1.msra.mxu0 0.0
    %2864 = vmatprep.subr.mxu0 0.0
    %2865 = vmatpush1.msra.mxu0 0.0
    %2866 = vmatprep.subr.mxu0 0.0
    %2867 = vmatpush1.msra.mxu0 0.0
    %2868 = vmatprep.subr.mxu0 0.0
    %2869 = vmatpush1.msra.mxu0 0.0
    %2870 = vmatprep.subr.mxu0 0.0
    %2871 = vmatpush1.msra.mxu0 0.0
    %2872 = vmatprep.subr.mxu0 0.0
    %2873 = vmatpush1.msra.mxu0 0.0
    %2874 = vmatprep.subr.mxu0 0.0
    %2875 = vmatpush1.msra.mxu0 0.0
    %2876 = vmatprep.subr.mxu0 0.0
    %2877 = vmatpush1.msra.mxu0 0.0
    %2878 = vmatprep.subr.mxu0 0.0
    %2879 = vmatpush1.msra.mxu0 0.0
    %2880 = vmatprep.subr.mxu0 0.0
    %2881 = vmatpush1.msra.mxu0 0.0
    %2882 = vmatprep.mubr.f32.mxu0 0.0
    %v2883 = vand.u32 %v2545, 4294901760
    %v2884 = vsub.f32 %v2545, %v2883
    %v2885 = vand.u32 %v2884, 4294901760
    %2886 = vmatmul.mubr.f32.gmra.mrb[0].mxu0 %v2885
    %v2887 = vpop.f32.mrb[0].mxu0
    %v2888 = vadd.f32 %v2805, %v2887
    %v2889 = vpop.f32.mrb[0].mxu0
    %2890 = vmatprep.mubr.f32.mxu0 0.0
    %v2891 = vand.u32 %v2548, 4294901760
    %v2892 = vsub.f32 %v2548, %v2891
    %v2893 = vand.u32 %v2892, 4294901760
    %2894 = vmatmul.mubr.f32.gmra.mrb[0].mxu0 %v2893
    %v2895 = vpop.f32.mrb[0].mxu0
    %v2896 = vadd.f32 %v2812, %v2895
    %v2897 = vpop.f32.mrb[0].mxu0
    %2898 = vdwg.mxu0
    %2899 = vmatprep.subr.mxu0 0.0
    %v2900 = vand.u32 %v2538, 4294901760
    %v2901 = vsub.f32 %v2538, %v2900
    %v2902 = vand.u32 %v2901, 4294901760
    %2903 = vmatpush1.msra.mxu0 %v2902
    %2904 = vmatprep.subr.mxu0 0.0
    %v2905 = vand.u32 %v2539, 4294901760
    %v2906 = vsub.f32 %v2539, %v2905
    %v2907 = vand.u32 %v2906, 4294901760
    %2908 = vmatpush1.msra.mxu0 %v2907
    %2909 = vmatprep.subr.mxu0 0.0
    %v2910 = vand.u32 %v2540, 4294901760
    %v2911 = vsub.f32 %v2540, %v2910
    %v2912 = vand.u32 %v2911, 4294901760
    %2913 = vmatpush1.msra.mxu0 %v2912
    %2914 = vmatprep.subr.mxu0 0.0
    %2915 = vmatpush1.msra.mxu0 0.0
    %2916 = vmatprep.subr.mxu0 0.0
    %2917 = vmatpush1.msra.mxu0 0.0
    %2918 = vmatprep.subr.mxu0 0.0
    %2919 = vmatpush1.msra.mxu0 0.0
    %2920 = vmatprep.subr.mxu0 0.0
    %2921 = vmatpush1.msra.mxu0 0.0
    %2922 = vmatprep.subr.mxu0 0.0
    %2923 = vmatpush1.msra.mxu0 0.0
    %2924 = vmatprep.subr.mxu0 0.0
    %2925 = vmatpush1.msra.mxu0 0.0
    %2926 = vmatprep.subr.mxu0 0.0
    %2927 = vmatpush1.msra.mxu0 0.0
    %2928 = vmatprep.subr.mxu0 0.0
    %2929 = vmatpush1.msra.mxu0 0.0
    %2930 = vmatprep.subr.mxu0 0.0
    %2931 = vmatpush1.msra.mxu0 0.0
    %2932 = vmatprep.subr.mxu0 0.0
    %2933 = vmatpush1.msra.mxu0 0.0
    %2934 = vmatprep.subr.mxu0 0.0
    %2935 = vmatpush1.msra.mxu0 0.0
    %2936 = vmatprep.subr.mxu0 0.0
    %2937 = vmatpush1.msra.mxu0 0.0
    %2938 = vmatprep.subr.mxu0 0.0
    %2939 = vmatpush1.msra.mxu0 0.0
    %2940 = vmatprep.subr.mxu0 0.0
    %2941 = vmatpush1.msra.mxu0 0.0
    %2942 = vmatprep.subr.mxu0 0.0
    %2943 = vmatpush1.msra.mxu0 0.0
    %2944 = vmatprep.subr.mxu0 0.0
    %2945 = vmatpush1.msra.mxu0 0.0
    %2946 = vmatprep.subr.mxu0 0.0
    %2947 = vmatpush1.msra.mxu0 0.0
    %2948 = vmatprep.subr.mxu0 0.0
    %2949 = vmatpush1.msra.mxu0 0.0
    %2950 = vmatprep.subr.mxu0 0.0
    %2951 = vmatpush1.msra.mxu0 0.0
    %2952 = vmatprep.subr.mxu0 0.0
    %2953 = vmatpush1.msra.mxu0 0.0
    %2954 = vmatprep.subr.mxu0 0.0
    %2955 = vmatpush1.msra.mxu0 0.0
    %2956 = vmatprep.subr.mxu0 0.0
    %2957 = vmatpush1.msra.mxu0 0.0
    %2958 = vmatprep.subr.mxu0 0.0
    %2959 = vmatpush1.msra.mxu0 0.0
    %2960 = vmatprep.subr.mxu0 0.0
    %2961 = vmatpush1.msra.mxu0 0.0
    %2962 = vmatprep.subr.mxu0 0.0
    %2963 = vmatpush1.msra.mxu0 0.0
    %2964 = vmatprep.subr.mxu0 0.0
    %2965 = vmatpush1.msra.mxu0 0.0
    %2966 = vmatprep.subr.mxu0 0.0
    %2967 = vmatpush1.msra.mxu0 0.0
    %2968 = vmatprep.subr.mxu0 0.0
    %2969 = vmatpush1.msra.mxu0 0.0
    %2970 = vmatprep.subr.mxu0 0.0
    %2971 = vmatpush1.msra.mxu0 0.0
    %2972 = vmatprep.mubr.f32.mxu0 0.0
    %v2973 = vand.u32 %v2545, 4294901760
    %2974 = vmatmul.mubr.f32.gmra.mrb[0].mxu0 %v2973
    %v2975 = vpop.f32.mrb[0].mxu0
    %v2976 = vadd.f32 %v2888, %v2975
    %v2977 = vpop.f32.mrb[0].mxu0
    %2978 = vmatprep.mubr.f32.mxu0 0.0
    %v2979 = vand.u32 %v2548, 4294901760
    %2980 = vmatmul.mubr.f32.gmra.mrb[0].mxu0 %v2979
    %v2981 = vpop.f32.mrb[0].mxu0
    %v2982 = vadd.f32 %v2896, %v2981
    %v2983 = vpop.f32.mrb[0].mxu0
    %2984 = vdwg.mxu0
    %2985 = vmatprep.subr.mxu0 0.0
    %v2986 = vand.u32 %v2538, 4294901760
    %2987 = vmatpush1.msra.mxu0 %v2986
    %2988 = vmatprep.subr.mxu0 0.0
    %v2989 = vand.u32 %v2539, 4294901760
    %2990 = vmatpush1.msra.mxu0 %v2989
    %2991 = vmatprep.subr.mxu0 0.0
    %v2992 = vand.u32 %v2540, 4294901760
    %2993 = vmatpush1.msra.mxu0 %v2992
    %2994 = vmatprep.subr.mxu0 0.0
    %2995 = vmatpush1.msra.mxu0 0.0
    %2996 = vmatprep.subr.mxu0 0.0
    %2997 = vmatpush1.msra.mxu0 0.0
    %2998 = vmatprep.subr.mxu0 0.0
    %2999 = vmatpush1.msra.mxu0 0.0
    %3000 = vmatprep.subr.mxu0 0.0
    %3001 = vmatpush1.msra.mxu0 0.0
    %3002 = vmatprep.subr.mxu0 0.0
    %3003 = vmatpush1.msra.mxu0 0.0
    %3004 = vmatprep.subr.mxu0 0.0
    %3005 = vmatpush1.msra.mxu0 0.0
    %3006 = vmatprep.subr.mxu0 0.0
    %3007 = vmatpush1.msra.mxu0 0.0
    %3008 = vmatprep.subr.mxu0 0.0
    %3009 = vmatpush1.msra.mxu0 0.0
    %3010 = vmatprep.subr.mxu0 0.0
    %3011 = vmatpush1.msra.mxu0 0.0
    %3012 = vmatprep.subr.mxu0 0.0
    %3013 = vmatpush1.msra.mxu0 0.0
    %3014 = vmatprep.subr.mxu0 0.0
    %3015 = vmatpush1.msra.mxu0 0.0
    %3016 = vmatprep.subr.mxu0 0.0
    %3017 = vmatpush1.msra.mxu0 0.0
    %3018 = vmatprep.subr.mxu0 0.0
    %3019 = vmatpush1.msra.mxu0 0.0
    %3020 = vmatprep.subr.mxu0 0.0
    %3021 = vmatpush1.msra.mxu0 0.0
    %3022 = vmatprep.subr.mxu0 0.0
    %3023 = vmatpush1.msra.mxu0 0.0
    %3024 = vmatprep.subr.mxu0 0.0
    %3025 = vmatpush1.msra.mxu0 0.0
    %3026 = vmatprep.subr.mxu0 0.0
    %3027 = vmatpush1.msra.mxu0 0.0
    %3028 = vmatprep.subr.mxu0 0.0
    %3029 = vmatpush1.msra.mxu0 0.0
    %3030 = vmatprep.subr.mxu0 0.0
    %3031 = vmatpush1.msra.mxu0 0.0
    %3032 = vmatprep.subr.mxu0 0.0
    %3033 = vmatpush1.msra.mxu0 0.0
    %3034 = vmatprep.subr.mxu0 0.0
    %3035 = vmatpush1.msra.mxu0 0.0
    %3036 = vmatprep.subr.mxu0 0.0
    %3037 = vmatpush1.msra.mxu0 0.0
    %3038 = vmatprep.subr.mxu0 0.0
    %3039 = vmatpush1.msra.mxu0 0.0
    %3040 = vmatprep.subr.mxu0 0.0
    %3041 = vmatpush1.msra.mxu0 0.0
    %3042 = vmatprep.subr.mxu0 0.0
    %3043 = vmatpush1.msra.mxu0 0.0
    %3044 = vmatprep.subr.mxu0 0.0
    %3045 = vmatpush1.msra.mxu0 0.0
    %3046 = vmatprep.subr.mxu0 0.0
    %3047 = vmatpush1.msra.mxu0 0.0
    %3048 = vmatprep.subr.mxu0 0.0
    %3049 = vmatpush1.msra.mxu0 0.0
    %3050 = vmatprep.subr.mxu0 0.0
    %3051 = vmatpush1.msra.mxu0 0.0
    %3052 = vmatprep.mubr.f32.mxu0 0.0
    %v3053 = vand.u32 %v2545, 4294901760
    %3054 = vmatmul.mubr.f32.gmra.mrb[0].mxu0 %v3053
    %v3055 = vpop.f32.mrb[0].mxu0
    %v3056 = vadd.f32 %v2976, %v3055
    %v3057 = vpop.f32.mrb[0].mxu0
    %3058 = vmatprep.mubr.f32.mxu0 0.0
    %v3059 = vand.u32 %v2548, 4294901760
    %3060 = vmatmul.mubr.f32.gmra.mrb[0].mxu0 %v3059
    %v3061 = vpop.f32.mrb[0].mxu0
    %v3062 = vadd.f32 %v2982, %v3061
    %v3063 = vpop.f32.mrb[0].mxu0
    %3064 = vdwg.mxu0
    %s3065 = scalar_lea.vmem %s12, 16
    %v3066 = vld [vmem:[%s3065] sm:$0xff]
    %v3067 = vld [vmem:[%s3065 + $0x8] sm:$0xf]
    %v3069 = vsel %vm2543, %v3066, 0
    %v3072 = vsel %vm2543, %v3067, 0
    %3074 = vmatprep.subr.mxu0 0.0
    %v3075 = vand.u32 %v2538, 4294901760
    %3076 = vmatpush1.msra.mxu0 %v3075
    %3077 = vmatprep.subr.mxu0 0.0
    %v3078 = vand.u32 %v2539, 4294901760
    %3079 = vmatpush1.msra.mxu0 %v3078
    %3080 = vmatprep.subr.mxu0 0.0
    %v3081 = vand.u32 %v2540, 4294901760
    %3082 = vmatpush1.msra.mxu0 %v3081
    %3083 = vmatprep.subr.mxu0 0.0
    %3084 = vmatpush1.msra.mxu0 0.0
    %3085 = vmatprep.subr.mxu0 0.0
    %3086 = vmatpush1.msra.mxu0 0.0
    %3087 = vmatprep.subr.mxu0 0.0
    %3088 = vmatpush1.msra.mxu0 0.0
    %3089 = vmatprep.subr.mxu0 0.0
    %3090 = vmatpush1.msra.mxu0 0.0
    %3091 = vmatprep.subr.mxu0 0.0
    %3092 = vmatpush1.msra.mxu0 0.0
    %3093 = vmatprep.subr.mxu0 0.0
    %3094 = vmatpush1.msra.mxu0 0.0
    %3095 = vmatprep.subr.mxu0 0.0
    %3096 = vmatpush1.msra.mxu0 0.0
    %3097 = vmatprep.subr.mxu0 0.0
    %3098 = vmatpush1.msra.mxu0 0.0
    %3099 = vmatprep.subr.mxu0 0.0
    %3100 = vmatpush1.msra.mxu0 0.0
    %3101 = vmatprep.subr.mxu0 0.0
    %3102 = vmatpush1.msra.mxu0 0.0
    %3103 = vmatprep.subr.mxu0 0.0
    %3104 = vmatpush1.msra.mxu0 0.0
    %3105 = vmatprep.subr.mxu0 0.0
    %3106 = vmatpush1.msra.mxu0 0.0
    %3107 = vmatprep.subr.mxu0 0.0
    %3108 = vmatpush1.msra.mxu0 0.0
    %3109 = vmatprep.subr.mxu0 0.0
    %3110 = vmatpush1.msra.mxu0 0.0
    %3111 = vmatprep.subr.mxu0 0.0
    %3112 = vmatpush1.msra.mxu0 0.0
    %3113 = vmatprep.subr.mxu0 0.0
    %3114 = vmatpush1.msra.mxu0 0.0
    %3115 = vmatprep.subr.mxu0 0.0
    %3116 = vmatpush1.msra.mxu0 0.0
    %3117 = vmatprep.subr.mxu0 0.0
    %3118 = vmatpush1.msra.mxu0 0.0
    %3119 = vmatprep.subr.mxu0 0.0
    %3120 = vmatpush1.msra.mxu0 0.0
    %3121 = vmatprep.subr.mxu0 0.0
    %3122 = vmatpush1.msra.mxu0 0.0
    %3123 = vmatprep.subr.mxu0 0.0
    %3124 = vmatpush1.msra.mxu0 0.0
    %3125 = vmatprep.subr.mxu0 0.0
    %3126 = vmatpush1.msra.mxu0 0.0
    %3127 = vmatprep.subr.mxu0 0.0
    %3128 = vmatpush1.msra.mxu0 0.0
    %3129 = vmatprep.subr.mxu0 0.0
    %3130 = vmatpush1.msra.mxu0 0.0
    %3131 = vmatprep.subr.mxu0 0.0
    %3132 = vmatpush1.msra.mxu0 0.0
    %3133 = vmatprep.subr.mxu0 0.0
    %3134 = vmatpush1.msra.mxu0 0.0
    %3135 = vmatprep.subr.mxu0 0.0
    %3136 = vmatpush1.msra.mxu0 0.0
    %3137 = vmatprep.subr.mxu0 0.0
    %3138 = vmatpush1.msra.mxu0 0.0
    %3139 = vmatprep.subr.mxu0 0.0
    %3140 = vmatpush1.msra.mxu0 0.0
    %3141 = vmatprep.mubr.f32.mxu0 0.0
    %v3142 = vand.u32 %v3069, 4294901760
    %v3143 = vsub.f32 %v3069, %v3142
    %v3144 = vand.u32 %v3143, 4294901760
    %v3145 = vsub.f32 %v3143, %v3144
    %v3146 = vand.u32 %v3145, 4294901760
    %3147 = vmatmul.mubr.f32.gmra.mrb[0].mxu0 %v3146
    %v3148 = vpop.f32.mrb[0].mxu0
    %v3149 = vadd.f32 0.0, %v3148
    %v3150 = vpop.f32.mrb[0].mxu0
    %3151 = vmatprep.mubr.f32.mxu0 0.0
    %v3152 = vand.u32 %v3072, 4294901760
    %v3153 = vsub.f32 %v3072, %v3152
    %v3154 = vand.u32 %v3153, 4294901760
    %v3155 = vsub.f32 %v3153, %v3154
    %v3156 = vand.u32 %v3155, 4294901760
    %3157 = vmatmul.mubr.f32.gmra.mrb[0].mxu0 %v3156
    %v3158 = vpop.f32.mrb[0].mxu0
    %v3159 = vadd.f32 0.0, %v3158
    %v3160 = vpop.f32.mrb[0].mxu0
    %3161 = vdwg.mxu0
    %3162 = vmatprep.subr.mxu0 0.0
    %v3163 = vand.u32 %v2538, 4294901760
    %v3164 = vsub.f32 %v2538, %v3163
    %v3165 = vand.u32 %v3164, 4294901760
    %v3166 = vsub.f32 %v3164, %v3165
    %v3167 = vand.u32 %v3166, 4294901760
    %3168 = vmatpush1.msra.mxu0 %v3167
    %3169 = vmatprep.subr.mxu0 0.0
    %v3170 = vand.u32 %v2539, 4294901760
    %v3171 = vsub.f32 %v2539, %v3170
    %v3172 = vand.u32 %v3171, 4294901760
    %v3173 = vsub.f32 %v3171, %v3172
    %v3174 = vand.u32 %v3173, 4294901760
    %3175 = vmatpush1.msra.mxu0 %v3174
    %3176 = vmatprep.subr.mxu0 0.0
    %v3177 = vand.u32 %v2540, 4294901760
    %v3178 = vsub.f32 %v2540, %v3177
    %v3179 = vand.u32 %v3178, 4294901760
    %v3180 = vsub.f32 %v3178, %v3179
    %v3181 = vand.u32 %v3180, 4294901760
    %3182 = vmatpush1.msra.mxu0 %v3181
    %3183 = vmatprep.subr.mxu0 0.0
    %3184 = vmatpush1.msra.mxu0 0.0
    %3185 = vmatprep.subr.mxu0 0.0
    %3186 = vmatpush1.msra.mxu0 0.0
    %3187 = vmatprep.subr.mxu0 0.0
    %3188 = vmatpush1.msra.mxu0 0.0
    %3189 = vmatprep.subr.mxu0 0.0
    %3190 = vmatpush1.msra.mxu0 0.0
    %3191 = vmatprep.subr.mxu0 0.0
    %3192 = vmatpush1.msra.mxu0 0.0
    %3193 = vmatprep.subr.mxu0 0.0
    %3194 = vmatpush1.msra.mxu0 0.0
    %3195 = vmatprep.subr.mxu0 0.0
    %3196 = vmatpush1.msra.mxu0 0.0
    %3197 = vmatprep.subr.mxu0 0.0
    %3198 = vmatpush1.msra.mxu0 0.0
    %3199 = vmatprep.subr.mxu0 0.0
    %3200 = vmatpush1.msra.mxu0 0.0
    %3201 = vmatprep.subr.mxu0 0.0
    %3202 = vmatpush1.msra.mxu0 0.0
    %3203 = vmatprep.subr.mxu0 0.0
    %3204 = vmatpush1.msra.mxu0 0.0
    %3205 = vmatprep.subr.mxu0 0.0
    %3206 = vmatpush1.msra.mxu0 0.0
    %3207 = vmatprep.subr.mxu0 0.0
    %3208 = vmatpush1.msra.mxu0 0.0
    %3209 = vmatprep.subr.mxu0 0.0
    %3210 = vmatpush1.msra.mxu0 0.0
    %3211 = vmatprep.subr.mxu0 0.0
    %3212 = vmatpush1.msra.mxu0 0.0
    %3213 = vmatprep.subr.mxu0 0.0
    %3214 = vmatpush1.msra.mxu0 0.0
    %3215 = vmatprep.subr.mxu0 0.0
    %3216 = vmatpush1.msra.mxu0 0.0
    %3217 = vmatprep.subr.mxu0 0.0
    %3218 = vmatpush1.msra.mxu0 0.0
    %3219 = vmatprep.subr.mxu0 0.0
    %3220 = vmatpush1.msra.mxu0 0.0
    %3221 = vmatprep.subr.mxu0 0.0
    %3222 = vmatpush1.msra.mxu0 0.0
    %3223 = vmatprep.subr.mxu0 0.0
    %3224 = vmatpush1.msra.mxu0 0.0
    %3225 = vmatprep.subr.mxu0 0.0
    %3226 = vmatpush1.msra.mxu0 0.0
    %3227 = vmatprep.subr.mxu0 0.0
    %3228 = vmatpush1.msra.mxu0 0.0
    %3229 = vmatprep.subr.mxu0 0.0
    %3230 = vmatpush1.msra.mxu0 0.0
    %3231 = vmatprep.subr.mxu0 0.0
    %3232 = vmatpush1.msra.mxu0 0.0
    %3233 = vmatprep.subr.mxu0 0.0
    %3234 = vmatpush1.msra.mxu0 0.0
    %3235 = vmatprep.subr.mxu0 0.0
    %3236 = vmatpush1.msra.mxu0 0.0
    %3237 = vmatprep.subr.mxu0 0.0
    %3238 = vmatpush1.msra.mxu0 0.0
    %3239 = vmatprep.subr.mxu0 0.0
    %3240 = vmatpush1.msra.mxu0 0.0
    %3241 = vmatprep.mubr.f32.mxu0 0.0
    %v3242 = vand.u32 %v3069, 4294901760
    %3243 = vmatmul.mubr.f32.gmra.mrb[0].mxu0 %v3242
    %v3244 = vpop.f32.mrb[0].mxu0
    %v3245 = vadd.f32 %v3149, %v3244
    %v3246 = vpop.f32.mrb[0].mxu0
    %3247 = vmatprep.mubr.f32.mxu0 0.0
    %v3248 = vand.u32 %v3072, 4294901760
    %3249 = vmatmul.mubr.f32.gmra.mrb[0].mxu0 %v3248
    %v3250 = vpop.f32.mrb[0].mxu0
    %v3251 = vadd.f32 %v3159, %v3250
    %v3252 = vpop.f32.mrb[0].mxu0
    %3253 = vdwg.mxu0
    %3254 = vmatprep.subr.mxu0 0.0
    %v3255 = vand.u32 %v2538, 4294901760
    %v3256 = vsub.f32 %v2538, %v3255
    %3257 = vmatpush1.msra.mxu0 %v3256
    %3258 = vmatprep.subr.mxu0 0.0
    %v3259 = vand.u32 %v2539, 4294901760
    %v3260 = vsub.f32 %v2539, %v3259
    %3261 = vmatpush1.msra.mxu0 %v3260
    %3262 = vmatprep.subr.mxu0 0.0
    %v3263 = vand.u32 %v2540, 4294901760
    %v3264 = vsub.f32 %v2540, %v3263
    %3265 = vmatpush1.msra.mxu0 %v3264
    %3266 = vmatprep.subr.mxu0 0.0
    %3267 = vmatpush1.msra.mxu0 0.0
    %3268 = vmatprep.subr.mxu0 0.0
    %3269 = vmatpush1.msra.mxu0 0.0
    %3270 = vmatprep.subr.mxu0 0.0
    %3271 = vmatpush1.msra.mxu0 0.0
    %3272 = vmatprep.subr.mxu0 0.0
    %3273 = vmatpush1.msra.mxu0 0.0
    %3274 = vmatprep.subr.mxu0 0.0
    %3275 = vmatpush1.msra.mxu0 0.0
    %3276 = vmatprep.subr.mxu0 0.0
    %3277 = vmatpush1.msra.mxu0 0.0
    %3278 = vmatprep.subr.mxu0 0.0
    %3279 = vmatpush1.msra.mxu0 0.0
    %3280 = vmatprep.subr.mxu0 0.0
    %3281 = vmatpush1.msra.mxu0 0.0
    %3282 = vmatprep.subr.mxu0 0.0
    %3283 = vmatpush1.msra.mxu0 0.0
    %3284 = vmatprep.subr.mxu0 0.0
    %3285 = vmatpush1.msra.mxu0 0.0
    %3286 = vmatprep.subr.mxu0 0.0
    %3287 = vmatpush1.msra.mxu0 0.0
    %3288 = vmatprep.subr.mxu0 0.0
    %3289 = vmatpush1.msra.mxu0 0.0
    %3290 = vmatprep.subr.mxu0 0.0
    %3291 = vmatpush1.msra.mxu0 0.0
    %3292 = vmatprep.subr.mxu0 0.0
    %3293 = vmatpush1.msra.mxu0 0.0
    %3294 = vmatprep.subr.mxu0 0.0
    %3295 = vmatpush1.msra.mxu0 0.0
    %3296 = vmatprep.subr.mxu0 0.0
    %3297 = vmatpush1.msra.mxu0 0.0
    %3298 = vmatprep.subr.mxu0 0.0
    %3299 = vmatpush1.msra.mxu0 0.0
    %3300 = vmatprep.subr.mxu0 0.0
    %3301 = vmatpush1.msra.mxu0 0.0
    %3302 = vmatprep.subr.mxu0 0.0
    %3303 = vmatpush1.msra.mxu0 0.0
    %3304 = vmatprep.subr.mxu0 0.0
    %3305 = vmatpush1.msra.mxu0 0.0
    %3306 = vmatprep.subr.mxu0 0.0
    %3307 = vmatpush1.msra.mxu0 0.0
    %3308 = vmatprep.subr.mxu0 0.0
    %3309 = vmatpush1.msra.mxu0 0.0
    %3310 = vmatprep.subr.mxu0 0.0
    %3311 = vmatpush1.msra.mxu0 0.0
    %3312 = vmatprep.subr.mxu0 0.0
    %3313 = vmatpush1.msra.mxu0 0.0
    %3314 = vmatprep.subr.mxu0 0.0
    %3315 = vmatpush1.msra.mxu0 0.0
    %3316 = vmatprep.subr.mxu0 0.0
    %3317 = vmatpush1.msra.mxu0 0.0
    %3318 = vmatprep.subr.mxu0 0.0
    %3319 = vmatpush1.msra.mxu0 0.0
    %3320 = vmatprep.subr.mxu0 0.0
    %3321 = vmatpush1.msra.mxu0 0.0
    %3322 = vmatprep.subr.mxu0 0.0
    %3323 = vmatpush1.msra.mxu0 0.0
    %3324 = vmatprep.mubr.f32.mxu0 0.0
    %v3325 = vand.u32 %v3069, 4294901760
    %v3326 = vsub.f32 %v3069, %v3325
    %3327 = vmatmul.mubr.f32.gmra.mrb[0].mxu0 %v3326
    %v3328 = vpop.f32.mrb[0].mxu0
    %v3329 = vadd.f32 %v3245, %v3328
    %v3330 = vpop.f32.mrb[0].mxu0
    %3331 = vmatprep.mubr.f32.mxu0 0.0
    %v3332 = vand.u32 %v3072, 4294901760
    %v3333 = vsub.f32 %v3072, %v3332
    %3334 = vmatmul.mubr.f32.gmra.mrb[0].mxu0 %v3333
    %v3335 = vpop.f32.mrb[0].mxu0
    %v3336 = vadd.f32 %v3251, %v3335
    %v3337 = vpop.f32.mrb[0].mxu0
    %3338 = vdwg.mxu0
    %3339 = vmatprep.subr.mxu0 0.0
    %v3340 = vand.u32 %v2538, 4294901760
    %3341 = vmatpush1.msra.mxu0 %v3340
    %3342 = vmatprep.subr.mxu0 0.0
    %v3343 = vand.u32 %v2539, 4294901760
    %3344 = vmatpush1.msra.mxu0 %v3343
    %3345 = vmatprep.subr.mxu0 0.0
    %v3346 = vand.u32 %v2540, 4294901760
    %3347 = vmatpush1.msra.mxu0 %v3346
    %3348 = vmatprep.subr.mxu0 0.0
    %3349 = vmatpush1.msra.mxu0 0.0
    %3350 = vmatprep.subr.mxu0 0.0
    %3351 = vmatpush1.msra.mxu0 0.0
    %3352 = vmatprep.subr.mxu0 0.0
    %3353 = vmatpush1.msra.mxu0 0.0
    %3354 = vmatprep.subr.mxu0 0.0
    %3355 = vmatpush1.msra.mxu0 0.0
    %3356 = vmatprep.subr.mxu0 0.0
    %3357 = vmatpush1.msra.mxu0 0.0
    %3358 = vmatprep.subr.mxu0 0.0
    %3359 = vmatpush1.msra.mxu0 0.0
    %3360 = vmatprep.subr.mxu0 0.0
    %3361 = vmatpush1.msra.mxu0 0.0
    %3362 = vmatprep.subr.mxu0 0.0
    %3363 = vmatpush1.msra.mxu0 0.0
    %3364 = vmatprep.subr.mxu0 0.0
    %3365 = vmatpush1.msra.mxu0 0.0
    %3366 = vmatprep.subr.mxu0 0.0
    %3367 = vmatpush1.msra.mxu0 0.0
    %3368 = vmatprep.subr.mxu0 0.0
    %3369 = vmatpush1.msra.mxu0 0.0
    %3370 = vmatprep.subr.mxu0 0.0
    %3371 = vmatpush1.msra.mxu0 0.0
    %3372 = vmatprep.subr.mxu0 0.0
    %3373 = vmatpush1.msra.mxu0 0.0
    %3374 = vmatprep.subr.mxu0 0.0
    %3375 = vmatpush1.msra.mxu0 0.0
    %3376 = vmatprep.subr.mxu0 0.0
    %3377 = vmatpush1.msra.mxu0 0.0
    %3378 = vmatprep.subr.mxu0 0.0
    %3379 = vmatpush1.msra.mxu0 0.0
    %3380 = vmatprep.subr.mxu0 0.0
    %3381 = vmatpush1.msra.mxu0 0.0
    %3382 = vmatprep.subr.mxu0 0.0
    %3383 = vmatpush1.msra.mxu0 0.0
    %3384 = vmatprep.subr.mxu0 0.0
    %3385 = vmatpush1.msra.mxu0 0.0
    %3386 = vmatprep.subr.mxu0 0.0
    %3387 = vmatpush1.msra.mxu0 0.0
    %3388 = vmatprep.subr.mxu0 0.0
    %3389 = vmatpush1.msra.mxu0 0.0
    %3390 = vmatprep.subr.mxu0 0.0
    %3391 = vmatpush1.msra.mxu0 0.0
    %3392 = vmatprep.subr.mxu0 0.0
    %3393 = vmatpush1.msra.mxu0 0.0
    %3394 = vmatprep.subr.mxu0 0.0
    %3395 = vmatpush1.msra.mxu0 0.0
    %3396 = vmatprep.subr.mxu0 0.0
    %3397 = vmatpush1.msra.mxu0 0.0
    %3398 = vmatprep.subr.mxu0 0.0
    %3399 = vmatpush1.msra.mxu0 0.0
    %3400 = vmatprep.subr.mxu0 0.0
    %3401 = vmatpush1.msra.mxu0 0.0
    %3402 = vmatprep.subr.mxu0 0.0
    %3403 = vmatpush1.msra.mxu0 0.0
    %3404 = vmatprep.subr.mxu0 0.0
    %3405 = vmatpush1.msra.mxu0 0.0
    %3406 = vmatprep.mubr.f32.mxu0 0.0
    %v3407 = vand.u32 %v3069, 4294901760
    %v3408 = vsub.f32 %v3069, %v3407
    %v3409 = vand.u32 %v3408, 4294901760
    %3410 = vmatmul.mubr.f32.gmra.mrb[0].mxu0 %v3409
    %v3411 = vpop.f32.mrb[0].mxu0
    %v3412 = vadd.f32 %v3329, %v3411
    %v3413 = vpop.f32.mrb[0].mxu0
    %3414 = vmatprep.mubr.f32.mxu0 0.0
    %v3415 = vand.u32 %v3072, 4294901760
    %v3416 = vsub.f32 %v3072, %v3415
    %v3417 = vand.u32 %v3416, 4294901760
    %3418 = vmatmul.mubr.f32.gmra.mrb[0].mxu0 %v3417
    %v3419 = vpop.f32.mrb[0].mxu0
    %v3420 = vadd.f32 %v3336, %v3419
    %v3421 = vpop.f32.mrb[0].mxu0
    %3422 = vdwg.mxu0
    %3423 = vmatprep.subr.mxu0 0.0
    %v3424 = vand.u32 %v2538, 4294901760
    %v3425 = vsub.f32 %v2538, %v3424
    %v3426 = vand.u32 %v3425, 4294901760
    %3427 = vmatpush1.msra.mxu0 %v3426
    %3428 = vmatprep.subr.mxu0 0.0
    %v3429 = vand.u32 %v2539, 4294901760
    %v3430 = vsub.f32 %v2539, %v3429
    %v3431 = vand.u32 %v3430, 4294901760
    %3432 = vmatpush1.msra.mxu0 %v3431
    %3433 = vmatprep.subr.mxu0 0.0
    %v3434 = vand.u32 %v2540, 4294901760
    %v3435 = vsub.f32 %v2540, %v3434
    %v3436 = vand.u32 %v3435, 4294901760
    %3437 = vmatpush1.msra.mxu0 %v3436
    %3438 = vmatprep.subr.mxu0 0.0
    %3439 = vmatpush1.msra.mxu0 0.0
    %3440 = vmatprep.subr.mxu0 0.0
    %3441 = vmatpush1.msra.mxu0 0.0
    %3442 = vmatprep.subr.mxu0 0.0
    %3443 = vmatpush1.msra.mxu0 0.0
    %3444 = vmatprep.subr.mxu0 0.0
    %3445 = vmatpush1.msra.mxu0 0.0
    %3446 = vmatprep.subr.mxu0 0.0
    %3447 = vmatpush1.msra.mxu0 0.0
    %3448 = vmatprep.subr.mxu0 0.0
    %3449 = vmatpush1.msra.mxu0 0.0
    %3450 = vmatprep.subr.mxu0 0.0
    %3451 = vmatpush1.msra.mxu0 0.0
    %3452 = vmatprep.subr.mxu0 0.0
    %3453 = vmatpush1.msra.mxu0 0.0
    %3454 = vmatprep.subr.mxu0 0.0
    %3455 = vmatpush1.msra.mxu0 0.0
    %3456 = vmatprep.subr.mxu0 0.0
    %3457 = vmatpush1.msra.mxu0 0.0
    %3458 = vmatprep.subr.mxu0 0.0
    %3459 = vmatpush1.msra.mxu0 0.0
    %3460 = vmatprep.subr.mxu0 0.0
    %3461 = vmatpush1.msra.mxu0 0.0
    %3462 = vmatprep.subr.mxu0 0.0
    %3463 = vmatpush1.msra.mxu0 0.0
    %3464 = vmatprep.subr.mxu0 0.0
    %3465 = vmatpush1.msra.mxu0 0.0
    %3466 = vmatprep.subr.mxu0 0.0
    %3467 = vmatpush1.msra.mxu0 0.0
    %3468 = vmatprep.subr.mxu0 0.0
    %3469 = vmatpush1.msra.mxu0 0.0
    %3470 = vmatprep.subr.mxu0 0.0
    %3471 = vmatpush1.msra.mxu0 0.0
    %3472 = vmatprep.subr.mxu0 0.0
    %3473 = vmatpush1.msra.mxu0 0.0
    %3474 = vmatprep.subr.mxu0 0.0
    %3475 = vmatpush1.msra.mxu0 0.0
    %3476 = vmatprep.subr.mxu0 0.0
    %3477 = vmatpush1.msra.mxu0 0.0
    %3478 = vmatprep.subr.mxu0 0.0
    %3479 = vmatpush1.msra.mxu0 0.0
    %3480 = vmatprep.subr.mxu0 0.0
    %3481 = vmatpush1.msra.mxu0 0.0
    %3482 = vmatprep.subr.mxu0 0.0
    %3483 = vmatpush1.msra.mxu0 0.0
    %3484 = vmatprep.subr.mxu0 0.0
    %3485 = vmatpush1.msra.mxu0 0.0
    %3486 = vmatprep.subr.mxu0 0.0
    %3487 = vmatpush1.msra.mxu0 0.0
    %3488 = vmatprep.subr.mxu0 0.0
    %3489 = vmatpush1.msra.mxu0 0.0
    %3490 = vmatprep.subr.mxu0 0.0
    %3491 = vmatpush1.msra.mxu0 0.0
    %3492 = vmatprep.subr.mxu0 0.0
    %3493 = vmatpush1.msra.mxu0 0.0
    %3494 = vmatprep.subr.mxu0 0.0
    %3495 = vmatpush1.msra.mxu0 0.0
    %3496 = vmatprep.mubr.f32.mxu0 0.0
    %v3497 = vand.u32 %v3069, 4294901760
    %3498 = vmatmul.mubr.f32.gmra.mrb[0].mxu0 %v3497
    %v3499 = vpop.f32.mrb[0].mxu0
    %v3500 = vadd.f32 %v3412, %v3499
    %v3501 = vpop.f32.mrb[0].mxu0
    %3502 = vmatprep.mubr.f32.mxu0 0.0
    %v3503 = vand.u32 %v3072, 4294901760
    %3504 = vmatmul.mubr.f32.gmra.mrb[0].mxu0 %v3503
    %v3505 = vpop.f32.mrb[0].mxu0
    %v3506 = vadd.f32 %v3420, %v3505
    %v3507 = vpop.f32.mrb[0].mxu0
    %3508 = vdwg.mxu0
    %3509 = vmatprep.subr.mxu0 0.0
    %v3510 = vand.u32 %v2538, 4294901760
    %3511 = vmatpush1.msra.mxu0 %v3510
    %3512 = vmatprep.subr.mxu0 0.0
    %v3513 = vand.u32 %v2539, 4294901760
    %3514 = vmatpush1.msra.mxu0 %v3513
    %3515 = vmatprep.subr.mxu0 0.0
    %v3516 = vand.u32 %v2540, 4294901760
    %3517 = vmatpush1.msra.mxu0 %v3516
    %3518 = vmatprep.subr.mxu0 0.0
    %3519 = vmatpush1.msra.mxu0 0.0
    %3520 = vmatprep.subr.mxu0 0.0
    %3521 = vmatpush1.msra.mxu0 0.0
    %3522 = vmatprep.subr.mxu0 0.0
    %3523 = vmatpush1.msra.mxu0 0.0
    %3524 = vmatprep.subr.mxu0 0.0
    %3525 = vmatpush1.msra.mxu0 0.0
    %3526 = vmatprep.subr.mxu0 0.0
    %3527 = vmatpush1.msra.mxu0 0.0
    %3528 = vmatprep.subr.mxu0 0.0
    %3529 = vmatpush1.msra.mxu0 0.0
    %3530 = vmatprep.subr.mxu0 0.0
    %3531 = vmatpush1.msra.mxu0 0.0
    %3532 = vmatprep.subr.mxu0 0.0
    %3533 = vmatpush1.msra.mxu0 0.0
    %3534 = vmatprep.subr.mxu0 0.0
    %3535 = vmatpush1.msra.mxu0 0.0
    %3536 = vmatprep.subr.mxu0 0.0
    %3537 = vmatpush1.msra.mxu0 0.0
    %3538 = vmatprep.subr.mxu0 0.0
    %3539 = vmatpush1.msra.mxu0 0.0
    %3540 = vmatprep.subr.mxu0 0.0
    %3541 = vmatpush1.msra.mxu0 0.0
    %3542 = vmatprep.subr.mxu0 0.0
    %3543 = vmatpush1.msra.mxu0 0.0
    %3544 = vmatprep.subr.mxu0 0.0
    %3545 = vmatpush1.msra.mxu0 0.0
    %3546 = vmatprep.subr.mxu0 0.0
    %3547 = vmatpush1.msra.mxu0 0.0
    %3548 = vmatprep.subr.mxu0 0.0
    %3549 = vmatpush1.msra.mxu0 0.0
    %3550 = vmatprep.subr.mxu0 0.0
    %3551 = vmatpush1.msra.mxu0 0.0
    %3552 = vmatprep.subr.mxu0 0.0
    %3553 = vmatpush1.msra.mxu0 0.0
    %3554 = vmatprep.subr.mxu0 0.0
    %3555 = vmatpush1.msra.mxu0 0.0
    %3556 = vmatprep.subr.mxu0 0.0
    %3557 = vmatpush1.msra.mxu0 0.0
    %3558 = vmatprep.subr.mxu0 0.0
    %3559 = vmatpush1.msra.mxu0 0.0
    %3560 = vmatprep.subr.mxu0 0.0
    %3561 = vmatpush1.msra.mxu0 0.0
    %3562 = vmatprep.subr.mxu0 0.0
    %3563 = vmatpush1.msra.mxu0 0.0
    %3564 = vmatprep.subr.mxu0 0.0
    %3565 = vmatpush1.msra.mxu0 0.0
    %3566 = vmatprep.subr.mxu0 0.0
    %3567 = vmatpush1.msra.mxu0 0.0
    %3568 = vmatprep.subr.mxu0 0.0
    %3569 = vmatpush1.msra.mxu0 0.0
    %3570 = vmatprep.subr.mxu0 0.0
    %3571 = vmatpush1.msra.mxu0 0.0
    %3572 = vmatprep.subr.mxu0 0.0
    %3573 = vmatpush1.msra.mxu0 0.0
    %3574 = vmatprep.subr.mxu0 0.0
    %3575 = vmatpush1.msra.mxu0 0.0
    %3576 = vmatprep.mubr.f32.mxu0 0.0
    %v3577 = vand.u32 %v3069, 4294901760
    %3578 = vmatmul.mubr.f32.gmra.mrb[0].mxu0 %v3577
    %v3579 = vpop.f32.mrb[0].mxu0
    %v3580 = vadd.f32 %v3500, %v3579
    %v3581 = vpop.f32.mrb[0].mxu0
    %3582 = vmatprep.mubr.f32.mxu0 0.0
    %v3583 = vand.u32 %v3072, 4294901760
    %3584 = vmatmul.mubr.f32.gmra.mrb[0].mxu0 %v3583
    %v3585 = vpop.f32.mrb[0].mxu0
    %v3586 = vadd.f32 %v3506, %v3585
    %v3587 = vpop.f32.mrb[0].mxu0
    %3588 = vdwg.mxu0
    %v3589 = vmax.f32 %v3056, %v3580
    %v3590 = vmax.f32 %v3062, %v3586
    %v3591 = vld [vmem:[%s13] sm:$0xff]
    %vm3592 = vcmask 97280
    %v3594 = vsel %vm3592, %v3591, 0
    %vm3596 = vcmask 1043456
    %v3598 = vsel %vm3596, %v3590, 0
    %3600 = vmatprep.subr.mxu0 0.0
    %v3601 = vand.u32 %v3589, 4294901760
    %3602 = vmatpush1.msra.mxu0 %v3601
    %3603 = vmatprep.subr.mxu0 0.0
    %v3604 = vand.u32 %v3598, 4294901760
    %3605 = vmatpush1.msra.mxu0 %v3604
    %3606 = vmatprep.subr.mxu0 0.0
    %3607 = vmatpush1.msra.mxu0 0.0
    %3608 = vmatprep.subr.mxu0 0.0
    %3609 = vmatpush1.msra.mxu0 0.0
    %3610 = vmatprep.subr.mxu0 0.0
    %3611 = vmatpush1.msra.mxu0 0.0
    %3612 = vmatprep.subr.mxu0 0.0
    %3613 = vmatpush1.msra.mxu0 0.0
    %3614 = vmatprep.subr.mxu0 0.0
    %3615 = vmatpush1.msra.mxu0 0.0
    %3616 = vmatprep.subr.mxu0 0.0
    %3617 = vmatpush1.msra.mxu0 0.0
    %3618 = vmatprep.subr.mxu0 0.0
    %3619 = vmatpush1.msra.mxu0 0.0
    %3620 = vmatprep.subr.mxu0 0.0
    %3621 = vmatpush1.msra.mxu0 0.0
    %3622 = vmatprep.subr.mxu0 0.0
    %3623 = vmatpush1.msra.mxu0 0.0
    %3624 = vmatprep.subr.mxu0 0.0
    %3625 = vmatpush1.msra.mxu0 0.0
    %3626 = vmatprep.subr.mxu0 0.0
    %3627 = vmatpush1.msra.mxu0 0.0
    %3628 = vmatprep.subr.mxu0 0.0
    %3629 = vmatpush1.msra.mxu0 0.0
    %3630 = vmatprep.subr.mxu0 0.0
    %3631 = vmatpush1.msra.mxu0 0.0
    %3632 = vmatprep.subr.mxu0 0.0
    %3633 = vmatpush1.msra.mxu0 0.0
    %3634 = vmatprep.subr.mxu0 0.0
    %3635 = vmatpush1.msra.mxu0 0.0
    %3636 = vmatprep.subr.mxu0 0.0
    %3637 = vmatpush1.msra.mxu0 0.0
    %3638 = vmatprep.subr.mxu0 0.0
    %3639 = vmatpush1.msra.mxu0 0.0
    %3640 = vmatprep.subr.mxu0 0.0
    %3641 = vmatpush1.msra.mxu0 0.0
    %3642 = vmatprep.subr.mxu0 0.0
    %3643 = vmatpush1.msra.mxu0 0.0
    %3644 = vmatprep.subr.mxu0 0.0
    %3645 = vmatpush1.msra.mxu0 0.0
    %3646 = vmatprep.subr.mxu0 0.0
    %3647 = vmatpush1.msra.mxu0 0.0
    %3648 = vmatprep.subr.mxu0 0.0
    %3649 = vmatpush1.msra.mxu0 0.0
    %3650 = vmatprep.subr.mxu0 0.0
    %3651 = vmatpush1.msra.mxu0 0.0
    %3652 = vmatprep.subr.mxu0 0.0
    %3653 = vmatpush1.msra.mxu0 0.0
    %3654 = vmatprep.subr.mxu0 0.0
    %3655 = vmatpush1.msra.mxu0 0.0
    %3656 = vmatprep.subr.mxu0 0.0
    %3657 = vmatpush1.msra.mxu0 0.0
    %3658 = vmatprep.subr.mxu0 0.0
    %3659 = vmatpush1.msra.mxu0 0.0
    %3660 = vmatprep.subr.mxu0 0.0
    %3661 = vmatpush1.msra.mxu0 0.0
    %3662 = vmatprep.subr.mxu0 0.0
    %3663 = vmatpush1.msra.mxu0 0.0
    %3664 = vmatprep.subr.mxu0 0.0
    %3665 = vmatpush1.msra.mxu0 0.0
    %3666 = vmatprep.mubr.f32.mxu0 0.0
    %v3667 = vand.u32 %v3594, 4294901760
    %v3668 = vsub.f32 %v3594, %v3667
    %v3669 = vand.u32 %v3668, 4294901760
    %v3670 = vsub.f32 %v3668, %v3669
    %v3671 = vand.u32 %v3670, 4294901760
    %3672 = vmatmul.mubr.f32.gmra.mrb[0].mxu0 %v3671
    %v3673 = vpop.f32.mrb[0].mxu0
    %v3674 = vadd.f32 0.0, %v3673
    %v3675 = vpop.f32.mrb[0].mxu0
    %3676 = vdwg.mxu0
    %3677 = vmatprep.subr.mxu0 0.0
    %v3678 = vand.u32 %v3589, 4294901760
    %v3679 = vsub.f32 %v3589, %v3678
    %v3680 = vand.u32 %v3679, 4294901760
    %v3681 = vsub.f32 %v3679, %v3680
    %v3682 = vand.u32 %v3681, 4294901760
    %3683 = vmatpush1.msra.mxu0 %v3682
    %3684 = vmatprep.subr.mxu0 0.0
    %v3685 = vand.u32 %v3598, 4294901760
    %v3686 = vsub.f32 %v3598, %v3685
    %v3687 = vand.u32 %v3686, 4294901760
    %v3688 = vsub.f32 %v3686, %v3687
    %v3689 = vand.u32 %v3688, 4294901760
    %3690 = vmatpush1.msra.mxu0 %v3689
    %3691 = vmatprep.subr.mxu0 0.0
    %3692 = vmatpush1.msra.mxu0 0.0
    %3693 = vmatprep.subr.mxu0 0.0
    %3694 = vmatpush1.msra.mxu0 0.0
    %3695 = vmatprep.subr.mxu0 0.0
    %3696 = vmatpush1.msra.mxu0 0.0
    %3697 = vmatprep.subr.mxu0 0.0
    %3698 = vmatpush1.msra.mxu0 0.0
    %3699 = vmatprep.subr.mxu0 0.0
    %3700 = vmatpush1.msra.mxu0 0.0
    %3701 = vmatprep.subr.mxu0 0.0
    %3702 = vmatpush1.msra.mxu0 0.0
    %3703 = vmatprep.subr.mxu0 0.0
    %3704 = vmatpush1.msra.mxu0 0.0
    %3705 = vmatprep.subr.mxu0 0.0
    %3706 = vmatpush1.msra.mxu0 0.0
    %3707 = vmatprep.subr.mxu0 0.0
    %3708 = vmatpush1.msra.mxu0 0.0
    %3709 = vmatprep.subr.mxu0 0.0
    %3710 = vmatpush1.msra.mxu0 0.0
    %3711 = vmatprep.subr.mxu0 0.0
    %3712 = vmatpush1.msra.mxu0 0.0
    %3713 = vmatprep.subr.mxu0 0.0
    %3714 = vmatpush1.msra.mxu0 0.0
    %3715 = vmatprep.subr.mxu0 0.0
    %3716 = vmatpush1.msra.mxu0 0.0
    %3717 = vmatprep.subr.mxu0 0.0
    %3718 = vmatpush1.msra.mxu0 0.0
    %3719 = vmatprep.subr.mxu0 0.0
    %3720 = vmatpush1.msra.mxu0 0.0
    %3721 = vmatprep.subr.mxu0 0.0
    %3722 = vmatpush1.msra.mxu0 0.0
    %3723 = vmatprep.subr.mxu0 0.0
    %3724 = vmatpush1.msra.mxu0 0.0
    %3725 = vmatprep.subr.mxu0 0.0
    %3726 = vmatpush1.msra.mxu0 0.0
    %3727 = vmatprep.subr.mxu0 0.0
    %3728 = vmatpush1.msra.mxu0 0.0
    %3729 = vmatprep.subr.mxu0 0.0
    %3730 = vmatpush1.msra.mxu0 0.0
    %3731 = vmatprep.subr.mxu0 0.0
    %3732 = vmatpush1.msra.mxu0 0.0
    %3733 = vmatprep.subr.mxu0 0.0
    %3734 = vmatpush1.msra.mxu0 0.0
    %3735 = vmatprep.subr.mxu0 0.0
    %3736 = vmatpush1.msra.mxu0 0.0
    %3737 = vmatprep.subr.mxu0 0.0
    %3738 = vmatpush1.msra.mxu0 0.0
    %3739 = vmatprep.subr.mxu0 0.0
    %3740 = vmatpush1.msra.mxu0 0.0
    %3741 = vmatprep.subr.mxu0 0.0
    %3742 = vmatpush1.msra.mxu0 0.0
    %3743 = vmatprep.subr.mxu0 0.0
    %3744 = vmatpush1.msra.mxu0 0.0
    %3745 = vmatprep.subr.mxu0 0.0
    %3746 = vmatpush1.msra.mxu0 0.0
    %3747 = vmatprep.subr.mxu0 0.0
    %3748 = vmatpush1.msra.mxu0 0.0
    %3749 = vmatprep.subr.mxu0 0.0
    %3750 = vmatpush1.msra.mxu0 0.0
    %3751 = vmatprep.mubr.f32.mxu0 0.0
    %v3752 = vand.u32 %v3594, 4294901760
    %3753 = vmatmul.mubr.f32.gmra.mrb[0].mxu0 %v3752
    %v3754 = vpop.f32.mrb[0].mxu0
    %v3755 = vadd.f32 %v3674, %v3754
    %v3756 = vpop.f32.mrb[0].mxu0
    %3757 = vdwg.mxu0
    %3758 = vmatprep.subr.mxu0 0.0
    %v3759 = vand.u32 %v3589, 4294901760
    %v3760 = vsub.f32 %v3589, %v3759
    %3761 = vmatpush1.msra.mxu0 %v3760
    %3762 = vmatprep.subr.mxu0 0.0
    %v3763 = vand.u32 %v3598, 4294901760
    %v3764 = vsub.f32 %v3598, %v3763
    %3765 = vmatpush1.msra.mxu0 %v3764
    %3766 = vmatprep.subr.mxu0 0.0
    %3767 = vmatpush1.msra.mxu0 0.0
    %3768 = vmatprep.subr.mxu0 0.0
    %3769 = vmatpush1.msra.mxu0 0.0
    %3770 = vmatprep.subr.mxu0 0.0
    %3771 = vmatpush1.msra.mxu0 0.0
    %3772 = vmatprep.subr.mxu0 0.0
    %3773 = vmatpush1.msra.mxu0 0.0
    %3774 = vmatprep.subr.mxu0 0.0
    %3775 = vmatpush1.msra.mxu0 0.0
    %3776 = vmatprep.subr.mxu0 0.0
    %3777 = vmatpush1.msra.mxu0 0.0
    %3778 = vmatprep.subr.mxu0 0.0
    %3779 = vmatpush1.msra.mxu0 0.0
    %3780 = vmatprep.subr.mxu0 0.0
    %3781 = vmatpush1.msra.mxu0 0.0
    %3782 = vmatprep.subr.mxu0 0.0
    %3783 = vmatpush1.msra.mxu0 0.0
    %3784 = vmatprep.subr.mxu0 0.0
    %3785 = vmatpush1.msra.mxu0 0.0
    %3786 = vmatprep.subr.mxu0 0.0
    %3787 = vmatpush1.msra.mxu0 0.0
    %3788 = vmatprep.subr.mxu0 0.0
    %3789 = vmatpush1.msra.mxu0 0.0
    %3790 = vmatprep.subr.mxu0 0.0
    %3791 = vmatpush1.msra.mxu0 0.0
    %3792 = vmatprep.subr.mxu0 0.0
    %3793 = vmatpush1.msra.mxu0 0.0
    %3794 = vmatprep.subr.mxu0 0.0
    %3795 = vmatpush1.msra.mxu0 0.0
    %3796 = vmatprep.subr.mxu0 0.0
    %3797 = vmatpush1.msra.mxu0 0.0
    %3798 = vmatprep.subr.mxu0 0.0
    %3799 = vmatpush1.msra.mxu0 0.0
    %3800 = vmatprep.subr.mxu0 0.0
    %3801 = vmatpush1.msra.mxu0 0.0
    %3802 = vmatprep.subr.mxu0 0.0
    %3803 = vmatpush1.msra.mxu0 0.0
    %3804 = vmatprep.subr.mxu0 0.0
    %3805 = vmatpush1.msra.mxu0 0.0
    %3806 = vmatprep.subr.mxu0 0.0
    %3807 = vmatpush1.msra.mxu0 0.0
    %3808 = vmatprep.subr.mxu0 0.0
    %3809 = vmatpush1.msra.mxu0 0.0
    %3810 = vmatprep.subr.mxu0 0.0
    %3811 = vmatpush1.msra.mxu0 0.0
    %3812 = vmatprep.subr.mxu0 0.0
    %3813 = vmatpush1.msra.mxu0 0.0
    %3814 = vmatprep.subr.mxu0 0.0
    %3815 = vmatpush1.msra.mxu0 0.0
    %3816 = vmatprep.subr.mxu0 0.0
    %3817 = vmatpush1.msra.mxu0 0.0
    %3818 = vmatprep.subr.mxu0 0.0
    %3819 = vmatpush1.msra.mxu0 0.0
    %3820 = vmatprep.subr.mxu0 0.0
    %3821 = vmatpush1.msra.mxu0 0.0
    %3822 = vmatprep.subr.mxu0 0.0
    %3823 = vmatpush1.msra.mxu0 0.0
    %3824 = vmatprep.subr.mxu0 0.0
    %3825 = vmatpush1.msra.mxu0 0.0
    %3826 = vmatprep.mubr.f32.mxu0 0.0
    %v3827 = vand.u32 %v3594, 4294901760
    %v3828 = vsub.f32 %v3594, %v3827
    %3829 = vmatmul.mubr.f32.gmra.mrb[0].mxu0 %v3828
    %v3830 = vpop.f32.mrb[0].mxu0
    %v3831 = vadd.f32 %v3755, %v3830
    %v3832 = vpop.f32.mrb[0].mxu0
    %3833 = vdwg.mxu0
    %3834 = vmatprep.subr.mxu0 0.0
    %v3835 = vand.u32 %v3589, 4294901760
    %3836 = vmatpush1.msra.mxu0 %v3835
    %3837 = vmatprep.subr.mxu0 0.0
    %v3838 = vand.u32 %v3598, 4294901760
    %3839 = vmatpush1.msra.mxu0 %v3838
    %3840 = vmatprep.subr.mxu0 0.0
    %3841 = vmatpush1.msra.mxu0 0.0
    %3842 = vmatprep.subr.mxu0 0.0
    %3843 = vmatpush1.msra.mxu0 0.0
    %3844 = vmatprep.subr.mxu0 0.0
    %3845 = vmatpush1.msra.mxu0 0.0
    %3846 = vmatprep.subr.mxu0 0.0
    %3847 = vmatpush1.msra.mxu0 0.0
    %3848 = vmatprep.subr.mxu0 0.0
    %3849 = vmatpush1.msra.mxu0 0.0
    %3850 = vmatprep.subr.mxu0 0.0
    %3851 = vmatpush1.msra.mxu0 0.0
    %3852 = vmatprep.subr.mxu0 0.0
    %3853 = vmatpush1.msra.mxu0 0.0
    %3854 = vmatprep.subr.mxu0 0.0
    %3855 = vmatpush1.msra.mxu0 0.0
    %3856 = vmatprep.subr.mxu0 0.0
    %3857 = vmatpush1.msra.mxu0 0.0
    %3858 = vmatprep.subr.mxu0 0.0
    %3859 = vmatpush1.msra.mxu0 0.0
    %3860 = vmatprep.subr.mxu0 0.0
    %3861 = vmatpush1.msra.mxu0 0.0
    %3862 = vmatprep.subr.mxu0 0.0
    %3863 = vmatpush1.msra.mxu0 0.0
    %3864 = vmatprep.subr.mxu0 0.0
    %3865 = vmatpush1.msra.mxu0 0.0
    %3866 = vmatprep.subr.mxu0 0.0
    %3867 = vmatpush1.msra.mxu0 0.0
    %3868 = vmatprep.subr.mxu0 0.0
    %3869 = vmatpush1.msra.mxu0 0.0
    %3870 = vmatprep.subr.mxu0 0.0
    %3871 = vmatpush1.msra.mxu0 0.0
    %3872 = vmatprep.subr.mxu0 0.0
    %3873 = vmatpush1.msra.mxu0 0.0
    %3874 = vmatprep.subr.mxu0 0.0
    %3875 = vmatpush1.msra.mxu0 0.0
    %3876 = vmatprep.subr.mxu0 0.0
    %3877 = vmatpush1.msra.mxu0 0.0
    %3878 = vmatprep.subr.mxu0 0.0
    %3879 = vmatpush1.msra.mxu0 0.0
    %3880 = vmatprep.subr.mxu0 0.0
    %3881 = vmatpush1.msra.mxu0 0.0
    %3882 = vmatprep.subr.mxu0 0.0
    %3883 = vmatpush1.msra.mxu0 0.0
    %3884 = vmatprep.subr.mxu0 0.0
    %3885 = vmatpush1.msra.mxu0 0.0
    %3886 = vmatprep.subr.mxu0 0.0
    %3887 = vmatpush1.msra.mxu0 0.0
    %3888 = vmatprep.subr.mxu0 0.0
    %3889 = vmatpush1.msra.mxu0 0.0
    %3890 = vmatprep.subr.mxu0 0.0
    %3891 = vmatpush1.msra.mxu0 0.0
    %3892 = vmatprep.subr.mxu0 0.0
    %3893 = vmatpush1.msra.mxu0 0.0
    %3894 = vmatprep.subr.mxu0 0.0
    %3895 = vmatpush1.msra.mxu0 0.0
    %3896 = vmatprep.subr.mxu0 0.0
    %3897 = vmatpush1.msra.mxu0 0.0
    %3898 = vmatprep.subr.mxu0 0.0
    %3899 = vmatpush1.msra.mxu0 0.0
    %3900 = vmatprep.mubr.f32.mxu0 0.0
    %v3901 = vand.u32 %v3594, 4294901760
    %v3902 = vsub.f32 %v3594, %v3901
    %v3903 = vand.u32 %v3902, 4294901760
    %3904 = vmatmul.mubr.f32.gmra.mrb[0].mxu0 %v3903
    %v3905 = vpop.f32.mrb[0].mxu0
    %v3906 = vadd.f32 %v3831, %v3905
    %v3907 = vpop.f32.mrb[0].mxu0
    %3908 = vdwg.mxu0
    %3909 = vmatprep.subr.mxu0 0.0
    %v3910 = vand.u32 %v3589, 4294901760
    %v3911 = vsub.f32 %v3589, %v3910
    %v3912 = vand.u32 %v3911, 4294901760
    %3913 = vmatpush1.msra.mxu0 %v3912
    %3914 = vmatprep.subr.mxu0 0.0
    %v3915 = vand.u32 %v3598, 4294901760
    %v3916 = vsub.f32 %v3598, %v3915
    %v3917 = vand.u32 %v3916, 4294901760
    %3918 = vmatpush1.msra.mxu0 %v3917
    %3919 = vmatprep.subr.mxu0 0.0
    %3920 = vmatpush1.msra.mxu0 0.0
    %3921 = vmatprep.subr.mxu0 0.0
    %3922 = vmatpush1.msra.mxu0 0.0
    %3923 = vmatprep.subr.mxu0 0.0
    %3924 = vmatpush1.msra.mxu0 0.0
    %3925 = vmatprep.subr.mxu0 0.0
    %3926 = vmatpush1.msra.mxu0 0.0
    %3927 = vmatprep.subr.mxu0 0.0
    %3928 = vmatpush1.msra.mxu0 0.0
    %3929 = vmatprep.subr.mxu0 0.0
    %3930 = vmatpush1.msra.mxu0 0.0
    %3931 = vmatprep.subr.mxu0 0.0
    %3932 = vmatpush1.msra.mxu0 0.0
    %3933 = vmatprep.subr.mxu0 0.0
    %3934 = vmatpush1.msra.mxu0 0.0
    %3935 = vmatprep.subr.mxu0 0.0
    %3936 = vmatpush1.msra.mxu0 0.0
    %3937 = vmatprep.subr.mxu0 0.0
    %3938 = vmatpush1.msra.mxu0 0.0
    %3939 = vmatprep.subr.mxu0 0.0
    %3940 = vmatpush1.msra.mxu0 0.0
    %3941 = vmatprep.subr.mxu0 0.0
    %3942 = vmatpush1.msra.mxu0 0.0
    %3943 = vmatprep.subr.mxu0 0.0
    %3944 = vmatpush1.msra.mxu0 0.0
    %3945 = vmatprep.subr.mxu0 0.0
    %3946 = vmatpush1.msra.mxu0 0.0
    %3947 = vmatprep.subr.mxu0 0.0
    %3948 = vmatpush1.msra.mxu0 0.0
    %3949 = vmatprep.subr.mxu0 0.0
    %3950 = vmatpush1.msra.mxu0 0.0
    %3951 = vmatprep.subr.mxu0 0.0
    %3952 = vmatpush1.msra.mxu0 0.0
    %3953 = vmatprep.subr.mxu0 0.0
    %3954 = vmatpush1.msra.mxu0 0.0
    %3955 = vmatprep.subr.mxu0 0.0
    %3956 = vmatpush1.msra.mxu0 0.0
    %3957 = vmatprep.subr.mxu0 0.0
    %3958 = vmatpush1.msra.mxu0 0.0
    %3959 = vmatprep.subr.mxu0 0.0
    %3960 = vmatpush1.msra.mxu0 0.0
    %3961 = vmatprep.subr.mxu0 0.0
    %3962 = vmatpush1.msra.mxu0 0.0
    %3963 = vmatprep.subr.mxu0 0.0
    %3964 = vmatpush1.msra.mxu0 0.0
    %3965 = vmatprep.subr.mxu0 0.0
    %3966 = vmatpush1.msra.mxu0 0.0
    %3967 = vmatprep.subr.mxu0 0.0
    %3968 = vmatpush1.msra.mxu0 0.0
    %3969 = vmatprep.subr.mxu0 0.0
    %3970 = vmatpush1.msra.mxu0 0.0
    %3971 = vmatprep.subr.mxu0 0.0
    %3972 = vmatpush1.msra.mxu0 0.0
    %3973 = vmatprep.subr.mxu0 0.0
    %3974 = vmatpush1.msra.mxu0 0.0
    %3975 = vmatprep.subr.mxu0 0.0
    %3976 = vmatpush1.msra.mxu0 0.0
    %3977 = vmatprep.subr.mxu0 0.0
    %3978 = vmatpush1.msra.mxu0 0.0
    %3979 = vmatprep.mubr.f32.mxu0 0.0
    %v3980 = vand.u32 %v3594, 4294901760
    %3981 = vmatmul.mubr.f32.gmra.mrb[0].mxu0 %v3980
    %v3982 = vpop.f32.mrb[0].mxu0
    %v3983 = vadd.f32 %v3906, %v3982
    %v3984 = vpop.f32.mrb[0].mxu0
    %3985 = vdwg.mxu0
    %3986 = vmatprep.subr.mxu0 0.0
    %v3987 = vand.u32 %v3589, 4294901760
    %3988 = vmatpush1.msra.mxu0 %v3987
    %3989 = vmatprep.subr.mxu0 0.0
    %v3990 = vand.u32 %v3598, 4294901760
    %3991 = vmatpush1.msra.mxu0 %v3990
    %3992 = vmatprep.subr.mxu0 0.0
    %3993 = vmatpush1.msra.mxu0 0.0
    %3994 = vmatprep.subr.mxu0 0.0
    %3995 = vmatpush1.msra.mxu0 0.0
    %3996 = vmatprep.subr.mxu0 0.0
    %3997 = vmatpush1.msra.mxu0 0.0
    %3998 = vmatprep.subr.mxu0 0.0
    %3999 = vmatpush1.msra.mxu0 0.0
    %4000 = vmatprep.subr.mxu0 0.0
    %4001 = vmatpush1.msra.mxu0 0.0
    %4002 = vmatprep.subr.mxu0 0.0
    %4003 = vmatpush1.msra.mxu0 0.0
    %4004 = vmatprep.subr.mxu0 0.0
    %4005 = vmatpush1.msra.mxu0 0.0
    %4006 = vmatprep.subr.mxu0 0.0
    %4007 = vmatpush1.msra.mxu0 0.0
    %4008 = vmatprep.subr.mxu0 0.0
    %4009 = vmatpush1.msra.mxu0 0.0
    %4010 = vmatprep.subr.mxu0 0.0
    %4011 = vmatpush1.msra.mxu0 0.0
    %4012 = vmatprep.subr.mxu0 0.0
    %4013 = vmatpush1.msra.mxu0 0.0
    %4014 = vmatprep.subr.mxu0 0.0
    %4015 = vmatpush1.msra.mxu0 0.0
    %4016 = vmatprep.subr.mxu0 0.0
    %4017 = vmatpush1.msra.mxu0 0.0
    %4018 = vmatprep.subr.mxu0 0.0
    %4019 = vmatpush1.msra.mxu0 0.0
    %4020 = vmatprep.subr.mxu0 0.0
    %4021 = vmatpush1.msra.mxu0 0.0
    %4022 = vmatprep.subr.mxu0 0.0
    %4023 = vmatpush1.msra.mxu0 0.0
    %4024 = vmatprep.subr.mxu0 0.0
    %4025 = vmatpush1.msra.mxu0 0.0
    %4026 = vmatprep.subr.mxu0 0.0
    %4027 = vmatpush1.msra.mxu0 0.0
    %4028 = vmatprep.subr.mxu0 0.0
    %4029 = vmatpush1.msra.mxu0 0.0
    %4030 = vmatprep.subr.mxu0 0.0
    %4031 = vmatpush1.msra.mxu0 0.0
    %4032 = vmatprep.subr.mxu0 0.0
    %4033 = vmatpush1.msra.mxu0 0.0
    %4034 = vmatprep.subr.mxu0 0.0
    %4035 = vmatpush1.msra.mxu0 0.0
    %4036 = vmatprep.subr.mxu0 0.0
    %4037 = vmatpush1.msra.mxu0 0.0
    %4038 = vmatprep.subr.mxu0 0.0
    %4039 = vmatpush1.msra.mxu0 0.0
    %4040 = vmatprep.subr.mxu0 0.0
    %4041 = vmatpush1.msra.mxu0 0.0
    %4042 = vmatprep.subr.mxu0 0.0
    %4043 = vmatpush1.msra.mxu0 0.0
    %4044 = vmatprep.subr.mxu0 0.0
    %4045 = vmatpush1.msra.mxu0 0.0
    %4046 = vmatprep.subr.mxu0 0.0
    %4047 = vmatpush1.msra.mxu0 0.0
    %4048 = vmatprep.subr.mxu0 0.0
    %4049 = vmatpush1.msra.mxu0 0.0
    %4050 = vmatprep.subr.mxu0 0.0
    %4051 = vmatpush1.msra.mxu0 0.0
    %4052 = vmatprep.mubr.f32.mxu0 0.0
    %v4053 = vand.u32 %v3594, 4294901760
    %4054 = vmatmul.mubr.f32.gmra.mrb[0].mxu0 %v4053
    %v4055 = vpop.f32.mrb[0].mxu0
    %v4056 = vadd.f32 %v3983, %v4055
    %v4057 = vpop.f32.mrb[0].mxu0
    %4058 = vdwg.mxu0
    %v4059 = vld [vmem:[%s5] sm:$0xff]
    %v4060 = vld [vmem:[%s5 + $0x8] sm:$0xff]
    %v4061 = vld [vmem:[%s5 + $0x10] sm:$0xff]
    %v4062 = vld [vmem:[%s5 + $0x18] sm:$0xff]
    %s4063 = scalar_lea.vmem %s13, 8
    %v4064 = vld [vmem:[%s4063] sm:$0xff]
    %v4066 = vsel %vm3592, %v4064, 0
    %4068 = vmatprep.subr.mxu0 0.0
    %v4069 = vand.u32 %v3589, 4294901760
    %4070 = vmatpush1.msra.mxu0 %v4069
    %4071 = vmatprep.subr.mxu0 0.0
    %v4072 = vand.u32 %v3598, 4294901760
    %4073 = vmatpush1.msra.mxu0 %v4072
    %4074 = vmatprep.subr.mxu0 0.0
    %4075 = vmatpush1.msra.mxu0 0.0
    %4076 = vmatprep.subr.mxu0 0.0
    %4077 = vmatpush1.msra.mxu0 0.0
    %4078 = vmatprep.subr.mxu0 0.0
    %4079 = vmatpush1.msra.mxu0 0.0
    %4080 = vmatprep.subr.mxu0 0.0
    %4081 = vmatpush1.msra.mxu0 0.0
    %4082 = vmatprep.subr.mxu0 0.0
    %4083 = vmatpush1.msra.mxu0 0.0
    %4084 = vmatprep.subr.mxu0 0.0
    %4085 = vmatpush1.msra.mxu0 0.0
    %4086 = vmatprep.subr.mxu0 0.0
    %4087 = vmatpush1.msra.mxu0 0.0
    %4088 = vmatprep.subr.mxu0 0.0
    %4089 = vmatpush1.msra.mxu0 0.0
    %4090 = vmatprep.subr.mxu0 0.0
    %4091 = vmatpush1.msra.mxu0 0.0
    %4092 = vmatprep.subr.mxu0 0.0
    %4093 = vmatpush1.msra.mxu0 0.0
    %4094 = vmatprep.subr.mxu0 0.0
    %4095 = vmatpush1.msra.mxu0 0.0
    %4096 = vmatprep.subr.mxu0 0.0
    %4097 = vmatpush1.msra.mxu0 0.0
    %4098 = vmatprep.subr.mxu0 0.0
    %4099 = vmatpush1.msra.mxu0 0.0
    %4100 = vmatprep.subr.mxu0 0.0
    %4101 = vmatpush1.msra.mxu0 0.0
    %4102 = vmatprep.subr.mxu0 0.0
    %4103 = vmatpush1.msra.mxu0 0.0
    %4104 = vmatprep.subr.mxu0 0.0
    %4105 = vmatpush1.msra.mxu0 0.0
    %4106 = vmatprep.subr.mxu0 0.0
    %4107 = vmatpush1.msra.mxu0 0.0
    %4108 = vmatprep.subr.mxu0 0.0
    %4109 = vmatpush1.msra.mxu0 0.0
    %4110 = vmatprep.subr.mxu0 0.0
    %4111 = vmatpush1.msra.mxu0 0.0
    %4112 = vmatprep.subr.mxu0 0.0
    %4113 = vmatpush1.msra.mxu0 0.0
    %4114 = vmatprep.subr.mxu0 0.0
    %4115 = vmatpush1.msra.mxu0 0.0
    %4116 = vmatprep.subr.mxu0 0.0
    %4117 = vmatpush1.msra.mxu0 0.0
    %4118 = vmatprep.subr.mxu0 0.0
    %4119 = vmatpush1.msra.mxu0 0.0
    %4120 = vmatprep.subr.mxu0 0.0
    %4121 = vmatpush1.msra.mxu0 0.0
    %4122 = vmatprep.subr.mxu0 0.0
    %4123 = vmatpush1.msra.mxu0 0.0
    %4124 = vmatprep.subr.mxu0 0.0
    %4125 = vmatpush1.msra.mxu0 0.0
    %4126 = vmatprep.subr.mxu0 0.0
    %4127 = vmatpush1.msra.mxu0 0.0
    %4128 = vmatprep.subr.mxu0 0.0
    %4129 = vmatpush1.msra.mxu0 0.0
    %4130 = vmatprep.subr.mxu0 0.0
    %4131 = vmatpush1.msra.mxu0 0.0
    %4132 = vmatprep.subr.mxu0 0.0
    %4133 = vmatpush1.msra.mxu0 0.0
    %4134 = vmatprep.mubr.f32.mxu0 0.0
    %v4135 = vand.u32 %v4066, 4294901760
    %v4136 = vsub.f32 %v4066, %v4135
    %v4137 = vand.u32 %v4136, 4294901760
    %v4138 = vsub.f32 %v4136, %v4137
    %v4139 = vand.u32 %v4138, 4294901760
    %4140 = vmatmul.mubr.f32.gmra.mrb[0].mxu0 %v4139
    %v4141 = vpop.f32.mrb[0].mxu0
    %v4142 = vadd.f32 0.0, %v4141
    %v4143 = vpop.f32.mrb[0].mxu0
    %4144 = vdwg.mxu0
    %4145 = vmatprep.subr.mxu0 0.0
    %v4146 = vand.u32 %v3589, 4294901760
    %v4147 = vsub.f32 %v3589, %v4146
    %v4148 = vand.u32 %v4147, 4294901760
    %v4149 = vsub.f32 %v4147, %v4148
    %v4150 = vand.u32 %v4149, 4294901760
    %4151 = vmatpush1.msra.mxu0 %v4150
    %4152 = vmatprep.subr.mxu0 0.0
    %v4153 = vand.u32 %v3598, 4294901760
    %v4154 = vsub.f32 %v3598, %v4153
    %v4155 = vand.u32 %v4154, 4294901760
    %v4156 = vsub.f32 %v4154, %v4155
    %v4157 = vand.u32 %v4156, 4294901760
    %4158 = vmatpush1.msra.mxu0 %v4157
    %4159 = vmatprep.subr.mxu0 0.0
    %4160 = vmatpush1.msra.mxu0 0.0
    %4161 = vmatprep.subr.mxu0 0.0
    %4162 = vmatpush1.msra.mxu0 0.0
    %4163 = vmatprep.subr.mxu0 0.0
    %4164 = vmatpush1.msra.mxu0 0.0
    %4165 = vmatprep.subr.mxu0 0.0
    %4166 = vmatpush1.msra.mxu0 0.0
    %4167 = vmatprep.subr.mxu0 0.0
    %4168 = vmatpush1.msra.mxu0 0.0
    %4169 = vmatprep.subr.mxu0 0.0
    %4170 = vmatpush1.msra.mxu0 0.0
    %4171 = vmatprep.subr.mxu0 0.0
    %4172 = vmatpush1.msra.mxu0 0.0
    %4173 = vmatprep.subr.mxu0 0.0
    %4174 = vmatpush1.msra.mxu0 0.0
    %4175 = vmatprep.subr.mxu0 0.0
    %4176 = vmatpush1.msra.mxu0 0.0
    %4177 = vmatprep.subr.mxu0 0.0
    %4178 = vmatpush1.msra.mxu0 0.0
    %4179 = vmatprep.subr.mxu0 0.0
    %4180 = vmatpush1.msra.mxu0 0.0
    %4181 = vmatprep.subr.mxu0 0.0
    %4182 = vmatpush1.msra.mxu0 0.0
    %4183 = vmatprep.subr.mxu0 0.0
    %4184 = vmatpush1.msra.mxu0 0.0
    %4185 = vmatprep.subr.mxu0 0.0
    %4186 = vmatpush1.msra.mxu0 0.0
    %4187 = vmatprep.subr.mxu0 0.0
    %4188 = vmatpush1.msra.mxu0 0.0
    %4189 = vmatprep.subr.mxu0 0.0
    %4190 = vmatpush1.msra.mxu0 0.0
    %4191 = vmatprep.subr.mxu0 0.0
    %4192 = vmatpush1.msra.mxu0 0.0
    %4193 = vmatprep.subr.mxu0 0.0
    %4194 = vmatpush1.msra.mxu0 0.0
    %4195 = vmatprep.subr.mxu0 0.0
    %4196 = vmatpush1.msra.mxu0 0.0
    %4197 = vmatprep.subr.mxu0 0.0
    %4198 = vmatpush1.msra.mxu0 0.0
    %4199 = vmatprep.subr.mxu0 0.0
    %4200 = vmatpush1.msra.mxu0 0.0
    %4201 = vmatprep.subr.mxu0 0.0
    %4202 = vmatpush1.msra.mxu0 0.0
    %4203 = vmatprep.subr.mxu0 0.0
    %4204 = vmatpush1.msra.mxu0 0.0
    %4205 = vmatprep.subr.mxu0 0.0
    %4206 = vmatpush1.msra.mxu0 0.0
    %4207 = vmatprep.subr.mxu0 0.0
    %4208 = vmatpush1.msra.mxu0 0.0
    %4209 = vmatprep.subr.mxu0 0.0
    %4210 = vmatpush1.msra.mxu0 0.0
    %4211 = vmatprep.subr.mxu0 0.0
    %4212 = vmatpush1.msra.mxu0 0.0
    %4213 = vmatprep.subr.mxu0 0.0
    %4214 = vmatpush1.msra.mxu0 0.0
    %4215 = vmatprep.subr.mxu0 0.0
    %4216 = vmatpush1.msra.mxu0 0.0
    %4217 = vmatprep.subr.mxu0 0.0
    %4218 = vmatpush1.msra.mxu0 0.0
    %4219 = vmatprep.mubr.f32.mxu0 0.0
    %v4220 = vand.u32 %v4066, 4294901760
    %4221 = vmatmul.mubr.f32.gmra.mrb[0].mxu0 %v4220
    %v4222 = vpop.f32.mrb[0].mxu0
    %v4223 = vadd.f32 %v4142, %v4222
    %v4224 = vpop.f32.mrb[0].mxu0
    %4225 = vdwg.mxu0
    %4226 = vmatprep.subr.mxu0 0.0
    %v4227 = vand.u32 %v3589, 4294901760
    %v4228 = vsub.f32 %v3589, %v4227
    %4229 = vmatpush1.msra.mxu0 %v4228
    %4230 = vmatprep.subr.mxu0 0.0
    %v4231 = vand.u32 %v3598, 4294901760
    %v4232 = vsub.f32 %v3598, %v4231
    %4233 = vmatpush1.msra.mxu0 %v4232
    %4234 = vmatprep.subr.mxu0 0.0
    %4235 = vmatpush1.msra.mxu0 0.0
    %4236 = vmatprep.subr.mxu0 0.0
    %4237 = vmatpush1.msra.mxu0 0.0
    %4238 = vmatprep.subr.mxu0 0.0
    %4239 = vmatpush1.msra.mxu0 0.0
    %4240 = vmatprep.subr.mxu0 0.0
    %4241 = vmatpush1.msra.mxu0 0.0
    %4242 = vmatprep.subr.mxu0 0.0
    %4243 = vmatpush1.msra.mxu0 0.0
    %4244 = vmatprep.subr.mxu0 0.0
    %4245 = vmatpush1.msra.mxu0 0.0
    %4246 = vmatprep.subr.mxu0 0.0
    %4247 = vmatpush1.msra.mxu0 0.0
    %4248 = vmatprep.subr.mxu0 0.0
    %4249 = vmatpush1.msra.mxu0 0.0
    %4250 = vmatprep.subr.mxu0 0.0
    %4251 = vmatpush1.msra.mxu0 0.0
    %4252 = vmatprep.subr.mxu0 0.0
    %4253 = vmatpush1.msra.mxu0 0.0
    %4254 = vmatprep.subr.mxu0 0.0
    %4255 = vmatpush1.msra.mxu0 0.0
    %4256 = vmatprep.subr.mxu0 0.0
    %4257 = vmatpush1.msra.mxu0 0.0
    %4258 = vmatprep.subr.mxu0 0.0
    %4259 = vmatpush1.msra.mxu0 0.0
    %4260 = vmatprep.subr.mxu0 0.0
    %4261 = vmatpush1.msra.mxu0 0.0
    %4262 = vmatprep.subr.mxu0 0.0
    %4263 = vmatpush1.msra.mxu0 0.0
    %4264 = vmatprep.subr.mxu0 0.0
    %4265 = vmatpush1.msra.mxu0 0.0
    %4266 = vmatprep.subr.mxu0 0.0
    %4267 = vmatpush1.msra.mxu0 0.0
    %4268 = vmatprep.subr.mxu0 0.0
    %4269 = vmatpush1.msra.mxu0 0.0
    %4270 = vmatprep.subr.mxu0 0.0
    %4271 = vmatpush1.msra.mxu0 0.0
    %4272 = vmatprep.subr.mxu0 0.0
    %4273 = vmatpush1.msra.mxu0 0.0
    %4274 = vmatprep.subr.mxu0 0.0
    %4275 = vmatpush1.msra.mxu0 0.0
    %4276 = vmatprep.subr.mxu0 0.0
    %4277 = vmatpush1.msra.mxu0 0.0
    %4278 = vmatprep.subr.mxu0 0.0
    %4279 = vmatpush1.msra.mxu0 0.0
    %4280 = vmatprep.subr.mxu0 0.0
    %4281 = vmatpush1.msra.mxu0 0.0
    %4282 = vmatprep.subr.mxu0 0.0
    %4283 = vmatpush1.msra.mxu0 0.0
    %4284 = vmatprep.subr.mxu0 0.0
    %4285 = vmatpush1.msra.mxu0 0.0
    %4286 = vmatprep.subr.mxu0 0.0
    %4287 = vmatpush1.msra.mxu0 0.0
    %4288 = vmatprep.subr.mxu0 0.0
    %4289 = vmatpush1.msra.mxu0 0.0
    %4290 = vmatprep.subr.mxu0 0.0
    %4291 = vmatpush1.msra.mxu0 0.0
    %4292 = vmatprep.subr.mxu0 0.0
    %4293 = vmatpush1.msra.mxu0 0.0
    %4294 = vmatprep.mubr.f32.mxu0 0.0
    %v4295 = vand.u32 %v4066, 4294901760
    %v4296 = vsub.f32 %v4066, %v4295
    %4297 = vmatmul.mubr.f32.gmra.mrb[0].mxu0 %v4296
    %v4298 = vpop.f32.mrb[0].mxu0
    %v4299 = vadd.f32 %v4223, %v4298
    %v4300 = vpop.f32.mrb[0].mxu0
    %4301 = vdwg.mxu0
    %4302 = vmatprep.subr.mxu0 0.0
    %v4303 = vand.u32 %v3589, 4294901760
    %4304 = vmatpush1.msra.mxu0 %v4303
    %4305 = vmatprep.subr.mxu0 0.0
    %v4306 = vand.u32 %v3598, 4294901760
    %4307 = vmatpush1.msra.mxu0 %v4306
    %4308 = vmatprep.subr.mxu0 0.0
    %4309 = vmatpush1.msra.mxu0 0.0
    %4310 = vmatprep.subr.mxu0 0.0
    %4311 = vmatpush1.msra.mxu0 0.0
    %4312 = vmatprep.subr.mxu0 0.0
    %4313 = vmatpush1.msra.mxu0 0.0
    %4314 = vmatprep.subr.mxu0 0.0
    %4315 = vmatpush1.msra.mxu0 0.0
    %4316 = vmatprep.subr.mxu0 0.0
    %4317 = vmatpush1.msra.mxu0 0.0
    %4318 = vmatprep.subr.mxu0 0.0
    %4319 = vmatpush1.msra.mxu0 0.0
    %4320 = vmatprep.subr.mxu0 0.0
    %4321 = vmatpush1.msra.mxu0 0.0
    %4322 = vmatprep.subr.mxu0 0.0
    %4323 = vmatpush1.msra.mxu0 0.0
    %4324 = vmatprep.subr.mxu0 0.0
    %4325 = vmatpush1.msra.mxu0 0.0
    %4326 = vmatprep.subr.mxu0 0.0
    %4327 = vmatpush1.msra.mxu0 0.0
    %4328 = vmatprep.subr.mxu0 0.0
    %4329 = vmatpush1.msra.mxu0 0.0
    %4330 = vmatprep.subr.mxu0 0.0
    %4331 = vmatpush1.msra.mxu0 0.0
    %4332 = vmatprep.subr.mxu0 0.0
    %4333 = vmatpush1.msra.mxu0 0.0
    %4334 = vmatprep.subr.mxu0 0.0
    %4335 = vmatpush1.msra.mxu0 0.0
    %4336 = vmatprep.subr.mxu0 0.0
    %4337 = vmatpush1.msra.mxu0 0.0
    %4338 = vmatprep.subr.mxu0 0.0
    %4339 = vmatpush1.msra.mxu0 0.0
    %4340 = vmatprep.subr.mxu0 0.0
    %4341 = vmatpush1.msra.mxu0 0.0
    %4342 = vmatprep.subr.mxu0 0.0
    %4343 = vmatpush1.msra.mxu0 0.0
    %4344 = vmatprep.subr.mxu0 0.0
    %4345 = vmatpush1.msra.mxu0 0.0
    %4346 = vmatprep.subr.mxu0 0.0
    %4347 = vmatpush1.msra.mxu0 0.0
    %4348 = vmatprep.subr.mxu0 0.0
    %4349 = vmatpush1.msra.mxu0 0.0
    %4350 = vmatprep.subr.mxu0 0.0
    %4351 = vmatpush1.msra.mxu0 0.0
    %4352 = vmatprep.subr.mxu0 0.0
    %4353 = vmatpush1.msra.mxu0 0.0
    %4354 = vmatprep.subr.mxu0 0.0
    %4355 = vmatpush1.msra.mxu0 0.0
    %4356 = vmatprep.subr.mxu0 0.0
    %4357 = vmatpush1.msra.mxu0 0.0
    %4358 = vmatprep.subr.mxu0 0.0
    %4359 = vmatpush1.msra.mxu0 0.0
    %4360 = vmatprep.subr.mxu0 0.0
    %4361 = vmatpush1.msra.mxu0 0.0
    %4362 = vmatprep.subr.mxu0 0.0
    %4363 = vmatpush1.msra.mxu0 0.0
    %4364 = vmatprep.subr.mxu0 0.0
    %4365 = vmatpush1.msra.mxu0 0.0
    %4366 = vmatprep.subr.mxu0 0.0
    %4367 = vmatpush1.msra.mxu0 0.0
    %4368 = vmatprep.mubr.f32.mxu0 0.0
    %v4369 = vand.u32 %v4066, 4294901760
    %v4370 = vsub.f32 %v4066, %v4369
    %v4371 = vand.u32 %v4370, 4294901760
    %4372 = vmatmul.mubr.f32.gmra.mrb[0].mxu0 %v4371
    %v4373 = vpop.f32.mrb[0].mxu0
    %v4374 = vadd.f32 %v4299, %v4373
    %v4375 = vpop.f32.mrb[0].mxu0
    %4376 = vdwg.mxu0
    %4377 = vmatprep.subr.mxu0 0.0
    %v4378 = vand.u32 %v3589, 4294901760
    %v4379 = vsub.f32 %v3589, %v4378
    %v4380 = vand.u32 %v4379, 4294901760
    %4381 = vmatpush1.msra.mxu0 %v4380
    %4382 = vmatprep.subr.mxu0 0.0
    %v4383 = vand.u32 %v3598, 4294901760
    %v4384 = vsub.f32 %v3598, %v4383
    %v4385 = vand.u32 %v4384, 4294901760
    %4386 = vmatpush1.msra.mxu0 %v4385
    %4387 = vmatprep.subr.mxu0 0.0
    %4388 = vmatpush1.msra.mxu0 0.0
    %4389 = vmatprep.subr.mxu0 0.0
    %4390 = vmatpush1.msra.mxu0 0.0
    %4391 = vmatprep.subr.mxu0 0.0
    %4392 = vmatpush1.msra.mxu0 0.0
    %4393 = vmatprep.subr.mxu0 0.0
    %4394 = vmatpush1.msra.mxu0 0.0
    %4395 = vmatprep.subr.mxu0 0.0
    %4396 = vmatpush1.msra.mxu0 0.0
    %4397 = vmatprep.subr.mxu0 0.0
    %4398 = vmatpush1.msra.mxu0 0.0
    %4399 = vmatprep.subr.mxu0 0.0
    %4400 = vmatpush1.msra.mxu0 0.0
    %4401 = vmatprep.subr.mxu0 0.0
    %4402 = vmatpush1.msra.mxu0 0.0
    %4403 = vmatprep.subr.mxu0 0.0
    %4404 = vmatpush1.msra.mxu0 0.0
    %4405 = vmatprep.subr.mxu0 0.0
    %4406 = vmatpush1.msra.mxu0 0.0
    %4407 = vmatprep.subr.mxu0 0.0
    %4408 = vmatpush1.msra.mxu0 0.0
    %4409 = vmatprep.subr.mxu0 0.0
    %4410 = vmatpush1.msra.mxu0 0.0
    %4411 = vmatprep.subr.mxu0 0.0
    %4412 = vmatpush1.msra.mxu0 0.0
    %4413 = vmatprep.subr.mxu0 0.0
    %4414 = vmatpush1.msra.mxu0 0.0
    %4415 = vmatprep.subr.mxu0 0.0
    %4416 = vmatpush1.msra.mxu0 0.0
    %4417 = vmatprep.subr.mxu0 0.0
    %4418 = vmatpush1.msra.mxu0 0.0
    %4419 = vmatprep.subr.mxu0 0.0
    %4420 = vmatpush1.msra.mxu0 0.0
    %4421 = vmatprep.subr.mxu0 0.0
    %4422 = vmatpush1.msra.mxu0 0.0
    %4423 = vmatprep.subr.mxu0 0.0
    %4424 = vmatpush1.msra.mxu0 0.0
    %4425 = vmatprep.subr.mxu0 0.0
    %4426 = vmatpush1.msra.mxu0 0.0
    %4427 = vmatprep.subr.mxu0 0.0
    %4428 = vmatpush1.msra.mxu0 0.0
    %4429 = vmatprep.subr.mxu0 0.0
    %4430 = vmatpush1.msra.mxu0 0.0
    %4431 = vmatprep.subr.mxu0 0.0
    %4432 = vmatpush1.msra.mxu0 0.0
    %4433 = vmatprep.subr.mxu0 0.0
    %4434 = vmatpush1.msra.mxu0 0.0
    %4435 = vmatprep.subr.mxu0 0.0
    %4436 = vmatpush1.msra.mxu0 0.0
    %4437 = vmatprep.subr.mxu0 0.0
    %4438 = vmatpush1.msra.mxu0 0.0
    %4439 = vmatprep.subr.mxu0 0.0
    %4440 = vmatpush1.msra.mxu0 0.0
    %4441 = vmatprep.subr.mxu0 0.0
    %4442 = vmatpush1.msra.mxu0 0.0
    %4443 = vmatprep.subr.mxu0 0.0
    %4444 = vmatpush1.msra.mxu0 0.0
    %4445 = vmatprep.subr.mxu0 0.0
    %4446 = vmatpush1.msra.mxu0 0.0
    %4447 = vmatprep.mubr.f32.mxu0 0.0
    %v4448 = vand.u32 %v4066, 4294901760
    %4449 = vmatmul.mubr.f32.gmra.mrb[0].mxu0 %v4448
    %v4450 = vpop.f32.mrb[0].mxu0
    %v4451 = vadd.f32 %v4374, %v4450
    %v4452 = vpop.f32.mrb[0].mxu0
    %4453 = vdwg.mxu0
    %4454 = vmatprep.subr.mxu0 0.0
    %v4455 = vand.u32 %v3589, 4294901760
    %4456 = vmatpush1.msra.mxu0 %v4455
    %4457 = vmatprep.subr.mxu0 0.0
    %v4458 = vand.u32 %v3598, 4294901760
    %4459 = vmatpush1.msra.mxu0 %v4458
    %4460 = vmatprep.subr.mxu0 0.0
    %4461 = vmatpush1.msra.mxu0 0.0
    %4462 = vmatprep.subr.mxu0 0.0
    %4463 = vmatpush1.msra.mxu0 0.0
    %4464 = vmatprep.subr.mxu0 0.0
    %4465 = vmatpush1.msra.mxu0 0.0
    %4466 = vmatprep.subr.mxu0 0.0
    %4467 = vmatpush1.msra.mxu0 0.0
    %4468 = vmatprep.subr.mxu0 0.0
    %4469 = vmatpush1.msra.mxu0 0.0
    %4470 = vmatprep.subr.mxu0 0.0
    %4471 = vmatpush1.msra.mxu0 0.0
    %4472 = vmatprep.subr.mxu0 0.0
    %4473 = vmatpush1.msra.mxu0 0.0
    %4474 = vmatprep.subr.mxu0 0.0
    %4475 = vmatpush1.msra.mxu0 0.0
    %4476 = vmatprep.subr.mxu0 0.0
    %4477 = vmatpush1.msra.mxu0 0.0
    %4478 = vmatprep.subr.mxu0 0.0
    %4479 = vmatpush1.msra.mxu0 0.0
    %4480 = vmatprep.subr.mxu0 0.0
    %4481 = vmatpush1.msra.mxu0 0.0
    %4482 = vmatprep.subr.mxu0 0.0
    %4483 = vmatpush1.msra.mxu0 0.0
    %4484 = vmatprep.subr.mxu0 0.0
    %4485 = vmatpush1.msra.mxu0 0.0
    %4486 = vmatprep.subr.mxu0 0.0
    %4487 = vmatpush1.msra.mxu0 0.0
    %4488 = vmatprep.subr.mxu0 0.0
    %4489 = vmatpush1.msra.mxu0 0.0
    %4490 = vmatprep.subr.mxu0 0.0
    %4491 = vmatpush1.msra.mxu0 0.0
    %4492 = vmatprep.subr.mxu0 0.0
    %4493 = vmatpush1.msra.mxu0 0.0
    %4494 = vmatprep.subr.mxu0 0.0
    %4495 = vmatpush1.msra.mxu0 0.0
    %4496 = vmatprep.subr.mxu0 0.0
    %4497 = vmatpush1.msra.mxu0 0.0
    %4498 = vmatprep.subr.mxu0 0.0
    %4499 = vmatpush1.msra.mxu0 0.0
    %4500 = vmatprep.subr.mxu0 0.0
    %4501 = vmatpush1.msra.mxu0 0.0
    %4502 = vmatprep.subr.mxu0 0.0
    %4503 = vmatpush1.msra.mxu0 0.0
    %4504 = vmatprep.subr.mxu0 0.0
    %4505 = vmatpush1.msra.mxu0 0.0
    %4506 = vmatprep.subr.mxu0 0.0
    %4507 = vmatpush1.msra.mxu0 0.0
    %4508 = vmatprep.subr.mxu0 0.0
    %4509 = vmatpush1.msra.mxu0 0.0
    %4510 = vmatprep.subr.mxu0 0.0
    %4511 = vmatpush1.msra.mxu0 0.0
    %4512 = vmatprep.subr.mxu0 0.0
    %4513 = vmatpush1.msra.mxu0 0.0
    %4514 = vmatprep.subr.mxu0 0.0
    %4515 = vmatpush1.msra.mxu0 0.0
    %4516 = vmatprep.subr.mxu0 0.0
    %4517 = vmatpush1.msra.mxu0 0.0
    %4518 = vmatprep.subr.mxu0 0.0
    %4519 = vmatpush1.msra.mxu0 0.0
    %4520 = vmatprep.mubr.f32.mxu0 0.0
    %v4521 = vand.u32 %v4066, 4294901760
    %4522 = vmatmul.mubr.f32.gmra.mrb[0].mxu0 %v4521
    %v4523 = vpop.f32.mrb[0].mxu0
    %v4524 = vadd.f32 %v4451, %v4523
    %v4525 = vpop.f32.mrb[0].mxu0
    %4526 = vdwg.mxu0
    %s4527 = scalar_lea.vmem %s5, 32
    %v4528 = vld [vmem:[%s4527] sm:$0xff]
    %v4529 = vld [vmem:[%s4527 + $0x8] sm:$0xff]
    %v4530 = vld [vmem:[%s4527 + $0x10] sm:$0xff]
    %v4531 = vld [vmem:[%s4527 + $0x18] sm:$0xff]
    %v4533 = vsel %vm2484, %v4524, 0
    %4535 = vmatprep.subr.mxu0 0.0
    %v4536 = vand.u32 %v4528, 4294901760
    %4537 = vmatpush1.msra.mxu0 %v4536
    %4538 = vmatprep.subr.mxu0 0.0
    %v4539 = vand.u32 %v4529, 4294901760
    %4540 = vmatpush1.msra.mxu0 %v4539
    %4541 = vmatprep.subr.mxu0 0.0
    %v4542 = vand.u32 %v4530, 4294901760
    %4543 = vmatpush1.msra.mxu0 %v4542
    %4544 = vmatprep.subr.mxu0 0.0
    %v4545 = vand.u32 %v4531, 4294901760
    %4546 = vmatpush1.msra.mxu0 %v4545
    %4547 = vmatprep.subr.mxu0 0.0
    %4548 = vmatpush1.msra.mxu0 0.0
    %4549 = vmatprep.subr.mxu0 0.0
    %4550 = vmatpush1.msra.mxu0 0.0
    %4551 = vmatprep.subr.mxu0 0.0
    %4552 = vmatpush1.msra.mxu0 0.0
    %4553 = vmatprep.subr.mxu0 0.0
    %4554 = vmatpush1.msra.mxu0 0.0
    %4555 = vmatprep.subr.mxu0 0.0
    %4556 = vmatpush1.msra.mxu0 0.0
    %4557 = vmatprep.subr.mxu0 0.0
    %4558 = vmatpush1.msra.mxu0 0.0
    %4559 = vmatprep.subr.mxu0 0.0
    %4560 = vmatpush1.msra.mxu0 0.0
    %4561 = vmatprep.subr.mxu0 0.0
    %4562 = vmatpush1.msra.mxu0 0.0
    %4563 = vmatprep.subr.mxu0 0.0
    %4564 = vmatpush1.msra.mxu0 0.0
    %4565 = vmatprep.subr.mxu0 0.0
    %4566 = vmatpush1.msra.mxu0 0.0
    %4567 = vmatprep.subr.mxu0 0.0
    %4568 = vmatpush1.msra.mxu0 0.0
    %4569 = vmatprep.subr.mxu0 0.0
    %4570 = vmatpush1.msra.mxu0 0.0
    %4571 = vmatprep.subr.mxu0 0.0
    %4572 = vmatpush1.msra.mxu0 0.0
    %4573 = vmatprep.subr.mxu0 0.0
    %4574 = vmatpush1.msra.mxu0 0.0
    %4575 = vmatprep.subr.mxu0 0.0
    %4576 = vmatpush1.msra.mxu0 0.0
    %4577 = vmatprep.subr.mxu0 0.0
    %4578 = vmatpush1.msra.mxu0 0.0
    %4579 = vmatprep.subr.mxu0 0.0
    %4580 = vmatpush1.msra.mxu0 0.0
    %4581 = vmatprep.subr.mxu0 0.0
    %4582 = vmatpush1.msra.mxu0 0.0
    %4583 = vmatprep.subr.mxu0 0.0
    %4584 = vmatpush1.msra.mxu0 0.0
    %4585 = vmatprep.subr.mxu0 0.0
    %4586 = vmatpush1.msra.mxu0 0.0
    %4587 = vmatprep.subr.mxu0 0.0
    %4588 = vmatpush1.msra.mxu0 0.0
    %4589 = vmatprep.subr.mxu0 0.0
    %4590 = vmatpush1.msra.mxu0 0.0
    %4591 = vmatprep.subr.mxu0 0.0
    %4592 = vmatpush1.msra.mxu0 0.0
    %4593 = vmatprep.subr.mxu0 0.0
    %4594 = vmatpush1.msra.mxu0 0.0
    %4595 = vmatprep.subr.mxu0 0.0
    %4596 = vmatpush1.msra.mxu0 0.0
    %4597 = vmatprep.subr.mxu0 0.0
    %4598 = vmatpush1.msra.mxu0 0.0
    %4599 = vmatprep.subr.mxu0 0.0
    %4600 = vmatpush1.msra.mxu0 0.0
    %4601 = vmatprep.subr.mxu0 0.0
    %4602 = vmatpush1.msra.mxu0 0.0
    %4603 = vmatprep.mubr.f32.mxu0 0.0
    %v4604 = vand.u32 %v4533, 4294901760
    %v4605 = vsub.f32 %v4533, %v4604
    %v4606 = vand.u32 %v4605, 4294901760
    %v4607 = vsub.f32 %v4605, %v4606
    %v4608 = vand.u32 %v4607, 4294901760
    %4609 = vmatmul.mubr.f32.gmra.mrb[0].mxu0 %v4608
    %v4610 = vpop.f32.mrb[0].mxu0
    %v4611 = vadd.f32 0.0, %v4610
    %v4612 = vpop.f32.mrb[0].mxu0
    %4613 = vdwg.mxu0
    %4614 = vmatprep.subr.mxu0 0.0
    %v4615 = vand.u32 %v4528, 4294901760
    %v4616 = vsub.f32 %v4528, %v4615
    %v4617 = vand.u32 %v4616, 4294901760
    %v4618 = vsub.f32 %v4616, %v4617
    %v4619 = vand.u32 %v4618, 4294901760
    %4620 = vmatpush1.msra.mxu0 %v4619
    %4621 = vmatprep.subr.mxu0 0.0
    %v4622 = vand.u32 %v4529, 4294901760
    %v4623 = vsub.f32 %v4529, %v4622
    %v4624 = vand.u32 %v4623, 4294901760
    %v4625 = vsub.f32 %v4623, %v4624
    %v4626 = vand.u32 %v4625, 4294901760
    %4627 = vmatpush1.msra.mxu0 %v4626
    %4628 = vmatprep.subr.mxu0 0.0
    %v4629 = vand.u32 %v4530, 4294901760
    %v4630 = vsub.f32 %v4530, %v4629
    %v4631 = vand.u32 %v4630, 4294901760
    %v4632 = vsub.f32 %v4630, %v4631
    %v4633 = vand.u32 %v4632, 4294901760
    %4634 = vmatpush1.msra.mxu0 %v4633
    %4635 = vmatprep.subr.mxu0 0.0
    %v4636 = vand.u32 %v4531, 4294901760
    %v4637 = vsub.f32 %v4531, %v4636
    %v4638 = vand.u32 %v4637, 4294901760
    %v4639 = vsub.f32 %v4637, %v4638
    %v4640 = vand.u32 %v4639, 4294901760
    %4641 = vmatpush1.msra.mxu0 %v4640
    %4642 = vmatprep.subr.mxu0 0.0
    %4643 = vmatpush1.msra.mxu0 0.0
    %4644 = vmatprep.subr.mxu0 0.0
    %4645 = vmatpush1.msra.mxu0 0.0
    %4646 = vmatprep.subr.mxu0 0.0
    %4647 = vmatpush1.msra.mxu0 0.0
    %4648 = vmatprep.subr.mxu0 0.0
    %4649 = vmatpush1.msra.mxu0 0.0
    %4650 = vmatprep.subr.mxu0 0.0
    %4651 = vmatpush1.msra.mxu0 0.0
    %4652 = vmatprep.subr.mxu0 0.0
    %4653 = vmatpush1.msra.mxu0 0.0
    %4654 = vmatprep.subr.mxu0 0.0
    %4655 = vmatpush1.msra.mxu0 0.0
    %4656 = vmatprep.subr.mxu0 0.0
    %4657 = vmatpush1.msra.mxu0 0.0
    %4658 = vmatprep.subr.mxu0 0.0
    %4659 = vmatpush1.msra.mxu0 0.0
    %4660 = vmatprep.subr.mxu0 0.0
    %4661 = vmatpush1.msra.mxu0 0.0
    %4662 = vmatprep.subr.mxu0 0.0
    %4663 = vmatpush1.msra.mxu0 0.0
    %4664 = vmatprep.subr.mxu0 0.0
    %4665 = vmatpush1.msra.mxu0 0.0
    %4666 = vmatprep.subr.mxu0 0.0
    %4667 = vmatpush1.msra.mxu0 0.0
    %4668 = vmatprep.subr.mxu0 0.0
    %4669 = vmatpush1.msra.mxu0 0.0
    %4670 = vmatprep.subr.mxu0 0.0
    %4671 = vmatpush1.msra.mxu0 0.0
    %4672 = vmatprep.subr.mxu0 0.0
    %4673 = vmatpush1.msra.mxu0 0.0
    %4674 = vmatprep.subr.mxu0 0.0
    %4675 = vmatpush1.msra.mxu0 0.0
    %4676 = vmatprep.subr.mxu0 0.0
    %4677 = vmatpush1.msra.mxu0 0.0
    %4678 = vmatprep.subr.mxu0 0.0
    %4679 = vmatpush1.msra.mxu0 0.0
    %4680 = vmatprep.subr.mxu0 0.0
    %4681 = vmatpush1.msra.mxu0 0.0
    %4682 = vmatprep.subr.mxu0 0.0
    %4683 = vmatpush1.msra.mxu0 0.0
    %4684 = vmatprep.subr.mxu0 0.0
    %4685 = vmatpush1.msra.mxu0 0.0
    %4686 = vmatprep.subr.mxu0 0.0
    %4687 = vmatpush1.msra.mxu0 0.0
    %4688 = vmatprep.subr.mxu0 0.0
    %4689 = vmatpush1.msra.mxu0 0.0
    %4690 = vmatprep.subr.mxu0 0.0
    %4691 = vmatpush1.msra.mxu0 0.0
    %4692 = vmatprep.subr.mxu0 0.0
    %4693 = vmatpush1.msra.mxu0 0.0
    %4694 = vmatprep.subr.mxu0 0.0
    %4695 = vmatpush1.msra.mxu0 0.0
    %4696 = vmatprep.subr.mxu0 0.0
    %4697 = vmatpush1.msra.mxu0 0.0
    %4698 = vmatprep.mubr.f32.mxu0 0.0
    %v4699 = vand.u32 %v4533, 4294901760
    %4700 = vmatmul.mubr.f32.gmra.mrb[0].mxu0 %v4699
    %v4701 = vpop.f32.mrb[0].mxu0
    %v4702 = vadd.f32 %v4611, %v4701
    %v4703 = vpop.f32.mrb[0].mxu0
    %4704 = vdwg.mxu0
    %4705 = vmatprep.subr.mxu0 0.0
    %v4706 = vand.u32 %v4528, 4294901760
    %v4707 = vsub.f32 %v4528, %v4706
    %4708 = vmatpush1.msra.mxu0 %v4707
    %4709 = vmatprep.subr.mxu0 0.0
    %v4710 = vand.u32 %v4529, 4294901760
    %v4711 = vsub.f32 %v4529, %v4710
    %4712 = vmatpush1.msra.mxu0 %v4711
    %4713 = vmatprep.subr.mxu0 0.0
    %v4714 = vand.u32 %v4530, 4294901760
    %v4715 = vsub.f32 %v4530, %v4714
    %4716 = vmatpush1.msra.mxu0 %v4715
    %4717 = vmatprep.subr.mxu0 0.0
    %v4718 = vand.u32 %v4531, 4294901760
    %v4719 = vsub.f32 %v4531, %v4718
    %4720 = vmatpush1.msra.mxu0 %v4719
    %4721 = vmatprep.subr.mxu0 0.0
    %4722 = vmatpush1.msra.mxu0 0.0
    %4723 = vmatprep.subr.mxu0 0.0
    %4724 = vmatpush1.msra.mxu0 0.0
    %4725 = vmatprep.subr.mxu0 0.0
    %4726 = vmatpush1.msra.mxu0 0.0
    %4727 = vmatprep.subr.mxu0 0.0
    %4728 = vmatpush1.msra.mxu0 0.0
    %4729 = vmatprep.subr.mxu0 0.0
    %4730 = vmatpush1.msra.mxu0 0.0
    %4731 = vmatprep.subr.mxu0 0.0
    %4732 = vmatpush1.msra.mxu0 0.0
    %4733 = vmatprep.subr.mxu0 0.0
    %4734 = vmatpush1.msra.mxu0 0.0
    %4735 = vmatprep.subr.mxu0 0.0
    %4736 = vmatpush1.msra.mxu0 0.0
    %4737 = vmatprep.subr.mxu0 0.0
    %4738 = vmatpush1.msra.mxu0 0.0
    %4739 = vmatprep.subr.mxu0 0.0
    %4740 = vmatpush1.msra.mxu0 0.0
    %4741 = vmatprep.subr.mxu0 0.0
    %4742 = vmatpush1.msra.mxu0 0.0
    %4743 = vmatprep.subr.mxu0 0.0
    %4744 = vmatpush1.msra.mxu0 0.0
    %4745 = vmatprep.subr.mxu0 0.0
    %4746 = vmatpush1.msra.mxu0 0.0
    %4747 = vmatprep.subr.mxu0 0.0
    %4748 = vmatpush1.msra.mxu0 0.0
    %4749 = vmatprep.subr.mxu0 0.0
    %4750 = vmatpush1.msra.mxu0 0.0
    %4751 = vmatprep.subr.mxu0 0.0
    %4752 = vmatpush1.msra.mxu0 0.0
    %4753 = vmatprep.subr.mxu0 0.0
    %4754 = vmatpush1.msra.mxu0 0.0
    %4755 = vmatprep.subr.mxu0 0.0
    %4756 = vmatpush1.msra.mxu0 0.0
    %4757 = vmatprep.subr.mxu0 0.0
    %4758 = vmatpush1.msra.mxu0 0.0
    %4759 = vmatprep.subr.mxu0 0.0
    %4760 = vmatpush1.msra.mxu0 0.0
    %4761 = vmatprep.subr.mxu0 0.0
    %4762 = vmatpush1.msra.mxu0 0.0
    %4763 = vmatprep.subr.mxu0 0.0
    %4764 = vmatpush1.msra.mxu0 0.0
    %4765 = vmatprep.subr.mxu0 0.0
    %4766 = vmatpush1.msra.mxu0 0.0
    %4767 = vmatprep.subr.mxu0 0.0
    %4768 = vmatpush1.msra.mxu0 0.0
    %4769 = vmatprep.subr.mxu0 0.0
    %4770 = vmatpush1.msra.mxu0 0.0
    %4771 = vmatprep.subr.mxu0 0.0
    %4772 = vmatpush1.msra.mxu0 0.0
    %4773 = vmatprep.subr.mxu0 0.0
    %4774 = vmatpush1.msra.mxu0 0.0
    %4775 = vmatprep.subr.mxu0 0.0
    %4776 = vmatpush1.msra.mxu0 0.0
    %4777 = vmatprep.mubr.f32.mxu0 0.0
    %v4778 = vand.u32 %v4533, 4294901760
    %v4779 = vsub.f32 %v4533, %v4778
    %4780 = vmatmul.mubr.f32.gmra.mrb[0].mxu0 %v4779
    %v4781 = vpop.f32.mrb[0].mxu0
    %v4782 = vadd.f32 %v4702, %v4781
    %v4783 = vpop.f32.mrb[0].mxu0
    %4784 = vdwg.mxu0
    %4785 = vmatprep.subr.mxu0 0.0
    %v4786 = vand.u32 %v4528, 4294901760
    %4787 = vmatpush1.msra.mxu0 %v4786
    %4788 = vmatprep.subr.mxu0 0.0
    %v4789 = vand.u32 %v4529, 4294901760
    %4790 = vmatpush1.msra.mxu0 %v4789
    %4791 = vmatprep.subr.mxu0 0.0
    %v4792 = vand.u32 %v4530, 4294901760
    %4793 = vmatpush1.msra.mxu0 %v4792
    %4794 = vmatprep.subr.mxu0 0.0
    %v4795 = vand.u32 %v4531, 4294901760
    %4796 = vmatpush1.msra.mxu0 %v4795
    %4797 = vmatprep.subr.mxu0 0.0
    %4798 = vmatpush1.msra.mxu0 0.0
    %4799 = vmatprep.subr.mxu0 0.0
    %4800 = vmatpush1.msra.mxu0 0.0
    %4801 = vmatprep.subr.mxu0 0.0
    %4802 = vmatpush1.msra.mxu0 0.0
    %4803 = vmatprep.subr.mxu0 0.0
    %4804 = vmatpush1.msra.mxu0 0.0
    %4805 = vmatprep.subr.mxu0 0.0
    %4806 = vmatpush1.msra.mxu0 0.0
    %4807 = vmatprep.subr.mxu0 0.0
    %4808 = vmatpush1.msra.mxu0 0.0
    %4809 = vmatprep.subr.mxu0 0.0
    %4810 = vmatpush1.msra.mxu0 0.0
    %4811 = vmatprep.subr.mxu0 0.0
    %4812 = vmatpush1.msra.mxu0 0.0
    %4813 = vmatprep.subr.mxu0 0.0
    %4814 = vmatpush1.msra.mxu0 0.0
    %4815 = vmatprep.subr.mxu0 0.0
    %4816 = vmatpush1.msra.mxu0 0.0
    %4817 = vmatprep.subr.mxu0 0.0
    %4818 = vmatpush1.msra.mxu0 0.0
    %4819 = vmatprep.subr.mxu0 0.0
    %4820 = vmatpush1.msra.mxu0 0.0
    %4821 = vmatprep.subr.mxu0 0.0
    %4822 = vmatpush1.msra.mxu0 0.0
    %4823 = vmatprep.subr.mxu0 0.0
    %4824 = vmatpush1.msra.mxu0 0.0
    %4825 = vmatprep.subr.mxu0 0.0
    %4826 = vmatpush1.msra.mxu0 0.0
    %4827 = vmatprep.subr.mxu0 0.0
    %4828 = vmatpush1.msra.mxu0 0.0
    %4829 = vmatprep.subr.mxu0 0.0
    %4830 = vmatpush1.msra.mxu0 0.0
    %4831 = vmatprep.subr.mxu0 0.0
    %4832 = vmatpush1.msra.mxu0 0.0
    %4833 = vmatprep.subr.mxu0 0.0
    %4834 = vmatpush1.msra.mxu0 0.0
    %4835 = vmatprep.subr.mxu0 0.0
    %4836 = vmatpush1.msra.mxu0 0.0
    %4837 = vmatprep.subr.mxu0 0.0
    %4838 = vmatpush1.msra.mxu0 0.0
    %4839 = vmatprep.subr.mxu0 0.0
    %4840 = vmatpush1.msra.mxu0 0.0
    %4841 = vmatprep.subr.mxu0 0.0
    %4842 = vmatpush1.msra.mxu0 0.0
    %4843 = vmatprep.subr.mxu0 0.0
    %4844 = vmatpush1.msra.mxu0 0.0
    %4845 = vmatprep.subr.mxu0 0.0
    %4846 = vmatpush1.msra.mxu0 0.0
    %4847 = vmatprep.subr.mxu0 0.0
    %4848 = vmatpush1.msra.mxu0 0.0
    %4849 = vmatprep.subr.mxu0 0.0
    %4850 = vmatpush1.msra.mxu0 0.0
    %4851 = vmatprep.subr.mxu0 0.0
    %4852 = vmatpush1.msra.mxu0 0.0
    %4853 = vmatprep.mubr.f32.mxu0 0.0
    %v4854 = vand.u32 %v4533, 4294901760
    %v4855 = vsub.f32 %v4533, %v4854
    %v4856 = vand.u32 %v4855, 4294901760
    %4857 = vmatmul.mubr.f32.gmra.mrb[0].mxu0 %v4856
    %v4858 = vpop.f32.mrb[0].mxu0
    %v4859 = vadd.f32 %v4782, %v4858
    %v4860 = vpop.f32.mrb[0].mxu0
    %4861 = vdwg.mxu0
    %4862 = vmatprep.subr.mxu0 0.0
    %v4863 = vand.u32 %v4528, 4294901760
    %v4864 = vsub.f32 %v4528, %v4863
    %v4865 = vand.u32 %v4864, 4294901760
    %4866 = vmatpush1.msra.mxu0 %v4865
    %4867 = vmatprep.subr.mxu0 0.0
    %v4868 = vand.u32 %v4529, 4294901760
    %v4869 = vsub.f32 %v4529, %v4868
    %v4870 = vand.u32 %v4869, 4294901760
    %4871 = vmatpush1.msra.mxu0 %v4870
    %4872 = vmatprep.subr.mxu0 0.0
    %v4873 = vand.u32 %v4530, 4294901760
    %v4874 = vsub.f32 %v4530, %v4873
    %v4875 = vand.u32 %v4874, 4294901760
    %4876 = vmatpush1.msra.mxu0 %v4875
    %4877 = vmatprep.subr.mxu0 0.0
    %v4878 = vand.u32 %v4531, 4294901760
    %v4879 = vsub.f32 %v4531, %v4878
    %v4880 = vand.u32 %v4879, 4294901760
    %4881 = vmatpush1.msra.mxu0 %v4880
    %4882 = vmatprep.subr.mxu0 0.0
    %4883 = vmatpush1.msra.mxu0 0.0
    %4884 = vmatprep.subr.mxu0 0.0
    %4885 = vmatpush1.msra.mxu0 0.0
    %4886 = vmatprep.subr.mxu0 0.0
    %4887 = vmatpush1.msra.mxu0 0.0
    %4888 = vmatprep.subr.mxu0 0.0
    %4889 = vmatpush1.msra.mxu0 0.0
    %4890 = vmatprep.subr.mxu0 0.0
    %4891 = vmatpush1.msra.mxu0 0.0
    %4892 = vmatprep.subr.mxu0 0.0
    %4893 = vmatpush1.msra.mxu0 0.0
    %4894 = vmatprep.subr.mxu0 0.0
    %4895 = vmatpush1.msra.mxu0 0.0
    %4896 = vmatprep.subr.mxu0 0.0
    %4897 = vmatpush1.msra.mxu0 0.0
    %4898 = vmatprep.subr.mxu0 0.0
    %4899 = vmatpush1.msra.mxu0 0.0
    %4900 = vmatprep.subr.mxu0 0.0
    %4901 = vmatpush1.msra.mxu0 0.0
    %4902 = vmatprep.subr.mxu0 0.0
    %4903 = vmatpush1.msra.mxu0 0.0
    %4904 = vmatprep.subr.mxu0 0.0
    %4905 = vmatpush1.msra.mxu0 0.0
    %4906 = vmatprep.subr.mxu0 0.0
    %4907 = vmatpush1.msra.mxu0 0.0
    %4908 = vmatprep.subr.mxu0 0.0
    %4909 = vmatpush1.msra.mxu0 0.0
    %4910 = vmatprep.subr.mxu0 0.0
    %4911 = vmatpush1.msra.mxu0 0.0
    %4912 = vmatprep.subr.mxu0 0.0
    %4913 = vmatpush1.msra.mxu0 0.0
    %4914 = vmatprep.subr.mxu0 0.0
    %4915 = vmatpush1.msra.mxu0 0.0
    %4916 = vmatprep.subr.mxu0 0.0
    %4917 = vmatpush1.msra.mxu0 0.0
    %4918 = vmatprep.subr.mxu0 0.0
    %4919 = vmatpush1.msra.mxu0 0.0
    %4920 = vmatprep.subr.mxu0 0.0
    %4921 = vmatpush1.msra.mxu0 0.0
    %4922 = vmatprep.subr.mxu0 0.0
    %4923 = vmatpush1.msra.mxu0 0.0
    %4924 = vmatprep.subr.mxu0 0.0
    %4925 = vmatpush1.msra.mxu0 0.0
    %4926 = vmatprep.subr.mxu0 0.0
    %4927 = vmatpush1.msra.mxu0 0.0
    %4928 = vmatprep.subr.mxu0 0.0
    %4929 = vmatpush1.msra.mxu0 0.0
    %4930 = vmatprep.subr.mxu0 0.0
    %4931 = vmatpush1.msra.mxu0 0.0
    %4932 = vmatprep.subr.mxu0 0.0
    %4933 = vmatpush1.msra.mxu0 0.0
    %4934 = vmatprep.subr.mxu0 0.0
    %4935 = vmatpush1.msra.mxu0 0.0
    %4936 = vmatprep.subr.mxu0 0.0
    %4937 = vmatpush1.msra.mxu0 0.0
    %4938 = vmatprep.mubr.f32.mxu0 0.0
    %v4939 = vand.u32 %v4533, 4294901760
    %4940 = vmatmul.mubr.f32.gmra.mrb[0].mxu0 %v4939
    %v4941 = vpop.f32.mrb[0].mxu0
    %v4942 = vadd.f32 %v4859, %v4941
    %v4943 = vpop.f32.mrb[0].mxu0
    %4944 = vdwg.mxu0
    %4945 = vmatprep.subr.mxu0 0.0
    %v4946 = vand.u32 %v4528, 4294901760
    %4947 = vmatpush1.msra.mxu0 %v4946
    %4948 = vmatprep.subr.mxu0 0.0
    %v4949 = vand.u32 %v4529, 4294901760
    %4950 = vmatpush1.msra.mxu0 %v4949
    %4951 = vmatprep.subr.mxu0 0.0
    %v4952 = vand.u32 %v4530, 4294901760
    %4953 = vmatpush1.msra.mxu0 %v4952
    %4954 = vmatprep.subr.mxu0 0.0
    %v4955 = vand.u32 %v4531, 4294901760
    %4956 = vmatpush1.msra.mxu0 %v4955
    %4957 = vmatprep.subr.mxu0 0.0
    %4958 = vmatpush1.msra.mxu0 0.0
    %4959 = vmatprep.subr.mxu0 0.0
    %4960 = vmatpush1.msra.mxu0 0.0
    %4961 = vmatprep.subr.mxu0 0.0
    %4962 = vmatpush1.msra.mxu0 0.0
    %4963 = vmatprep.subr.mxu0 0.0
    %4964 = vmatpush1.msra.mxu0 0.0
    %4965 = vmatprep.subr.mxu0 0.0
    %4966 = vmatpush1.msra.mxu0 0.0
    %4967 = vmatprep.subr.mxu0 0.0
    %4968 = vmatpush1.msra.mxu0 0.0
    %4969 = vmatprep.subr.mxu0 0.0
    %4970 = vmatpush1.msra.mxu0 0.0
    %4971 = vmatprep.subr.mxu0 0.0
    %4972 = vmatpush1.msra.mxu0 0.0
    %4973 = vmatprep.subr.mxu0 0.0
    %4974 = vmatpush1.msra.mxu0 0.0
    %4975 = vmatprep.subr.mxu0 0.0
    %4976 = vmatpush1.msra.mxu0 0.0
    %4977 = vmatprep.subr.mxu0 0.0
    %4978 = vmatpush1.msra.mxu0 0.0
    %4979 = vmatprep.subr.mxu0 0.0
    %4980 = vmatpush1.msra.mxu0 0.0
    %4981 = vmatprep.subr.mxu0 0.0
    %4982 = vmatpush1.msra.mxu0 0.0
    %4983 = vmatprep.subr.mxu0 0.0
    %4984 = vmatpush1.msra.mxu0 0.0
    %4985 = vmatprep.subr.mxu0 0.0
    %4986 = vmatpush1.msra.mxu0 0.0
    %4987 = vmatprep.subr.mxu0 0.0
    %4988 = vmatpush1.msra.mxu0 0.0
    %4989 = vmatprep.subr.mxu0 0.0
    %4990 = vmatpush1.msra.mxu0 0.0
    %4991 = vmatprep.subr.mxu0 0.0
    %4992 = vmatpush1.msra.mxu0 0.0
    %4993 = vmatprep.subr.mxu0 0.0
    %4994 = vmatpush1.msra.mxu0 0.0
    %4995 = vmatprep.subr.mxu0 0.0
    %4996 = vmatpush1.msra.mxu0 0.0
    %4997 = vmatprep.subr.mxu0 0.0
    %4998 = vmatpush1.msra.mxu0 0.0
    %4999 = vmatprep.subr.mxu0 0.0
    %5000 = vmatpush1.msra.mxu0 0.0
    %5001 = vmatprep.subr.mxu0 0.0
    %5002 = vmatpush1.msra.mxu0 0.0
    %5003 = vmatprep.subr.mxu0 0.0
    %5004 = vmatpush1.msra.mxu0 0.0
    %5005 = vmatprep.subr.mxu0 0.0
    %5006 = vmatpush1.msra.mxu0 0.0
    %5007 = vmatprep.subr.mxu0 0.0
    %5008 = vmatpush1.msra.mxu0 0.0
    %5009 = vmatprep.subr.mxu0 0.0
    %5010 = vmatpush1.msra.mxu0 0.0
    %5011 = vmatprep.subr.mxu0 0.0
    %5012 = vmatpush1.msra.mxu0 0.0
    %5013 = vmatprep.mubr.f32.mxu0 0.0
    %v5014 = vand.u32 %v4533, 4294901760
    %5015 = vmatmul.mubr.f32.gmra.mrb[0].mxu0 %v5014
    %v5016 = vpop.f32.mrb[0].mxu0
    %v5017 = vadd.f32 %v4942, %v5016
    %v5018 = vpop.f32.mrb[0].mxu0
    %5019 = vdwg.mxu0
    %v5021 = vsel %vm2484, %v4056, 0
    %5023 = vmatprep.subr.mxu0 0.0
    %v5024 = vand.u32 %v4059, 4294901760
    %5025 = vmatpush1.msra.mxu0 %v5024
    %5026 = vmatprep.subr.mxu0 0.0
    %v5027 = vand.u32 %v4060, 4294901760
    %5028 = vmatpush1.msra.mxu0 %v5027
    %5029 = vmatprep.subr.mxu0 0.0
    %v5030 = vand.u32 %v4061, 4294901760
    %5031 = vmatpush1.msra.mxu0 %v5030
    %5032 = vmatprep.subr.mxu0 0.0
    %v5033 = vand.u32 %v4062, 4294901760
    %5034 = vmatpush1.msra.mxu0 %v5033
    %5035 = vmatprep.subr.mxu0 0.0
    %5036 = vmatpush1.msra.mxu0 0.0
    %5037 = vmatprep.subr.mxu0 0.0
    %5038 = vmatpush1.msra.mxu0 0.0
    %5039 = vmatprep.subr.mxu0 0.0
    %5040 = vmatpush1.msra.mxu0 0.0
    %5041 = vmatprep.subr.mxu0 0.0
    %5042 = vmatpush1.msra.mxu0 0.0
    %5043 = vmatprep.subr.mxu0 0.0
    %5044 = vmatpush1.msra.mxu0 0.0
    %5045 = vmatprep.subr.mxu0 0.0
    %5046 = vmatpush1.msra.mxu0 0.0
    %5047 = vmatprep.subr.mxu0 0.0
    %5048 = vmatpush1.msra.mxu0 0.0
    %5049 = vmatprep.subr.mxu0 0.0
    %5050 = vmatpush1.msra.mxu0 0.0
    %5051 = vmatprep.subr.mxu0 0.0
    %5052 = vmatpush1.msra.mxu0 0.0
    %5053 = vmatprep.subr.mxu0 0.0
    %5054 = vmatpush1.msra.mxu0 0.0
    %5055 = vmatprep.subr.mxu0 0.0
    %5056 = vmatpush1.msra.mxu0 0.0
    %5057 = vmatprep.subr.mxu0 0.0
    %5058 = vmatpush1.msra.mxu0 0.0
    %5059 = vmatprep.subr.mxu0 0.0
    %5060 = vmatpush1.msra.mxu0 0.0
    %5061 = vmatprep.subr.mxu0 0.0
    %5062 = vmatpush1.msra.mxu0 0.0
    %5063 = vmatprep.subr.mxu0 0.0
    %5064 = vmatpush1.msra.mxu0 0.0
    %5065 = vmatprep.subr.mxu0 0.0
    %5066 = vmatpush1.msra.mxu0 0.0
    %5067 = vmatprep.subr.mxu0 0.0
    %5068 = vmatpush1.msra.mxu0 0.0
    %5069 = vmatprep.subr.mxu0 0.0
    %5070 = vmatpush1.msra.mxu0 0.0
    %5071 = vmatprep.subr.mxu0 0.0
    %5072 = vmatpush1.msra.mxu0 0.0
    %5073 = vmatprep.subr.mxu0 0.0
    %5074 = vmatpush1.msra.mxu0 0.0
    %5075 = vmatprep.subr.mxu0 0.0
    %5076 = vmatpush1.msra.mxu0 0.0
    %5077 = vmatprep.subr.mxu0 0.0
    %5078 = vmatpush1.msra.mxu0 0.0
    %5079 = vmatprep.subr.mxu0 0.0
    %5080 = vmatpush1.msra.mxu0 0.0
    %5081 = vmatprep.subr.mxu0 0.0
    %5082 = vmatpush1.msra.mxu0 0.0
    %5083 = vmatprep.subr.mxu0 0.0
    %5084 = vmatpush1.msra.mxu0 0.0
    %5085 = vmatprep.subr.mxu0 0.0
    %5086 = vmatpush1.msra.mxu0 0.0
    %5087 = vmatprep.subr.mxu0 0.0
    %5088 = vmatpush1.msra.mxu0 0.0
    %5089 = vmatprep.subr.mxu0 0.0
    %5090 = vmatpush1.msra.mxu0 0.0
    %5091 = vmatprep.mubr.f32.mxu0 0.0
    %v5092 = vand.u32 %v5021, 4294901760
    %v5093 = vsub.f32 %v5021, %v5092
    %v5094 = vand.u32 %v5093, 4294901760
    %v5095 = vsub.f32 %v5093, %v5094
    %v5096 = vand.u32 %v5095, 4294901760
    %5097 = vmatmul.mubr.f32.gmra.mrb[0].mxu0 %v5096
    %v5098 = vpop.f32.mrb[0].mxu0
    %v5099 = vadd.f32 %v5017, %v5098
    %v5100 = vpop.f32.mrb[0].mxu0
    %5101 = vdwg.mxu0
    %5102 = vmatprep.subr.mxu0 0.0
    %v5103 = vand.u32 %v4059, 4294901760
    %v5104 = vsub.f32 %v4059, %v5103
    %v5105 = vand.u32 %v5104, 4294901760
    %v5106 = vsub.f32 %v5104, %v5105
    %v5107 = vand.u32 %v5106, 4294901760
    %5108 = vmatpush1.msra.mxu0 %v5107
    %5109 = vmatprep.subr.mxu0 0.0
    %v5110 = vand.u32 %v4060, 4294901760
    %v5111 = vsub.f32 %v4060, %v5110
    %v5112 = vand.u32 %v5111, 4294901760
    %v5113 = vsub.f32 %v5111, %v5112
    %v5114 = vand.u32 %v5113, 4294901760
    %5115 = vmatpush1.msra.mxu0 %v5114
    %5116 = vmatprep.subr.mxu0 0.0
    %v5117 = vand.u32 %v4061, 4294901760
    %v5118 = vsub.f32 %v4061, %v5117
    %v5119 = vand.u32 %v5118, 4294901760
    %v5120 = vsub.f32 %v5118, %v5119
    %v5121 = vand.u32 %v5120, 4294901760
    %5122 = vmatpush1.msra.mxu0 %v5121
    %5123 = vmatprep.subr.mxu0 0.0
    %v5124 = vand.u32 %v4062, 4294901760
    %v5125 = vsub.f32 %v4062, %v5124
    %v5126 = vand.u32 %v5125, 4294901760
    %v5127 = vsub.f32 %v5125, %v5126
    %v5128 = vand.u32 %v5127, 4294901760
    %5129 = vmatpush1.msra.mxu0 %v5128
    %5130 = vmatprep.subr.mxu0 0.0
    %5131 = vmatpush1.msra.mxu0 0.0
    %5132 = vmatprep.subr.mxu0 0.0
    %5133 = vmatpush1.msra.mxu0 0.0
    %5134 = vmatprep.subr.mxu0 0.0
    %5135 = vmatpush1.msra.mxu0 0.0
    %5136 = vmatprep.subr.mxu0 0.0
    %5137 = vmatpush1.msra.mxu0 0.0
    %5138 = vmatprep.subr.mxu0 0.0
    %5139 = vmatpush1.msra.mxu0 0.0
    %5140 = vmatprep.subr.mxu0 0.0
    %5141 = vmatpush1.msra.mxu0 0.0
    %5142 = vmatprep.subr.mxu0 0.0
    %5143 = vmatpush1.msra.mxu0 0.0
    %5144 = vmatprep.subr.mxu0 0.0
    %5145 = vmatpush1.msra.mxu0 0.0
    %5146 = vmatprep.subr.mxu0 0.0
    %5147 = vmatpush1.msra.mxu0 0.0
    %5148 = vmatprep.subr.mxu0 0.0
    %5149 = vmatpush1.msra.mxu0 0.0
    %5150 = vmatprep.subr.mxu0 0.0
    %5151 = vmatpush1.msra.mxu0 0.0
    %5152 = vmatprep.subr.mxu0 0.0
    %5153 = vmatpush1.msra.mxu0 0.0
    %5154 = vmatprep.subr.mxu0 0.0
    %5155 = vmatpush1.msra.mxu0 0.0
    %5156 = vmatprep.subr.mxu0 0.0
    %5157 = vmatpush1.msra.mxu0 0.0
    %5158 = vmatprep.subr.mxu0 0.0
    %5159 = vmatpush1.msra.mxu0 0.0
    %5160 = vmatprep.subr.mxu0 0.0
    %5161 = vmatpush1.msra.mxu0 0.0
    %5162 = vmatprep.subr.mxu0 0.0
    %5163 = vmatpush1.msra.mxu0 0.0
    %5164 = vmatprep.subr.mxu0 0.0
    %5165 = vmatpush1.msra.mxu0 0.0
    %5166 = vmatprep.subr.mxu0 0.0
    %5167 = vmatpush1.msra.mxu0 0.0
    %5168 = vmatprep.subr.mxu0 0.0
    %5169 = vmatpush1.msra.mxu0 0.0
    %5170 = vmatprep.subr.mxu0 0.0
    %5171 = vmatpush1.msra.mxu0 0.0
    %5172 = vmatprep.subr.mxu0 0.0
    %5173 = vmatpush1.msra.mxu0 0.0
    %5174 = vmatprep.subr.mxu0 0.0
    %5175 = vmatpush1.msra.mxu0 0.0
    %5176 = vmatprep.subr.mxu0 0.0
    %5177 = vmatpush1.msra.mxu0 0.0
    %5178 = vmatprep.subr.mxu0 0.0
    %5179 = vmatpush1.msra.mxu0 0.0
    %5180 = vmatprep.subr.mxu0 0.0
    %5181 = vmatpush1.msra.mxu0 0.0
    %5182 = vmatprep.subr.mxu0 0.0
    %5183 = vmatpush1.msra.mxu0 0.0
    %5184 = vmatprep.subr.mxu0 0.0
    %5185 = vmatpush1.msra.mxu0 0.0
    %5186 = vmatprep.mubr.f32.mxu0 0.0
    %v5187 = vand.u32 %v5021, 4294901760
    %5188 = vmatmul.mubr.f32.gmra.mrb[0].mxu0 %v5187
    %v5189 = vpop.f32.mrb[0].mxu0
    %v5190 = vadd.f32 %v5099, %v5189
    %v5191 = vpop.f32.mrb[0].mxu0
    %5192 = vdwg.mxu0
    %5193 = vmatprep.subr.mxu0 0.0
    %v5194 = vand.u32 %v4059, 4294901760
    %v5195 = vsub.f32 %v4059, %v5194
    %5196 = vmatpush1.msra.mxu0 %v5195
    %5197 = vmatprep.subr.mxu0 0.0
    %v5198 = vand.u32 %v4060, 4294901760
    %v5199 = vsub.f32 %v4060, %v5198
    %5200 = vmatpush1.msra.mxu0 %v5199
    %5201 = vmatprep.subr.mxu0 0.0
    %v5202 = vand.u32 %v4061, 4294901760
    %v5203 = vsub.f32 %v4061, %v5202
    %5204 = vmatpush1.msra.mxu0 %v5203
    %5205 = vmatprep.subr.mxu0 0.0
    %v5206 = vand.u32 %v4062, 4294901760
    %v5207 = vsub.f32 %v4062, %v5206
    %5208 = vmatpush1.msra.mxu0 %v5207
    %5209 = vmatprep.subr.mxu0 0.0
    %5210 = vmatpush1.msra.mxu0 0.0
    %5211 = vmatprep.subr.mxu0 0.0
    %5212 = vmatpush1.msra.mxu0 0.0
    %5213 = vmatprep.subr.mxu0 0.0
    %5214 = vmatpush1.msra.mxu0 0.0
    %5215 = vmatprep.subr.mxu0 0.0
    %5216 = vmatpush1.msra.mxu0 0.0
    %5217 = vmatprep.subr.mxu0 0.0
    %5218 = vmatpush1.msra.mxu0 0.0
    %5219 = vmatprep.subr.mxu0 0.0
    %5220 = vmatpush1.msra.mxu0 0.0
    %5221 = vmatprep.subr.mxu0 0.0
    %5222 = vmatpush1.msra.mxu0 0.0
    %5223 = vmatprep.subr.mxu0 0.0
    %5224 = vmatpush1.msra.mxu0 0.0
    %5225 = vmatprep.subr.mxu0 0.0
    %5226 = vmatpush1.msra.mxu0 0.0
    %5227 = vmatprep.subr.mxu0 0.0
    %5228 = vmatpush1.msra.mxu0 0.0
    %5229 = vmatprep.subr.mxu0 0.0
    %5230 = vmatpush1.msra.mxu0 0.0
    %5231 = vmatprep.subr.mxu0 0.0
    %5232 = vmatpush1.msra.mxu0 0.0
    %5233 = vmatprep.subr.mxu0 0.0
    %5234 = vmatpush1.msra.mxu0 0.0
    %5235 = vmatprep.subr.mxu0 0.0
    %5236 = vmatpush1.msra.mxu0 0.0
    %5237 = vmatprep.subr.mxu0 0.0
    %5238 = vmatpush1.msra.mxu0 0.0
    %5239 = vmatprep.subr.mxu0 0.0
    %5240 = vmatpush1.msra.mxu0 0.0
    %5241 = vmatprep.subr.mxu0 0.0
    %5242 = vmatpush1.msra.mxu0 0.0
    %5243 = vmatprep.subr.mxu0 0.0
    %5244 = vmatpush1.msra.mxu0 0.0
    %5245 = vmatprep.subr.mxu0 0.0
    %5246 = vmatpush1.msra.mxu0 0.0
    %5247 = vmatprep.subr.mxu0 0.0
    %5248 = vmatpush1.msra.mxu0 0.0
    %5249 = vmatprep.subr.mxu0 0.0
    %5250 = vmatpush1.msra.mxu0 0.0
    %5251 = vmatprep.subr.mxu0 0.0
    %5252 = vmatpush1.msra.mxu0 0.0
    %5253 = vmatprep.subr.mxu0 0.0
    %5254 = vmatpush1.msra.mxu0 0.0
    %5255 = vmatprep.subr.mxu0 0.0
    %5256 = vmatpush1.msra.mxu0 0.0
    %5257 = vmatprep.subr.mxu0 0.0
    %5258 = vmatpush1.msra.mxu0 0.0
    %5259 = vmatprep.subr.mxu0 0.0
    %5260 = vmatpush1.msra.mxu0 0.0
    %5261 = vmatprep.subr.mxu0 0.0
    %5262 = vmatpush1.msra.mxu0 0.0
    %5263 = vmatprep.subr.mxu0 0.0
    %5264 = vmatpush1.msra.mxu0 0.0
    %5265 = vmatprep.mubr.f32.mxu0 0.0
    %v5266 = vand.u32 %v5021, 4294901760
    %v5267 = vsub.f32 %v5021, %v5266
    %5268 = vmatmul.mubr.f32.gmra.mrb[0].mxu0 %v5267
    %v5269 = vpop.f32.mrb[0].mxu0
    %v5270 = vadd.f32 %v5190, %v5269
    %v5271 = vpop.f32.mrb[0].mxu0
    %5272 = vdwg.mxu0
    %5273 = vmatprep.subr.mxu0 0.0
    %v5274 = vand.u32 %v4059, 4294901760
    %5275 = vmatpush1.msra.mxu0 %v5274
    %5276 = vmatprep.subr.mxu0 0.0
    %v5277 = vand.u32 %v4060, 4294901760
    %5278 = vmatpush1.msra.mxu0 %v5277
    %5279 = vmatprep.subr.mxu0 0.0
    %v5280 = vand.u32 %v4061, 4294901760
    %5281 = vmatpush1.msra.mxu0 %v5280
    %5282 = vmatprep.subr.mxu0 0.0
    %v5283 = vand.u32 %v4062, 4294901760
    %5284 = vmatpush1.msra.mxu0 %v5283
    %5285 = vmatprep.subr.mxu0 0.0
    %5286 = vmatpush1.msra.mxu0 0.0
    %5287 = vmatprep.subr.mxu0 0.0
    %5288 = vmatpush1.msra.mxu0 0.0
    %5289 = vmatprep.subr.mxu0 0.0
    %5290 = vmatpush1.msra.mxu0 0.0
    %5291 = vmatprep.subr.mxu0 0.0
    %5292 = vmatpush1.msra.mxu0 0.0
    %5293 = vmatprep.subr.mxu0 0.0
    %5294 = vmatpush1.msra.mxu0 0.0
    %5295 = vmatprep.subr.mxu0 0.0
    %5296 = vmatpush1.msra.mxu0 0.0
    %5297 = vmatprep.subr.mxu0 0.0
    %5298 = vmatpush1.msra.mxu0 0.0
    %5299 = vmatprep.subr.mxu0 0.0
    %5300 = vmatpush1.msra.mxu0 0.0
    %5301 = vmatprep.subr.mxu0 0.0
    %5302 = vmatpush1.msra.mxu0 0.0
    %5303 = vmatprep.subr.mxu0 0.0
    %5304 = vmatpush1.msra.mxu0 0.0
    %5305 = vmatprep.subr.mxu0 0.0
    %5306 = vmatpush1.msra.mxu0 0.0
    %5307 = vmatprep.subr.mxu0 0.0
    %5308 = vmatpush1.msra.mxu0 0.0
    %5309 = vmatprep.subr.mxu0 0.0
    %5310 = vmatpush1.msra.mxu0 0.0
    %5311 = vmatprep.subr.mxu0 0.0
    %5312 = vmatpush1.msra.mxu0 0.0
    %5313 = vmatprep.subr.mxu0 0.0
    %5314 = vmatpush1.msra.mxu0 0.0
    %5315 = vmatprep.subr.mxu0 0.0
    %5316 = vmatpush1.msra.mxu0 0.0
    %5317 = vmatprep.subr.mxu0 0.0
    %5318 = vmatpush1.msra.mxu0 0.0
    %5319 = vmatprep.subr.mxu0 0.0
    %5320 = vmatpush1.msra.mxu0 0.0
    %5321 = vmatprep.subr.mxu0 0.0
    %5322 = vmatpush1.msra.mxu0 0.0
    %5323 = vmatprep.subr.mxu0 0.0
    %5324 = vmatpush1.msra.mxu0 0.0
    %5325 = vmatprep.subr.mxu0 0.0
    %5326 = vmatpush1.msra.mxu0 0.0
    %5327 = vmatprep.subr.mxu0 0.0
    %5328 = vmatpush1.msra.mxu0 0.0
    %5329 = vmatprep.subr.mxu0 0.0
    %5330 = vmatpush1.msra.mxu0 0.0
    %5331 = vmatprep.subr.mxu0 0.0
    %5332 = vmatpush1.msra.mxu0 0.0
    %5333 = vmatprep.subr.mxu0 0.0
    %5334 = vmatpush1.msra.mxu0 0.0
    %5335 = vmatprep.subr.mxu0 0.0
    %5336 = vmatpush1.msra.mxu0 0.0
    %5337 = vmatprep.subr.mxu0 0.0
    %5338 = vmatpush1.msra.mxu0 0.0
    %5339 = vmatprep.subr.mxu0 0.0
    %5340 = vmatpush1.msra.mxu0 0.0
    %5341 = vmatprep.mubr.f32.mxu0 0.0
    %v5342 = vand.u32 %v5021, 4294901760
    %v5343 = vsub.f32 %v5021, %v5342
    %v5344 = vand.u32 %v5343, 4294901760
    %5345 = vmatmul.mubr.f32.gmra.mrb[0].mxu0 %v5344
    %v5346 = vpop.f32.mrb[0].mxu0
    %v5347 = vadd.f32 %v5270, %v5346
    %v5348 = vpop.f32.mrb[0].mxu0
    %5349 = vdwg.mxu0
    %5350 = vmatprep.subr.mxu0 0.0
    %v5351 = vand.u32 %v4059, 4294901760
    %v5352 = vsub.f32 %v4059, %v5351
    %v5353 = vand.u32 %v5352, 4294901760
    %5354 = vmatpush1.msra.mxu0 %v5353
    %5355 = vmatprep.subr.mxu0 0.0
    %v5356 = vand.u32 %v4060, 4294901760
    %v5357 = vsub.f32 %v4060, %v5356
    %v5358 = vand.u32 %v5357, 4294901760
    %5359 = vmatpush1.msra.mxu0 %v5358
    %5360 = vmatprep.subr.mxu0 0.0
    %v5361 = vand.u32 %v4061, 4294901760
    %v5362 = vsub.f32 %v4061, %v5361
    %v5363 = vand.u32 %v5362, 4294901760
    %5364 = vmatpush1.msra.mxu0 %v5363
    %5365 = vmatprep.subr.mxu0 0.0
    %v5366 = vand.u32 %v4062, 4294901760
    %v5367 = vsub.f32 %v4062, %v5366
    %v5368 = vand.u32 %v5367, 4294901760
    %5369 = vmatpush1.msra.mxu0 %v5368
    %5370 = vmatprep.subr.mxu0 0.0
    %5371 = vmatpush1.msra.mxu0 0.0
    %5372 = vmatprep.subr.mxu0 0.0
    %5373 = vmatpush1.msra.mxu0 0.0
    %5374 = vmatprep.subr.mxu0 0.0
    %5375 = vmatpush1.msra.mxu0 0.0
    %5376 = vmatprep.subr.mxu0 0.0
    %5377 = vmatpush1.msra.mxu0 0.0
    %5378 = vmatprep.subr.mxu0 0.0
    %5379 = vmatpush1.msra.mxu0 0.0
    %5380 = vmatprep.subr.mxu0 0.0
    %5381 = vmatpush1.msra.mxu0 0.0
    %5382 = vmatprep.subr.mxu0 0.0
    %5383 = vmatpush1.msra.mxu0 0.0
    %5384 = vmatprep.subr.mxu0 0.0
    %5385 = vmatpush1.msra.mxu0 0.0
    %5386 = vmatprep.subr.mxu0 0.0
    %5387 = vmatpush1.msra.mxu0 0.0
    %5388 = vmatprep.subr.mxu0 0.0
    %5389 = vmatpush1.msra.mxu0 0.0
    %5390 = vmatprep.subr.mxu0 0.0
    %5391 = vmatpush1.msra.mxu0 0.0
    %5392 = vmatprep.subr.mxu0 0.0
    %5393 = vmatpush1.msra.mxu0 0.0
    %5394 = vmatprep.subr.mxu0 0.0
    %5395 = vmatpush1.msra.mxu0 0.0
    %5396 = vmatprep.subr.mxu0 0.0
    %5397 = vmatpush1.msra.mxu0 0.0
    %5398 = vmatprep.subr.mxu0 0.0
    %5399 = vmatpush1.msra.mxu0 0.0
    %5400 = vmatprep.subr.mxu0 0.0
    %5401 = vmatpush1.msra.mxu0 0.0
    %5402 = vmatprep.subr.mxu0 0.0
    %5403 = vmatpush1.msra.mxu0 0.0
    %5404 = vmatprep.subr.mxu0 0.0
    %5405 = vmatpush1.msra.mxu0 0.0
    %5406 = vmatprep.subr.mxu0 0.0
    %5407 = vmatpush1.msra.mxu0 0.0
    %5408 = vmatprep.subr.mxu0 0.0
    %5409 = vmatpush1.msra.mxu0 0.0
    %5410 = vmatprep.subr.mxu0 0.0
    %5411 = vmatpush1.msra.mxu0 0.0
    %5412 = vmatprep.subr.mxu0 0.0
    %5413 = vmatpush1.msra.mxu0 0.0
    %5414 = vmatprep.subr.mxu0 0.0
    %5415 = vmatpush1.msra.mxu0 0.0
    %5416 = vmatprep.subr.mxu0 0.0
    %5417 = vmatpush1.msra.mxu0 0.0
    %5418 = vmatprep.subr.mxu0 0.0
    %5419 = vmatpush1.msra.mxu0 0.0
    %5420 = vmatprep.subr.mxu0 0.0
    %5421 = vmatpush1.msra.mxu0 0.0
    %5422 = vmatprep.subr.mxu0 0.0
    %5423 = vmatpush1.msra.mxu0 0.0
    %5424 = vmatprep.subr.mxu0 0.0
    %5425 = vmatpush1.msra.mxu0 0.0
    %5426 = vmatprep.mubr.f32.mxu0 0.0
    %v5427 = vand.u32 %v5021, 4294901760
    %5428 = vmatmul.mubr.f32.gmra.mrb[0].mxu0 %v5427
    %v5429 = vpop.f32.mrb[0].mxu0
    %v5430 = vadd.f32 %v5347, %v5429
    %v5431 = vpop.f32.mrb[0].mxu0
    %5432 = vdwg.mxu0
    %5433 = vmatprep.subr.mxu0 0.0
    %v5434 = vand.u32 %v4059, 4294901760
    %5435 = vmatpush1.msra.mxu0 %v5434
    %5436 = vmatprep.subr.mxu0 0.0
    %v5437 = vand.u32 %v4060, 4294901760
    %5438 = vmatpush1.msra.mxu0 %v5437
    %5439 = vmatprep.subr.mxu0 0.0
    %v5440 = vand.u32 %v4061, 4294901760
    %5441 = vmatpush1.msra.mxu0 %v5440
    %5442 = vmatprep.subr.mxu0 0.0
    %v5443 = vand.u32 %v4062, 4294901760
    %5444 = vmatpush1.msra.mxu0 %v5443
    %5445 = vmatprep.subr.mxu0 0.0
    %5446 = vmatpush1.msra.mxu0 0.0
    %5447 = vmatprep.subr.mxu0 0.0
    %5448 = vmatpush1.msra.mxu0 0.0
    %5449 = vmatprep.subr.mxu0 0.0
    %5450 = vmatpush1.msra.mxu0 0.0
    %5451 = vmatprep.subr.mxu0 0.0
    %5452 = vmatpush1.msra.mxu0 0.0
    %5453 = vmatprep.subr.mxu0 0.0
    %5454 = vmatpush1.msra.mxu0 0.0
    %5455 = vmatprep.subr.mxu0 0.0
    %5456 = vmatpush1.msra.mxu0 0.0
    %5457 = vmatprep.subr.mxu0 0.0
    %5458 = vmatpush1.msra.mxu0 0.0
    %5459 = vmatprep.subr.mxu0 0.0
    %5460 = vmatpush1.msra.mxu0 0.0
    %5461 = vmatprep.subr.mxu0 0.0
    %5462 = vmatpush1.msra.mxu0 0.0
    %5463 = vmatprep.subr.mxu0 0.0
    %5464 = vmatpush1.msra.mxu0 0.0
    %5465 = vmatprep.subr.mxu0 0.0
    %5466 = vmatpush1.msra.mxu0 0.0
    %5467 = vmatprep.subr.mxu0 0.0
    %5468 = vmatpush1.msra.mxu0 0.0
    %5469 = vmatprep.subr.mxu0 0.0
    %5470 = vmatpush1.msra.mxu0 0.0
    %5471 = vmatprep.subr.mxu0 0.0
    %5472 = vmatpush1.msra.mxu0 0.0
    %5473 = vmatprep.subr.mxu0 0.0
    %5474 = vmatpush1.msra.mxu0 0.0
    %5475 = vmatprep.subr.mxu0 0.0
    %5476 = vmatpush1.msra.mxu0 0.0
    %5477 = vmatprep.subr.mxu0 0.0
    %5478 = vmatpush1.msra.mxu0 0.0
    %5479 = vmatprep.subr.mxu0 0.0
    %5480 = vmatpush1.msra.mxu0 0.0
    %5481 = vmatprep.subr.mxu0 0.0
    %5482 = vmatpush1.msra.mxu0 0.0
    %5483 = vmatprep.subr.mxu0 0.0
    %5484 = vmatpush1.msra.mxu0 0.0
    %5485 = vmatprep.subr.mxu0 0.0
    %5486 = vmatpush1.msra.mxu0 0.0
    %5487 = vmatprep.subr.mxu0 0.0
    %5488 = vmatpush1.msra.mxu0 0.0
    %5489 = vmatprep.subr.mxu0 0.0
    %5490 = vmatpush1.msra.mxu0 0.0
    %5491 = vmatprep.subr.mxu0 0.0
    %5492 = vmatpush1.msra.mxu0 0.0
    %5493 = vmatprep.subr.mxu0 0.0
    %5494 = vmatpush1.msra.mxu0 0.0
    %5495 = vmatprep.subr.mxu0 0.0
    %5496 = vmatpush1.msra.mxu0 0.0
    %5497 = vmatprep.subr.mxu0 0.0
    %5498 = vmatpush1.msra.mxu0 0.0
    %5499 = vmatprep.subr.mxu0 0.0
    %5500 = vmatpush1.msra.mxu0 0.0
    %5501 = vmatprep.mubr.f32.mxu0 0.0
    %v5502 = vand.u32 %v5021, 4294901760
    %5503 = vmatmul.mubr.f32.gmra.mrb[0].mxu0 %v5502
    %v5504 = vpop.f32.mrb[0].mxu0
    %v5505 = vadd.f32 %v5430, %v5504
    %v5506 = vpop.f32.mrb[0].mxu0
    %5507 = vdwg.mxu0
    %s5508 = scalar_lea.vmem %s13, 16
    %v5509 = vld [vmem:[%s5508] sm:$0xff]
    %v5511 = vsel %vm3592, %v5509, 0
    %5513 = vmatprep.subr.mxu0 0.0
    %v5514 = vand.u32 %v3589, 4294901760
    %5515 = vmatpush1.msra.mxu0 %v5514
    %5516 = vmatprep.subr.mxu0 0.0
    %v5517 = vand.u32 %v3598, 4294901760
    %5518 = vmatpush1.msra.mxu0 %v5517
    %5519 = vmatprep.subr.mxu0 0.0
    %5520 = vmatpush1.msra.mxu0 0.0
    %5521 = vmatprep.subr.mxu0 0.0
    %5522 = vmatpush1.msra.mxu0 0.0
    %5523 = vmatprep.subr.mxu0 0.0
    %5524 = vmatpush1.msra.mxu0 0.0
    %5525 = vmatprep.subr.mxu0 0.0
    %5526 = vmatpush1.msra.mxu0 0.0
    %5527 = vmatprep.subr.mxu0 0.0
    %5528 = vmatpush1.msra.mxu0 0.0
    %5529 = vmatprep.subr.mxu0 0.0
    %5530 = vmatpush1.msra.mxu0 0.0
    %5531 = vmatprep.subr.mxu0 0.0
    %5532 = vmatpush1.msra.mxu0 0.0
    %5533 = vmatprep.subr.mxu0 0.0
    %5534 = vmatpush1.msra.mxu0 0.0
    %5535 = vmatprep.subr.mxu0 0.0
    %5536 = vmatpush1.msra.mxu0 0.0
    %5537 = vmatprep.subr.mxu0 0.0
    %5538 = vmatpush1.msra.mxu0 0.0
    %5539 = vmatprep.subr.mxu0 0.0
    %5540 = vmatpush1.msra.mxu0 0.0
    %5541 = vmatprep.subr.mxu0 0.0
    %5542 = vmatpush1.msra.mxu0 0.0
    %5543 = vmatprep.subr.mxu0 0.0
    %5544 = vmatpush1.msra.mxu0 0.0
    %5545 = vmatprep.subr.mxu0 0.0
    %5546 = vmatpush1.msra.mxu0 0.0
    %5547 = vmatprep.subr.mxu0 0.0
    %5548 = vmatpush1.msra.mxu0 0.0
    %5549 = vmatprep.subr.mxu0 0.0
    %5550 = vmatpush1.msra.mxu0 0.0
    %5551 = vmatprep.subr.mxu0 0.0
    %5552 = vmatpush1.msra.mxu0 0.0
    %5553 = vmatprep.subr.mxu0 0.0
    %5554 = vmatpush1.msra.mxu0 0.0
    %5555 = vmatprep.subr.mxu0 0.0
    %5556 = vmatpush1.msra.mxu0 0.0
    %5557 = vmatprep.subr.mxu0 0.0
    %5558 = vmatpush1.msra.mxu0 0.0
    %5559 = vmatprep.subr.mxu0 0.0
    %5560 = vmatpush1.msra.mxu0 0.0
    %5561 = vmatprep.subr.mxu0 0.0
    %5562 = vmatpush1.msra.mxu0 0.0
    %5563 = vmatprep.subr.mxu0 0.0
    %5564 = vmatpush1.msra.mxu0 0.0
    %5565 = vmatprep.subr.mxu0 0.0
    %5566 = vmatpush1.msra.mxu0 0.0
    %5567 = vmatprep.subr.mxu0 0.0
    %5568 = vmatpush1.msra.mxu0 0.0
    %5569 = vmatprep.subr.mxu0 0.0
    %5570 = vmatpush1.msra.mxu0 0.0
    %5571 = vmatprep.subr.mxu0 0.0
    %5572 = vmatpush1.msra.mxu0 0.0
    %5573 = vmatprep.subr.mxu0 0.0
    %5574 = vmatpush1.msra.mxu0 0.0
    %5575 = vmatprep.subr.mxu0 0.0
    %5576 = vmatpush1.msra.mxu0 0.0
    %5577 = vmatprep.subr.mxu0 0.0
    %5578 = vmatpush1.msra.mxu0 0.0
    %5579 = vmatprep.mubr.f32.mxu0 0.0
    %v5580 = vand.u32 %v5511, 4294901760
    %v5581 = vsub.f32 %v5511, %v5580
    %v5582 = vand.u32 %v5581, 4294901760
    %v5583 = vsub.f32 %v5581, %v5582
    %v5584 = vand.u32 %v5583, 4294901760
    %5585 = vmatmul.mubr.f32.gmra.mrb[0].mxu0 %v5584
    %v5586 = vpop.f32.mrb[0].mxu0
    %v5587 = vadd.f32 0.0, %v5586
    %v5588 = vpop.f32.mrb[0].mxu0
    %5589 = vdwg.mxu0
    %5590 = vmatprep.subr.mxu0 0.0
    %v5591 = vand.u32 %v3589, 4294901760
    %v5592 = vsub.f32 %v3589, %v5591
    %v5593 = vand.u32 %v5592, 4294901760
    %v5594 = vsub.f32 %v5592, %v5593
    %v5595 = vand.u32 %v5594, 4294901760
    %5596 = vmatpush1.msra.mxu0 %v5595
    %5597 = vmatprep.subr.mxu0 0.0
    %v5598 = vand.u32 %v3598, 4294901760
    %v5599 = vsub.f32 %v3598, %v5598
    %v5600 = vand.u32 %v5599, 4294901760
    %v5601 = vsub.f32 %v5599, %v5600
    %v5602 = vand.u32 %v5601, 4294901760
    %5603 = vmatpush1.msra.mxu0 %v5602
    %5604 = vmatprep.subr.mxu0 0.0
    %5605 = vmatpush1.msra.mxu0 0.0
    %5606 = vmatprep.subr.mxu0 0.0
    %5607 = vmatpush1.msra.mxu0 0.0
    %5608 = vmatprep.subr.mxu0 0.0
    %5609 = vmatpush1.msra.mxu0 0.0
    %5610 = vmatprep.subr.mxu0 0.0
    %5611 = vmatpush1.msra.mxu0 0.0
    %5612 = vmatprep.subr.mxu0 0.0
    %5613 = vmatpush1.msra.mxu0 0.0
    %5614 = vmatprep.subr.mxu0 0.0
    %5615 = vmatpush1.msra.mxu0 0.0
    %5616 = vmatprep.subr.mxu0 0.0
    %5617 = vmatpush1.msra.mxu0 0.0
    %5618 = vmatprep.subr.mxu0 0.0
    %5619 = vmatpush1.msra.mxu0 0.0
    %5620 = vmatprep.subr.mxu0 0.0
    %5621 = vmatpush1.msra.mxu0 0.0
    %5622 = vmatprep.subr.mxu0 0.0
    %5623 = vmatpush1.msra.mxu0 0.0
    %5624 = vmatprep.subr.mxu0 0.0
    %5625 = vmatpush1.msra.mxu0 0.0
    %5626 = vmatprep.subr.mxu0 0.0
    %5627 = vmatpush1.msra.mxu0 0.0
    %5628 = vmatprep.subr.mxu0 0.0
    %5629 = vmatpush1.msra.mxu0 0.0
    %5630 = vmatprep.subr.mxu0 0.0
    %5631 = vmatpush1.msra.mxu0 0.0
    %5632 = vmatprep.subr.mxu0 0.0
    %5633 = vmatpush1.msra.mxu0 0.0
    %5634 = vmatprep.subr.mxu0 0.0
    %5635 = vmatpush1.msra.mxu0 0.0
    %5636 = vmatprep.subr.mxu0 0.0
    %5637 = vmatpush1.msra.mxu0 0.0
    %5638 = vmatprep.subr.mxu0 0.0
    %5639 = vmatpush1.msra.mxu0 0.0
    %5640 = vmatprep.subr.mxu0 0.0
    %5641 = vmatpush1.msra.mxu0 0.0
    %5642 = vmatprep.subr.mxu0 0.0
    %5643 = vmatpush1.msra.mxu0 0.0
    %5644 = vmatprep.subr.mxu0 0.0
    %5645 = vmatpush1.msra.mxu0 0.0
    %5646 = vmatprep.subr.mxu0 0.0
    %5647 = vmatpush1.msra.mxu0 0.0
    %5648 = vmatprep.subr.mxu0 0.0
    %5649 = vmatpush1.msra.mxu0 0.0
    %5650 = vmatprep.subr.mxu0 0.0
    %5651 = vmatpush1.msra.mxu0 0.0
    %5652 = vmatprep.subr.mxu0 0.0
    %5653 = vmatpush1.msra.mxu0 0.0
    %5654 = vmatprep.subr.mxu0 0.0
    %5655 = vmatpush1.msra.mxu0 0.0
    %5656 = vmatprep.subr.mxu0 0.0
    %5657 = vmatpush1.msra.mxu0 0.0
    %5658 = vmatprep.subr.mxu0 0.0
    %5659 = vmatpush1.msra.mxu0 0.0
    %5660 = vmatprep.subr.mxu0 0.0
    %5661 = vmatpush1.msra.mxu0 0.0
    %5662 = vmatprep.subr.mxu0 0.0
    %5663 = vmatpush1.msra.mxu0 0.0
    %5664 = vmatprep.mubr.f32.mxu0 0.0
    %v5665 = vand.u32 %v5511, 4294901760
    %5666 = vmatmul.mubr.f32.gmra.mrb[0].mxu0 %v5665
    %v5667 = vpop.f32.mrb[0].mxu0
    %v5668 = vadd.f32 %v5587, %v5667
    %v5669 = vpop.f32.mrb[0].mxu0
    %5670 = vdwg.mxu0
    %5671 = vmatprep.subr.mxu0 0.0
    %v5672 = vand.u32 %v3589, 4294901760
    %v5673 = vsub.f32 %v3589, %v5672
    %5674 = vmatpush1.msra.mxu0 %v5673
    %5675 = vmatprep.subr.mxu0 0.0
    %v5676 = vand.u32 %v3598, 4294901760
    %v5677 = vsub.f32 %v3598, %v5676
    %5678 = vmatpush1.msra.mxu0 %v5677
    %5679 = vmatprep.subr.mxu0 0.0
    %5680 = vmatpush1.msra.mxu0 0.0
    %5681 = vmatprep.subr.mxu0 0.0
    %5682 = vmatpush1.msra.mxu0 0.0
    %5683 = vmatprep.subr.mxu0 0.0
    %5684 = vmatpush1.msra.mxu0 0.0
    %5685 = vmatprep.subr.mxu0 0.0
    %5686 = vmatpush1.msra.mxu0 0.0
    %5687 = vmatprep.subr.mxu0 0.0
    %5688 = vmatpush1.msra.mxu0 0.0
    %5689 = vmatprep.subr.mxu0 0.0
    %5690 = vmatpush1.msra.mxu0 0.0
    %5691 = vmatprep.subr.mxu0 0.0
    %5692 = vmatpush1.msra.mxu0 0.0
    %5693 = vmatprep.subr.mxu0 0.0
    %5694 = vmatpush1.msra.mxu0 0.0
    %5695 = vmatprep.subr.mxu0 0.0
    %5696 = vmatpush1.msra.mxu0 0.0
    %5697 = vmatprep.subr.mxu0 0.0
    %5698 = vmatpush1.msra.mxu0 0.0
    %5699 = vmatprep.subr.mxu0 0.0
    %5700 = vmatpush1.msra.mxu0 0.0
    %5701 = vmatprep.subr.mxu0 0.0
    %5702 = vmatpush1.msra.mxu0 0.0
    %5703 = vmatprep.subr.mxu0 0.0
    %5704 = vmatpush1.msra.mxu0 0.0
    %5705 = vmatprep.subr.mxu0 0.0
    %5706 = vmatpush1.msra.mxu0 0.0
    %5707 = vmatprep.subr.mxu0 0.0
    %5708 = vmatpush1.msra.mxu0 0.0
    %5709 = vmatprep.subr.mxu0 0.0
    %5710 = vmatpush1.msra.mxu0 0.0
    %5711 = vmatprep.subr.mxu0 0.0
    %5712 = vmatpush1.msra.mxu0 0.0
    %5713 = vmatprep.subr.mxu0 0.0
    %5714 = vmatpush1.msra.mxu0 0.0
    %5715 = vmatprep.subr.mxu0 0.0
    %5716 = vmatpush1.msra.mxu0 0.0
    %5717 = vmatprep.subr.mxu0 0.0
    %5718 = vmatpush1.msra.mxu0 0.0
    %5719 = vmatprep.subr.mxu0 0.0
    %5720 = vmatpush1.msra.mxu0 0.0
    %5721 = vmatprep.subr.mxu0 0.0
    %5722 = vmatpush1.msra.mxu0 0.0
    %5723 = vmatprep.subr.mxu0 0.0
    %5724 = vmatpush1.msra.mxu0 0.0
    %5725 = vmatprep.subr.mxu0 0.0
    %5726 = vmatpush1.msra.mxu0 0.0
    %5727 = vmatprep.subr.mxu0 0.0
    %5728 = vmatpush1.msra.mxu0 0.0
    %5729 = vmatprep.subr.mxu0 0.0
    %5730 = vmatpush1.msra.mxu0 0.0
    %5731 = vmatprep.subr.mxu0 0.0
    %5732 = vmatpush1.msra.mxu0 0.0
    %5733 = vmatprep.subr.mxu0 0.0
    %5734 = vmatpush1.msra.mxu0 0.0
    %5735 = vmatprep.subr.mxu0 0.0
    %5736 = vmatpush1.msra.mxu0 0.0
    %5737 = vmatprep.subr.mxu0 0.0
    %5738 = vmatpush1.msra.mxu0 0.0
    %5739 = vmatprep.mubr.f32.mxu0 0.0
    %v5740 = vand.u32 %v5511, 4294901760
    %v5741 = vsub.f32 %v5511, %v5740
    %5742 = vmatmul.mubr.f32.gmra.mrb[0].mxu0 %v5741
    %v5743 = vpop.f32.mrb[0].mxu0
    %v5744 = vadd.f32 %v5668, %v5743
    %v5745 = vpop.f32.mrb[0].mxu0
    %5746 = vdwg.mxu0
    %5747 = vmatprep.subr.mxu0 0.0
    %v5748 = vand.u32 %v3589, 4294901760
    %5749 = vmatpush1.msra.mxu0 %v5748
    %5750 = vmatprep.subr.mxu0 0.0
    %v5751 = vand.u32 %v3598, 4294901760
    %5752 = vmatpush1.msra.mxu0 %v5751
    %5753 = vmatprep.subr.mxu0 0.0
    %5754 = vmatpush1.msra.mxu0 0.0
    %5755 = vmatprep.subr.mxu0 0.0
    %5756 = vmatpush1.msra.mxu0 0.0
    %5757 = vmatprep.subr.mxu0 0.0
    %5758 = vmatpush1.msra.mxu0 0.0
    %5759 = vmatprep.subr.mxu0 0.0
    %5760 = vmatpush1.msra.mxu0 0.0
    %5761 = vmatprep.subr.mxu0 0.0
    %5762 = vmatpush1.msra.mxu0 0.0
    %5763 = vmatprep.subr.mxu0 0.0
    %5764 = vmatpush1.msra.mxu0 0.0
    %5765 = vmatprep.subr.mxu0 0.0
    %5766 = vmatpush1.msra.mxu0 0.0
    %5767 = vmatprep.subr.mxu0 0.0
    %5768 = vmatpush1.msra.mxu0 0.0
    %5769 = vmatprep.subr.mxu0 0.0
    %5770 = vmatpush1.msra.mxu0 0.0
    %5771 = vmatprep.subr.mxu0 0.0
    %5772 = vmatpush1.msra.mxu0 0.0
    %5773 = vmatprep.subr.mxu0 0.0
    %5774 = vmatpush1.msra.mxu0 0.0
    %5775 = vmatprep.subr.mxu0 0.0
    %5776 = vmatpush1.msra.mxu0 0.0
    %5777 = vmatprep.subr.mxu0 0.0
    %5778 = vmatpush1.msra.mxu0 0.0
    %5779 = vmatprep.subr.mxu0 0.0
    %5780 = vmatpush1.msra.mxu0 0.0
    %5781 = vmatprep.subr.mxu0 0.0
    %5782 = vmatpush1.msra.mxu0 0.0
    %5783 = vmatprep.subr.mxu0 0.0
    %5784 = vmatpush1.msra.mxu0 0.0
    %5785 = vmatprep.subr.mxu0 0.0
    %5786 = vmatpush1.msra.mxu0 0.0
    %5787 = vmatprep.subr.mxu0 0.0
    %5788 = vmatpush1.msra.mxu0 0.0
    %5789 = vmatprep.subr.mxu0 0.0
    %5790 = vmatpush1.msra.mxu0 0.0
    %5791 = vmatprep.subr.mxu0 0.0
    %5792 = vmatpush1.msra.mxu0 0.0
    %5793 = vmatprep.subr.mxu0 0.0
    %5794 = vmatpush1.msra.mxu0 0.0
    %5795 = vmatprep.subr.mxu0 0.0
    %5796 = vmatpush1.msra.mxu0 0.0
    %5797 = vmatprep.subr.mxu0 0.0
    %5798 = vmatpush1.msra.mxu0 0.0
    %5799 = vmatprep.subr.mxu0 0.0
    %5800 = vmatpush1.msra.mxu0 0.0
    %5801 = vmatprep.subr.mxu0 0.0
    %5802 = vmatpush1.msra.mxu0 0.0
    %5803 = vmatprep.subr.mxu0 0.0
    %5804 = vmatpush1.msra.mxu0 0.0
    %5805 = vmatprep.subr.mxu0 0.0
    %5806 = vmatpush1.msra.mxu0 0.0
    %5807 = vmatprep.subr.mxu0 0.0
    %5808 = vmatpush1.msra.mxu0 0.0
    %5809 = vmatprep.subr.mxu0 0.0
    %5810 = vmatpush1.msra.mxu0 0.0
    %5811 = vmatprep.subr.mxu0 0.0
    %5812 = vmatpush1.msra.mxu0 0.0
    %5813 = vmatprep.mubr.f32.mxu0 0.0
    %v5814 = vand.u32 %v5511, 4294901760
    %v5815 = vsub.f32 %v5511, %v5814
    %v5816 = vand.u32 %v5815, 4294901760
    %5817 = vmatmul.mubr.f32.gmra.mrb[0].mxu0 %v5816
    %v5818 = vpop.f32.mrb[0].mxu0
    %v5819 = vadd.f32 %v5744, %v5818
    %v5820 = vpop.f32.mrb[0].mxu0
    %5821 = vdwg.mxu0
    %5822 = vmatprep.subr.mxu0 0.0
    %v5823 = vand.u32 %v3589, 4294901760
    %v5824 = vsub.f32 %v3589, %v5823
    %v5825 = vand.u32 %v5824, 4294901760
    %5826 = vmatpush1.msra.mxu0 %v5825
    %5827 = vmatprep.subr.mxu0 0.0
    %v5828 = vand.u32 %v3598, 4294901760
    %v5829 = vsub.f32 %v3598, %v5828
    %v5830 = vand.u32 %v5829, 4294901760
    %5831 = vmatpush1.msra.mxu0 %v5830
    %5832 = vmatprep.subr.mxu0 0.0
    %5833 = vmatpush1.msra.mxu0 0.0
    %5834 = vmatprep.subr.mxu0 0.0
    %5835 = vmatpush1.msra.mxu0 0.0
    %5836 = vmatprep.subr.mxu0 0.0
    %5837 = vmatpush1.msra.mxu0 0.0
    %5838 = vmatprep.subr.mxu0 0.0
    %5839 = vmatpush1.msra.mxu0 0.0
    %5840 = vmatprep.subr.mxu0 0.0
    %5841 = vmatpush1.msra.mxu0 0.0
    %5842 = vmatprep.subr.mxu0 0.0
    %5843 = vmatpush1.msra.mxu0 0.0
    %5844 = vmatprep.subr.mxu0 0.0
    %5845 = vmatpush1.msra.mxu0 0.0
    %5846 = vmatprep.subr.mxu0 0.0
    %5847 = vmatpush1.msra.mxu0 0.0
    %5848 = vmatprep.subr.mxu0 0.0
    %5849 = vmatpush1.msra.mxu0 0.0
    %5850 = vmatprep.subr.mxu0 0.0
    %5851 = vmatpush1.msra.mxu0 0.0
    %5852 = vmatprep.subr.mxu0 0.0
    %5853 = vmatpush1.msra.mxu0 0.0
    %5854 = vmatprep.subr.mxu0 0.0
    %5855 = vmatpush1.msra.mxu0 0.0
    %5856 = vmatprep.subr.mxu0 0.0
    %5857 = vmatpush1.msra.mxu0 0.0
    %5858 = vmatprep.subr.mxu0 0.0
    %5859 = vmatpush1.msra.mxu0 0.0
    %5860 = vmatprep.subr.mxu0 0.0
    %5861 = vmatpush1.msra.mxu0 0.0
    %5862 = vmatprep.subr.mxu0 0.0
    %5863 = vmatpush1.msra.mxu0 0.0
    %5864 = vmatprep.subr.mxu0 0.0
    %5865 = vmatpush1.msra.mxu0 0.0
    %5866 = vmatprep.subr.mxu0 0.0
    %5867 = vmatpush1.msra.mxu0 0.0
    %5868 = vmatprep.subr.mxu0 0.0
    %5869 = vmatpush1.msra.mxu0 0.0
    %5870 = vmatprep.subr.mxu0 0.0
    %5871 = vmatpush1.msra.mxu0 0.0
    %5872 = vmatprep.subr.mxu0 0.0
    %5873 = vmatpush1.msra.mxu0 0.0
    %5874 = vmatprep.subr.mxu0 0.0
    %5875 = vmatpush1.msra.mxu0 0.0
    %5876 = vmatprep.subr.mxu0 0.0
    %5877 = vmatpush1.msra.mxu0 0.0
    %5878 = vmatprep.subr.mxu0 0.0
    %5879 = vmatpush1.msra.mxu0 0.0
    %5880 = vmatprep.subr.mxu0 0.0
    %5881 = vmatpush1.msra.mxu0 0.0
    %5882 = vmatprep.subr.mxu0 0.0
    %5883 = vmatpush1.msra.mxu0 0.0
    %5884 = vmatprep.subr.mxu0 0.0
    %5885 = vmatpush1.msra.mxu0 0.0
    %5886 = vmatprep.subr.mxu0 0.0
    %5887 = vmatpush1.msra.mxu0 0.0
    %5888 = vmatprep.subr.mxu0 0.0
    %5889 = vmatpush1.msra.mxu0 0.0
    %5890 = vmatprep.subr.mxu0 0.0
    %5891 = vmatpush1.msra.mxu0 0.0
    %5892 = vmatprep.mubr.f32.mxu0 0.0
    %v5893 = vand.u32 %v5511, 4294901760
    %5894 = vmatmul.mubr.f32.gmra.mrb[0].mxu0 %v5893
    %v5895 = vpop.f32.mrb[0].mxu0
    %v5896 = vadd.f32 %v5819, %v5895
    %v5897 = vpop.f32.mrb[0].mxu0
    %5898 = vdwg.mxu0
    %5899 = vmatprep.subr.mxu0 0.0
    %v5900 = vand.u32 %v3589, 4294901760
    %5901 = vmatpush1.msra.mxu0 %v5900
    %5902 = vmatprep.subr.mxu0 0.0
    %v5903 = vand.u32 %v3598, 4294901760
    %5904 = vmatpush1.msra.mxu0 %v5903
    %5905 = vmatprep.subr.mxu0 0.0
    %5906 = vmatpush1.msra.mxu0 0.0
    %5907 = vmatprep.subr.mxu0 0.0
    %5908 = vmatpush1.msra.mxu0 0.0
    %5909 = vmatprep.subr.mxu0 0.0
    %5910 = vmatpush1.msra.mxu0 0.0
    %5911 = vmatprep.subr.mxu0 0.0
    %5912 = vmatpush1.msra.mxu0 0.0
    %5913 = vmatprep.subr.mxu0 0.0
    %5914 = vmatpush1.msra.mxu0 0.0
    %5915 = vmatprep.subr.mxu0 0.0
    %5916 = vmatpush1.msra.mxu0 0.0
    %5917 = vmatprep.subr.mxu0 0.0
    %5918 = vmatpush1.msra.mxu0 0.0
    %5919 = vmatprep.subr.mxu0 0.0
    %5920 = vmatpush1.msra.mxu0 0.0
    %5921 = vmatprep.subr.mxu0 0.0
    %5922 = vmatpush1.msra.mxu0 0.0
    %5923 = vmatprep.subr.mxu0 0.0
    %5924 = vmatpush1.msra.mxu0 0.0
    %5925 = vmatprep.subr.mxu0 0.0
    %5926 = vmatpush1.msra.mxu0 0.0
    %5927 = vmatprep.subr.mxu0 0.0
    %5928 = vmatpush1.msra.mxu0 0.0
    %5929 = vmatprep.subr.mxu0 0.0
    %5930 = vmatpush1.msra.mxu0 0.0
    %5931 = vmatprep.subr.mxu0 0.0
    %5932 = vmatpush1.msra.mxu0 0.0
    %5933 = vmatprep.subr.mxu0 0.0
    %5934 = vmatpush1.msra.mxu0 0.0
    %5935 = vmatprep.subr.mxu0 0.0
    %5936 = vmatpush1.msra.mxu0 0.0
    %5937 = vmatprep.subr.mxu0 0.0
    %5938 = vmatpush1.msra.mxu0 0.0
    %5939 = vmatprep.subr.mxu0 0.0
    %5940 = vmatpush1.msra.mxu0 0.0
    %5941 = vmatprep.subr.mxu0 0.0
    %5942 = vmatpush1.msra.mxu0 0.0
    %5943 = vmatprep.subr.mxu0 0.0
    %5944 = vmatpush1.msra.mxu0 0.0
    %5945 = vmatprep.subr.mxu0 0.0
    %5946 = vmatpush1.msra.mxu0 0.0
    %5947 = vmatprep.subr.mxu0 0.0
    %5948 = vmatpush1.msra.mxu0 0.0
    %5949 = vmatprep.subr.mxu0 0.0
    %5950 = vmatpush1.msra.mxu0 0.0
    %5951 = vmatprep.subr.mxu0 0.0
    %5952 = vmatpush1.msra.mxu0 0.0
    %5953 = vmatprep.subr.mxu0 0.0
    %5954 = vmatpush1.msra.mxu0 0.0
    %5955 = vmatprep.subr.mxu0 0.0
    %5956 = vmatpush1.msra.mxu0 0.0
    %5957 = vmatprep.subr.mxu0 0.0
    %5958 = vmatpush1.msra.mxu0 0.0
    %5959 = vmatprep.subr.mxu0 0.0
    %5960 = vmatpush1.msra.mxu0 0.0
    %5961 = vmatprep.subr.mxu0 0.0
    %5962 = vmatpush1.msra.mxu0 0.0
    %5963 = vmatprep.subr.mxu0 0.0
    %5964 = vmatpush1.msra.mxu0 0.0
    %5965 = vmatprep.mubr.f32.mxu0 0.0
    %v5966 = vand.u32 %v5511, 4294901760
    %5967 = vmatmul.mubr.f32.gmra.mrb[0].mxu0 %v5966
    %v5968 = vpop.f32.mrb[0].mxu0
    %v5969 = vadd.f32 %v5896, %v5968
    %v5970 = vpop.f32.mrb[0].mxu0
    %5971 = vdwg.mxu0
    %s5972 = scalar_lea.vmem %s5, 64
    %v5973 = vld [vmem:[%s5972] sm:$0xff]
    %v5974 = vld [vmem:[%s5972 + $0x8] sm:$0xff]
    %v5975 = vld [vmem:[%s5972 + $0x10] sm:$0xff]
    %v5976 = vld [vmem:[%s5972 + $0x18] sm:$0xff]
    %v5978 = vsel %vm2484, %v5969, 0
    %5980 = vmatprep.subr.mxu0 0.0
    %v5981 = vand.u32 %v5973, 4294901760
    %5982 = vmatpush1.msra.mxu0 %v5981
    %5983 = vmatprep.subr.mxu0 0.0
    %v5984 = vand.u32 %v5974, 4294901760
    %5985 = vmatpush1.msra.mxu0 %v5984
    %5986 = vmatprep.subr.mxu0 0.0
    %v5987 = vand.u32 %v5975, 4294901760
    %5988 = vmatpush1.msra.mxu0 %v5987
    %5989 = vmatprep.subr.mxu0 0.0
    %v5990 = vand.u32 %v5976, 4294901760
    %5991 = vmatpush1.msra.mxu0 %v5990
    %5992 = vmatprep.subr.mxu0 0.0
    %5993 = vmatpush1.msra.mxu0 0.0
    %5994 = vmatprep.subr.mxu0 0.0
    %5995 = vmatpush1.msra.mxu0 0.0
    %5996 = vmatprep.subr.mxu0 0.0
    %5997 = vmatpush1.msra.mxu0 0.0
    %5998 = vmatprep.subr.mxu0 0.0
    %5999 = vmatpush1.msra.mxu0 0.0
    %6000 = vmatprep.subr.mxu0 0.0
    %6001 = vmatpush1.msra.mxu0 0.0
    %6002 = vmatprep.subr.mxu0 0.0
    %6003 = vmatpush1.msra.mxu0 0.0
    %6004 = vmatprep.subr.mxu0 0.0
    %6005 = vmatpush1.msra.mxu0 0.0
    %6006 = vmatprep.subr.mxu0 0.0
    %6007 = vmatpush1.msra.mxu0 0.0
    %6008 = vmatprep.subr.mxu0 0.0
    %6009 = vmatpush1.msra.mxu0 0.0
    %6010 = vmatprep.subr.mxu0 0.0
    %6011 = vmatpush1.msra.mxu0 0.0
    %6012 = vmatprep.subr.mxu0 0.0
    %6013 = vmatpush1.msra.mxu0 0.0
    %6014 = vmatprep.subr.mxu0 0.0
    %6015 = vmatpush1.msra.mxu0 0.0
    %6016 = vmatprep.subr.mxu0 0.0
    %6017 = vmatpush1.msra.mxu0 0.0
    %6018 = vmatprep.subr.mxu0 0.0
    %6019 = vmatpush1.msra.mxu0 0.0
    %6020 = vmatprep.subr.mxu0 0.0
    %6021 = vmatpush1.msra.mxu0 0.0
    %6022 = vmatprep.subr.mxu0 0.0
    %6023 = vmatpush1.msra.mxu0 0.0
    %6024 = vmatprep.subr.mxu0 0.0
    %6025 = vmatpush1.msra.mxu0 0.0
    %6026 = vmatprep.subr.mxu0 0.0
    %6027 = vmatpush1.msra.mxu0 0.0
    %6028 = vmatprep.subr.mxu0 0.0
    %6029 = vmatpush1.msra.mxu0 0.0
    %6030 = vmatprep.subr.mxu0 0.0
    %6031 = vmatpush1.msra.mxu0 0.0
    %6032 = vmatprep.subr.mxu0 0.0
    %6033 = vmatpush1.msra.mxu0 0.0
    %6034 = vmatprep.subr.mxu0 0.0
    %6035 = vmatpush1.msra.mxu0 0.0
    %6036 = vmatprep.subr.mxu0 0.0
    %6037 = vmatpush1.msra.mxu0 0.0
    %6038 = vmatprep.subr.mxu0 0.0
    %6039 = vmatpush1.msra.mxu0 0.0
    %6040 = vmatprep.subr.mxu0 0.0
    %6041 = vmatpush1.msra.mxu0 0.0
    %6042 = vmatprep.subr.mxu0 0.0
    %6043 = vmatpush1.msra.mxu0 0.0
    %6044 = vmatprep.subr.mxu0 0.0
    %6045 = vmatpush1.msra.mxu0 0.0
    %6046 = vmatprep.subr.mxu0 0.0
    %6047 = vmatpush1.msra.mxu0 0.0
    %6048 = vmatprep.mubr.f32.mxu0 0.0
    %v6049 = vand.u32 %v5978, 4294901760
    %v6050 = vsub.f32 %v5978, %v6049
    %v6051 = vand.u32 %v6050, 4294901760
    %v6052 = vsub.f32 %v6050, %v6051
    %v6053 = vand.u32 %v6052, 4294901760
    %6054 = vmatmul.mubr.f32.gmra.mrb[0].mxu0 %v6053
    %v6055 = vpop.f32.mrb[0].mxu0
    %v6056 = vadd.f32 0.0, %v6055
    %v6057 = vpop.f32.mrb[0].mxu0
    %6058 = vdwg.mxu0
    %6059 = vmatprep.subr.mxu0 0.0
    %v6060 = vand.u32 %v5973, 4294901760
    %v6061 = vsub.f32 %v5973, %v6060
    %v6062 = vand.u32 %v6061, 4294901760
    %v6063 = vsub.f32 %v6061, %v6062
    %v6064 = vand.u32 %v6063, 4294901760
    %6065 = vmatpush1.msra.mxu0 %v6064
    %6066 = vmatprep.subr.mxu0 0.0
    %v6067 = vand.u32 %v5974, 4294901760
    %v6068 = vsub.f32 %v5974, %v6067
    %v6069 = vand.u32 %v6068, 4294901760
    %v6070 = vsub.f32 %v6068, %v6069
    %v6071 = vand.u32 %v6070, 4294901760
    %6072 = vmatpush1.msra.mxu0 %v6071
    %6073 = vmatprep.subr.mxu0 0.0
    %v6074 = vand.u32 %v5975, 4294901760
    %v6075 = vsub.f32 %v5975, %v6074
    %v6076 = vand.u32 %v6075, 4294901760
    %v6077 = vsub.f32 %v6075, %v6076
    %v6078 = vand.u32 %v6077, 4294901760
    %6079 = vmatpush1.msra.mxu0 %v6078
    %6080 = vmatprep.subr.mxu0 0.0
    %v6081 = vand.u32 %v5976, 4294901760
    %v6082 = vsub.f32 %v5976, %v6081
    %v6083 = vand.u32 %v6082, 4294901760
    %v6084 = vsub.f32 %v6082, %v6083
    %v6085 = vand.u32 %v6084, 4294901760
    %6086 = vmatpush1.msra.mxu0 %v6085
    %6087 = vmatprep.subr.mxu0 0.0
    %6088 = vmatpush1.msra.mxu0 0.0
    %6089 = vmatprep.subr.mxu0 0.0
    %6090 = vmatpush1.msra.mxu0 0.0
    %6091 = vmatprep.subr.mxu0 0.0
    %6092 = vmatpush1.msra.mxu0 0.0
    %6093 = vmatprep.subr.mxu0 0.0
    %6094 = vmatpush1.msra.mxu0 0.0
    %6095 = vmatprep.subr.mxu0 0.0
    %6096 = vmatpush1.msra.mxu0 0.0
    %6097 = vmatprep.subr.mxu0 0.0
    %6098 = vmatpush1.msra.mxu0 0.0
    %6099 = vmatprep.subr.mxu0 0.0
    %6100 = vmatpush1.msra.mxu0 0.0
    %6101 = vmatprep.subr.mxu0 0.0
    %6102 = vmatpush1.msra.mxu0 0.0
    %6103 = vmatprep.subr.mxu0 0.0
    %6104 = vmatpush1.msra.mxu0 0.0
    %6105 = vmatprep.subr.mxu0 0.0
    %6106 = vmatpush1.msra.mxu0 0.0
    %6107 = vmatprep.subr.mxu0 0.0
    %6108 = vmatpush1.msra.mxu0 0.0
    %6109 = vmatprep.subr.mxu0 0.0
    %6110 = vmatpush1.msra.mxu0 0.0
    %6111 = vmatprep.subr.mxu0 0.0
    %6112 = vmatpush1.msra.mxu0 0.0
    %6113 = vmatprep.subr.mxu0 0.0
    %6114 = vmatpush1.msra.mxu0 0.0
    %6115 = vmatprep.subr.mxu0 0.0
    %6116 = vmatpush1.msra.mxu0 0.0
    %6117 = vmatprep.subr.mxu0 0.0
    %6118 = vmatpush1.msra.mxu0 0.0
    %6119 = vmatprep.subr.mxu0 0.0
    %6120 = vmatpush1.msra.mxu0 0.0
    %6121 = vmatprep.subr.mxu0 0.0
    %6122 = vmatpush1.msra.mxu0 0.0
    %6123 = vmatprep.subr.mxu0 0.0
    %6124 = vmatpush1.msra.mxu0 0.0
    %6125 = vmatprep.subr.mxu0 0.0
    %6126 = vmatpush1.msra.mxu0 0.0
    %6127 = vmatprep.subr.mxu0 0.0
    %6128 = vmatpush1.msra.mxu0 0.0
    %6129 = vmatprep.subr.mxu0 0.0
    %6130 = vmatpush1.msra.mxu0 0.0
    %6131 = vmatprep.subr.mxu0 0.0
    %6132 = vmatpush1.msra.mxu0 0.0
    %6133 = vmatprep.subr.mxu0 0.0
    %6134 = vmatpush1.msra.mxu0 0.0
    %6135 = vmatprep.subr.mxu0 0.0
    %6136 = vmatpush1.msra.mxu0 0.0
    %6137 = vmatprep.subr.mxu0 0.0
    %6138 = vmatpush1.msra.mxu0 0.0
    %6139 = vmatprep.subr.mxu0 0.0
    %6140 = vmatpush1.msra.mxu0 0.0
    %6141 = vmatprep.subr.mxu0 0.0
    %6142 = vmatpush1.msra.mxu0 0.0
    %6143 = vmatprep.mubr.f32.mxu0 0.0
    %v6144 = vand.u32 %v5978, 4294901760
    %6145 = vmatmul.mubr.f32.gmra.mrb[0].mxu0 %v6144
    %v6146 = vpop.f32.mrb[0].mxu0
    %v6147 = vadd.f32 %v6056, %v6146
    %v6148 = vpop.f32.mrb[0].mxu0
    %6149 = vdwg.mxu0
    %6150 = vmatprep.subr.mxu0 0.0
    %v6151 = vand.u32 %v5973, 4294901760
    %v6152 = vsub.f32 %v5973, %v6151
    %6153 = vmatpush1.msra.mxu0 %v6152
    %6154 = vmatprep.subr.mxu0 0.0
    %v6155 = vand.u32 %v5974, 4294901760
    %v6156 = vsub.f32 %v5974, %v6155
    %6157 = vmatpush1.msra.mxu0 %v6156
    %6158 = vmatprep.subr.mxu0 0.0
    %v6159 = vand.u32 %v5975, 4294901760
    %v6160 = vsub.f32 %v5975, %v6159
    %6161 = vmatpush1.msra.mxu0 %v6160
    %6162 = vmatprep.subr.mxu0 0.0
    %v6163 = vand.u32 %v5976, 4294901760
    %v6164 = vsub.f32 %v5976, %v6163
    %6165 = vmatpush1.msra.mxu0 %v6164
    %6166 = vmatprep.subr.mxu0 0.0
    %6167 = vmatpush1.msra.mxu0 0.0
    %6168 = vmatprep.subr.mxu0 0.0
    %6169 = vmatpush1.msra.mxu0 0.0
    %6170 = vmatprep.subr.mxu0 0.0
    %6171 = vmatpush1.msra.mxu0 0.0
    %6172 = vmatprep.subr.mxu0 0.0
    %6173 = vmatpush1.msra.mxu0 0.0
    %6174 = vmatprep.subr.mxu0 0.0
    %6175 = vmatpush1.msra.mxu0 0.0
    %6176 = vmatprep.subr.mxu0 0.0
    %6177 = vmatpush1.msra.mxu0 0.0
    %6178 = vmatprep.subr.mxu0 0.0
    %6179 = vmatpush1.msra.mxu0 0.0
    %6180 = vmatprep.subr.mxu0 0.0
    %6181 = vmatpush1.msra.mxu0 0.0
    %6182 = vmatprep.subr.mxu0 0.0
    %6183 = vmatpush1.msra.mxu0 0.0
    %6184 = vmatprep.subr.mxu0 0.0
    %6185 = vmatpush1.msra.mxu0 0.0
    %6186 = vmatprep.subr.mxu0 0.0
    %6187 = vmatpush1.msra.mxu0 0.0
    %6188 = vmatprep.subr.mxu0 0.0
    %6189 = vmatpush1.msra.mxu0 0.0
    %6190 = vmatprep.subr.mxu0 0.0
    %6191 = vmatpush1.msra.mxu0 0.0
    %6192 = vmatprep.subr.mxu0 0.0
    %6193 = vmatpush1.msra.mxu0 0.0
    %6194 = vmatprep.subr.mxu0 0.0
    %6195 = vmatpush1.msra.mxu0 0.0
    %6196 = vmatprep.subr.mxu0 0.0
    %6197 = vmatpush1.msra.mxu0 0.0
    %6198 = vmatprep.subr.mxu0 0.0
    %6199 = vmatpush1.msra.mxu0 0.0
    %6200 = vmatprep.subr.mxu0 0.0
    %6201 = vmatpush1.msra.mxu0 0.0
    %6202 = vmatprep.subr.mxu0 0.0
    %6203 = vmatpush1.msra.mxu0 0.0
    %6204 = vmatprep.subr.mxu0 0.0
    %6205 = vmatpush1.msra.mxu0 0.0
    %6206 = vmatprep.subr.mxu0 0.0
    %6207 = vmatpush1.msra.mxu0 0.0
    %6208 = vmatprep.subr.mxu0 0.0
    %6209 = vmatpush1.msra.mxu0 0.0
    %6210 = vmatprep.subr.mxu0 0.0
    %6211 = vmatpush1.msra.mxu0 0.0
    %6212 = vmatprep.subr.mxu0 0.0
    %6213 = vmatpush1.msra.mxu0 0.0
    %6214 = vmatprep.subr.mxu0 0.0
    %6215 = vmatpush1.msra.mxu0 0.0
    %6216 = vmatprep.subr.mxu0 0.0
    %6217 = vmatpush1.msra.mxu0 0.0
    %6218 = vmatprep.subr.mxu0 0.0
    %6219 = vmatpush1.msra.mxu0 0.0
    %6220 = vmatprep.subr.mxu0 0.0
    %6221 = vmatpush1.msra.mxu0 0.0
    %6222 = vmatprep.mubr.f32.mxu0 0.0
    %v6223 = vand.u32 %v5978, 4294901760
    %v6224 = vsub.f32 %v5978, %v6223
    %6225 = vmatmul.mubr.f32.gmra.mrb[0].mxu0 %v6224
    %v6226 = vpop.f32.mrb[0].mxu0
    %v6227 = vadd.f32 %v6147, %v6226
    %v6228 = vpop.f32.mrb[0].mxu0
    %6229 = vdwg.mxu0
    %6230 = vmatprep.subr.mxu0 0.0
    %v6231 = vand.u32 %v5973, 4294901760
    %6232 = vmatpush1.msra.mxu0 %v6231
    %6233 = vmatprep.subr.mxu0 0.0
    %v6234 = vand.u32 %v5974, 4294901760
    %6235 = vmatpush1.msra.mxu0 %v6234
    %6236 = vmatprep.subr.mxu0 0.0
    %v6237 = vand.u32 %v5975, 4294901760
    %6238 = vmatpush1.msra.mxu0 %v6237
    %6239 = vmatprep.subr.mxu0 0.0
    %v6240 = vand.u32 %v5976, 4294901760
    %6241 = vmatpush1.msra.mxu0 %v6240
    %6242 = vmatprep.subr.mxu0 0.0
    %6243 = vmatpush1.msra.mxu0 0.0
    %6244 = vmatprep.subr.mxu0 0.0
    %6245 = vmatpush1.msra.mxu0 0.0
    %6246 = vmatprep.subr.mxu0 0.0
    %6247 = vmatpush1.msra.mxu0 0.0
    %6248 = vmatprep.subr.mxu0 0.0
    %6249 = vmatpush1.msra.mxu0 0.0
    %6250 = vmatprep.subr.mxu0 0.0
    %6251 = vmatpush1.msra.mxu0 0.0
    %6252 = vmatprep.subr.mxu0 0.0
    %6253 = vmatpush1.msra.mxu0 0.0
    %6254 = vmatprep.subr.mxu0 0.0
    %6255 = vmatpush1.msra.mxu0 0.0
    %6256 = vmatprep.subr.mxu0 0.0
    %6257 = vmatpush1.msra.mxu0 0.0
    %6258 = vmatprep.subr.mxu0 0.0
    %6259 = vmatpush1.msra.mxu0 0.0
    %6260 = vmatprep.subr.mxu0 0.0
    %6261 = vmatpush1.msra.mxu0 0.0
    %6262 = vmatprep.subr.mxu0 0.0
    %6263 = vmatpush1.msra.mxu0 0.0
    %6264 = vmatprep.subr.mxu0 0.0
    %6265 = vmatpush1.msra.mxu0 0.0
    %6266 = vmatprep.subr.mxu0 0.0
    %6267 = vmatpush1.msra.mxu0 0.0
    %6268 = vmatprep.subr.mxu0 0.0
    %6269 = vmatpush1.msra.mxu0 0.0
    %6270 = vmatprep.subr.mxu0 0.0
    %6271 = vmatpush1.msra.mxu0 0.0
    %6272 = vmatprep.subr.mxu0 0.0
    %6273 = vmatpush1.msra.mxu0 0.0
    %6274 = vmatprep.subr.mxu0 0.0
    %6275 = vmatpush1.msra.mxu0 0.0
    %6276 = vmatprep.subr.mxu0 0.0
    %6277 = vmatpush1.msra.mxu0 0.0
    %6278 = vmatprep.subr.mxu0 0.0
    %6279 = vmatpush1.msra.mxu0 0.0
    %6280 = vmatprep.subr.mxu0 0.0
    %6281 = vmatpush1.msra.mxu0 0.0
    %6282 = vmatprep.subr.mxu0 0.0
    %6283 = vmatpush1.msra.mxu0 0.0
    %6284 = vmatprep.subr.mxu0 0.0
    %6285 = vmatpush1.msra.mxu0 0.0
    %6286 = vmatprep.subr.mxu0 0.0
    %6287 = vmatpush1.msra.mxu0 0.0
    %6288 = vmatprep.subr.mxu0 0.0
    %6289 = vmatpush1.msra.mxu0 0.0
    %6290 = vmatprep.subr.mxu0 0.0
    %6291 = vmatpush1.msra.mxu0 0.0
    %6292 = vmatprep.subr.mxu0 0.0
    %6293 = vmatpush1.msra.mxu0 0.0
    %6294 = vmatprep.subr.mxu0 0.0
    %6295 = vmatpush1.msra.mxu0 0.0
    %6296 = vmatprep.subr.mxu0 0.0
    %6297 = vmatpush1.msra.mxu0 0.0
    %6298 = vmatprep.mubr.f32.mxu0 0.0
    %v6299 = vand.u32 %v5978, 4294901760
    %v6300 = vsub.f32 %v5978, %v6299
    %v6301 = vand.u32 %v6300, 4294901760
    %6302 = vmatmul.mubr.f32.gmra.mrb[0].mxu0 %v6301
    %v6303 = vpop.f32.mrb[0].mxu0
    %v6304 = vadd.f32 %v6227, %v6303
    %v6305 = vpop.f32.mrb[0].mxu0
    %6306 = vdwg.mxu0
    %6307 = vmatprep.subr.mxu0 0.0
    %v6308 = vand.u32 %v5973, 4294901760
    %v6309 = vsub.f32 %v5973, %v6308
    %v6310 = vand.u32 %v6309, 4294901760
    %6311 = vmatpush1.msra.mxu0 %v6310
    %6312 = vmatprep.subr.mxu0 0.0
    %v6313 = vand.u32 %v5974, 4294901760
    %v6314 = vsub.f32 %v5974, %v6313
    %v6315 = vand.u32 %v6314, 4294901760
    %6316 = vmatpush1.msra.mxu0 %v6315
    %6317 = vmatprep.subr.mxu0 0.0
    %v6318 = vand.u32 %v5975, 4294901760
    %v6319 = vsub.f32 %v5975, %v6318
    %v6320 = vand.u32 %v6319, 4294901760
    %6321 = vmatpush1.msra.mxu0 %v6320
    %6322 = vmatprep.subr.mxu0 0.0
    %v6323 = vand.u32 %v5976, 4294901760
    %v6324 = vsub.f32 %v5976, %v6323
    %v6325 = vand.u32 %v6324, 4294901760
    %6326 = vmatpush1.msra.mxu0 %v6325
    %6327 = vmatprep.subr.mxu0 0.0
    %6328 = vmatpush1.msra.mxu0 0.0
    %6329 = vmatprep.subr.mxu0 0.0
    %6330 = vmatpush1.msra.mxu0 0.0
    %6331 = vmatprep.subr.mxu0 0.0
    %6332 = vmatpush1.msra.mxu0 0.0
    %6333 = vmatprep.subr.mxu0 0.0
    %6334 = vmatpush1.msra.mxu0 0.0
    %6335 = vmatprep.subr.mxu0 0.0
    %6336 = vmatpush1.msra.mxu0 0.0
    %6337 = vmatprep.subr.mxu0 0.0
    %6338 = vmatpush1.msra.mxu0 0.0
    %6339 = vmatprep.subr.mxu0 0.0
    %6340 = vmatpush1.msra.mxu0 0.0
    %6341 = vmatprep.subr.mxu0 0.0
    %6342 = vmatpush1.msra.mxu0 0.0
    %6343 = vmatprep.subr.mxu0 0.0
    %6344 = vmatpush1.msra.mxu0 0.0
    %6345 = vmatprep.subr.mxu0 0.0
    %6346 = vmatpush1.msra.mxu0 0.0
    %6347 = vmatprep.subr.mxu0 0.0
    %6348 = vmatpush1.msra.mxu0 0.0
    %6349 = vmatprep.subr.mxu0 0.0
    %6350 = vmatpush1.msra.mxu0 0.0
    %6351 = vmatprep.subr.mxu0 0.0
    %6352 = vmatpush1.msra.mxu0 0.0
    %6353 = vmatprep.subr.mxu0 0.0
    %6354 = vmatpush1.msra.mxu0 0.0
    %6355 = vmatprep.subr.mxu0 0.0
    %6356 = vmatpush1.msra.mxu0 0.0
    %6357 = vmatprep.subr.mxu0 0.0
    %6358 = vmatpush1.msra.mxu0 0.0
    %6359 = vmatprep.subr.mxu0 0.0
    %6360 = vmatpush1.msra.mxu0 0.0
    %6361 = vmatprep.subr.mxu0 0.0
    %6362 = vmatpush1.msra.mxu0 0.0
    %6363 = vmatprep.subr.mxu0 0.0
    %6364 = vmatpush1.msra.mxu0 0.0
    %6365 = vmatprep.subr.mxu0 0.0
    %6366 = vmatpush1.msra.mxu0 0.0
    %6367 = vmatprep.subr.mxu0 0.0
    %6368 = vmatpush1.msra.mxu0 0.0
    %6369 = vmatprep.subr.mxu0 0.0
    %6370 = vmatpush1.msra.mxu0 0.0
    %6371 = vmatprep.subr.mxu0 0.0
    %6372 = vmatpush1.msra.mxu0 0.0
    %6373 = vmatprep.subr.mxu0 0.0
    %6374 = vmatpush1.msra.mxu0 0.0
    %6375 = vmatprep.subr.mxu0 0.0
    %6376 = vmatpush1.msra.mxu0 0.0
    %6377 = vmatprep.subr.mxu0 0.0
    %6378 = vmatpush1.msra.mxu0 0.0
    %6379 = vmatprep.subr.mxu0 0.0
    %6380 = vmatpush1.msra.mxu0 0.0
    %6381 = vmatprep.subr.mxu0 0.0
    %6382 = vmatpush1.msra.mxu0 0.0
    %6383 = vmatprep.mubr.f32.mxu0 0.0
    %v6384 = vand.u32 %v5978, 4294901760
    %6385 = vmatmul.mubr.f32.gmra.mrb[0].mxu0 %v6384
    %v6386 = vpop.f32.mrb[0].mxu0
    %v6387 = vadd.f32 %v6304, %v6386
    %v6388 = vpop.f32.mrb[0].mxu0
    %6389 = vdwg.mxu0
    %6390 = vmatprep.subr.mxu0 0.0
    %v6391 = vand.u32 %v5973, 4294901760
    %6392 = vmatpush1.msra.mxu0 %v6391
    %6393 = vmatprep.subr.mxu0 0.0
    %v6394 = vand.u32 %v5974, 4294901760
    %6395 = vmatpush1.msra.mxu0 %v6394
    %6396 = vmatprep.subr.mxu0 0.0
    %v6397 = vand.u32 %v5975, 4294901760
    %6398 = vmatpush1.msra.mxu0 %v6397
    %6399 = vmatprep.subr.mxu0 0.0
    %v6400 = vand.u32 %v5976, 4294901760
    %6401 = vmatpush1.msra.mxu0 %v6400
    %6402 = vmatprep.subr.mxu0 0.0
    %6403 = vmatpush1.msra.mxu0 0.0
    %6404 = vmatprep.subr.mxu0 0.0
    %6405 = vmatpush1.msra.mxu0 0.0
    %6406 = vmatprep.subr.mxu0 0.0
    %6407 = vmatpush1.msra.mxu0 0.0
    %6408 = vmatprep.subr.mxu0 0.0
    %6409 = vmatpush1.msra.mxu0 0.0
    %6410 = vmatprep.subr.mxu0 0.0
    %6411 = vmatpush1.msra.mxu0 0.0
    %6412 = vmatprep.subr.mxu0 0.0
    %6413 = vmatpush1.msra.mxu0 0.0
    %6414 = vmatprep.subr.mxu0 0.0
    %6415 = vmatpush1.msra.mxu0 0.0
    %6416 = vmatprep.subr.mxu0 0.0
    %6417 = vmatpush1.msra.mxu0 0.0
    %6418 = vmatprep.subr.mxu0 0.0
    %6419 = vmatpush1.msra.mxu0 0.0
    %6420 = vmatprep.subr.mxu0 0.0
    %6421 = vmatpush1.msra.mxu0 0.0
    %6422 = vmatprep.subr.mxu0 0.0
    %6423 = vmatpush1.msra.mxu0 0.0
    %6424 = vmatprep.subr.mxu0 0.0
    %6425 = vmatpush1.msra.mxu0 0.0
    %6426 = vmatprep.subr.mxu0 0.0
    %6427 = vmatpush1.msra.mxu0 0.0
    %6428 = vmatprep.subr.mxu0 0.0
    %6429 = vmatpush1.msra.mxu0 0.0
    %6430 = vmatprep.subr.mxu0 0.0
    %6431 = vmatpush1.msra.mxu0 0.0
    %6432 = vmatprep.subr.mxu0 0.0
    %6433 = vmatpush1.msra.mxu0 0.0
    %6434 = vmatprep.subr.mxu0 0.0
    %6435 = vmatpush1.msra.mxu0 0.0
    %6436 = vmatprep.subr.mxu0 0.0
    %6437 = vmatpush1.msra.mxu0 0.0
    %6438 = vmatprep.subr.mxu0 0.0
    %6439 = vmatpush1.msra.mxu0 0.0
    %6440 = vmatprep.subr.mxu0 0.0
    %6441 = vmatpush1.msra.mxu0 0.0
    %6442 = vmatprep.subr.mxu0 0.0
    %6443 = vmatpush1.msra.mxu0 0.0
    %6444 = vmatprep.subr.mxu0 0.0
    %6445 = vmatpush1.msra.mxu0 0.0
    %6446 = vmatprep.subr.mxu0 0.0
    %6447 = vmatpush1.msra.mxu0 0.0
    %6448 = vmatprep.subr.mxu0 0.0
    %6449 = vmatpush1.msra.mxu0 0.0
    %6450 = vmatprep.subr.mxu0 0.0
    %6451 = vmatpush1.msra.mxu0 0.0
    %6452 = vmatprep.subr.mxu0 0.0
    %6453 = vmatpush1.msra.mxu0 0.0
    %6454 = vmatprep.subr.mxu0 0.0
    %6455 = vmatpush1.msra.mxu0 0.0
    %6456 = vmatprep.subr.mxu0 0.0
    %6457 = vmatpush1.msra.mxu0 0.0
    %6458 = vmatprep.mubr.f32.mxu0 0.0
    %v6459 = vand.u32 %v5978, 4294901760
    %6460 = vmatmul.mubr.f32.gmra.mrb[0].mxu0 %v6459
    %v6461 = vpop.f32.mrb[0].mxu0
    %v6462 = vadd.f32 %v6387, %v6461
    %v6463 = vpop.f32.mrb[0].mxu0
    %6464 = vdwg.mxu0
    %v6465 = vadd.f32 %v5505, %v6462
    %v6466 = vld [vmem:[%s6] sm:$0x1]
    %v6468 = vlaneseq
    %v6469 = vshrl.u32 %v6468, 7
    %v6470 = vsub.s32 0, %v6469
    %v6471 = vrot.slane %v6466, %v6470
    %v6473 = vadd.f32 %v6465, %v6471
    %vm6474 = vcmask 523264
    %v6475 = vsel %vm6474, %v6473, 0.0
    %v6476 = vrot.slane %v6475, 4
    %v6477 = vadd.f32 %v6475, %v6476
    %v6478 = vrot.slane %v6477, 2
    %v6479 = vadd.f32 %v6477, %v6478
    %v6480 = vrot.slane %v6479, 1
    %v6481 = vadd.f32 %v6479, %v6480
    %v6482 = vmul.f32 %v6481, 0.125
    %v6483 = vsub.f32 %v6473, %v6482
    %v6484 = vmul.f32 %v6483, %v6483
    %v6485 = vsel %vm6474, %v6484, 0.0
    %v6486 = vrot.slane %v6485, 4
    %v6487 = vadd.f32 %v6485, %v6486
    %v6488 = vrot.slane %v6487, 2
    %v6489 = vadd.f32 %v6487, %v6488
    %v6490 = vrot.slane %v6489, 1
    %v6491 = vadd.f32 %v6489, %v6490
    %v6492 = vmul.f32 %v6491, 0.125
    %v6493 = vld [vmem:[%s7] sm:$0x1]
    %v6494 = vadd.f32 %v6492, 1e-05
    %v6495 = vrsqrt.pop %v6494
    %v6496 = vmul.f32 %v6493, %v6495
    %v6498 = vlaneseq
    %v6499 = vshrl.u32 %v6498, 7
    %v6500 = vsub.s32 0, %v6499
    %v6501 = vrot.slane %v6496, %v6500
    %v6503 = vmul.f32 %v6483, %v6501
    %v6504 = vld [vmem:[%s8] sm:$0x1]
    %v6506 = vlaneseq
    %v6507 = vshrl.u32 %v6506, 7
    %v6508 = vsub.s32 0, %v6507
    %v6509 = vrot.slane %v6504, %v6508
    %v6511 = vadd.f32 %v6503, %v6509
    %v6512 = vmax.f32 %v6511, 0.0
    %v6513 = vld [vmem:[%s14] sm:$0xf]
    %vm6514 = vcmask 64512
    %v6516 = vsel %vm6514, %v6513, 0
    %6518 = vmatprep.subr.mxu0 0.0
    %v6519 = vand.u32 %v6512, 4294901760
    %6520 = vmatpush1.msra.mxu0 %v6519
    %6521 = vmatprep.subr.mxu0 0.0
    %6522 = vmatpush1.msra.mxu0 0.0
    %6523 = vmatprep.subr.mxu0 0.0
    %6524 = vmatpush1.msra.mxu0 0.0
    %6525 = vmatprep.subr.mxu0 0.0
    %6526 = vmatpush1.msra.mxu0 0.0
    %6527 = vmatprep.subr.mxu0 0.0
    %6528 = vmatpush1.msra.mxu0 0.0
    %6529 = vmatprep.subr.mxu0 0.0
    %6530 = vmatpush1.msra.mxu0 0.0
    %6531 = vmatprep.subr.mxu0 0.0
    %6532 = vmatpush1.msra.mxu0 0.0
    %6533 = vmatprep.subr.mxu0 0.0
    %6534 = vmatpush1.msra.mxu0 0.0
    %6535 = vmatprep.subr.mxu0 0.0
    %6536 = vmatpush1.msra.mxu0 0.0
    %6537 = vmatprep.subr.mxu0 0.0
    %6538 = vmatpush1.msra.mxu0 0.0
    %6539 = vmatprep.subr.mxu0 0.0
    %6540 = vmatpush1.msra.mxu0 0.0
    %6541 = vmatprep.subr.mxu0 0.0
    %6542 = vmatpush1.msra.mxu0 0.0
    %6543 = vmatprep.subr.mxu0 0.0
    %6544 = vmatpush1.msra.mxu0 0.0
    %6545 = vmatprep.subr.mxu0 0.0
    %6546 = vmatpush1.msra.mxu0 0.0
    %6547 = vmatprep.subr.mxu0 0.0
    %6548 = vmatpush1.msra.mxu0 0.0
    %6549 = vmatprep.subr.mxu0 0.0
    %6550 = vmatpush1.msra.mxu0 0.0
    %6551 = vmatprep.subr.mxu0 0.0
    %6552 = vmatpush1.msra.mxu0 0.0
    %6553 = vmatprep.subr.mxu0 0.0
    %6554 = vmatpush1.msra.mxu0 0.0
    %6555 = vmatprep.subr.mxu0 0.0
    %6556 = vmatpush1.msra.mxu0 0.0
    %6557 = vmatprep.subr.mxu0 0.0
    %6558 = vmatpush1.msra.mxu0 0.0
    %6559 = vmatprep.subr.mxu0 0.0
    %6560 = vmatpush1.msra.mxu0 0.0
    %6561 = vmatprep.subr.mxu0 0.0
    %6562 = vmatpush1.msra.mxu0 0.0
    %6563 = vmatprep.subr.mxu0 0.0
    %6564 = vmatpush1.msra.mxu0 0.0
    %6565 = vmatprep.subr.mxu0 0.0
    %6566 = vmatpush1.msra.mxu0 0.0
    %6567 = vmatprep.subr.mxu0 0.0
    %6568 = vmatpush1.msra.mxu0 0.0
    %6569 = vmatprep.subr.mxu0 0.0
    %6570 = vmatpush1.msra.mxu0 0.0
    %6571 = vmatprep.subr.mxu0 0.0
    %6572 = vmatpush1.msra.mxu0 0.0
    %6573 = vmatprep.subr.mxu0 0.0
    %6574 = vmatpush1.msra.mxu0 0.0
    %6575 = vmatprep.subr.mxu0 0.0
    %6576 = vmatpush1.msra.mxu0 0.0
    %6577 = vmatprep.subr.mxu0 0.0
    %6578 = vmatpush1.msra.mxu0 0.0
    %6579 = vmatprep.subr.mxu0 0.0
    %6580 = vmatpush1.msra.mxu0 0.0
    %6581 = vmatprep.subr.mxu0 0.0
    %6582 = vmatpush1.msra.mxu0 0.0
    %6583 = vmatprep.mubr.f32.mxu0 0.0
    %v6584 = vand.u32 %v6516, 4294901760
    %v6585 = vsub.f32 %v6516, %v6584
    %v6586 = vand.u32 %v6585, 4294901760
    %v6587 = vsub.f32 %v6585, %v6586
    %v6588 = vand.u32 %v6587, 4294901760
    %6589 = vmatmul.mubr.f32.gmra.mrb[0].mxu0 %v6588
    %v6590 = vpop.f32.mrb[0].mxu0
    %v6591 = vadd.f32 0.0, %v6590
    %v6592 = vpop.f32.mrb[0].mxu0
    %6593 = vdwg.mxu0
    %6594 = vmatprep.subr.mxu0 0.0
    %v6595 = vand.u32 %v6512, 4294901760
    %v6596 = vsub.f32 %v6512, %v6595
    %v6597 = vand.u32 %v6596, 4294901760
    %v6598 = vsub.f32 %v6596, %v6597
    %v6599 = vand.u32 %v6598, 4294901760
    %6600 = vmatpush1.msra.mxu0 %v6599
    %6601 = vmatprep.subr.mxu0 0.0
    %6602 = vmatpush1.msra.mxu0 0.0
    %6603 = vmatprep.subr.mxu0 0.0
    %6604 = vmatpush1.msra.mxu0 0.0
    %6605 = vmatprep.subr.mxu0 0.0
    %6606 = vmatpush1.msra.mxu0 0.0
    %6607 = vmatprep.subr.mxu0 0.0
    %6608 = vmatpush1.msra.mxu0 0.0
    %6609 = vmatprep.subr.mxu0 0.0
    %6610 = vmatpush1.msra.mxu0 0.0
    %6611 = vmatprep.subr.mxu0 0.0
    %6612 = vmatpush1.msra.mxu0 0.0
    %6613 = vmatprep.subr.mxu0 0.0
    %6614 = vmatpush1.msra.mxu0 0.0
    %6615 = vmatprep.subr.mxu0 0.0
    %6616 = vmatpush1.msra.mxu0 0.0
    %6617 = vmatprep.subr.mxu0 0.0
    %6618 = vmatpush1.msra.mxu0 0.0
    %6619 = vmatprep.subr.mxu0 0.0
    %6620 = vmatpush1.msra.mxu0 0.0
    %6621 = vmatprep.subr.mxu0 0.0
    %6622 = vmatpush1.msra.mxu0 0.0
    %6623 = vmatprep.subr.mxu0 0.0
    %6624 = vmatpush1.msra.mxu0 0.0
    %6625 = vmatprep.subr.mxu0 0.0
    %6626 = vmatpush1.msra.mxu0 0.0
    %6627 = vmatprep.subr.mxu0 0.0
    %6628 = vmatpush1.msra.mxu0 0.0
    %6629 = vmatprep.subr.mxu0 0.0
    %6630 = vmatpush1.msra.mxu0 0.0
    %6631 = vmatprep.subr.mxu0 0.0
    %6632 = vmatpush1.msra.mxu0 0.0
    %6633 = vmatprep.subr.mxu0 0.0
    %6634 = vmatpush1.msra.mxu0 0.0
    %6635 = vmatprep.subr.mxu0 0.0
    %6636 = vmatpush1.msra.mxu0 0.0
    %6637 = vmatprep.subr.mxu0 0.0
    %6638 = vmatpush1.msra.mxu0 0.0
    %6639 = vmatprep.subr.mxu0 0.0
    %6640 = vmatpush1.msra.mxu0 0.0
    %6641 = vmatprep.subr.mxu0 0.0
    %6642 = vmatpush1.msra.mxu0 0.0
    %6643 = vmatprep.subr.mxu0 0.0
    %6644 = vmatpush1.msra.mxu0 0.0
    %6645 = vmatprep.subr.mxu0 0.0
    %6646 = vmatpush1.msra.mxu0 0.0
    %6647 = vmatprep.subr.mxu0 0.0
    %6648 = vmatpush1.msra.mxu0 0.0
    %6649 = vmatprep.subr.mxu0 0.0
    %6650 = vmatpush1.msra.mxu0 0.0
    %6651 = vmatprep.subr.mxu0 0.0
    %6652 = vmatpush1.msra.mxu0 0.0
    %6653 = vmatprep.subr.mxu0 0.0
    %6654 = vmatpush1.msra.mxu0 0.0
    %6655 = vmatprep.subr.mxu0 0.0
    %6656 = vmatpush1.msra.mxu0 0.0
    %6657 = vmatprep.subr.mxu0 0.0
    %6658 = vmatpush1.msra.mxu0 0.0
    %6659 = vmatprep.subr.mxu0 0.0
    %6660 = vmatpush1.msra.mxu0 0.0
    %6661 = vmatprep.subr.mxu0 0.0
    %6662 = vmatpush1.msra.mxu0 0.0
    %6663 = vmatprep.mubr.f32.mxu0 0.0
    %v6664 = vand.u32 %v6516, 4294901760
    %6665 = vmatmul.mubr.f32.gmra.mrb[0].mxu0 %v6664
    %v6666 = vpop.f32.mrb[0].mxu0
    %v6667 = vadd.f32 %v6591, %v6666
    %v6668 = vpop.f32.mrb[0].mxu0
    %6669 = vdwg.mxu0
    %6670 = vmatprep.subr.mxu0 0.0
    %v6671 = vand.u32 %v6512, 4294901760
    %v6672 = vsub.f32 %v6512, %v6671
    %6673 = vmatpush1.msra.mxu0 %v6672
    %6674 = vmatprep.subr.mxu0 0.0
    %6675 = vmatpush1.msra.mxu0 0.0
    %6676 = vmatprep.subr.mxu0 0.0
    %6677 = vmatpush1.msra.mxu0 0.0
    %6678 = vmatprep.subr.mxu0 0.0
    %6679 = vmatpush1.msra.mxu0 0.0
    %6680 = vmatprep.subr.mxu0 0.0
    %6681 = vmatpush1.msra.mxu0 0.0
    %6682 = vmatprep.subr.mxu0 0.0
    %6683 = vmatpush1.msra.mxu0 0.0
    %6684 = vmatprep.subr.mxu0 0.0
    %6685 = vmatpush1.msra.mxu0 0.0
    %6686 = vmatprep.subr.mxu0 0.0
    %6687 = vmatpush1.msra.mxu0 0.0
    %6688 = vmatprep.subr.mxu0 0.0
    %6689 = vmatpush1.msra.mxu0 0.0
    %6690 = vmatprep.subr.mxu0 0.0
    %6691 = vmatpush1.msra.mxu0 0.0
    %6692 = vmatprep.subr.mxu0 0.0
    %6693 = vmatpush1.msra.mxu0 0.0
    %6694 = vmatprep.subr.mxu0 0.0
    %6695 = vmatpush1.msra.mxu0 0.0
    %6696 = vmatprep.subr.mxu0 0.0
    %6697 = vmatpush1.msra.mxu0 0.0
    %6698 = vmatprep.subr.mxu0 0.0
    %6699 = vmatpush1.msra.mxu0 0.0
    %6700 = vmatprep.subr.mxu0 0.0
    %6701 = vmatpush1.msra.mxu0 0.0
    %6702 = vmatprep.subr.mxu0 0.0
    %6703 = vmatpush1.msra.mxu0 0.0
    %6704 = vmatprep.subr.mxu0 0.0
    %6705 = vmatpush1.msra.mxu0 0.0
    %6706 = vmatprep.subr.mxu0 0.0
    %6707 = vmatpush1.msra.mxu0 0.0
    %6708 = vmatprep.subr.mxu0 0.0
    %6709 = vmatpush1.msra.mxu0 0.0
    %6710 = vmatprep.subr.mxu0 0.0
    %6711 = vmatpush1.msra.mxu0 0.0
    %6712 = vmatprep.subr.mxu0 0.0
    %6713 = vmatpush1.msra.mxu0 0.0
    %6714 = vmatprep.subr.mxu0 0.0
    %6715 = vmatpush1.msra.mxu0 0.0
    %6716 = vmatprep.subr.mxu0 0.0
    %6717 = vmatpush1.msra.mxu0 0.0
    %6718 = vmatprep.subr.mxu0 0.0
    %6719 = vmatpush1.msra.mxu0 0.0
    %6720 = vmatprep.subr.mxu0 0.0
    %6721 = vmatpush1.msra.mxu0 0.0
    %6722 = vmatprep.subr.mxu0 0.0
    %6723 = vmatpush1.msra.mxu0 0.0
    %6724 = vmatprep.subr.mxu0 0.0
    %6725 = vmatpush1.msra.mxu0 0.0
    %6726 = vmatprep.subr.mxu0 0.0
    %6727 = vmatpush1.msra.mxu0 0.0
    %6728 = vmatprep.subr.mxu0 0.0
    %6729 = vmatpush1.msra.mxu0 0.0
    %6730 = vmatprep.subr.mxu0 0.0
    %6731 = vmatpush1.msra.mxu0 0.0
    %6732 = vmatprep.subr.mxu0 0.0
    %6733 = vmatpush1.msra.mxu0 0.0
    %6734 = vmatprep.subr.mxu0 0.0
    %6735 = vmatpush1.msra.mxu0 0.0
    %6736 = vmatprep.mubr.f32.mxu0 0.0
    %v6737 = vand.u32 %v6516, 4294901760
    %v6738 = vsub.f32 %v6516, %v6737
    %6739 = vmatmul.mubr.f32.gmra.mrb[0].mxu0 %v6738
    %v6740 = vpop.f32.mrb[0].mxu0
    %v6741 = vadd.f32 %v6667, %v6740
    %v6742 = vpop.f32.mrb[0].mxu0
    %6743 = vdwg.mxu0
    %6744 = vmatprep.subr.mxu0 0.0
    %v6745 = vand.u32 %v6512, 4294901760
    %6746 = vmatpush1.msra.mxu0 %v6745
    %6747 = vmatprep.subr.mxu0 0.0
    %6748 = vmatpush1.msra.mxu0 0.0
    %6749 = vmatprep.subr.mxu0 0.0
    %6750 = vmatpush1.msra.mxu0 0.0
    %6751 = vmatprep.subr.mxu0 0.0
    %6752 = vmatpush1.msra.mxu0 0.0
    %6753 = vmatprep.subr.mxu0 0.0
    %6754 = vmatpush1.msra.mxu0 0.0
    %6755 = vmatprep.subr.mxu0 0.0
    %6756 = vmatpush1.msra.mxu0 0.0
    %6757 = vmatprep.subr.mxu0 0.0
    %6758 = vmatpush1.msra.mxu0 0.0
    %6759 = vmatprep.subr.mxu0 0.0
    %6760 = vmatpush1.msra.mxu0 0.0
    %6761 = vmatprep.subr.mxu0 0.0
    %6762 = vmatpush1.msra.mxu0 0.0
    %6763 = vmatprep.subr.mxu0 0.0
    %6764 = vmatpush1.msra.mxu0 0.0
    %6765 = vmatprep.subr.mxu0 0.0
    %6766 = vmatpush1.msra.mxu0 0.0
    %6767 = vmatprep.subr.mxu0 0.0
    %6768 = vmatpush1.msra.mxu0 0.0
    %6769 = vmatprep.subr.mxu0 0.0
    %6770 = vmatpush1.msra.mxu0 0.0
    %6771 = vmatprep.subr.mxu0 0.0
    %6772 = vmatpush1.msra.mxu0 0.0
    %6773 = vmatprep.subr.mxu0 0.0
    %6774 = vmatpush1.msra.mxu0 0.0
    %6775 = vmatprep.subr.mxu0 0.0
    %6776 = vmatpush1.msra.mxu0 0.0
    %6777 = vmatprep.subr.mxu0 0.0
    %6778 = vmatpush1.msra.mxu0 0.0
    %6779 = vmatprep.subr.mxu0 0.0
    %6780 = vmatpush1.msra.mxu0 0.0
    %6781 = vmatprep.subr.mxu0 0.0
    %6782 = vmatpush1.msra.mxu0 0.0
    %6783 = vmatprep.subr.mxu0 0.0
    %6784 = vmatpush1.msra.mxu0 0.0
    %6785 = vmatprep.subr.mxu0 0.0
    %6786 = vmatpush1.msra.mxu0 0.0
    %6787 = vmatprep.subr.mxu0 0.0
    %6788 = vmatpush1.msra.mxu0 0.0
    %6789 = vmatprep.subr.mxu0 0.0
    %6790 = vmatpush1.msra.mxu0 0.0
    %6791 = vmatprep.subr.mxu0 0.0
    %6792 = vmatpush1.msra.mxu0 0.0
    %6793 = vmatprep.subr.mxu0 0.0
    %6794 = vmatpush1.msra.mxu0 0.0
    %6795 = vmatprep.subr.mxu0 0.0
    %6796 = vmatpush1.msra.mxu0 0.0
    %6797 = vmatprep.subr.mxu0 0.0
    %6798 = vmatpush1.msra.mxu0 0.0
    %6799 = vmatprep.subr.mxu0 0.0
    %6800 = vmatpush1.msra.mxu0 0.0
    %6801 = vmatprep.subr.mxu0 0.0
    %6802 = vmatpush1.msra.mxu0 0.0
    %6803 = vmatprep.subr.mxu0 0.0
    %6804 = vmatpush1.msra.mxu0 0.0
    %6805 = vmatprep.subr.mxu0 0.0
    %6806 = vmatpush1.msra.mxu0 0.0
    %6807 = vmatprep.subr.mxu0 0.0
    %6808 = vmatpush1.msra.mxu0 0.0
    %6809 = vmatprep.mubr.f32.mxu0 0.0
    %v6810 = vand.u32 %v6516, 4294901760
    %v6811 = vsub.f32 %v6516, %v6810
    %v6812 = vand.u32 %v6811, 4294901760
    %6813 = vmatmul.mubr.f32.gmra.mrb[0].mxu0 %v6812
    %v6814 = vpop.f32.mrb[0].mxu0
    %v6815 = vadd.f32 %v6741, %v6814
    %v6816 = vpop.f32.mrb[0].mxu0
    %6817 = vdwg.mxu0
    %6818 = vmatprep.subr.mxu0 0.0
    %v6819 = vand.u32 %v6512, 4294901760
    %v6820 = vsub.f32 %v6512, %v6819
    %v6821 = vand.u32 %v6820, 4294901760
    %6822 = vmatpush1.msra.mxu0 %v6821
    %6823 = vmatprep.subr.mxu0 0.0
    %6824 = vmatpush1.msra.mxu0 0.0
    %6825 = vmatprep.subr.mxu0 0.0
    %6826 = vmatpush1.msra.mxu0 0.0
    %6827 = vmatprep.subr.mxu0 0.0
    %6828 = vmatpush1.msra.mxu0 0.0
    %6829 = vmatprep.subr.mxu0 0.0
    %6830 = vmatpush1.msra.mxu0 0.0
    %6831 = vmatprep.subr.mxu0 0.0
    %6832 = vmatpush1.msra.mxu0 0.0
    %6833 = vmatprep.subr.mxu0 0.0
    %6834 = vmatpush1.msra.mxu0 0.0
    %6835 = vmatprep.subr.mxu0 0.0
    %6836 = vmatpush1.msra.mxu0 0.0
    %6837 = vmatprep.subr.mxu0 0.0
    %6838 = vmatpush1.msra.mxu0 0.0
    %6839 = vmatprep.subr.mxu0 0.0
    %6840 = vmatpush1.msra.mxu0 0.0
    %6841 = vmatprep.subr.mxu0 0.0
    %6842 = vmatpush1.msra.mxu0 0.0
    %6843 = vmatprep.subr.mxu0 0.0
    %6844 = vmatpush1.msra.mxu0 0.0
    %6845 = vmatprep.subr.mxu0 0.0
    %6846 = vmatpush1.msra.mxu0 0.0
    %6847 = vmatprep.subr.mxu0 0.0
    %6848 = vmatpush1.msra.mxu0 0.0
    %6849 = vmatprep.subr.mxu0 0.0
    %6850 = vmatpush1.msra.mxu0 0.0
    %6851 = vmatprep.subr.mxu0 0.0
    %6852 = vmatpush1.msra.mxu0 0.0
    %6853 = vmatprep.subr.mxu0 0.0
    %6854 = vmatpush1.msra.mxu0 0.0
    %6855 = vmatprep.subr.mxu0 0.0
    %6856 = vmatpush1.msra.mxu0 0.0
    %6857 = vmatprep.subr.mxu0 0.0
    %6858 = vmatpush1.msra.mxu0 0.0
    %6859 = vmatprep.subr.mxu0 0.0
    %6860 = vmatpush1.msra.mxu0 0.0
    %6861 = vmatprep.subr.mxu0 0.0
    %6862 = vmatpush1.msra.mxu0 0.0
    %6863 = vmatprep.subr.mxu0 0.0
    %6864 = vmatpush1.msra.mxu0 0.0
    %6865 = vmatprep.subr.mxu0 0.0
    %6866 = vmatpush1.msra.mxu0 0.0
    %6867 = vmatprep.subr.mxu0 0.0
    %6868 = vmatpush1.msra.mxu0 0.0
    %6869 = vmatprep.subr.mxu0 0.0
    %6870 = vmatpush1.msra.mxu0 0.0
    %6871 = vmatprep.subr.mxu0 0.0
    %6872 = vmatpush1.msra.mxu0 0.0
    %6873 = vmatprep.subr.mxu0 0.0
    %6874 = vmatpush1.msra.mxu0 0.0
    %6875 = vmatprep.subr.mxu0 0.0
    %6876 = vmatpush1.msra.mxu0 0.0
    %6877 = vmatprep.subr.mxu0 0.0
    %6878 = vmatpush1.msra.mxu0 0.0
    %6879 = vmatprep.subr.mxu0 0.0
    %6880 = vmatpush1.msra.mxu0 0.0
    %6881 = vmatprep.subr.mxu0 0.0
    %6882 = vmatpush1.msra.mxu0 0.0
    %6883 = vmatprep.subr.mxu0 0.0
    %6884 = vmatpush1.msra.mxu0 0.0
    %6885 = vmatprep.mubr.f32.mxu0 0.0
    %v6886 = vand.u32 %v6516, 4294901760
    %6887 = vmatmul.mubr.f32.gmra.mrb[0].mxu0 %v6886
    %v6888 = vpop.f32.mrb[0].mxu0
    %v6889 = vadd.f32 %v6815, %v6888
    %v6890 = vpop.f32.mrb[0].mxu0
    %6891 = vdwg.mxu0
    %6892 = vmatprep.subr.mxu0 0.0
    %v6893 = vand.u32 %v6512, 4294901760
    %6894 = vmatpush1.msra.mxu0 %v6893
    %6895 = vmatprep.subr.mxu0 0.0
    %6896 = vmatpush1.msra.mxu0 0.0
    %6897 = vmatprep.subr.mxu0 0.0
    %6898 = vmatpush1.msra.mxu0 0.0
    %6899 = vmatprep.subr.mxu0 0.0
    %6900 = vmatpush1.msra.mxu0 0.0
    %6901 = vmatprep.subr.mxu0 0.0
    %6902 = vmatpush1.msra.mxu0 0.0
    %6903 = vmatprep.subr.mxu0 0.0
    %6904 = vmatpush1.msra.mxu0 0.0
    %6905 = vmatprep.subr.mxu0 0.0
    %6906 = vmatpush1.msra.mxu0 0.0
    %6907 = vmatprep.subr.mxu0 0.0
    %6908 = vmatpush1.msra.mxu0 0.0
    %6909 = vmatprep.subr.mxu0 0.0
    %6910 = vmatpush1.msra.mxu0 0.0
    %6911 = vmatprep.subr.mxu0 0.0
    %6912 = vmatpush1.msra.mxu0 0.0
    %6913 = vmatprep.subr.mxu0 0.0
    %6914 = vmatpush1.msra.mxu0 0.0
    %6915 = vmatprep.subr.mxu0 0.0
    %6916 = vmatpush1.msra.mxu0 0.0
    %6917 = vmatprep.subr.mxu0 0.0
    %6918 = vmatpush1.msra.mxu0 0.0
    %6919 = vmatprep.subr.mxu0 0.0
    %6920 = vmatpush1.msra.mxu0 0.0
    %6921 = vmatprep.subr.mxu0 0.0
    %6922 = vmatpush1.msra.mxu0 0.0
    %6923 = vmatprep.subr.mxu0 0.0
    %6924 = vmatpush1.msra.mxu0 0.0
    %6925 = vmatprep.subr.mxu0 0.0
    %6926 = vmatpush1.msra.mxu0 0.0
    %6927 = vmatprep.subr.mxu0 0.0
    %6928 = vmatpush1.msra.mxu0 0.0
    %6929 = vmatprep.subr.mxu0 0.0
    %6930 = vmatpush1.msra.mxu0 0.0
    %6931 = vmatprep.subr.mxu0 0.0
    %6932 = vmatpush1.msra.mxu0 0.0
    %6933 = vmatprep.subr.mxu0 0.0
    %6934 = vmatpush1.msra.mxu0 0.0
    %6935 = vmatprep.subr.mxu0 0.0
    %6936 = vmatpush1.msra.mxu0 0.0
    %6937 = vmatprep.subr.mxu0 0.0
    %6938 = vmatpush1.msra.mxu0 0.0
    %6939 = vmatprep.subr.mxu0 0.0
    %6940 = vmatpush1.msra.mxu0 0.0
    %6941 = vmatprep.subr.mxu0 0.0
    %6942 = vmatpush1.msra.mxu0 0.0
    %6943 = vmatprep.subr.mxu0 0.0
    %6944 = vmatpush1.msra.mxu0 0.0
    %6945 = vmatprep.subr.mxu0 0.0
    %6946 = vmatpush1.msra.mxu0 0.0
    %6947 = vmatprep.subr.mxu0 0.0
    %6948 = vmatpush1.msra.mxu0 0.0
    %6949 = vmatprep.subr.mxu0 0.0
    %6950 = vmatpush1.msra.mxu0 0.0
    %6951 = vmatprep.subr.mxu0 0.0
    %6952 = vmatpush1.msra.mxu0 0.0
    %6953 = vmatprep.subr.mxu0 0.0
    %6954 = vmatpush1.msra.mxu0 0.0
    %6955 = vmatprep.subr.mxu0 0.0
    %6956 = vmatpush1.msra.mxu0 0.0
    %6957 = vmatprep.mubr.f32.mxu0 0.0
    %v6958 = vand.u32 %v6516, 4294901760
    %6959 = vmatmul.mubr.f32.gmra.mrb[0].mxu0 %v6958
    %v6960 = vpop.f32.mrb[0].mxu0
    %v6961 = vadd.f32 %v6889, %v6960
    %v6962 = vpop.f32.mrb[0].mxu0
    %6963 = vdwg.mxu0
    %s6964 = scalar_lea.vmem %s14, 4
    %v6965 = vld [vmem:[%s6964] sm:$0xf]
    %v6967 = vsel %vm6514, %v6965, 0
    %6969 = vmatprep.subr.mxu0 0.0
    %v6970 = vand.u32 %v6512, 4294901760
    %6971 = vmatpush1.msra.mxu0 %v6970
    %6972 = vmatprep.subr.mxu0 0.0
    %6973 = vmatpush1.msra.mxu0 0.0
    %6974 = vmatprep.subr.mxu0 0.0
    %6975 = vmatpush1.msra.mxu0 0.0
    %6976 = vmatprep.subr.mxu0 0.0
    %6977 = vmatpush1.msra.mxu0 0.0
    %6978 = vmatprep.subr.mxu0 0.0
    %6979 = vmatpush1.msra.mxu0 0.0
    %6980 = vmatprep.subr.mxu0 0.0
    %6981 = vmatpush1.msra.mxu0 0.0
    %6982 = vmatprep.subr.mxu0 0.0
    %6983 = vmatpush1.msra.mxu0 0.0
    %6984 = vmatprep.subr.mxu0 0.0
    %6985 = vmatpush1.msra.mxu0 0.0
    %6986 = vmatprep.subr.mxu0 0.0
    %6987 = vmatpush1.msra.mxu0 0.0
    %6988 = vmatprep.subr.mxu0 0.0
    %6989 = vmatpush1.msra.mxu0 0.0
    %6990 = vmatprep.subr.mxu0 0.0
    %6991 = vmatpush1.msra.mxu0 0.0
    %6992 = vmatprep.subr.mxu0 0.0
    %6993 = vmatpush1.msra.mxu0 0.0
    %6994 = vmatprep.subr.mxu0 0.0
    %6995 = vmatpush1.msra.mxu0 0.0
    %6996 = vmatprep.subr.mxu0 0.0
    %6997 = vmatpush1.msra.mxu0 0.0
    %6998 = vmatprep.subr.mxu0 0.0
    %6999 = vmatpush1.msra.mxu0 0.0
    %7000 = vmatprep.subr.mxu0 0.0
    %7001 = vmatpush1.msra.mxu0 0.0
    %7002 = vmatprep.subr.mxu0 0.0
    %7003 = vmatpush1.msra.mxu0 0.0
    %7004 = vmatprep.subr.mxu0 0.0
    %7005 = vmatpush1.msra.mxu0 0.0
    %7006 = vmatprep.subr.mxu0 0.0
    %7007 = vmatpush1.msra.mxu0 0.0
    %7008 = vmatprep.subr.mxu0 0.0
    %7009 = vmatpush1.msra.mxu0 0.0
    %7010 = vmatprep.subr.mxu0 0.0
    %7011 = vmatpush1.msra.mxu0 0.0
    %7012 = vmatprep.subr.mxu0 0.0
    %7013 = vmatpush1.msra.mxu0 0.0
    %7014 = vmatprep.subr.mxu0 0.0
    %7015 = vmatpush1.msra.mxu0 0.0
    %7016 = vmatprep.subr.mxu0 0.0
    %7017 = vmatpush1.msra.mxu0 0.0
    %7018 = vmatprep.subr.mxu0 0.0
    %7019 = vmatpush1.msra.mxu0 0.0
    %7020 = vmatprep.subr.mxu0 0.0
    %7021 = vmatpush1.msra.mxu0 0.0
    %7022 = vmatprep.subr.mxu0 0.0
    %7023 = vmatpush1.msra.mxu0 0.0
    %7024 = vmatprep.subr.mxu0 0.0
    %7025 = vmatpush1.msra.mxu0 0.0
    %7026 = vmatprep.subr.mxu0 0.0
    %7027 = vmatpush1.msra.mxu0 0.0
    %7028 = vmatprep.subr.mxu0 0.0
    %7029 = vmatpush1.msra.mxu0 0.0
    %7030 = vmatprep.subr.mxu0 0.0
    %7031 = vmatpush1.msra.mxu0 0.0
    %7032 = vmatprep.subr.mxu0 0.0
    %7033 = vmatpush1.msra.mxu0 0.0
    %7034 = vmatprep.mubr.f32.mxu0 0.0
    %v7035 = vand.u32 %v6967, 4294901760
    %v7036 = vsub.f32 %v6967, %v7035
    %v7037 = vand.u32 %v7036, 4294901760
    %v7038 = vsub.f32 %v7036, %v7037
    %v7039 = vand.u32 %v7038, 4294901760
    %7040 = vmatmul.mubr.f32.gmra.mrb[0].mxu0 %v7039
    %v7041 = vpop.f32.mrb[0].mxu0
    %v7042 = vadd.f32 0.0, %v7041
    %v7043 = vpop.f32.mrb[0].mxu0
    %7044 = vdwg.mxu0
    %7045 = vmatprep.subr.mxu0 0.0
    %v7046 = vand.u32 %v6512, 4294901760
    %v7047 = vsub.f32 %v6512, %v7046
    %v7048 = vand.u32 %v7047, 4294901760
    %v7049 = vsub.f32 %v7047, %v7048
    %v7050 = vand.u32 %v7049, 4294901760
    %7051 = vmatpush1.msra.mxu0 %v7050
    %7052 = vmatprep.subr.mxu0 0.0
    %7053 = vmatpush1.msra.mxu0 0.0
    %7054 = vmatprep.subr.mxu0 0.0
    %7055 = vmatpush1.msra.mxu0 0.0
    %7056 = vmatprep.subr.mxu0 0.0
    %7057 = vmatpush1.msra.mxu0 0.0
    %7058 = vmatprep.subr.mxu0 0.0
    %7059 = vmatpush1.msra.mxu0 0.0
    %7060 = vmatprep.subr.mxu0 0.0
    %7061 = vmatpush1.msra.mxu0 0.0
    %7062 = vmatprep.subr.mxu0 0.0
    %7063 = vmatpush1.msra.mxu0 0.0
    %7064 = vmatprep.subr.mxu0 0.0
    %7065 = vmatpush1.msra.mxu0 0.0
    %7066 = vmatprep.subr.mxu0 0.0
    %7067 = vmatpush1.msra.mxu0 0.0
    %7068 = vmatprep.subr.mxu0 0.0
    %7069 = vmatpush1.msra.mxu0 0.0
    %7070 = vmatprep.subr.mxu0 0.0
    %7071 = vmatpush1.msra.mxu0 0.0
    %7072 = vmatprep.subr.mxu0 0.0
    %7073 = vmatpush1.msra.mxu0 0.0
    %7074 = vmatprep.subr.mxu0 0.0
    %7075 = vmatpush1.msra.mxu0 0.0
    %7076 = vmatprep.subr.mxu0 0.0
    %7077 = vmatpush1.msra.mxu0 0.0
    %7078 = vmatprep.subr.mxu0 0.0
    %7079 = vmatpush1.msra.mxu0 0.0
    %7080 = vmatprep.subr.mxu0 0.0
    %7081 = vmatpush1.msra.mxu0 0.0
    %7082 = vmatprep.subr.mxu0 0.0
    %7083 = vmatpush1.msra.mxu0 0.0
    %7084 = vmatprep.subr.mxu0 0.0
    %7085 = vmatpush1.msra.mxu0 0.0
    %7086 = vmatprep.subr.mxu0 0.0
    %7087 = vmatpush1.msra.mxu0 0.0
    %7088 = vmatprep.subr.mxu0 0.0
    %7089 = vmatpush1.msra.mxu0 0.0
    %7090 = vmatprep.subr.mxu0 0.0
    %7091 = vmatpush1.msra.mxu0 0.0
    %7092 = vmatprep.subr.mxu0 0.0
    %7093 = vmatpush1.msra.mxu0 0.0
    %7094 = vmatprep.subr.mxu0 0.0
    %7095 = vmatpush1.msra.mxu0 0.0
    %7096 = vmatprep.subr.mxu0 0.0
    %7097 = vmatpush1.msra.mxu0 0.0
    %7098 = vmatprep.subr.mxu0 0.0
    %7099 = vmatpush1.msra.mxu0 0.0
    %7100 = vmatprep.subr.mxu0 0.0
    %7101 = vmatpush1.msra.mxu0 0.0
    %7102 = vmatprep.subr.mxu0 0.0
    %7103 = vmatpush1.msra.mxu0 0.0
    %7104 = vmatprep.subr.mxu0 0.0
    %7105 = vmatpush1.msra.mxu0 0.0
    %7106 = vmatprep.subr.mxu0 0.0
    %7107 = vmatpush1.msra.mxu0 0.0
    %7108 = vmatprep.subr.mxu0 0.0
    %7109 = vmatpush1.msra.mxu0 0.0
    %7110 = vmatprep.subr.mxu0 0.0
    %7111 = vmatpush1.msra.mxu0 0.0
    %7112 = vmatprep.subr.mxu0 0.0
    %7113 = vmatpush1.msra.mxu0 0.0
    %7114 = vmatprep.mubr.f32.mxu0 0.0
    %v7115 = vand.u32 %v6967, 4294901760
    %7116 = vmatmul.mubr.f32.gmra.mrb[0].mxu0 %v7115
    %v7117 = vpop.f32.mrb[0].mxu0
    %v7118 = vadd.f32 %v7042, %v7117
    %v7119 = vpop.f32.mrb[0].mxu0
    %7120 = vdwg.mxu0
    %7121 = vmatprep.subr.mxu0 0.0
    %v7122 = vand.u32 %v6512, 4294901760
    %v7123 = vsub.f32 %v6512, %v7122
    %7124 = vmatpush1.msra.mxu0 %v7123
    %7125 = vmatprep.subr.mxu0 0.0
    %7126 = vmatpush1.msra.mxu0 0.0
    %7127 = vmatprep.subr.mxu0 0.0
    %7128 = vmatpush1.msra.mxu0 0.0
    %7129 = vmatprep.subr.mxu0 0.0
    %7130 = vmatpush1.msra.mxu0 0.0
    %7131 = vmatprep.subr.mxu0 0.0
    %7132 = vmatpush1.msra.mxu0 0.0
    %7133 = vmatprep.subr.mxu0 0.0
    %7134 = vmatpush1.msra.mxu0 0.0
    %7135 = vmatprep.subr.mxu0 0.0
    %7136 = vmatpush1.msra.mxu0 0.0
    %7137 = vmatprep.subr.mxu0 0.0
    %7138 = vmatpush1.msra.mxu0 0.0
    %7139 = vmatprep.subr.mxu0 0.0
    %7140 = vmatpush1.msra.mxu0 0.0
    %7141 = vmatprep.subr.mxu0 0.0
    %7142 = vmatpush1.msra.mxu0 0.0
    %7143 = vmatprep.subr.mxu0 0.0
    %7144 = vmatpush1.msra.mxu0 0.0
    %7145 = vmatprep.subr.mxu0 0.0
    %7146 = vmatpush1.msra.mxu0 0.0
    %7147 = vmatprep.subr.mxu0 0.0
    %7148 = vmatpush1.msra.mxu0 0.0
    %7149 = vmatprep.subr.mxu0 0.0
    %7150 = vmatpush1.msra.mxu0 0.0
    %7151 = vmatprep.subr.mxu0 0.0
    %7152 = vmatpush1.msra.mxu0 0.0
    %7153 = vmatprep.subr.mxu0 0.0
    %7154 = vmatpush1.msra.mxu0 0.0
    %7155 = vmatprep.subr.mxu0 0.0
    %7156 = vmatpush1.msra.mxu0 0.0
    %7157 = vmatprep.subr.mxu0 0.0
    %7158 = vmatpush1.msra.mxu0 0.0
    %7159 = vmatprep.subr.mxu0 0.0
    %7160 = vmatpush1.msra.mxu0 0.0
    %7161 = vmatprep.subr.mxu0 0.0
    %7162 = vmatpush1.msra.mxu0 0.0
    %7163 = vmatprep.subr.mxu0 0.0
    %7164 = vmatpush1.msra.mxu0 0.0
    %7165 = vmatprep.subr.mxu0 0.0
    %7166 = vmatpush1.msra.mxu0 0.0
    %7167 = vmatprep.subr.mxu0 0.0
    %7168 = vmatpush1.msra.mxu0 0.0
    %7169 = vmatprep.subr.mxu0 0.0
    %7170 = vmatpush1.msra.mxu0 0.0
    %7171 = vmatprep.subr.mxu0 0.0
    %7172 = vmatpush1.msra.mxu0 0.0
    %7173 = vmatprep.subr.mxu0 0.0
    %7174 = vmatpush1.msra.mxu0 0.0
    %7175 = vmatprep.subr.mxu0 0.0
    %7176 = vmatpush1.msra.mxu0 0.0
    %7177 = vmatprep.subr.mxu0 0.0
    %7178 = vmatpush1.msra.mxu0 0.0
    %7179 = vmatprep.subr.mxu0 0.0
    %7180 = vmatpush1.msra.mxu0 0.0
    %7181 = vmatprep.subr.mxu0 0.0
    %7182 = vmatpush1.msra.mxu0 0.0
    %7183 = vmatprep.subr.mxu0 0.0
    %7184 = vmatpush1.msra.mxu0 0.0
    %7185 = vmatprep.subr.mxu0 0.0
    %7186 = vmatpush1.msra.mxu0 0.0
    %7187 = vmatprep.mubr.f32.mxu0 0.0
    %v7188 = vand.u32 %v6967, 4294901760
    %v7189 = vsub.f32 %v6967, %v7188
    %7190 = vmatmul.mubr.f32.gmra.mrb[0].mxu0 %v7189
    %v7191 = vpop.f32.mrb[0].mxu0
    %v7192 = vadd.f32 %v7118, %v7191
    %v7193 = vpop.f32.mrb[0].mxu0
    %7194 = vdwg.mxu0
    %7195 = vmatprep.subr.mxu0 0.0
    %v7196 = vand.u32 %v6512, 4294901760
    %7197 = vmatpush1.msra.mxu0 %v7196
    %7198 = vmatprep.subr.mxu0 0.0
    %7199 = vmatpush1.msra.mxu0 0.0
    %7200 = vmatprep.subr.mxu0 0.0
    %7201 = vmatpush1.msra.mxu0 0.0
    %7202 = vmatprep.subr.mxu0 0.0
    %7203 = vmatpush1.msra.mxu0 0.0
    %7204 = vmatprep.subr.mxu0 0.0
    %7205 = vmatpush1.msra.mxu0 0.0
    %7206 = vmatprep.subr.mxu0 0.0
    %7207 = vmatpush1.msra.mxu0 0.0
    %7208 = vmatprep.subr.mxu0 0.0
    %7209 = vmatpush1.msra.mxu0 0.0
    %7210 = vmatprep.subr.mxu0 0.0
    %7211 = vmatpush1.msra.mxu0 0.0
    %7212 = vmatprep.subr.mxu0 0.0
    %7213 = vmatpush1.msra.mxu0 0.0
    %7214 = vmatprep.subr.mxu0 0.0
    %7215 = vmatpush1.msra.mxu0 0.0
    %7216 = vmatprep.subr.mxu0 0.0
    %7217 = vmatpush1.msra.mxu0 0.0
    %7218 = vmatprep.subr.mxu0 0.0
    %7219 = vmatpush1.msra.mxu0 0.0
    %7220 = vmatprep.subr.mxu0 0.0
    %7221 = vmatpush1.msra.mxu0 0.0
    %7222 = vmatprep.subr.mxu0 0.0
    %7223 = vmatpush1.msra.mxu0 0.0
    %7224 = vmatprep.subr.mxu0 0.0
    %7225 = vmatpush1.msra.mxu0 0.0
    %7226 = vmatprep.subr.mxu0 0.0
    %7227 = vmatpush1.msra.mxu0 0.0
    %7228 = vmatprep.subr.mxu0 0.0
    %7229 = vmatpush1.msra.mxu0 0.0
    %7230 = vmatprep.subr.mxu0 0.0
    %7231 = vmatpush1.msra.mxu0 0.0
    %7232 = vmatprep.subr.mxu0 0.0
    %7233 = vmatpush1.msra.mxu0 0.0
    %7234 = vmatprep.subr.mxu0 0.0
    %7235 = vmatpush1.msra.mxu0 0.0
    %7236 = vmatprep.subr.mxu0 0.0
    %7237 = vmatpush1.msra.mxu0 0.0
    %7238 = vmatprep.subr.mxu0 0.0
    %7239 = vmatpush1.msra.mxu0 0.0
    %7240 = vmatprep.subr.mxu0 0.0
    %7241 = vmatpush1.msra.mxu0 0.0
    %7242 = vmatprep.subr.mxu0 0.0
    %7243 = vmatpush1.msra.mxu0 0.0
    %7244 = vmatprep.subr.mxu0 0.0
    %7245 = vmatpush1.msra.mxu0 0.0
    %7246 = vmatprep.subr.mxu0 0.0
    %7247 = vmatpush1.msra.mxu0 0.0
    %7248 = vmatprep.subr.mxu0 0.0
    %7249 = vmatpush1.msra.mxu0 0.0
    %7250 = vmatprep.subr.mxu0 0.0
    %7251 = vmatpush1.msra.mxu0 0.0
    %7252 = vmatprep.subr.mxu0 0.0
    %7253 = vmatpush1.msra.mxu0 0.0
    %7254 = vmatprep.subr.mxu0 0.0
    %7255 = vmatpush1.msra.mxu0 0.0
    %7256 = vmatprep.subr.mxu0 0.0
    %7257 = vmatpush1.msra.mxu0 0.0
    %7258 = vmatprep.subr.mxu0 0.0
    %7259 = vmatpush1.msra.mxu0 0.0
    %7260 = vmatprep.mubr.f32.mxu0 0.0
    %v7261 = vand.u32 %v6967, 4294901760
    %v7262 = vsub.f32 %v6967, %v7261
    %v7263 = vand.u32 %v7262, 4294901760
    %7264 = vmatmul.mubr.f32.gmra.mrb[0].mxu0 %v7263
    %v7265 = vpop.f32.mrb[0].mxu0
    %v7266 = vadd.f32 %v7192, %v7265
    %v7267 = vpop.f32.mrb[0].mxu0
    %7268 = vdwg.mxu0
    %7269 = vmatprep.subr.mxu0 0.0
    %v7270 = vand.u32 %v6512, 4294901760
    %v7271 = vsub.f32 %v6512, %v7270
    %v7272 = vand.u32 %v7271, 4294901760
    %7273 = vmatpush1.msra.mxu0 %v7272
    %7274 = vmatprep.subr.mxu0 0.0
    %7275 = vmatpush1.msra.mxu0 0.0
    %7276 = vmatprep.subr.mxu0 0.0
    %7277 = vmatpush1.msra.mxu0 0.0
    %7278 = vmatprep.subr.mxu0 0.0
    %7279 = vmatpush1.msra.mxu0 0.0
    %7280 = vmatprep.subr.mxu0 0.0
    %7281 = vmatpush1.msra.mxu0 0.0
    %7282 = vmatprep.subr.mxu0 0.0
    %7283 = vmatpush1.msra.mxu0 0.0
    %7284 = vmatprep.subr.mxu0 0.0
    %7285 = vmatpush1.msra.mxu0 0.0
    %7286 = vmatprep.subr.mxu0 0.0
    %7287 = vmatpush1.msra.mxu0 0.0
    %7288 = vmatprep.subr.mxu0 0.0
    %7289 = vmatpush1.msra.mxu0 0.0
    %7290 = vmatprep.subr.mxu0 0.0
    %7291 = vmatpush1.msra.mxu0 0.0
    %7292 = vmatprep.subr.mxu0 0.0
    %7293 = vmatpush1.msra.mxu0 0.0
    %7294 = vmatprep.subr.mxu0 0.0
    %7295 = vmatpush1.msra.mxu0 0.0
    %7296 = vmatprep.subr.mxu0 0.0
    %7297 = vmatpush1.msra.mxu0 0.0
    %7298 = vmatprep.subr.mxu0 0.0
    %7299 = vmatpush1.msra.mxu0 0.0
    %7300 = vmatprep.subr.mxu0 0.0
    %7301 = vmatpush1.msra.mxu0 0.0
    %7302 = vmatprep.subr.mxu0 0.0
    %7303 = vmatpush1.msra.mxu0 0.0
    %7304 = vmatprep.subr.mxu0 0.0
    %7305 = vmatpush1.msra.mxu0 0.0
    %7306 = vmatprep.subr.mxu0 0.0
    %7307 = vmatpush1.msra.mxu0 0.0
    %7308 = vmatprep.subr.mxu0 0.0
    %7309 = vmatpush1.msra.mxu0 0.0
    %7310 = vmatprep.subr.mxu0 0.0
    %7311 = vmatpush1.msra.mxu0 0.0
    %7312 = vmatprep.subr.mxu0 0.0
    %7313 = vmatpush1.msra.mxu0 0.0
    %7314 = vmatprep.subr.mxu0 0.0
    %7315 = vmatpush1.msra.mxu0 0.0
    %7316 = vmatprep.subr.mxu0 0.0
    %7317 = vmatpush1.msra.mxu0 0.0
    %7318 = vmatprep.subr.mxu0 0.0
    %7319 = vmatpush1.msra.mxu0 0.0
    %7320 = vmatprep.subr.mxu0 0.0
    %7321 = vmatpush1.msra.mxu0 0.0
    %7322 = vmatprep.subr.mxu0 0.0
    %7323 = vmatpush1.msra.mxu0 0.0
    %7324 = vmatprep.subr.mxu0 0.0
    %7325 = vmatpush1.msra.mxu0 0.0
    %7326 = vmatprep.subr.mxu0 0.0
    %7327 = vmatpush1.msra.mxu0 0.0
    %7328 = vmatprep.subr.mxu0 0.0
    %7329 = vmatpush1.msra.mxu0 0.0
    %7330 = vmatprep.subr.mxu0 0.0
    %7331 = vmatpush1.msra.mxu0 0.0
    %7332 = vmatprep.subr.mxu0 0.0
    %7333 = vmatpush1.msra.mxu0 0.0
    %7334 = vmatprep.subr.mxu0 0.0
    %7335 = vmatpush1.msra.mxu0 0.0
    %7336 = vmatprep.mubr.f32.mxu0 0.0
    %v7337 = vand.u32 %v6967, 4294901760
    %7338 = vmatmul.mubr.f32.gmra.mrb[0].mxu0 %v7337
    %v7339 = vpop.f32.mrb[0].mxu0
    %v7340 = vadd.f32 %v7266, %v7339
    %v7341 = vpop.f32.mrb[0].mxu0
    %7342 = vdwg.mxu0
    %7343 = vmatprep.subr.mxu0 0.0
    %v7344 = vand.u32 %v6512, 4294901760
    %7345 = vmatpush1.msra.mxu0 %v7344
    %7346 = vmatprep.subr.mxu0 0.0
    %7347 = vmatpush1.msra.mxu0 0.0
    %7348 = vmatprep.subr.mxu0 0.0
    %7349 = vmatpush1.msra.mxu0 0.0
    %7350 = vmatprep.subr.mxu0 0.0
    %7351 = vmatpush1.msra.mxu0 0.0
    %7352 = vmatprep.subr.mxu0 0.0
    %7353 = vmatpush1.msra.mxu0 0.0
    %7354 = vmatprep.subr.mxu0 0.0
    %7355 = vmatpush1.msra.mxu0 0.0
    %7356 = vmatprep.subr.mxu0 0.0
    %7357 = vmatpush1.msra.mxu0 0.0
    %7358 = vmatprep.subr.mxu0 0.0
    %7359 = vmatpush1.msra.mxu0 0.0
    %7360 = vmatprep.subr.mxu0 0.0
    %7361 = vmatpush1.msra.mxu0 0.0
    %7362 = vmatprep.subr.mxu0 0.0
    %7363 = vmatpush1.msra.mxu0 0.0
    %7364 = vmatprep.subr.mxu0 0.0
    %7365 = vmatpush1.msra.mxu0 0.0
    %7366 = vmatprep.subr.mxu0 0.0
    %7367 = vmatpush1.msra.mxu0 0.0
    %7368 = vmatprep.subr.mxu0 0.0
    %7369 = vmatpush1.msra.mxu0 0.0
    %7370 = vmatprep.subr.mxu0 0.0
    %7371 = vmatpush1.msra.mxu0 0.0
    %7372 = vmatprep.subr.mxu0 0.0
    %7373 = vmatpush1.msra.mxu0 0.0
    %7374 = vmatprep.subr.mxu0 0.0
    %7375 = vmatpush1.msra.mxu0 0.0
    %7376 = vmatprep.subr.mxu0 0.0
    %7377 = vmatpush1.msra.mxu0 0.0
    %7378 = vmatprep.subr.mxu0 0.0
    %7379 = vmatpush1.msra.mxu0 0.0
    %7380 = vmatprep.subr.mxu0 0.0
    %7381 = vmatpush1.msra.mxu0 0.0
    %7382 = vmatprep.subr.mxu0 0.0
    %7383 = vmatpush1.msra.mxu0 0.0
    %7384 = vmatprep.subr.mxu0 0.0
    %7385 = vmatpush1.msra.mxu0 0.0
    %7386 = vmatprep.subr.mxu0 0.0
    %7387 = vmatpush1.msra.mxu0 0.0
    %7388 = vmatprep.subr.mxu0 0.0
    %7389 = vmatpush1.msra.mxu0 0.0
    %7390 = vmatprep.subr.mxu0 0.0
    %7391 = vmatpush1.msra.mxu0 0.0
    %7392 = vmatprep.subr.mxu0 0.0
    %7393 = vmatpush1.msra.mxu0 0.0
    %7394 = vmatprep.subr.mxu0 0.0
    %7395 = vmatpush1.msra.mxu0 0.0
    %7396 = vmatprep.subr.mxu0 0.0
    %7397 = vmatpush1.msra.mxu0 0.0
    %7398 = vmatprep.subr.mxu0 0.0
    %7399 = vmatpush1.msra.mxu0 0.0
    %7400 = vmatprep.subr.mxu0 0.0
    %7401 = vmatpush1.msra.mxu0 0.0
    %7402 = vmatprep.subr.mxu0 0.0
    %7403 = vmatpush1.msra.mxu0 0.0
    %7404 = vmatprep.subr.mxu0 0.0
    %7405 = vmatpush1.msra.mxu0 0.0
    %7406 = vmatprep.subr.mxu0 0.0
    %7407 = vmatpush1.msra.mxu0 0.0
    %7408 = vmatprep.mubr.f32.mxu0 0.0
    %v7409 = vand.u32 %v6967, 4294901760
    %7410 = vmatmul.mubr.f32.gmra.mrb[0].mxu0 %v7409
    %v7411 = vpop.f32.mrb[0].mxu0
    %v7412 = vadd.f32 %v7340, %v7411
    %v7413 = vpop.f32.mrb[0].mxu0
    %7414 = vdwg.mxu0
    %v7415 = vmax.f32 %v6961, %v7412
    %v7416 = vld [vmem:[%s15] sm:$0x3]
    %vm7417 = vcmask 31744
    %v7419 = vsel %vm7417, %v7416, 0
    %v7422 = vsel %vm3596, %v7415, 0
    %7424 = vmatprep.subr.mxu0 0.0
    %v7425 = vand.u32 %v7422, 4294901760
    %7426 = vmatpush1.msra.mxu0 %v7425
    %7427 = vmatprep.subr.mxu0 0.0
    %7428 = vmatpush1.msra.mxu0 0.0
    %7429 = vmatprep.subr.mxu0 0.0
    %7430 = vmatpush1.msra.mxu0 0.0
    %7431 = vmatprep.subr.mxu0 0.0
    %7432 = vmatpush1.msra.mxu0 0.0
    %7433 = vmatprep.subr.mxu0 0.0
    %7434 = vmatpush1.msra.mxu0 0.0
    %7435 = vmatprep.subr.mxu0 0.0
    %7436 = vmatpush1.msra.mxu0 0.0
    %7437 = vmatprep.subr.mxu0 0.0
    %7438 = vmatpush1.msra.mxu0 0.0
    %7439 = vmatprep.subr.mxu0 0.0
    %7440 = vmatpush1.msra.mxu0 0.0
    %7441 = vmatprep.subr.mxu0 0.0
    %7442 = vmatpush1.msra.mxu0 0.0
    %7443 = vmatprep.subr.mxu0 0.0
    %7444 = vmatpush1.msra.mxu0 0.0
    %7445 = vmatprep.subr.mxu0 0.0
    %7446 = vmatpush1.msra.mxu0 0.0
    %7447 = vmatprep.subr.mxu0 0.0
    %7448 = vmatpush1.msra.mxu0 0.0
    %7449 = vmatprep.subr.mxu0 0.0
    %7450 = vmatpush1.msra.mxu0 0.0
    %7451 = vmatprep.subr.mxu0 0.0
    %7452 = vmatpush1.msra.mxu0 0.0
    %7453 = vmatprep.subr.mxu0 0.0
    %7454 = vmatpush1.msra.mxu0 0.0
    %7455 = vmatprep.subr.mxu0 0.0
    %7456 = vmatpush1.msra.mxu0 0.0
    %7457 = vmatprep.subr.mxu0 0.0
    %7458 = vmatpush1.msra.mxu0 0.0
    %7459 = vmatprep.subr.mxu0 0.0
    %7460 = vmatpush1.msra.mxu0 0.0
    %7461 = vmatprep.subr.mxu0 0.0
    %7462 = vmatpush1.msra.mxu0 0.0
    %7463 = vmatprep.subr.mxu0 0.0
    %7464 = vmatpush1.msra.mxu0 0.0
    %7465 = vmatprep.subr.mxu0 0.0
    %7466 = vmatpush1.msra.mxu0 0.0
    %7467 = vmatprep.subr.mxu0 0.0
    %7468 = vmatpush1.msra.mxu0 0.0
    %7469 = vmatprep.subr.mxu0 0.0
    %7470 = vmatpush1.msra.mxu0 0.0
    %7471 = vmatprep.subr.mxu0 0.0
    %7472 = vmatpush1.msra.mxu0 0.0
    %7473 = vmatprep.subr.mxu0 0.0
    %7474 = vmatpush1.msra.mxu0 0.0
    %7475 = vmatprep.subr.mxu0 0.0
    %7476 = vmatpush1.msra.mxu0 0.0
    %7477 = vmatprep.subr.mxu0 0.0
    %7478 = vmatpush1.msra.mxu0 0.0
    %7479 = vmatprep.subr.mxu0 0.0
    %7480 = vmatpush1.msra.mxu0 0.0
    %7481 = vmatprep.subr.mxu0 0.0
    %7482 = vmatpush1.msra.mxu0 0.0
    %7483 = vmatprep.subr.mxu0 0.0
    %7484 = vmatpush1.msra.mxu0 0.0
    %7485 = vmatprep.subr.mxu0 0.0
    %7486 = vmatpush1.msra.mxu0 0.0
    %7487 = vmatprep.subr.mxu0 0.0
    %7488 = vmatpush1.msra.mxu0 0.0
    %7489 = vmatprep.mubr.f32.mxu0 0.0
    %v7490 = vand.u32 %v7419, 4294901760
    %v7491 = vsub.f32 %v7419, %v7490
    %v7492 = vand.u32 %v7491, 4294901760
    %v7493 = vsub.f32 %v7491, %v7492
    %v7494 = vand.u32 %v7493, 4294901760
    %7495 = vmatmul.mubr.f32.gmra.mrb[0].mxu0 %v7494
    %v7496 = vpop.f32.mrb[0].mxu0
    %v7497 = vadd.f32 0.0, %v7496
    %v7498 = vpop.f32.mrb[0].mxu0
    %7499 = vdwg.mxu0
    %7500 = vmatprep.subr.mxu0 0.0
    %v7501 = vand.u32 %v7422, 4294901760
    %v7502 = vsub.f32 %v7422, %v7501
    %v7503 = vand.u32 %v7502, 4294901760
    %v7504 = vsub.f32 %v7502, %v7503
    %v7505 = vand.u32 %v7504, 4294901760
    %7506 = vmatpush1.msra.mxu0 %v7505
    %7507 = vmatprep.subr.mxu0 0.0
    %7508 = vmatpush1.msra.mxu0 0.0
    %7509 = vmatprep.subr.mxu0 0.0
    %7510 = vmatpush1.msra.mxu0 0.0
    %7511 = vmatprep.subr.mxu0 0.0
    %7512 = vmatpush1.msra.mxu0 0.0
    %7513 = vmatprep.subr.mxu0 0.0
    %7514 = vmatpush1.msra.mxu0 0.0
    %7515 = vmatprep.subr.mxu0 0.0
    %7516 = vmatpush1.msra.mxu0 0.0
    %7517 = vmatprep.subr.mxu0 0.0
    %7518 = vmatpush1.msra.mxu0 0.0
    %7519 = vmatprep.subr.mxu0 0.0
    %7520 = vmatpush1.msra.mxu0 0.0
    %7521 = vmatprep.subr.mxu0 0.0
    %7522 = vmatpush1.msra.mxu0 0.0
    %7523 = vmatprep.subr.mxu0 0.0
    %7524 = vmatpush1.msra.mxu0 0.0
    %7525 = vmatprep.subr.mxu0 0.0
    %7526 = vmatpush1.msra.mxu0 0.0
    %7527 = vmatprep.subr.mxu0 0.0
    %7528 = vmatpush1.msra.mxu0 0.0
    %7529 = vmatprep.subr.mxu0 0.0
    %7530 = vmatpush1.msra.mxu0 0.0
    %7531 = vmatprep.subr.mxu0 0.0
    %7532 = vmatpush1.msra.mxu0 0.0
    %7533 = vmatprep.subr.mxu0 0.0
    %7534 = vmatpush1.msra.mxu0 0.0
    %7535 = vmatprep.subr.mxu0 0.0
    %7536 = vmatpush1.msra.mxu0 0.0
    %7537 = vmatprep.subr.mxu0 0.0
    %7538 = vmatpush1.msra.mxu0 0.0
    %7539 = vmatprep.subr.mxu0 0.0
    %7540 = vmatpush1.msra.mxu0 0.0
    %7541 = vmatprep.subr.mxu0 0.0
    %7542 = vmatpush1.msra.mxu0 0.0
    %7543 = vmatprep.subr.mxu0 0.0
    %7544 = vmatpush1.msra.mxu0 0.0
    %7545 = vmatprep.subr.mxu0 0.0
    %7546 = vmatpush1.msra.mxu0 0.0
    %7547 = vmatprep.subr.mxu0 0.0
    %7548 = vmatpush1.msra.mxu0 0.0
    %7549 = vmatprep.subr.mxu0 0.0
    %7550 = vmatpush1.msra.mxu0 0.0
    %7551 = vmatprep.subr.mxu0 0.0
    %7552 = vmatpush1.msra.mxu0 0.0
    %7553 = vmatprep.subr.mxu0 0.0
    %7554 = vmatpush1.msra.mxu0 0.0
    %7555 = vmatprep.subr.mxu0 0.0
    %7556 = vmatpush1.msra.mxu0 0.0
    %7557 = vmatprep.subr.mxu0 0.0
    %7558 = vmatpush1.msra.mxu0 0.0
    %7559 = vmatprep.subr.mxu0 0.0
    %7560 = vmatpush1.msra.mxu0 0.0
    %7561 = vmatprep.subr.mxu0 0.0
    %7562 = vmatpush1.msra.mxu0 0.0
    %7563 = vmatprep.subr.mxu0 0.0
    %7564 = vmatpush1.msra.mxu0 0.0
    %7565 = vmatprep.subr.mxu0 0.0
    %7566 = vmatpush1.msra.mxu0 0.0
    %7567 = vmatprep.subr.mxu0 0.0
    %7568 = vmatpush1.msra.mxu0 0.0
    %7569 = vmatprep.mubr.f32.mxu0 0.0
    %v7570 = vand.u32 %v7419, 4294901760
    %7571 = vmatmul.mubr.f32.gmra.mrb[0].mxu0 %v7570
    %v7572 = vpop.f32.mrb[0].mxu0
    %v7573 = vadd.f32 %v7497, %v7572
    %v7574 = vpop.f32.mrb[0].mxu0
    %7575 = vdwg.mxu0
    %7576 = vmatprep.subr.mxu0 0.0
    %v7577 = vand.u32 %v7422, 4294901760
    %v7578 = vsub.f32 %v7422, %v7577
    %7579 = vmatpush1.msra.mxu0 %v7578
    %7580 = vmatprep.subr.mxu0 0.0
    %7581 = vmatpush1.msra.mxu0 0.0
    %7582 = vmatprep.subr.mxu0 0.0
    %7583 = vmatpush1.msra.mxu0 0.0
    %7584 = vmatprep.subr.mxu0 0.0
    %7585 = vmatpush1.msra.mxu0 0.0
    %7586 = vmatprep.subr.mxu0 0.0
    %7587 = vmatpush1.msra.mxu0 0.0
    %7588 = vmatprep.subr.mxu0 0.0
    %7589 = vmatpush1.msra.mxu0 0.0
    %7590 = vmatprep.subr.mxu0 0.0
    %7591 = vmatpush1.msra.mxu0 0.0
    %7592 = vmatprep.subr.mxu0 0.0
    %7593 = vmatpush1.msra.mxu0 0.0
    %7594 = vmatprep.subr.mxu0 0.0
    %7595 = vmatpush1.msra.mxu0 0.0
    %7596 = vmatprep.subr.mxu0 0.0
    %7597 = vmatpush1.msra.mxu0 0.0
    %7598 = vmatprep.subr.mxu0 0.0
    %7599 = vmatpush1.msra.mxu0 0.0
    %7600 = vmatprep.subr.mxu0 0.0
    %7601 = vmatpush1.msra.mxu0 0.0
    %7602 = vmatprep.subr.mxu0 0.0
    %7603 = vmatpush1.msra.mxu0 0.0
    %7604 = vmatprep.subr.mxu0 0.0
    %7605 = vmatpush1.msra.mxu0 0.0
    %7606 = vmatprep.subr.mxu0 0.0
    %7607 = vmatpush1.msra.mxu0 0.0
    %7608 = vmatprep.subr.mxu0 0.0
    %7609 = vmatpush1.msra.mxu0 0.0
    %7610 = vmatprep.subr.mxu0 0.0
    %7611 = vmatpush1.msra.mxu0 0.0
    %7612 = vmatprep.subr.mxu0 0.0
    %7613 = vmatpush1.msra.mxu0 0.0
    %7614 = vmatprep.subr.mxu0 0.0
    %7615 = vmatpush1.msra.mxu0 0.0
    %7616 = vmatprep.subr.mxu0 0.0
    %7617 = vmatpush1.msra.mxu0 0.0
    %7618 = vmatprep.subr.mxu0 0.0
    %7619 = vmatpush1.msra.mxu0 0.0
    %7620 = vmatprep.subr.mxu0 0.0
    %7621 = vmatpush1.msra.mxu0 0.0
    %7622 = vmatprep.subr.mxu0 0.0
    %7623 = vmatpush1.msra.mxu0 0.0
    %7624 = vmatprep.subr.mxu0 0.0
    %7625 = vmatpush1.msra.mxu0 0.0
    %7626 = vmatprep.subr.mxu0 0.0
    %7627 = vmatpush1.msra.mxu0 0.0
    %7628 = vmatprep.subr.mxu0 0.0
    %7629 = vmatpush1.msra.mxu0 0.0
    %7630 = vmatprep.subr.mxu0 0.0
    %7631 = vmatpush1.msra.mxu0 0.0
    %7632 = vmatprep.subr.mxu0 0.0
    %7633 = vmatpush1.msra.mxu0 0.0
    %7634 = vmatprep.subr.mxu0 0.0
    %7635 = vmatpush1.msra.mxu0 0.0
    %7636 = vmatprep.subr.mxu0 0.0
    %7637 = vmatpush1.msra.mxu0 0.0
    %7638 = vmatprep.subr.mxu0 0.0
    %7639 = vmatpush1.msra.mxu0 0.0
    %7640 = vmatprep.subr.mxu0 0.0
    %7641 = vmatpush1.msra.mxu0 0.0
    %7642 = vmatprep.mubr.f32.mxu0 0.0
    %v7643 = vand.u32 %v7419, 4294901760
    %v7644 = vsub.f32 %v7419, %v7643
    %7645 = vmatmul.mubr.f32.gmra.mrb[0].mxu0 %v7644
    %v7646 = vpop.f32.mrb[0].mxu0
    %v7647 = vadd.f32 %v7573, %v7646
    %v7648 = vpop.f32.mrb[0].mxu0
    %7649 = vdwg.mxu0
    %7650 = vmatprep.subr.mxu0 0.0
    %v7651 = vand.u32 %v7422, 4294901760
    %7652 = vmatpush1.msra.mxu0 %v7651
    %7653 = vmatprep.subr.mxu0 0.0
    %7654 = vmatpush1.msra.mxu0 0.0
    %7655 = vmatprep.subr.mxu0 0.0
    %7656 = vmatpush1.msra.mxu0 0.0
    %7657 = vmatprep.subr.mxu0 0.0
    %7658 = vmatpush1.msra.mxu0 0.0
    %7659 = vmatprep.subr.mxu0 0.0
    %7660 = vmatpush1.msra.mxu0 0.0
    %7661 = vmatprep.subr.mxu0 0.0
    %7662 = vmatpush1.msra.mxu0 0.0
    %7663 = vmatprep.subr.mxu0 0.0
    %7664 = vmatpush1.msra.mxu0 0.0
    %7665 = vmatprep.subr.mxu0 0.0
    %7666 = vmatpush1.msra.mxu0 0.0
    %7667 = vmatprep.subr.mxu0 0.0
    %7668 = vmatpush1.msra.mxu0 0.0
    %7669 = vmatprep.subr.mxu0 0.0
    %7670 = vmatpush1.msra.mxu0 0.0
    %7671 = vmatprep.subr.mxu0 0.0
    %7672 = vmatpush1.msra.mxu0 0.0
    %7673 = vmatprep.subr.mxu0 0.0
    %7674 = vmatpush1.msra.mxu0 0.0
    %7675 = vmatprep.subr.mxu0 0.0
    %7676 = vmatpush1.msra.mxu0 0.0
    %7677 = vmatprep.subr.mxu0 0.0
    %7678 = vmatpush1.msra.mxu0 0.0
    %7679 = vmatprep.subr.mxu0 0.0
    %7680 = vmatpush1.msra.mxu0 0.0
    %7681 = vmatprep.subr.mxu0 0.0
    %7682 = vmatpush1.msra.mxu0 0.0
    %7683 = vmatprep.subr.mxu0 0.0
    %7684 = vmatpush1.msra.mxu0 0.0
    %7685 = vmatprep.subr.mxu0 0.0
    %7686 = vmatpush1.msra.mxu0 0.0
    %7687 = vmatprep.subr.mxu0 0.0
    %7688 = vmatpush1.msra.mxu0 0.0
    %7689 = vmatprep.subr.mxu0 0.0
    %7690 = vmatpush1.msra.mxu0 0.0
    %7691 = vmatprep.subr.mxu0 0.0
    %7692 = vmatpush1.msra.mxu0 0.0
    %7693 = vmatprep.subr.mxu0 0.0
    %7694 = vmatpush1.msra.mxu0 0.0
    %7695 = vmatprep.subr.mxu0 0.0
    %7696 = vmatpush1.msra.mxu0 0.0
    %7697 = vmatprep.subr.mxu0 0.0
    %7698 = vmatpush1.msra.mxu0 0.0
    %7699 = vmatprep.subr.mxu0 0.0
    %7700 = vmatpush1.msra.mxu0 0.0
    %7701 = vmatprep.subr.mxu0 0.0
    %7702 = vmatpush1.msra.mxu0 0.0
    %7703 = vmatprep.subr.mxu0 0.0
    %7704 = vmatpush1.msra.mxu0 0.0
    %7705 = vmatprep.subr.mxu0 0.0
    %7706 = vmatpush1.msra.mxu0 0.0
    %7707 = vmatprep.subr.mxu0 0.0
    %7708 = vmatpush1.msra.mxu0 0.0
    %7709 = vmatprep.subr.mxu0 0.0
    %7710 = vmatpush1.msra.mxu0 0.0
    %7711 = vmatprep.subr.mxu0 0.0
    %7712 = vmatpush1.msra.mxu0 0.0
    %7713 = vmatprep.subr.mxu0 0.0
    %7714 = vmatpush1.msra.mxu0 0.0
    %7715 = vmatprep.mubr.f32.mxu0 0.0
    %v7716 = vand.u32 %v7419, 4294901760
    %v7717 = vsub.f32 %v7419, %v7716
    %v7718 = vand.u32 %v7717, 4294901760
    %7719 = vmatmul.mubr.f32.gmra.mrb[0].mxu0 %v7718
    %v7720 = vpop.f32.mrb[0].mxu0
    %v7721 = vadd.f32 %v7647, %v7720
    %v7722 = vpop.f32.mrb[0].mxu0
    %7723 = vdwg.mxu0
    %7724 = vmatprep.subr.mxu0 0.0
    %v7725 = vand.u32 %v7422, 4294901760
    %v7726 = vsub.f32 %v7422, %v7725
    %v7727 = vand.u32 %v7726, 4294901760
    %7728 = vmatpush1.msra.mxu0 %v7727
    %7729 = vmatprep.subr.mxu0 0.0
    %7730 = vmatpush1.msra.mxu0 0.0
    %7731 = vmatprep.subr.mxu0 0.0
    %7732 = vmatpush1.msra.mxu0 0.0
    %7733 = vmatprep.subr.mxu0 0.0
    %7734 = vmatpush1.msra.mxu0 0.0
    %7735 = vmatprep.subr.mxu0 0.0
    %7736 = vmatpush1.msra.mxu0 0.0
    %7737 = vmatprep.subr.mxu0 0.0
    %7738 = vmatpush1.msra.mxu0 0.0
    %7739 = vmatprep.subr.mxu0 0.0
    %7740 = vmatpush1.msra.mxu0 0.0
    %7741 = vmatprep.subr.mxu0 0.0
    %7742 = vmatpush1.msra.mxu0 0.0
    %7743 = vmatprep.subr.mxu0 0.0
    %7744 = vmatpush1.msra.mxu0 0.0
    %7745 = vmatprep.subr.mxu0 0.0
    %7746 = vmatpush1.msra.mxu0 0.0
    %7747 = vmatprep.subr.mxu0 0.0
    %7748 = vmatpush1.msra.mxu0 0.0
    %7749 = vmatprep.subr.mxu0 0.0
    %7750 = vmatpush1.msra.mxu0 0.0
    %7751 = vmatprep.subr.mxu0 0.0
    %7752 = vmatpush1.msra.mxu0 0.0
    %7753 = vmatprep.subr.mxu0 0.0
    %7754 = vmatpush1.msra.mxu0 0.0
    %7755 = vmatprep.subr.mxu0 0.0
    %7756 = vmatpush1.msra.mxu0 0.0
    %7757 = vmatprep.subr.mxu0 0.0
    %7758 = vmatpush1.msra.mxu0 0.0
    %7759 = vmatprep.subr.mxu0 0.0
    %7760 = vmatpush1.msra.mxu0 0.0
    %7761 = vmatprep.subr.mxu0 0.0
    %7762 = vmatpush1.msra.mxu0 0.0
    %7763 = vmatprep.subr.mxu0 0.0
    %7764 = vmatpush1.msra.mxu0 0.0
    %7765 = vmatprep.subr.mxu0 0.0
    %7766 = vmatpush1.msra.mxu0 0.0
    %7767 = vmatprep.subr.mxu0 0.0
    %7768 = vmatpush1.msra.mxu0 0.0
    %7769 = vmatprep.subr.mxu0 0.0
    %7770 = vmatpush1.msra.mxu0 0.0
    %7771 = vmatprep.subr.mxu0 0.0
    %7772 = vmatpush1.msra.mxu0 0.0
    %7773 = vmatprep.subr.mxu0 0.0
    %7774 = vmatpush1.msra.mxu0 0.0
    %7775 = vmatprep.subr.mxu0 0.0
    %7776 = vmatpush1.msra.mxu0 0.0
    %7777 = vmatprep.subr.mxu0 0.0
    %7778 = vmatpush1.msra.mxu0 0.0
    %7779 = vmatprep.subr.mxu0 0.0
    %7780 = vmatpush1.msra.mxu0 0.0
    %7781 = vmatprep.subr.mxu0 0.0
    %7782 = vmatpush1.msra.mxu0 0.0
    %7783 = vmatprep.subr.mxu0 0.0
    %7784 = vmatpush1.msra.mxu0 0.0
    %7785 = vmatprep.subr.mxu0 0.0
    %7786 = vmatpush1.msra.mxu0 0.0
    %7787 = vmatprep.subr.mxu0 0.0
    %7788 = vmatpush1.msra.mxu0 0.0
    %7789 = vmatprep.subr.mxu0 0.0
    %7790 = vmatpush1.msra.mxu0 0.0
    %7791 = vmatprep.mubr.f32.mxu0 0.0
    %v7792 = vand.u32 %v7419, 4294901760
    %7793 = vmatmul.mubr.f32.gmra.mrb[0].mxu0 %v7792
    %v7794 = vpop.f32.mrb[0].mxu0
    %v7795 = vadd.f32 %v7721, %v7794
    %v7796 = vpop.f32.mrb[0].mxu0
    %7797 = vdwg.mxu0
    %7798 = vmatprep.subr.mxu0 0.0
    %v7799 = vand.u32 %v7422, 4294901760
    %7800 = vmatpush1.msra.mxu0 %v7799
    %7801 = vmatprep.subr.mxu0 0.0
    %7802 = vmatpush1.msra.mxu0 0.0
    %7803 = vmatprep.subr.mxu0 0.0
    %7804 = vmatpush1.msra.mxu0 0.0
    %7805 = vmatprep.subr.mxu0 0.0
    %7806 = vmatpush1.msra.mxu0 0.0
    %7807 = vmatprep.subr.mxu0 0.0
    %7808 = vmatpush1.msra.mxu0 0.0
    %7809 = vmatprep.subr.mxu0 0.0
    %7810 = vmatpush1.msra.mxu0 0.0
    %7811 = vmatprep.subr.mxu0 0.0
    %7812 = vmatpush1.msra.mxu0 0.0
    %7813 = vmatprep.subr.mxu0 0.0
    %7814 = vmatpush1.msra.mxu0 0.0
    %7815 = vmatprep.subr.mxu0 0.0
    %7816 = vmatpush1.msra.mxu0 0.0
    %7817 = vmatprep.subr.mxu0 0.0
    %7818 = vmatpush1.msra.mxu0 0.0
    %7819 = vmatprep.subr.mxu0 0.0
    %7820 = vmatpush1.msra.mxu0 0.0
    %7821 = vmatprep.subr.mxu0 0.0
    %7822 = vmatpush1.msra.mxu0 0.0
    %7823 = vmatprep.subr.mxu0 0.0
    %7824 = vmatpush1.msra.mxu0 0.0
    %7825 = vmatprep.subr.mxu0 0.0
    %7826 = vmatpush1.msra.mxu0 0.0
    %7827 = vmatprep.subr.mxu0 0.0
    %7828 = vmatpush1.msra.mxu0 0.0
    %7829 = vmatprep.subr.mxu0 0.0
    %7830 = vmatpush1.msra.mxu0 0.0
    %7831 = vmatprep.subr.mxu0 0.0
    %7832 = vmatpush1.msra.mxu0 0.0
    %7833 = vmatprep.subr.mxu0 0.0
    %7834 = vmatpush1.msra.mxu0 0.0
    %7835 = vmatprep.subr.mxu0 0.0
    %7836 = vmatpush1.msra.mxu0 0.0
    %7837 = vmatprep.subr.mxu0 0.0
    %7838 = vmatpush1.msra.mxu0 0.0
    %7839 = vmatprep.subr.mxu0 0.0
    %7840 = vmatpush1.msra.mxu0 0.0
    %7841 = vmatprep.subr.mxu0 0.0
    %7842 = vmatpush1.msra.mxu0 0.0
    %7843 = vmatprep.subr.mxu0 0.0
    %7844 = vmatpush1.msra.mxu0 0.0
    %7845 = vmatprep.subr.mxu0 0.0
    %7846 = vmatpush1.msra.mxu0 0.0
    %7847 = vmatprep.subr.mxu0 0.0
    %7848 = vmatpush1.msra.mxu0 0.0
    %7849 = vmatprep.subr.mxu0 0.0
    %7850 = vmatpush1.msra.mxu0 0.0
    %7851 = vmatprep.subr.mxu0 0.0
    %7852 = vmatpush1.msra.mxu0 0.0
    %7853 = vmatprep.subr.mxu0 0.0
    %7854 = vmatpush1.msra.mxu0 0.0
    %7855 = vmatprep.subr.mxu0 0.0
    %7856 = vmatpush1.msra.mxu0 0.0
    %7857 = vmatprep.subr.mxu0 0.0
    %7858 = vmatpush1.msra.mxu0 0.0
    %7859 = vmatprep.subr.mxu0 0.0
    %7860 = vmatpush1.msra.mxu0 0.0
    %7861 = vmatprep.subr.mxu0 0.0
    %7862 = vmatpush1.msra.mxu0 0.0
    %7863 = vmatprep.mubr.f32.mxu0 0.0
    %v7864 = vand.u32 %v7419, 4294901760
    %7865 = vmatmul.mubr.f32.gmra.mrb[0].mxu0 %v7864
    %v7866 = vpop.f32.mrb[0].mxu0
    %v7867 = vadd.f32 %v7795, %v7866
    %v7868 = vpop.f32.mrb[0].mxu0
    %7869 = vdwg.mxu0
    %v7870 = vld [vmem:[%s9] sm:$0xff]
    %v7871 = vld [vmem:[%s9 + $0x8] sm:$0xff]
    %v7872 = vld [vmem:[%s9 + $0x10] sm:$0xff]
    %v7873 = vld [vmem:[%s9 + $0x18] sm:$0xff]
    %v7874 = vld [vmem:[%s9 + $0x20] sm:$0xff]
    %v7875 = vld [vmem:[%s9 + $0x28] sm:$0xff]
    %v7876 = vld [vmem:[%s9 + $0x30] sm:$0xff]
    %v7877 = vld [vmem:[%s9 + $0x38] sm:$0xff]
    %s7878 = scalar_lea.vmem %s15, 2
    %v7879 = vld [vmem:[%s7878] sm:$0x3]
    %v7881 = vsel %vm7417, %v7879, 0
    %7883 = vmatprep.subr.mxu0 0.0
    %v7884 = vand.u32 %v7422, 4294901760
    %7885 = vmatpush1.msra.mxu0 %v7884
    %7886 = vmatprep.subr.mxu0 0.0
    %7887 = vmatpush1.msra.mxu0 0.0
    %7888 = vmatprep.subr.mxu0 0.0
    %7889 = vmatpush1.msra.mxu0 0.0
    %7890 = vmatprep.subr.mxu0 0.0
    %7891 = vmatpush1.msra.mxu0 0.0
    %7892 = vmatprep.subr.mxu0 0.0
    %7893 = vmatpush1.msra.mxu0 0.0
    %7894 = vmatprep.subr.mxu0 0.0
    %7895 = vmatpush1.msra.mxu0 0.0
    %7896 = vmatprep.subr.mxu0 0.0
    %7897 = vmatpush1.msra.mxu0 0.0
    %7898 = vmatprep.subr.mxu0 0.0
    %7899 = vmatpush1.msra.mxu0 0.0
    %7900 = vmatprep.subr.mxu0 0.0
    %7901 = vmatpush1.msra.mxu0 0.0
    %7902 = vmatprep.subr.mxu0 0.0
    %7903 = vmatpush1.msra.mxu0 0.0
    %7904 = vmatprep.subr.mxu0 0.0
    %7905 = vmatpush1.msra.mxu0 0.0
    %7906 = vmatprep.subr.mxu0 0.0
    %7907 = vmatpush1.msra.mxu0 0.0
    %7908 = vmatprep.subr.mxu0 0.0
    %7909 = vmatpush1.msra.mxu0 0.0
    %7910 = vmatprep.subr.mxu0 0.0
    %7911 = vmatpush1.msra.mxu0 0.0
    %7912 = vmatprep.subr.mxu0 0.0
    %7913 = vmatpush1.msra.mxu0 0.0
    %7914 = vmatprep.subr.mxu0 0.0
    %7915 = vmatpush1.msra.mxu0 0.0
    %7916 = vmatprep.subr.mxu0 0.0
    %7917 = vmatpush1.msra.mxu0 0.0
    %7918 = vmatprep.subr.mxu0 0.0
    %7919 = vmatpush1.msra.mxu0 0.0
    %7920 = vmatprep.subr.mxu0 0.0
    %7921 = vmatpush1.msra.mxu0 0.0
    %7922 = vmatprep.subr.mxu0 0.0
    %7923 = vmatpush1.msra.mxu0 0.0
    %7924 = vmatprep.subr.mxu0 0.0
    %7925 = vmatpush1.msra.mxu0 0.0
    %7926 = vmatprep.subr.mxu0 0.0
    %7927 = vmatpush1.msra.mxu0 0.0
    %7928 = vmatprep.subr.mxu0 0.0
    %7929 = vmatpush1.msra.mxu0 0.0
    %7930 = vmatprep.subr.mxu0 0.0
    %7931 = vmatpush1.msra.mxu0 0.0
    %7932 = vmatprep.subr.mxu0 0.0
    %7933 = vmatpush1.msra.mxu0 0.0
    %7934 = vmatprep.subr.mxu0 0.0
    %7935 = vmatpush1.msra.mxu0 0.0
    %7936 = vmatprep.subr.mxu0 0.0
    %7937 = vmatpush1.msra.mxu0 0.0
    %7938 = vmatprep.subr.mxu0 0.0
    %7939 = vmatpush1.msra.mxu0 0.0
    %7940 = vmatprep.subr.mxu0 0.0
    %7941 = vmatpush1.msra.mxu0 0.0
    %7942 = vmatprep.subr.mxu0 0.0
    %7943 = vmatpush1.msra.mxu0 0.0
    %7944 = vmatprep.subr.mxu0 0.0
    %7945 = vmatpush1.msra.mxu0 0.0
    %7946 = vmatprep.subr.mxu0 0.0
    %7947 = vmatpush1.msra.mxu0 0.0
    %7948 = vmatprep.mubr.f32.mxu0 0.0
    %v7949 = vand.u32 %v7881, 4294901760
    %v7950 = vsub.f32 %v7881, %v7949
    %v7951 = vand.u32 %v7950, 4294901760
    %v7952 = vsub.f32 %v7950, %v7951
    %v7953 = vand.u32 %v7952, 4294901760
    %7954 = vmatmul.mubr.f32.gmra.mrb[0].mxu0 %v7953
    %v7955 = vpop.f32.mrb[0].mxu0
    %v7956 = vadd.f32 0.0, %v7955
    %v7957 = vpop.f32.mrb[0].mxu0
    %7958 = vdwg.mxu0
    %7959 = vmatprep.subr.mxu0 0.0
    %v7960 = vand.u32 %v7422, 4294901760
    %v7961 = vsub.f32 %v7422, %v7960
    %v7962 = vand.u32 %v7961, 4294901760
    %v7963 = vsub.f32 %v7961, %v7962
    %v7964 = vand.u32 %v7963, 4294901760
    %7965 = vmatpush1.msra.mxu0 %v7964
    %7966 = vmatprep.subr.mxu0 0.0
    %7967 = vmatpush1.msra.mxu0 0.0
    %7968 = vmatprep.subr.mxu0 0.0
    %7969 = vmatpush1.msra.mxu0 0.0
    %7970 = vmatprep.subr.mxu0 0.0
    %7971 = vmatpush1.msra.mxu0 0.0
    %7972 = vmatprep.subr.mxu0 0.0
    %7973 = vmatpush1.msra.mxu0 0.0
    %7974 = vmatprep.subr.mxu0 0.0
    %7975 = vmatpush1.msra.mxu0 0.0
    %7976 = vmatprep.subr.mxu0 0.0
    %7977 = vmatpush1.msra.mxu0 0.0
    %7978 = vmatprep.subr.mxu0 0.0
    %7979 = vmatpush1.msra.mxu0 0.0
    %7980 = vmatprep.subr.mxu0 0.0
    %7981 = vmatpush1.msra.mxu0 0.0
    %7982 = vmatprep.subr.mxu0 0.0
    %7983 = vmatpush1.msra.mxu0 0.0
    %7984 = vmatprep.subr.mxu0 0.0
    %7985 = vmatpush1.msra.mxu0 0.0
    %7986 = vmatprep.subr.mxu0 0.0
    %7987 = vmatpush1.msra.mxu0 0.0
    %7988 = vmatprep.subr.mxu0 0.0
    %7989 = vmatpush1.msra.mxu0 0.0
    %7990 = vmatprep.subr.mxu0 0.0
    %7991 = vmatpush1.msra.mxu0 0.0
    %7992 = vmatprep.subr.mxu0 0.0
    %7993 = vmatpush1.msra.mxu0 0.0
    %7994 = vmatprep.subr.mxu0 0.0
    %7995 = vmatpush1.msra.mxu0 0.0
    %7996 = vmatprep.subr.mxu0 0.0
    %7997 = vmatpush1.msra.mxu0 0.0
    %7998 = vmatprep.subr.mxu0 0.0
    %7999 = vmatpush1.msra.mxu0 0.0
    %8000 = vmatprep.subr.mxu0 0.0
    %8001 = vmatpush1.msra.mxu0 0.0
    %8002 = vmatprep.subr.mxu0 0.0
    %8003 = vmatpush1.msra.mxu0 0.0
    %8004 = vmatprep.subr.mxu0 0.0
    %8005 = vmatpush1.msra.mxu0 0.0
    %8006 = vmatprep.subr.mxu0 0.0
    %8007 = vmatpush1.msra.mxu0 0.0
    %8008 = vmatprep.subr.mxu0 0.0
    %8009 = vmatpush1.msra.mxu0 0.0
    %8010 = vmatprep.subr.mxu0 0.0
    %8011 = vmatpush1.msra.mxu0 0.0
    %8012 = vmatprep.subr.mxu0 0.0
    %8013 = vmatpush1.msra.mxu0 0.0
    %8014 = vmatprep.subr.mxu0 0.0
    %8015 = vmatpush1.msra.mxu0 0.0
    %8016 = vmatprep.subr.mxu0 0.0
    %8017 = vmatpush1.msra.mxu0 0.0
    %8018 = vmatprep.subr.mxu0 0.0
    %8019 = vmatpush1.msra.mxu0 0.0
    %8020 = vmatprep.subr.mxu0 0.0
    %8021 = vmatpush1.msra.mxu0 0.0
    %8022 = vmatprep.subr.mxu0 0.0
    %8023 = vmatpush1.msra.mxu0 0.0
    %8024 = vmatprep.subr.mxu0 0.0
    %8025 = vmatpush1.msra.mxu0 0.0
    %8026 = vmatprep.subr.mxu0 0.0
    %8027 = vmatpush1.msra.mxu0 0.0
    %8028 = vmatprep.mubr.f32.mxu0 0.0
    %v8029 = vand.u32 %v7881, 4294901760
    %8030 = vmatmul.mubr.f32.gmra.mrb[0].mxu0 %v8029
    %v8031 = vpop.f32.mrb[0].mxu0
    %v8032 = vadd.f32 %v7956, %v8031
    %v8033 = vpop.f32.mrb[0].mxu0
    %8034 = vdwg.mxu0
    %8035 = vmatprep.subr.mxu0 0.0
    %v8036 = vand.u32 %v7422, 4294901760
    %v8037 = vsub.f32 %v7422, %v8036
    %8038 = vmatpush1.msra.mxu0 %v8037
    %8039 = vmatprep.subr.mxu0 0.0
    %8040 = vmatpush1.msra.mxu0 0.0
    %8041 = vmatprep.subr.mxu0 0.0
    %8042 = vmatpush1.msra.mxu0 0.0
    %8043 = vmatprep.subr.mxu0 0.0
    %8044 = vmatpush1.msra.mxu0 0.0
    %8045 = vmatprep.subr.mxu0 0.0
    %8046 = vmatpush1.msra.mxu0 0.0
    %8047 = vmatprep.subr.mxu0 0.0
    %8048 = vmatpush1.msra.mxu0 0.0
    %8049 = vmatprep.subr.mxu0 0.0
    %8050 = vmatpush1.msra.mxu0 0.0
    %8051 = vmatprep.subr.mxu0 0.0
    %8052 = vmatpush1.msra.mxu0 0.0
    %8053 = vmatprep.subr.mxu0 0.0
    %8054 = vmatpush1.msra.mxu0 0.0
    %8055 = vmatprep.subr.mxu0 0.0
    %8056 = vmatpush1.msra.mxu0 0.0
    %8057 = vmatprep.subr.mxu0 0.0
    %8058 = vmatpush1.msra.mxu0 0.0
    %8059 = vmatprep.subr.mxu0 0.0
    %8060 = vmatpush1.msra.mxu0 0.0
    %8061 = vmatprep.subr.mxu0 0.0
    %8062 = vmatpush1.msra.mxu0 0.0
    %8063 = vmatprep.subr.mxu0 0.0
    %8064 = vmatpush1.msra.mxu0 0.0
    %8065 = vmatprep.subr.mxu0 0.0
    %8066 = vmatpush1.msra.mxu0 0.0
    %8067 = vmatprep.subr.mxu0 0.0
    %8068 = vmatpush1.msra.mxu0 0.0
    %8069 = vmatprep.subr.mxu0 0.0
    %8070 = vmatpush1.msra.mxu0 0.0
    %8071 = vmatprep.subr.mxu0 0.0
    %8072 = vmatpush1.msra.mxu0 0.0
    %8073 = vmatprep.subr.mxu0 0.0
    %8074 = vmatpush1.msra.mxu0 0.0
    %8075 = vmatprep.subr.mxu0 0.0
    %8076 = vmatpush1.msra.mxu0 0.0
    %8077 = vmatprep.subr.mxu0 0.0
    %8078 = vmatpush1.msra.mxu0 0.0
    %8079 = vmatprep.subr.mxu0 0.0
    %8080 = vmatpush1.msra.mxu0 0.0
    %8081 = vmatprep.subr.mxu0 0.0
    %8082 = vmatpush1.msra.mxu0 0.0
    %8083 = vmatprep.subr.mxu0 0.0
    %8084 = vmatpush1.msra.mxu0 0.0
    %8085 = vmatprep.subr.mxu0 0.0
    %8086 = vmatpush1.msra.mxu0 0.0
    %8087 = vmatprep.subr.mxu0 0.0
    %8088 = vmatpush1.msra.mxu0 0.0
    %8089 = vmatprep.subr.mxu0 0.0
    %8090 = vmatpush1.msra.mxu0 0.0
    %8091 = vmatprep.subr.mxu0 0.0
    %8092 = vmatpush1.msra.mxu0 0.0
    %8093 = vmatprep.subr.mxu0 0.0
    %8094 = vmatpush1.msra.mxu0 0.0
    %8095 = vmatprep.subr.mxu0 0.0
    %8096 = vmatpush1.msra.mxu0 0.0
    %8097 = vmatprep.subr.mxu0 0.0
    %8098 = vmatpush1.msra.mxu0 0.0
    %8099 = vmatprep.subr.mxu0 0.0
    %8100 = vmatpush1.msra.mxu0 0.0
    %8101 = vmatprep.mubr.f32.mxu0 0.0
    %v8102 = vand.u32 %v7881, 4294901760
    %v8103 = vsub.f32 %v7881, %v8102
    %8104 = vmatmul.mubr.f32.gmra.mrb[0].mxu0 %v8103
    %v8105 = vpop.f32.mrb[0].mxu0
    %v8106 = vadd.f32 %v8032, %v8105
    %v8107 = vpop.f32.mrb[0].mxu0
    %8108 = vdwg.mxu0
    %8109 = vmatprep.subr.mxu0 0.0
    %v8110 = vand.u32 %v7422, 4294901760
    %8111 = vmatpush1.msra.mxu0 %v8110
    %8112 = vmatprep.subr.mxu0 0.0
    %8113 = vmatpush1.msra.mxu0 0.0
    %8114 = vmatprep.subr.mxu0 0.0
    %8115 = vmatpush1.msra.mxu0 0.0
    %8116 = vmatprep.subr.mxu0 0.0
    %8117 = vmatpush1.msra.mxu0 0.0
    %8118 = vmatprep.subr.mxu0 0.0
    %8119 = vmatpush1.msra.mxu0 0.0
    %8120 = vmatprep.subr.mxu0 0.0
    %8121 = vmatpush1.msra.mxu0 0.0
    %8122 = vmatprep.subr.mxu0 0.0
    %8123 = vmatpush1.msra.mxu0 0.0
    %8124 = vmatprep.subr.mxu0 0.0
    %8125 = vmatpush1.msra.mxu0 0.0
    %8126 = vmatprep.subr.mxu0 0.0
    %8127 = vmatpush1.msra.mxu0 0.0
    %8128 = vmatprep.subr.mxu0 0.0
    %8129 = vmatpush1.msra.mxu0 0.0
    %8130 = vmatprep.subr.mxu0 0.0
    %8131 = vmatpush1.msra.mxu0 0.0
    %8132 = vmatprep.subr.mxu0 0.0
    %8133 = vmatpush1.msra.mxu0 0.0
    %8134 = vmatprep.subr.mxu0 0.0
    %8135 = vmatpush1.msra.mxu0 0.0
    %8136 = vmatprep.subr.mxu0 0.0
    %8137 = vmatpush1.msra.mxu0 0.0
    %8138 = vmatprep.subr.mxu0 0.0
    %8139 = vmatpush1.msra.mxu0 0.0
    %8140 = vmatprep.subr.mxu0 0.0
    %8141 = vmatpush1.msra.mxu0 0.0
    %8142 = vmatprep.subr.mxu0 0.0
    %8143 = vmatpush1.msra.mxu0 0.0
    %8144 = vmatprep.subr.mxu0 0.0
    %8145 = vmatpush1.msra.mxu0 0.0
    %8146 = vmatprep.subr.mxu0 0.0
    %8147 = vmatpush1.msra.mxu0 0.0
    %8148 = vmatprep.subr.mxu0 0.0
    %8149 = vmatpush1.msra.mxu0 0.0
    %8150 = vmatprep.subr.mxu0 0.0
    %8151 = vmatpush1.msra.mxu0 0.0
    %8152 = vmatprep.subr.mxu0 0.0
    %8153 = vmatpush1.msra.mxu0 0.0
    %8154 = vmatprep.subr.mxu0 0.0
    %8155 = vmatpush1.msra.mxu0 0.0
    %8156 = vmatprep.subr.mxu0 0.0
    %8157 = vmatpush1.msra.mxu0 0.0
    %8158 = vmatprep.subr.mxu0 0.0
    %8159 = vmatpush1.msra.mxu0 0.0
    %8160 = vmatprep.subr.mxu0 0.0
    %8161 = vmatpush1.msra.mxu0 0.0
    %8162 = vmatprep.subr.mxu0 0.0
    %8163 = vmatpush1.msra.mxu0 0.0
    %8164 = vmatprep.subr.mxu0 0.0
    %8165 = vmatpush1.msra.mxu0 0.0
    %8166 = vmatprep.subr.mxu0 0.0
    %8167 = vmatpush1.msra.mxu0 0.0
    %8168 = vmatprep.subr.mxu0 0.0
    %8169 = vmatpush1.msra.mxu0 0.0
    %8170 = vmatprep.subr.mxu0 0.0
    %8171 = vmatpush1.msra.mxu0 0.0
    %8172 = vmatprep.subr.mxu0 0.0
    %8173 = vmatpush1.msra.mxu0 0.0
    %8174 = vmatprep.mubr.f32.mxu0 0.0
    %v8175 = vand.u32 %v7881, 4294901760
    %v8176 = vsub.f32 %v7881, %v8175
    %v8177 = vand.u32 %v8176, 4294901760
    %8178 = vmatmul.mubr.f32.gmra.mrb[0].mxu0 %v8177
    %v8179 = vpop.f32.mrb[0].mxu0
    %v8180 = vadd.f32 %v8106, %v8179
    %v8181 = vpop.f32.mrb[0].mxu0
    %8182 = vdwg.mxu0
    %8183 = vmatprep.subr.mxu0 0.0
    %v8184 = vand.u32 %v7422, 4294901760
    %v8185 = vsub.f32 %v7422, %v8184
    %v8186 = vand.u32 %v8185, 4294901760
    %8187 = vmatpush1.msra.mxu0 %v8186
    %8188 = vmatprep.subr.mxu0 0.0
    %8189 = vmatpush1.msra.mxu0 0.0
    %8190 = vmatprep.subr.mxu0 0.0
    %8191 = vmatpush1.msra.mxu0 0.0
    %8192 = vmatprep.subr.mxu0 0.0
    %8193 = vmatpush1.msra.mxu0 0.0
    %8194 = vmatprep.subr.mxu0 0.0
    %8195 = vmatpush1.msra.mxu0 0.0
    %8196 = vmatprep.subr.mxu0 0.0
    %8197 = vmatpush1.msra.mxu0 0.0
    %8198 = vmatprep.subr.mxu0 0.0
    %8199 = vmatpush1.msra.mxu0 0.0
    %8200 = vmatprep.subr.mxu0 0.0
    %8201 = vmatpush1.msra.mxu0 0.0
    %8202 = vmatprep.subr.mxu0 0.0
    %8203 = vmatpush1.msra.mxu0 0.0
    %8204 = vmatprep.subr.mxu0 0.0
    %8205 = vmatpush1.msra.mxu0 0.0
    %8206 = vmatprep.subr.mxu0 0.0
    %8207 = vmatpush1.msra.mxu0 0.0
    %8208 = vmatprep.subr.mxu0 0.0
    %8209 = vmatpush1.msra.mxu0 0.0
    %8210 = vmatprep.subr.mxu0 0.0
    %8211 = vmatpush1.msra.mxu0 0.0
    %8212 = vmatprep.subr.mxu0 0.0
    %8213 = vmatpush1.msra.mxu0 0.0
    %8214 = vmatprep.subr.mxu0 0.0
    %8215 = vmatpush1.msra.mxu0 0.0
    %8216 = vmatprep.subr.mxu0 0.0
    %8217 = vmatpush1.msra.mxu0 0.0
    %8218 = vmatprep.subr.mxu0 0.0
    %8219 = vmatpush1.msra.mxu0 0.0
    %8220 = vmatprep.subr.mxu0 0.0
    %8221 = vmatpush1.msra.mxu0 0.0
    %8222 = vmatprep.subr.mxu0 0.0
    %8223 = vmatpush1.msra.mxu0 0.0
    %8224 = vmatprep.subr.mxu0 0.0
    %8225 = vmatpush1.msra.mxu0 0.0
    %8226 = vmatprep.subr.mxu0 0.0
    %8227 = vmatpush1.msra.mxu0 0.0
    %8228 = vmatprep.subr.mxu0 0.0
    %8229 = vmatpush1.msra.mxu0 0.0
    %8230 = vmatprep.subr.mxu0 0.0
    %8231 = vmatpush1.msra.mxu0 0.0
    %8232 = vmatprep.subr.mxu0 0.0
    %8233 = vmatpush1.msra.mxu0 0.0
    %8234 = vmatprep.subr.mxu0 0.0
    %8235 = vmatpush1.msra.mxu0 0.0
    %8236 = vmatprep.subr.mxu0 0.0
    %8237 = vmatpush1.msra.mxu0 0.0
    %8238 = vmatprep.subr.mxu0 0.0
    %8239 = vmatpush1.msra.mxu0 0.0
    %8240 = vmatprep.subr.mxu0 0.0
    %8241 = vmatpush1.msra.mxu0 0.0
    %8242 = vmatprep.subr.mxu0 0.0
    %8243 = vmatpush1.msra.mxu0 0.0
    %8244 = vmatprep.subr.mxu0 0.0
    %8245 = vmatpush1.msra.mxu0 0.0
    %8246 = vmatprep.subr.mxu0 0.0
    %8247 = vmatpush1.msra.mxu0 0.0
    %8248 = vmatprep.subr.mxu0 0.0
    %8249 = vmatpush1.msra.mxu0 0.0
    %8250 = vmatprep.mubr.f32.mxu0 0.0
    %v8251 = vand.u32 %v7881, 4294901760
    %8252 = vmatmul.mubr.f32.gmra.mrb[0].mxu0 %v8251
    %v8253 = vpop.f32.mrb[0].mxu0
    %v8254 = vadd.f32 %v8180, %v8253
    %v8255 = vpop.f32.mrb[0].mxu0
    %8256 = vdwg.mxu0
    %8257 = vmatprep.subr.mxu0 0.0
    %v8258 = vand.u32 %v7422, 4294901760
    %8259 = vmatpush1.msra.mxu0 %v8258
    %8260 = vmatprep.subr.mxu0 0.0
    %8261 = vmatpush1.msra.mxu0 0.0
    %8262 = vmatprep.subr.mxu0 0.0
    %8263 = vmatpush1.msra.mxu0 0.0
    %8264 = vmatprep.subr.mxu0 0.0
    %8265 = vmatpush1.msra.mxu0 0.0
    %8266 = vmatprep.subr.mxu0 0.0
    %8267 = vmatpush1.msra.mxu0 0.0
    %8268 = vmatprep.subr.mxu0 0.0
    %8269 = vmatpush1.msra.mxu0 0.0
    %8270 = vmatprep.subr.mxu0 0.0
    %8271 = vmatpush1.msra.mxu0 0.0
    %8272 = vmatprep.subr.mxu0 0.0
    %8273 = vmatpush1.msra.mxu0 0.0
    %8274 = vmatprep.subr.mxu0 0.0
    %8275 = vmatpush1.msra.mxu0 0.0
    %8276 = vmatprep.subr.mxu0 0.0
    %8277 = vmatpush1.msra.mxu0 0.0
    %8278 = vmatprep.subr.mxu0 0.0
    %8279 = vmatpush1.msra.mxu0 0.0
    %8280 = vmatprep.subr.mxu0 0.0
    %8281 = vmatpush1.msra.mxu0 0.0
    %8282 = vmatprep.subr.mxu0 0.0
    %8283 = vmatpush1.msra.mxu0 0.0
    %8284 = vmatprep.subr.mxu0 0.0
    %8285 = vmatpush1.msra.mxu0 0.0
    %8286 = vmatprep.subr.mxu0 0.0
    %8287 = vmatpush1.msra.mxu0 0.0
    %8288 = vmatprep.subr.mxu0 0.0
    %8289 = vmatpush1.msra.mxu0 0.0
    %8290 = vmatprep.subr.mxu0 0.0
    %8291 = vmatpush1.msra.mxu0 0.0
    %8292 = vmatprep.subr.mxu0 0.0
    %8293 = vmatpush1.msra.mxu0 0.0
    %8294 = vmatprep.subr.mxu0 0.0
    %8295 = vmatpush1.msra.mxu0 0.0
    %8296 = vmatprep.subr.mxu0 0.0
    %8297 = vmatpush1.msra.mxu0 0.0
    %8298 = vmatprep.subr.mxu0 0.0
    %8299 = vmatpush1.msra.mxu0 0.0
    %8300 = vmatprep.subr.mxu0 0.0
    %8301 = vmatpush1.msra.mxu0 0.0
    %8302 = vmatprep.subr.mxu0 0.0
    %8303 = vmatpush1.msra.mxu0 0.0
    %8304 = vmatprep.subr.mxu0 0.0
    %8305 = vmatpush1.msra.mxu0 0.0
    %8306 = vmatprep.subr.mxu0 0.0
    %8307 = vmatpush1.msra.mxu0 0.0
    %8308 = vmatprep.subr.mxu0 0.0
    %8309 = vmatpush1.msra.mxu0 0.0
    %8310 = vmatprep.subr.mxu0 0.0
    %8311 = vmatpush1.msra.mxu0 0.0
    %8312 = vmatprep.subr.mxu0 0.0
    %8313 = vmatpush1.msra.mxu0 0.0
    %8314 = vmatprep.subr.mxu0 0.0
    %8315 = vmatpush1.msra.mxu0 0.0
    %8316 = vmatprep.subr.mxu0 0.0
    %8317 = vmatpush1.msra.mxu0 0.0
    %8318 = vmatprep.subr.mxu0 0.0
    %8319 = vmatpush1.msra.mxu0 0.0
    %8320 = vmatprep.subr.mxu0 0.0
    %8321 = vmatpush1.msra.mxu0 0.0
    %8322 = vmatprep.mubr.f32.mxu0 0.0
    %v8323 = vand.u32 %v7881, 4294901760
    %8324 = vmatmul.mubr.f32.gmra.mrb[0].mxu0 %v8323
    %v8325 = vpop.f32.mrb[0].mxu0
    %v8326 = vadd.f32 %v8254, %v8325
    %v8327 = vpop.f32.mrb[0].mxu0
    %8328 = vdwg.mxu0
    %s8329 = scalar_lea.vmem %s9, 64
    %v8330 = vld [vmem:[%s8329] sm:$0xff]
    %v8331 = vld [vmem:[%s8329 + $0x8] sm:$0xff]
    %v8332 = vld [vmem:[%s8329 + $0x10] sm:$0xff]
    %v8333 = vld [vmem:[%s8329 + $0x18] sm:$0xff]
    %v8334 = vld [vmem:[%s8329 + $0x20] sm:$0xff]
    %v8335 = vld [vmem:[%s8329 + $0x28] sm:$0xff]
    %v8336 = vld [vmem:[%s8329 + $0x30] sm:$0xff]
    %v8337 = vld [vmem:[%s8329 + $0x38] sm:$0xff]
    %v8339 = vsel %vm6474, %v8326, 0
    %8341 = vmatprep.subr.mxu0 0.0
    %v8342 = vand.u32 %v8330, 4294901760
    %8343 = vmatpush1.msra.mxu0 %v8342
    %8344 = vmatprep.subr.mxu0 0.0
    %v8345 = vand.u32 %v8331, 4294901760
    %8346 = vmatpush1.msra.mxu0 %v8345
    %8347 = vmatprep.subr.mxu0 0.0
    %v8348 = vand.u32 %v8332, 4294901760
    %8349 = vmatpush1.msra.mxu0 %v8348
    %8350 = vmatprep.subr.mxu0 0.0
    %v8351 = vand.u32 %v8333, 4294901760
    %8352 = vmatpush1.msra.mxu0 %v8351
    %8353 = vmatprep.subr.mxu0 0.0
    %v8354 = vand.u32 %v8334, 4294901760
    %8355 = vmatpush1.msra.mxu0 %v8354
    %8356 = vmatprep.subr.mxu0 0.0
    %v8357 = vand.u32 %v8335, 4294901760
    %8358 = vmatpush1.msra.mxu0 %v8357
    %8359 = vmatprep.subr.mxu0 0.0
    %v8360 = vand.u32 %v8336, 4294901760
    %8361 = vmatpush1.msra.mxu0 %v8360
    %8362 = vmatprep.subr.mxu0 0.0
    %v8363 = vand.u32 %v8337, 4294901760
    %8364 = vmatpush1.msra.mxu0 %v8363
    %8365 = vmatprep.subr.mxu0 0.0
    %8366 = vmatpush1.msra.mxu0 0.0
    %8367 = vmatprep.subr.mxu0 0.0
    %8368 = vmatpush1.msra.mxu0 0.0
    %8369 = vmatprep.subr.mxu0 0.0
    %8370 = vmatpush1.msra.mxu0 0.0
    %8371 = vmatprep.subr.mxu0 0.0
    %8372 = vmatpush1.msra.mxu0 0.0
    %8373 = vmatprep.subr.mxu0 0.0
    %8374 = vmatpush1.msra.mxu0 0.0
    %8375 = vmatprep.subr.mxu0 0.0
    %8376 = vmatpush1.msra.mxu0 0.0
    %8377 = vmatprep.subr.mxu0 0.0
    %8378 = vmatpush1.msra.mxu0 0.0
    %8379 = vmatprep.subr.mxu0 0.0
    %8380 = vmatpush1.msra.mxu0 0.0
    %8381 = vmatprep.subr.mxu0 0.0
    %8382 = vmatpush1.msra.mxu0 0.0
    %8383 = vmatprep.subr.mxu0 0.0
    %8384 = vmatpush1.msra.mxu0 0.0
    %8385 = vmatprep.subr.mxu0 0.0
    %8386 = vmatpush1.msra.mxu0 0.0
    %8387 = vmatprep.subr.mxu0 0.0
    %8388 = vmatpush1.msra.mxu0 0.0
    %8389 = vmatprep.subr.mxu0 0.0
    %8390 = vmatpush1.msra.mxu0 0.0
    %8391 = vmatprep.subr.mxu0 0.0
    %8392 = vmatpush1.msra.mxu0 0.0
    %8393 = vmatprep.subr.mxu0 0.0
    %8394 = vmatpush1.msra.mxu0 0.0
    %8395 = vmatprep.subr.mxu0 0.0
    %8396 = vmatpush1.msra.mxu0 0.0
    %8397 = vmatprep.subr.mxu0 0.0
    %8398 = vmatpush1.msra.mxu0 0.0
    %8399 = vmatprep.subr.mxu0 0.0
    %8400 = vmatpush1.msra.mxu0 0.0
    %8401 = vmatprep.subr.mxu0 0.0
    %8402 = vmatpush1.msra.mxu0 0.0
    %8403 = vmatprep.subr.mxu0 0.0
    %8404 = vmatpush1.msra.mxu0 0.0
    %8405 = vmatprep.subr.mxu0 0.0
    %8406 = vmatpush1.msra.mxu0 0.0
    %8407 = vmatprep.subr.mxu0 0.0
    %8408 = vmatpush1.msra.mxu0 0.0
    %8409 = vmatprep.subr.mxu0 0.0
    %8410 = vmatpush1.msra.mxu0 0.0
    %8411 = vmatprep.subr.mxu0 0.0
    %8412 = vmatpush1.msra.mxu0 0.0
    %8413 = vmatprep.mubr.f32.mxu0 0.0
    %v8414 = vand.u32 %v8339, 4294901760
    %v8415 = vsub.f32 %v8339, %v8414
    %v8416 = vand.u32 %v8415, 4294901760
    %v8417 = vsub.f32 %v8415, %v8416
    %v8418 = vand.u32 %v8417, 4294901760
    %8419 = vmatmul.mubr.f32.gmra.mrb[0].mxu0 %v8418
    %v8420 = vpop.f32.mrb[0].mxu0
    %v8421 = vadd.f32 0.0, %v8420
    %v8422 = vpop.f32.mrb[0].mxu0
    %8423 = vdwg.mxu0
    %8424 = vmatprep.subr.mxu0 0.0
    %v8425 = vand.u32 %v8330, 4294901760
    %v8426 = vsub.f32 %v8330, %v8425
    %v8427 = vand.u32 %v8426, 4294901760
    %v8428 = vsub.f32 %v8426, %v8427
    %v8429 = vand.u32 %v8428, 4294901760
    %8430 = vmatpush1.msra.mxu0 %v8429
    %8431 = vmatprep.subr.mxu0 0.0
    %v8432 = vand.u32 %v8331, 4294901760
    %v8433 = vsub.f32 %v8331, %v8432
    %v8434 = vand.u32 %v8433, 4294901760
    %v8435 = vsub.f32 %v8433, %v8434
    %v8436 = vand.u32 %v8435, 4294901760
    %8437 = vmatpush1.msra.mxu0 %v8436
    %8438 = vmatprep.subr.mxu0 0.0
    %v8439 = vand.u32 %v8332, 4294901760
    %v8440 = vsub.f32 %v8332, %v8439
    %v8441 = vand.u32 %v8440, 4294901760
    %v8442 = vsub.f32 %v8440, %v8441
    %v8443 = vand.u32 %v8442, 4294901760
    %8444 = vmatpush1.msra.mxu0 %v8443
    %8445 = vmatprep.subr.mxu0 0.0
    %v8446 = vand.u32 %v8333, 4294901760
    %v8447 = vsub.f32 %v8333, %v8446
    %v8448 = vand.u32 %v8447, 4294901760
    %v8449 = vsub.f32 %v8447, %v8448
    %v8450 = vand.u32 %v8449, 4294901760
    %8451 = vmatpush1.msra.mxu0 %v8450
    %8452 = vmatprep.subr.mxu0 0.0
    %v8453 = vand.u32 %v8334, 4294901760
    %v8454 = vsub.f32 %v8334, %v8453
    %v8455 = vand.u32 %v8454, 4294901760
    %v8456 = vsub.f32 %v8454, %v8455
    %v8457 = vand.u32 %v8456, 4294901760
    %8458 = vmatpush1.msra.mxu0 %v8457
    %8459 = vmatprep.subr.mxu0 0.0
    %v8460 = vand.u32 %v8335, 4294901760
    %v8461 = vsub.f32 %v8335, %v8460
    %v8462 = vand.u32 %v8461, 4294901760
    %v8463 = vsub.f32 %v8461, %v8462
    %v8464 = vand.u32 %v8463, 4294901760
    %8465 = vmatpush1.msra.mxu0 %v8464
    %8466 = vmatprep.subr.mxu0 0.0
    %v8467 = vand.u32 %v8336, 4294901760
    %v8468 = vsub.f32 %v8336, %v8467
    %v8469 = vand.u32 %v8468, 4294901760
    %v8470 = vsub.f32 %v8468, %v8469
    %v8471 = vand.u32 %v8470, 4294901760
    %8472 = vmatpush1.msra.mxu0 %v8471
    %8473 = vmatprep.subr.mxu0 0.0
    %v8474 = vand.u32 %v8337, 4294901760
    %v8475 = vsub.f32 %v8337, %v8474
    %v8476 = vand.u32 %v8475, 4294901760
    %v8477 = vsub.f32 %v8475, %v8476
    %v8478 = vand.u32 %v8477, 4294901760
    %8479 = vmatpush1.msra.mxu0 %v8478
    %8480 = vmatprep.subr.mxu0 0.0
    %8481 = vmatpush1.msra.mxu0 0.0
    %8482 = vmatprep.subr.mxu0 0.0
    %8483 = vmatpush1.msra.mxu0 0.0
    %8484 = vmatprep.subr.mxu0 0.0
    %8485 = vmatpush1.msra.mxu0 0.0
    %8486 = vmatprep.subr.mxu0 0.0
    %8487 = vmatpush1.msra.mxu0 0.0
    %8488 = vmatprep.subr.mxu0 0.0
    %8489 = vmatpush1.msra.mxu0 0.0
    %8490 = vmatprep.subr.mxu0 0.0
    %8491 = vmatpush1.msra.mxu0 0.0
    %8492 = vmatprep.subr.mxu0 0.0
    %8493 = vmatpush1.msra.mxu0 0.0
    %8494 = vmatprep.subr.mxu0 0.0
    %8495 = vmatpush1.msra.mxu0 0.0
    %8496 = vmatprep.subr.mxu0 0.0
    %8497 = vmatpush1.msra.mxu0 0.0
    %8498 = vmatprep.subr.mxu0 0.0
    %8499 = vmatpush1.msra.mxu0 0.0
    %8500 = vmatprep.subr.mxu0 0.0
    %8501 = vmatpush1.msra.mxu0 0.0
    %8502 = vmatprep.subr.mxu0 0.0
    %8503 = vmatpush1.msra.mxu0 0.0
    %8504 = vmatprep.subr.mxu0 0.0
    %8505 = vmatpush1.msra.mxu0 0.0
    %8506 = vmatprep.subr.mxu0 0.0
    %8507 = vmatpush1.msra.mxu0 0.0
    %8508 = vmatprep.subr.mxu0 0.0
    %8509 = vmatpush1.msra.mxu0 0.0
    %8510 = vmatprep.subr.mxu0 0.0
    %8511 = vmatpush1.msra.mxu0 0.0
    %8512 = vmatprep.subr.mxu0 0.0
    %8513 = vmatpush1.msra.mxu0 0.0
    %8514 = vmatprep.subr.mxu0 0.0
    %8515 = vmatpush1.msra.mxu0 0.0
    %8516 = vmatprep.subr.mxu0 0.0
    %8517 = vmatpush1.msra.mxu0 0.0
    %8518 = vmatprep.subr.mxu0 0.0
    %8519 = vmatpush1.msra.mxu0 0.0
    %8520 = vmatprep.subr.mxu0 0.0
    %8521 = vmatpush1.msra.mxu0 0.0
    %8522 = vmatprep.subr.mxu0 0.0
    %8523 = vmatpush1.msra.mxu0 0.0
    %8524 = vmatprep.subr.mxu0 0.0
    %8525 = vmatpush1.msra.mxu0 0.0
    %8526 = vmatprep.subr.mxu0 0.0
    %8527 = vmatpush1.msra.mxu0 0.0
    %8528 = vmatprep.mubr.f32.mxu0 0.0
    %v8529 = vand.u32 %v8339, 4294901760
    %8530 = vmatmul.mubr.f32.gmra.mrb[0].mxu0 %v8529
    %v8531 = vpop.f32.mrb[0].mxu0
    %v8532 = vadd.f32 %v8421, %v8531
    %v8533 = vpop.f32.mrb[0].mxu0
    %8534 = vdwg.mxu0
    %8535 = vmatprep.subr.mxu0 0.0
    %v8536 = vand.u32 %v8330, 4294901760
    %v8537 = vsub.f32 %v8330, %v8536
    %8538 = vmatpush1.msra.mxu0 %v8537
    %8539 = vmatprep.subr.mxu0 0.0
    %v8540 = vand.u32 %v8331, 4294901760
    %v8541 = vsub.f32 %v8331, %v8540
    %8542 = vmatpush1.msra.mxu0 %v8541
    %8543 = vmatprep.subr.mxu0 0.0
    %v8544 = vand.u32 %v8332, 4294901760
    %v8545 = vsub.f32 %v8332, %v8544
    %8546 = vmatpush1.msra.mxu0 %v8545
    %8547 = vmatprep.subr.mxu0 0.0
    %v8548 = vand.u32 %v8333, 4294901760
    %v8549 = vsub.f32 %v8333, %v8548
    %8550 = vmatpush1.msra.mxu0 %v8549
    %8551 = vmatprep.subr.mxu0 0.0
    %v8552 = vand.u32 %v8334, 4294901760
    %v8553 = vsub.f32 %v8334, %v8552
    %8554 = vmatpush1.msra.mxu0 %v8553
    %8555 = vmatprep.subr.mxu0 0.0
    %v8556 = vand.u32 %v8335, 4294901760
    %v8557 = vsub.f32 %v8335, %v8556
    %8558 = vmatpush1.msra.mxu0 %v8557
    %8559 = vmatprep.subr.mxu0 0.0
    %v8560 = vand.u32 %v8336, 4294901760
    %v8561 = vsub.f32 %v8336, %v8560
    %8562 = vmatpush1.msra.mxu0 %v8561
    %8563 = vmatprep.subr.mxu0 0.0
    %v8564 = vand.u32 %v8337, 4294901760
    %v8565 = vsub.f32 %v8337, %v8564
    %8566 = vmatpush1.msra.mxu0 %v8565
    %8567 = vmatprep.subr.mxu0 0.0
    %8568 = vmatpush1.msra.mxu0 0.0
    %8569 = vmatprep.subr.mxu0 0.0
    %8570 = vmatpush1.msra.mxu0 0.0
    %8571 = vmatprep.subr.mxu0 0.0
    %8572 = vmatpush1.msra.mxu0 0.0
    %8573 = vmatprep.subr.mxu0 0.0
    %8574 = vmatpush1.msra.mxu0 0.0
    %8575 = vmatprep.subr.mxu0 0.0
    %8576 = vmatpush1.msra.mxu0 0.0
    %8577 = vmatprep.subr.mxu0 0.0
    %8578 = vmatpush1.msra.mxu0 0.0
    %8579 = vmatprep.subr.mxu0 0.0
    %8580 = vmatpush1.msra.mxu0 0.0
    %8581 = vmatprep.subr.mxu0 0.0
    %8582 = vmatpush1.msra.mxu0 0.0
    %8583 = vmatprep.subr.mxu0 0.0
    %8584 = vmatpush1.msra.mxu0 0.0
    %8585 = vmatprep.subr.mxu0 0.0
    %8586 = vmatpush1.msra.mxu0 0.0
    %8587 = vmatprep.subr.mxu0 0.0
    %8588 = vmatpush1.msra.mxu0 0.0
    %8589 = vmatprep.subr.mxu0 0.0
    %8590 = vmatpush1.msra.mxu0 0.0
    %8591 = vmatprep.subr.mxu0 0.0
    %8592 = vmatpush1.msra.mxu0 0.0
    %8593 = vmatprep.subr.mxu0 0.0
    %8594 = vmatpush1.msra.mxu0 0.0
    %8595 = vmatprep.subr.mxu0 0.0
    %8596 = vmatpush1.msra.mxu0 0.0
    %8597 = vmatprep.subr.mxu0 0.0
    %8598 = vmatpush1.msra.mxu0 0.0
    %8599 = vmatprep.subr.mxu0 0.0
    %8600 = vmatpush1.msra.mxu0 0.0
    %8601 = vmatprep.subr.mxu0 0.0
    %8602 = vmatpush1.msra.mxu0 0.0
    %8603 = vmatprep.subr.mxu0 0.0
    %8604 = vmatpush1.msra.mxu0 0.0
    %8605 = vmatprep.subr.mxu0 0.0
    %8606 = vmatpush1.msra.mxu0 0.0
    %8607 = vmatprep.subr.mxu0 0.0
    %8608 = vmatpush1.msra.mxu0 0.0
    %8609 = vmatprep.subr.mxu0 0.0
    %8610 = vmatpush1.msra.mxu0 0.0
    %8611 = vmatprep.subr.mxu0 0.0
    %8612 = vmatpush1.msra.mxu0 0.0
    %8613 = vmatprep.subr.mxu0 0.0
    %8614 = vmatpush1.msra.mxu0 0.0
    %8615 = vmatprep.mubr.f32.mxu0 0.0
    %v8616 = vand.u32 %v8339, 4294901760
    %v8617 = vsub.f32 %v8339, %v8616
    %8618 = vmatmul.mubr.f32.gmra.mrb[0].mxu0 %v8617
    %v8619 = vpop.f32.mrb[0].mxu0
    %v8620 = vadd.f32 %v8532, %v8619
    %v8621 = vpop.f32.mrb[0].mxu0
    %8622 = vdwg.mxu0
    %8623 = vmatprep.subr.mxu0 0.0
    %v8624 = vand.u32 %v8330, 4294901760
    %8625 = vmatpush1.msra.mxu0 %v8624
    %8626 = vmatprep.subr.mxu0 0.0
    %v8627 = vand.u32 %v8331, 4294901760
    %8628 = vmatpush1.msra.mxu0 %v8627
    %8629 = vmatprep.subr.mxu0 0.0
    %v8630 = vand.u32 %v8332, 4294901760
    %8631 = vmatpush1.msra.mxu0 %v8630
    %8632 = vmatprep.subr.mxu0 0.0
    %v8633 = vand.u32 %v8333, 4294901760
    %8634 = vmatpush1.msra.mxu0 %v8633
    %8635 = vmatprep.subr.mxu0 0.0
    %v8636 = vand.u32 %v8334, 4294901760
    %8637 = vmatpush1.msra.mxu0 %v8636
    %8638 = vmatprep.subr.mxu0 0.0
    %v8639 = vand.u32 %v8335, 4294901760
    %8640 = vmatpush1.msra.mxu0 %v8639
    %8641 = vmatprep.subr.mxu0 0.0
    %v8642 = vand.u32 %v8336, 4294901760
    %8643 = vmatpush1.msra.mxu0 %v8642
    %8644 = vmatprep.subr.mxu0 0.0
    %v8645 = vand.u32 %v8337, 4294901760
    %8646 = vmatpush1.msra.mxu0 %v8645
    %8647 = vmatprep.subr.mxu0 0.0
    %8648 = vmatpush1.msra.mxu0 0.0
    %8649 = vmatprep.subr.mxu0 0.0
    %8650 = vmatpush1.msra.mxu0 0.0
    %8651 = vmatprep.subr.mxu0 0.0
    %8652 = vmatpush1.msra.mxu0 0.0
    %8653 = vmatprep.subr.mxu0 0.0
    %8654 = vmatpush1.msra.mxu0 0.0
    %8655 = vmatprep.subr.mxu0 0.0
    %8656 = vmatpush1.msra.mxu0 0.0
    %8657 = vmatprep.subr.mxu0 0.0
    %8658 = vmatpush1.msra.mxu0 0.0
    %8659 = vmatprep.subr.mxu0 0.0
    %8660 = vmatpush1.msra.mxu0 0.0
    %8661 = vmatprep.subr.mxu0 0.0
    %8662 = vmatpush1.msra.mxu0 0.0
    %8663 = vmatprep.subr.mxu0 0.0
    %8664 = vmatpush1.msra.mxu0 0.0
    %8665 = vmatprep.subr.mxu0 0.0
    %8666 = vmatpush1.msra.mxu0 0.0
    %8667 = vmatprep.subr.mxu0 0.0
    %8668 = vmatpush1.msra.mxu0 0.0
    %8669 = vmatprep.subr.mxu0 0.0
    %8670 = vmatpush1.msra.mxu0 0.0
    %8671 = vmatprep.subr.mxu0 0.0
    %8672 = vmatpush1.msra.mxu0 0.0
    %8673 = vmatprep.subr.mxu0 0.0
    %8674 = vmatpush1.msra.mxu0 0.0
    %8675 = vmatprep.subr.mxu0 0.0
    %8676 = vmatpush1.msra.mxu0 0.0
    %8677 = vmatprep.subr.mxu0 0.0
    %8678 = vmatpush1.msra.mxu0 0.0
    %8679 = vmatprep.subr.mxu0 0.0
    %8680 = vmatpush1.msra.mxu0 0.0
    %8681 = vmatprep.subr.mxu0 0.0
    %8682 = vmatpush1.msra.mxu0 0.0
    %8683 = vmatprep.subr.mxu0 0.0
    %8684 = vmatpush1.msra.mxu0 0.0
    %8685 = vmatprep.subr.mxu0 0.0
    %8686 = vmatpush1.msra.mxu0 0.0
    %8687 = vmatprep.subr.mxu0 0.0
    %8688 = vmatpush1.msra.mxu0 0.0
    %8689 = vmatprep.subr.mxu0 0.0
    %8690 = vmatpush1.msra.mxu0 0.0
    %8691 = vmatprep.subr.mxu0 0.0
    %8692 = vmatpush1.msra.mxu0 0.0
    %8693 = vmatprep.subr.mxu0 0.0
    %8694 = vmatpush1.msra.mxu0 0.0
    %8695 = vmatprep.mubr.f32.mxu0 0.0
    %v8696 = vand.u32 %v8339, 4294901760
    %v8697 = vsub.f32 %v8339, %v8696
    %v8698 = vand.u32 %v8697, 4294901760
    %8699 = vmatmul.mubr.f32.gmra.mrb[0].mxu0 %v8698
    %v8700 = vpop.f32.mrb[0].mxu0
    %v8701 = vadd.f32 %v8620, %v8700
    %v8702 = vpop.f32.mrb[0].mxu0
    %8703 = vdwg.mxu0
    %8704 = vmatprep.subr.mxu0 0.0
    %v8705 = vand.u32 %v8330, 4294901760
    %v8706 = vsub.f32 %v8330, %v8705
    %v8707 = vand.u32 %v8706, 4294901760
    %8708 = vmatpush1.msra.mxu0 %v8707
    %8709 = vmatprep.subr.mxu0 0.0
    %v8710 = vand.u32 %v8331, 4294901760
    %v8711 = vsub.f32 %v8331, %v8710
    %v8712 = vand.u32 %v8711, 4294901760
    %8713 = vmatpush1.msra.mxu0 %v8712
    %8714 = vmatprep.subr.mxu0 0.0
    %v8715 = vand.u32 %v8332, 4294901760
    %v8716 = vsub.f32 %v8332, %v8715
    %v8717 = vand.u32 %v8716, 4294901760
    %8718 = vmatpush1.msra.mxu0 %v8717
    %8719 = vmatprep.subr.mxu0 0.0
    %v8720 = vand.u32 %v8333, 4294901760
    %v8721 = vsub.f32 %v8333, %v8720
    %v8722 = vand.u32 %v8721, 4294901760
    %8723 = vmatpush1.msra.mxu0 %v8722
    %8724 = vmatprep.subr.mxu0 0.0
    %v8725 = vand.u32 %v8334, 4294901760
    %v8726 = vsub.f32 %v8334, %v8725
    %v8727 = vand.u32 %v8726, 4294901760
    %8728 = vmatpush1.msra.mxu0 %v8727
    %8729 = vmatprep.subr.mxu0 0.0
    %v8730 = vand.u32 %v8335, 4294901760
    %v8731 = vsub.f32 %v8335, %v8730
    %v8732 = vand.u32 %v8731, 4294901760
    %8733 = vmatpush1.msra.mxu0 %v8732
    %8734 = vmatprep.subr.mxu0 0.0
    %v8735 = vand.u32 %v8336, 4294901760
    %v8736 = vsub.f32 %v8336, %v8735
    %v8737 = vand.u32 %v8736, 4294901760
    %8738 = vmatpush1.msra.mxu0 %v8737
    %8739 = vmatprep.subr.mxu0 0.0
    %v8740 = vand.u32 %v8337, 4294901760
    %v8741 = vsub.f32 %v8337, %v8740
    %v8742 = vand.u32 %v8741, 4294901760
    %8743 = vmatpush1.msra.mxu0 %v8742
    %8744 = vmatprep.subr.mxu0 0.0
    %8745 = vmatpush1.msra.mxu0 0.0
    %8746 = vmatprep.subr.mxu0 0.0
    %8747 = vmatpush1.msra.mxu0 0.0
    %8748 = vmatprep.subr.mxu0 0.0
    %8749 = vmatpush1.msra.mxu0 0.0
    %8750 = vmatprep.subr.mxu0 0.0
    %8751 = vmatpush1.msra.mxu0 0.0
    %8752 = vmatprep.subr.mxu0 0.0
    %8753 = vmatpush1.msra.mxu0 0.0
    %8754 = vmatprep.subr.mxu0 0.0
    %8755 = vmatpush1.msra.mxu0 0.0
    %8756 = vmatprep.subr.mxu0 0.0
    %8757 = vmatpush1.msra.mxu0 0.0
    %8758 = vmatprep.subr.mxu0 0.0
    %8759 = vmatpush1.msra.mxu0 0.0
    %8760 = vmatprep.subr.mxu0 0.0
    %8761 = vmatpush1.msra.mxu0 0.0
    %8762 = vmatprep.subr.mxu0 0.0
    %8763 = vmatpush1.msra.mxu0 0.0
    %8764 = vmatprep.subr.mxu0 0.0
    %8765 = vmatpush1.msra.mxu0 0.0
    %8766 = vmatprep.subr.mxu0 0.0
    %8767 = vmatpush1.msra.mxu0 0.0
    %8768 = vmatprep.subr.mxu0 0.0
    %8769 = vmatpush1.msra.mxu0 0.0
    %8770 = vmatprep.subr.mxu0 0.0
    %8771 = vmatpush1.msra.mxu0 0.0
    %8772 = vmatprep.subr.mxu0 0.0
    %8773 = vmatpush1.msra.mxu0 0.0
    %8774 = vmatprep.subr.mxu0 0.0
    %8775 = vmatpush1.msra.mxu0 0.0
    %8776 = vmatprep.subr.mxu0 0.0
    %8777 = vmatpush1.msra.mxu0 0.0
    %8778 = vmatprep.subr.mxu0 0.0
    %8779 = vmatpush1.msra.mxu0 0.0
    %8780 = vmatprep.subr.mxu0 0.0
    %8781 = vmatpush1.msra.mxu0 0.0
    %8782 = vmatprep.subr.mxu0 0.0
    %8783 = vmatpush1.msra.mxu0 0.0
    %8784 = vmatprep.subr.mxu0 0.0
    %8785 = vmatpush1.msra.mxu0 0.0
    %8786 = vmatprep.subr.mxu0 0.0
    %8787 = vmatpush1.msra.mxu0 0.0
    %8788 = vmatprep.subr.mxu0 0.0
    %8789 = vmatpush1.msra.mxu0 0.0
    %8790 = vmatprep.subr.mxu0 0.0
    %8791 = vmatpush1.msra.mxu0 0.0
    %8792 = vmatprep.mubr.f32.mxu0 0.0
    %v8793 = vand.u32 %v8339, 4294901760
    %8794 = vmatmul.mubr.f32.gmra.mrb[0].mxu0 %v8793
    %v8795 = vpop.f32.mrb[0].mxu0
    %v8796 = vadd.f32 %v8701, %v8795
    %v8797 = vpop.f32.mrb[0].mxu0
    %8798 = vdwg.mxu0
    %8799 = vmatprep.subr.mxu0 0.0
    %v8800 = vand.u32 %v8330, 4294901760
    %8801 = vmatpush1.msra.mxu0 %v8800
    %8802 = vmatprep.subr.mxu0 0.0
    %v8803 = vand.u32 %v8331, 4294901760
    %8804 = vmatpush1.msra.mxu0 %v8803
    %8805 = vmatprep.subr.mxu0 0.0
    %v8806 = vand.u32 %v8332, 4294901760
    %8807 = vmatpush1.msra.mxu0 %v8806
    %8808 = vmatprep.subr.mxu0 0.0
    %v8809 = vand.u32 %v8333, 4294901760
    %8810 = vmatpush1.msra.mxu0 %v8809
    %8811 = vmatprep.subr.mxu0 0.0
    %v8812 = vand.u32 %v8334, 4294901760
    %8813 = vmatpush1.msra.mxu0 %v8812
    %8814 = vmatprep.subr.mxu0 0.0
    %v8815 = vand.u32 %v8335, 4294901760
    %8816 = vmatpush1.msra.mxu0 %v8815
    %8817 = vmatprep.subr.mxu0 0.0
    %v8818 = vand.u32 %v8336, 4294901760
    %8819 = vmatpush1.msra.mxu0 %v8818
    %8820 = vmatprep.subr.mxu0 0.0
    %v8821 = vand.u32 %v8337, 4294901760
    %8822 = vmatpush1.msra.mxu0 %v8821
    %8823 = vmatprep.subr.mxu0 0.0
    %8824 = vmatpush1.msra.mxu0 0.0
    %8825 = vmatprep.subr.mxu0 0.0
    %8826 = vmatpush1.msra.mxu0 0.0
    %8827 = vmatprep.subr.mxu0 0.0
    %8828 = vmatpush1.msra.mxu0 0.0
    %8829 = vmatprep.subr.mxu0 0.0
    %8830 = vmatpush1.msra.mxu0 0.0
    %8831 = vmatprep.subr.mxu0 0.0
    %8832 = vmatpush1.msra.mxu0 0.0
    %8833 = vmatprep.subr.mxu0 0.0
    %8834 = vmatpush1.msra.mxu0 0.0
    %8835 = vmatprep.subr.mxu0 0.0
    %8836 = vmatpush1.msra.mxu0 0.0
    %8837 = vmatprep.subr.mxu0 0.0
    %8838 = vmatpush1.msra.mxu0 0.0
    %8839 = vmatprep.subr.mxu0 0.0
    %8840 = vmatpush1.msra.mxu0 0.0
    %8841 = vmatprep.subr.mxu0 0.0
    %8842 = vmatpush1.msra.mxu0 0.0
    %8843 = vmatprep.subr.mxu0 0.0
    %8844 = vmatpush1.msra.mxu0 0.0
    %8845 = vmatprep.subr.mxu0 0.0
    %8846 = vmatpush1.msra.mxu0 0.0
    %8847 = vmatprep.subr.mxu0 0.0
    %8848 = vmatpush1.msra.mxu0 0.0
    %8849 = vmatprep.subr.mxu0 0.0
    %8850 = vmatpush1.msra.mxu0 0.0
    %8851 = vmatprep.subr.mxu0 0.0
    %8852 = vmatpush1.msra.mxu0 0.0
    %8853 = vmatprep.subr.mxu0 0.0
    %8854 = vmatpush1.msra.mxu0 0.0
    %8855 = vmatprep.subr.mxu0 0.0
    %8856 = vmatpush1.msra.mxu0 0.0
    %8857 = vmatprep.subr.mxu0 0.0
    %8858 = vmatpush1.msra.mxu0 0.0
    %8859 = vmatprep.subr.mxu0 0.0
    %8860 = vmatpush1.msra.mxu0 0.0
    %8861 = vmatprep.subr.mxu0 0.0
    %8862 = vmatpush1.msra.mxu0 0.0
    %8863 = vmatprep.subr.mxu0 0.0
    %8864 = vmatpush1.msra.mxu0 0.0
    %8865 = vmatprep.subr.mxu0 0.0
    %8866 = vmatpush1.msra.mxu0 0.0
    %8867 = vmatprep.subr.mxu0 0.0
    %8868 = vmatpush1.msra.mxu0 0.0
    %8869 = vmatprep.subr.mxu0 0.0
    %8870 = vmatpush1.msra.mxu0 0.0
    %8871 = vmatprep.mubr.f32.mxu0 0.0
    %v8872 = vand.u32 %v8339, 4294901760
    %8873 = vmatmul.mubr.f32.gmra.mrb[0].mxu0 %v8872
    %v8874 = vpop.f32.mrb[0].mxu0
    %v8875 = vadd.f32 %v8796, %v8874
    %v8876 = vpop.f32.mrb[0].mxu0
    %8877 = vdwg.mxu0
    %v8879 = vsel %vm6474, %v7867, 0
    %8881 = vmatprep.subr.mxu0 0.0
    %v8882 = vand.u32 %v7870, 4294901760
    %8883 = vmatpush1.msra.mxu0 %v8882
    %8884 = vmatprep.subr.mxu0 0.0
    %v8885 = vand.u32 %v7871, 4294901760
    %8886 = vmatpush1.msra.mxu0 %v8885
    %8887 = vmatprep.subr.mxu0 0.0
    %v8888 = vand.u32 %v7872, 4294901760
    %8889 = vmatpush1.msra.mxu0 %v8888
    %8890 = vmatprep.subr.mxu0 0.0
    %v8891 = vand.u32 %v7873, 4294901760
    %8892 = vmatpush1.msra.mxu0 %v8891
    %8893 = vmatprep.subr.mxu0 0.0
    %v8894 = vand.u32 %v7874, 4294901760
    %8895 = vmatpush1.msra.mxu0 %v8894
    %8896 = vmatprep.subr.mxu0 0.0
    %v8897 = vand.u32 %v7875, 4294901760
    %8898 = vmatpush1.msra.mxu0 %v8897
    %8899 = vmatprep.subr.mxu0 0.0
    %v8900 = vand.u32 %v7876, 4294901760
    %8901 = vmatpush1.msra.mxu0 %v8900
    %8902 = vmatprep.subr.mxu0 0.0
    %v8903 = vand.u32 %v7877, 4294901760
    %8904 = vmatpush1.msra.mxu0 %v8903
    %8905 = vmatprep.subr.mxu0 0.0
    %8906 = vmatpush1.msra.mxu0 0.0
    %8907 = vmatprep.subr.mxu0 0.0
    %8908 = vmatpush1.msra.mxu0 0.0
    %8909 = vmatprep.subr.mxu0 0.0
    %8910 = vmatpush1.msra.mxu0 0.0
    %8911 = vmatprep.subr.mxu0 0.0
    %8912 = vmatpush1.msra.mxu0 0.0
    %8913 = vmatprep.subr.mxu0 0.0
    %8914 = vmatpush1.msra.mxu0 0.0
    %8915 = vmatprep.subr.mxu0 0.0
    %8916 = vmatpush1.msra.mxu0 0.0
    %8917 = vmatprep.subr.mxu0 0.0
    %8918 = vmatpush1.msra.mxu0 0.0
    %8919 = vmatprep.subr.mxu0 0.0
    %8920 = vmatpush1.msra.mxu0 0.0
    %8921 = vmatprep.subr.mxu0 0.0
    %8922 = vmatpush1.msra.mxu0 0.0
    %8923 = vmatprep.subr.mxu0 0.0
    %8924 = vmatpush1.msra.mxu0 0.0
    %8925 = vmatprep.subr.mxu0 0.0
    %8926 = vmatpush1.msra.mxu0 0.0
    %8927 = vmatprep.subr.mxu0 0.0
    %8928 = vmatpush1.msra.mxu0 0.0
    %8929 = vmatprep.subr.mxu0 0.0
    %8930 = vmatpush1.msra.mxu0 0.0
    %8931 = vmatprep.subr.mxu0 0.0
    %8932 = vmatpush1.msra.mxu0 0.0
    %8933 = vmatprep.subr.mxu0 0.0
    %8934 = vmatpush1.msra.mxu0 0.0
    %8935 = vmatprep.subr.mxu0 0.0
    %8936 = vmatpush1.msra.mxu0 0.0
    %8937 = vmatprep.subr.mxu0 0.0
    %8938 = vmatpush1.msra.mxu0 0.0
    %8939 = vmatprep.subr.mxu0 0.0
    %8940 = vmatpush1.msra.mxu0 0.0
    %8941 = vmatprep.subr.mxu0 0.0
    %8942 = vmatpush1.msra.mxu0 0.0
    %8943 = vmatprep.subr.mxu0 0.0
    %8944 = vmatpush1.msra.mxu0 0.0
    %8945 = vmatprep.subr.mxu0 0.0
    %8946 = vmatpush1.msra.mxu0 0.0
    %8947 = vmatprep.subr.mxu0 0.0
    %8948 = vmatpush1.msra.mxu0 0.0
    %8949 = vmatprep.subr.mxu0 0.0
    %8950 = vmatpush1.msra.mxu0 0.0
    %8951 = vmatprep.subr.mxu0 0.0
    %8952 = vmatpush1.msra.mxu0 0.0
    %8953 = vmatprep.mubr.f32.mxu0 0.0
    %v8954 = vand.u32 %v8879, 4294901760
    %v8955 = vsub.f32 %v8879, %v8954
    %v8956 = vand.u32 %v8955, 4294901760
    %v8957 = vsub.f32 %v8955, %v8956
    %v8958 = vand.u32 %v8957, 4294901760
    %8959 = vmatmul.mubr.f32.gmra.mrb[0].mxu0 %v8958
    %v8960 = vpop.f32.mrb[0].mxu0
    %v8961 = vadd.f32 %v8875, %v8960
    %v8962 = vpop.f32.mrb[0].mxu0
    %8963 = vdwg.mxu0
    %8964 = vmatprep.subr.mxu0 0.0
    %v8965 = vand.u32 %v7870, 4294901760
    %v8966 = vsub.f32 %v7870, %v8965
    %v8967 = vand.u32 %v8966, 4294901760
    %v8968 = vsub.f32 %v8966, %v8967
    %v8969 = vand.u32 %v8968, 4294901760
    %8970 = vmatpush1.msra.mxu0 %v8969
    %8971 = vmatprep.subr.mxu0 0.0
    %v8972 = vand.u32 %v7871, 4294901760
    %v8973 = vsub.f32 %v7871, %v8972
    %v8974 = vand.u32 %v8973, 4294901760
    %v8975 = vsub.f32 %v8973, %v8974
    %v8976 = vand.u32 %v8975, 4294901760
    %8977 = vmatpush1.msra.mxu0 %v8976
    %8978 = vmatprep.subr.mxu0 0.0
    %v8979 = vand.u32 %v7872, 4294901760
    %v8980 = vsub.f32 %v7872, %v8979
    %v8981 = vand.u32 %v8980, 4294901760
    %v8982 = vsub.f32 %v8980, %v8981
    %v8983 = vand.u32 %v8982, 4294901760
    %8984 = vmatpush1.msra.mxu0 %v8983
    %8985 = vmatprep.subr.mxu0 0.0
    %v8986 = vand.u32 %v7873, 4294901760
    %v8987 = vsub.f32 %v7873, %v8986
    %v8988 = vand.u32 %v8987, 4294901760
    %v8989 = vsub.f32 %v8987, %v8988
    %v8990 = vand.u32 %v8989, 4294901760
    %8991 = vmatpush1.msra.mxu0 %v8990
    %8992 = vmatprep.subr.mxu0 0.0
    %v8993 = vand.u32 %v7874, 4294901760
    %v8994 = vsub.f32 %v7874, %v8993
    %v8995 = vand.u32 %v8994, 4294901760
    %v8996 = vsub.f32 %v8994, %v8995
    %v8997 = vand.u32 %v8996, 4294901760
    %8998 = vmatpush1.msra.mxu0 %v8997
    %8999 = vmatprep.subr.mxu0 0.0
    %v9000 = vand.u32 %v7875, 4294901760
    %v9001 = vsub.f32 %v7875, %v9000
    %v9002 = vand.u32 %v9001, 4294901760
    %v9003 = vsub.f32 %v9001, %v9002
    %v9004 = vand.u32 %v9003, 4294901760
    %9005 = vmatpush1.msra.mxu0 %v9004
    %9006 = vmatprep.subr.mxu0 0.0
    %v9007 = vand.u32 %v7876, 4294901760
    %v9008 = vsub.f32 %v7876, %v9007
    %v9009 = vand.u32 %v9008, 4294901760
    %v9010 = vsub.f32 %v9008, %v9009
    %v9011 = vand.u32 %v9010, 4294901760
    %9012 = vmatpush1.msra.mxu0 %v9011
    %9013 = vmatprep.subr.mxu0 0.0
    %v9014 = vand.u32 %v7877, 4294901760
    %v9015 = vsub.f32 %v7877, %v9014
    %v9016 = vand.u32 %v9015, 4294901760
    %v9017 = vsub.f32 %v9015, %v9016
    %v9018 = vand.u32 %v9017, 4294901760
    %9019 = vmatpush1.msra.mxu0 %v9018
    %9020 = vmatprep.subr.mxu0 0.0
    %9021 = vmatpush1.msra.mxu0 0.0
    %9022 = vmatprep.subr.mxu0 0.0
    %9023 = vmatpush1.msra.mxu0 0.0
    %9024 = vmatprep.subr.mxu0 0.0
    %9025 = vmatpush1.msra.mxu0 0.0
    %9026 = vmatprep.subr.mxu0 0.0
    %9027 = vmatpush1.msra.mxu0 0.0
    %9028 = vmatprep.subr.mxu0 0.0
    %9029 = vmatpush1.msra.mxu0 0.0
    %9030 = vmatprep.subr.mxu0 0.0
    %9031 = vmatpush1.msra.mxu0 0.0
    %9032 = vmatprep.subr.mxu0 0.0
    %9033 = vmatpush1.msra.mxu0 0.0
    %9034 = vmatprep.subr.mxu0 0.0
    %9035 = vmatpush1.msra.mxu0 0.0
    %9036 = vmatprep.subr.mxu0 0.0
    %9037 = vmatpush1.msra.mxu0 0.0
    %9038 = vmatprep.subr.mxu0 0.0
    %9039 = vmatpush1.msra.mxu0 0.0
    %9040 = vmatprep.subr.mxu0 0.0
    %9041 = vmatpush1.msra.mxu0 0.0
    %9042 = vmatprep.subr.mxu0 0.0
    %9043 = vmatpush1.msra.mxu0 0.0
    %9044 = vmatprep.subr.mxu0 0.0
    %9045 = vmatpush1.msra.mxu0 0.0
    %9046 = vmatprep.subr.mxu0 0.0
    %9047 = vmatpush1.msra.mxu0 0.0
    %9048 = vmatprep.subr.mxu0 0.0
    %9049 = vmatpush1.msra.mxu0 0.0
    %9050 = vmatprep.subr.mxu0 0.0
    %9051 = vmatpush1.msra.mxu0 0.0
    %9052 = vmatprep.subr.mxu0 0.0
    %9053 = vmatpush1.msra.mxu0 0.0
    %9054 = vmatprep.subr.mxu0 0.0
    %9055 = vmatpush1.msra.mxu0 0.0
    %9056 = vmatprep.subr.mxu0 0.0
    %9057 = vmatpush1.msra.mxu0 0.0
    %9058 = vmatprep.subr.mxu0 0.0
    %9059 = vmatpush1.msra.mxu0 0.0
    %9060 = vmatprep.subr.mxu0 0.0
    %9061 = vmatpush1.msra.mxu0 0.0
    %9062 = vmatprep.subr.mxu0 0.0
    %9063 = vmatpush1.msra.mxu0 0.0
    %9064 = vmatprep.subr.mxu0 0.0
    %9065 = vmatpush1.msra.mxu0 0.0
    %9066 = vmatprep.subr.mxu0 0.0
    %9067 = vmatpush1.msra.mxu0 0.0
    %9068 = vmatprep.mubr.f32.mxu0 0.0
    %v9069 = vand.u32 %v8879, 4294901760
    %9070 = vmatmul.mubr.f32.gmra.mrb[0].mxu0 %v9069
    %v9071 = vpop.f32.mrb[0].mxu0
    %v9072 = vadd.f32 %v8961, %v9071
    %v9073 = vpop.f32.mrb[0].mxu0
    %9074 = vdwg.mxu0
    %9075 = vmatprep.subr.mxu0 0.0
    %v9076 = vand.u32 %v7870, 4294901760
    %v9077 = vsub.f32 %v7870, %v9076
    %9078 = vmatpush1.msra.mxu0 %v9077
    %9079 = vmatprep.subr.mxu0 0.0
    %v9080 = vand.u32 %v7871, 4294901760
    %v9081 = vsub.f32 %v7871, %v9080
    %9082 = vmatpush1.msra.mxu0 %v9081
    %9083 = vmatprep.subr.mxu0 0.0
    %v9084 = vand.u32 %v7872, 4294901760
    %v9085 = vsub.f32 %v7872, %v9084
    %9086 = vmatpush1.msra.mxu0 %v9085
    %9087 = vmatprep.subr.mxu0 0.0
    %v9088 = vand.u32 %v7873, 4294901760
    %v9089 = vsub.f32 %v7873, %v9088
    %9090 = vmatpush1.msra.mxu0 %v9089
    %9091 = vmatprep.subr.mxu0 0.0
    %v9092 = vand.u32 %v7874, 4294901760
    %v9093 = vsub.f32 %v7874, %v9092
    %9094 = vmatpush1.msra.mxu0 %v9093
    %9095 = vmatprep.subr.mxu0 0.0
    %v9096 = vand.u32 %v7875, 4294901760
    %v9097 = vsub.f32 %v7875, %v9096
    %9098 = vmatpush1.msra.mxu0 %v9097
    %9099 = vmatprep.subr.mxu0 0.0
    %v9100 = vand.u32 %v7876, 4294901760
    %v9101 = vsub.f32 %v7876, %v9100
    %9102 = vmatpush1.msra.mxu0 %v9101
    %9103 = vmatprep.subr.mxu0 0.0
    %v9104 = vand.u32 %v7877, 4294901760
    %v9105 = vsub.f32 %v7877, %v9104
    %9106 = vmatpush1.msra.mxu0 %v9105
    %9107 = vmatprep.subr.mxu0 0.0
    %9108 = vmatpush1.msra.mxu0 0.0
    %9109 = vmatprep.subr.mxu0 0.0
    %9110 = vmatpush1.msra.mxu0 0.0
    %9111 = vmatprep.subr.mxu0 0.0
    %9112 = vmatpush1.msra.mxu0 0.0
    %9113 = vmatprep.subr.mxu0 0.0
    %9114 = vmatpush1.msra.mxu0 0.0
    %9115 = vmatprep.subr.mxu0 0.0
    %9116 = vmatpush1.msra.mxu0 0.0
    %9117 = vmatprep.subr.mxu0 0.0
    %9118 = vmatpush1.msra.mxu0 0.0
    %9119 = vmatprep.subr.mxu0 0.0
    %9120 = vmatpush1.msra.mxu0 0.0
    %9121 = vmatprep.subr.mxu0 0.0
    %9122 = vmatpush1.msra.mxu0 0.0
    %9123 = vmatprep.subr.mxu0 0.0
    %9124 = vmatpush1.msra.mxu0 0.0
    %9125 = vmatprep.subr.mxu0 0.0
    %9126 = vmatpush1.msra.mxu0 0.0
    %9127 = vmatprep.subr.mxu0 0.0
    %9128 = vmatpush1.msra.mxu0 0.0
    %9129 = vmatprep.subr.mxu0 0.0
    %9130 = vmatpush1.msra.mxu0 0.0
    %9131 = vmatprep.subr.mxu0 0.0
    %9132 = vmatpush1.msra.mxu0 0.0
    %9133 = vmatprep.subr.mxu0 0.0
    %9134 = vmatpush1.msra.mxu0 0.0
    %9135 = vmatprep.subr.mxu0 0.0
    %9136 = vmatpush1.msra.mxu0 0.0
    %9137 = vmatprep.subr.mxu0 0.0
    %9138 = vmatpush1.msra.mxu0 0.0
    %9139 = vmatprep.subr.mxu0 0.0
    %9140 = vmatpush1.msra.mxu0 0.0
    %9141 = vmatprep.subr.mxu0 0.0
    %9142 = vmatpush1.msra.mxu0 0.0
    %9143 = vmatprep.subr.mxu0 0.0
    %9144 = vmatpush1.msra.mxu0 0.0
    %9145 = vmatprep.subr.mxu0 0.0
    %9146 = vmatpush1.msra.mxu0 0.0
    %9147 = vmatprep.subr.mxu0 0.0
    %9148 = vmatpush1.msra.mxu0 0.0
    %9149 = vmatprep.subr.mxu0 0.0
    %9150 = vmatpush1.msra.mxu0 0.0
    %9151 = vmatprep.subr.mxu0 0.0
    %9152 = vmatpush1.msra.mxu0 0.0
    %9153 = vmatprep.subr.mxu0 0.0
    %9154 = vmatpush1.msra.mxu0 0.0
    %9155 = vmatprep.mubr.f32.mxu0 0.0
    %v9156 = vand.u32 %v8879, 4294901760
    %v9157 = vsub.f32 %v8879, %v9156
    %9158 = vmatmul.mubr.f32.gmra.mrb[0].mxu0 %v9157
    %v9159 = vpop.f32.mrb[0].mxu0
    %v9160 = vadd.f32 %v9072, %v9159
    %v9161 = vpop.f32.mrb[0].mxu0
    %9162 = vdwg.mxu0
    %9163 = vmatprep.subr.mxu0 0.0
    %v9164 = vand.u32 %v7870, 4294901760
    %9165 = vmatpush1.msra.mxu0 %v9164
    %9166 = vmatprep.subr.mxu0 0.0
    %v9167 = vand.u32 %v7871, 4294901760
    %9168 = vmatpush1.msra.mxu0 %v9167
    %9169 = vmatprep.subr.mxu0 0.0
    %v9170 = vand.u32 %v7872, 4294901760
    %9171 = vmatpush1.msra.mxu0 %v9170
    %9172 = vmatprep.subr.mxu0 0.0
    %v9173 = vand.u32 %v7873, 4294901760
    %9174 = vmatpush1.msra.mxu0 %v9173
    %9175 = vmatprep.subr.mxu0 0.0
    %v9176 = vand.u32 %v7874, 4294901760
    %9177 = vmatpush1.msra.mxu0 %v9176
    %9178 = vmatprep.subr.mxu0 0.0
    %v9179 = vand.u32 %v7875, 4294901760
    %9180 = vmatpush1.msra.mxu0 %v9179
    %9181 = vmatprep.subr.mxu0 0.0
    %v9182 = vand.u32 %v7876, 4294901760
    %9183 = vmatpush1.msra.mxu0 %v9182
    %9184 = vmatprep.subr.mxu0 0.0
    %v9185 = vand.u32 %v7877, 4294901760
    %9186 = vmatpush1.msra.mxu0 %v9185
    %9187 = vmatprep.subr.mxu0 0.0
    %9188 = vmatpush1.msra.mxu0 0.0
    %9189 = vmatprep.subr.mxu0 0.0
    %9190 = vmatpush1.msra.mxu0 0.0
    %9191 = vmatprep.subr.mxu0 0.0
    %9192 = vmatpush1.msra.mxu0 0.0
    %9193 = vmatprep.subr.mxu0 0.0
    %9194 = vmatpush1.msra.mxu0 0.0
    %9195 = vmatprep.subr.mxu0 0.0
    %9196 = vmatpush1.msra.mxu0 0.0
    %9197 = vmatprep.subr.mxu0 0.0
    %9198 = vmatpush1.msra.mxu0 0.0
    %9199 = vmatprep.subr.mxu0 0.0
    %9200 = vmatpush1.msra.mxu0 0.0
    %9201 = vmatprep.subr.mxu0 0.0
    %9202 = vmatpush1.msra.mxu0 0.0
    %9203 = vmatprep.subr.mxu0 0.0
    %9204 = vmatpush1.msra.mxu0 0.0
    %9205 = vmatprep.subr.mxu0 0.0
    %9206 = vmatpush1.msra.mxu0 0.0
    %9207 = vmatprep.subr.mxu0 0.0
    %9208 = vmatpush1.msra.mxu0 0.0
    %9209 = vmatprep.subr.mxu0 0.0
    %9210 = vmatpush1.msra.mxu0 0.0
    %9211 = vmatprep.subr.mxu0 0.0
    %9212 = vmatpush1.msra.mxu0 0.0
    %9213 = vmatprep.subr.mxu0 0.0
    %9214 = vmatpush1.msra.mxu0 0.0
    %9215 = vmatprep.subr.mxu0 0.0
    %9216 = vmatpush1.msra.mxu0 0.0
    %9217 = vmatprep.subr.mxu0 0.0
    %9218 = vmatpush1.msra.mxu0 0.0
    %9219 = vmatprep.subr.mxu0 0.0
    %9220 = vmatpush1.msra.mxu0 0.0
    %9221 = vmatprep.subr.mxu0 0.0
    %9222 = vmatpush1.msra.mxu0 0.0
    %9223 = vmatprep.subr.mxu0 0.0
    %9224 = vmatpush1.msra.mxu0 0.0
    %9225 = vmatprep.subr.mxu0 0.0
    %9226 = vmatpush1.msra.mxu0 0.0
    %9227 = vmatprep.subr.mxu0 0.0
    %9228 = vmatpush1.msra.mxu0 0.0
    %9229 = vmatprep.subr.mxu0 0.0
    %9230 = vmatpush1.msra.mxu0 0.0
    %9231 = vmatprep.subr.mxu0 0.0
    %9232 = vmatpush1.msra.mxu0 0.0
    %9233 = vmatprep.subr.mxu0 0.0
    %9234 = vmatpush1.msra.mxu0 0.0
    %9235 = vmatprep.mubr.f32.mxu0 0.0
    %v9236 = vand.u32 %v8879, 4294901760
    %v9237 = vsub.f32 %v8879, %v9236
    %v9238 = vand.u32 %v9237, 4294901760
    %9239 = vmatmul.mubr.f32.gmra.mrb[0].mxu0 %v9238
    %v9240 = vpop.f32.mrb[0].mxu0
    %v9241 = vadd.f32 %v9160, %v9240
    %v9242 = vpop.f32.mrb[0].mxu0
    %9243 = vdwg.mxu0
    %9244 = vmatprep.subr.mxu0 0.0
    %v9245 = vand.u32 %v7870, 4294901760
    %v9246 = vsub.f32 %v7870, %v9245
    %v9247 = vand.u32 %v9246, 4294901760
    %9248 = vmatpush1.msra.mxu0 %v9247
    %9249 = vmatprep.subr.mxu0 0.0
    %v9250 = vand.u32 %v7871, 4294901760
    %v9251 = vsub.f32 %v7871, %v9250
    %v9252 = vand.u32 %v9251, 4294901760
    %9253 = vmatpush1.msra.mxu0 %v9252
    %9254 = vmatprep.subr.mxu0 0.0
    %v9255 = vand.u32 %v7872, 4294901760
    %v9256 = vsub.f32 %v7872, %v9255
    %v9257 = vand.u32 %v9256, 4294901760
    %9258 = vmatpush1.msra.mxu0 %v9257
    %9259 = vmatprep.subr.mxu0 0.0
    %v9260 = vand.u32 %v7873, 4294901760
    %v9261 = vsub.f32 %v7873, %v9260
    %v9262 = vand.u32 %v9261, 4294901760
    %9263 = vmatpush1.msra.mxu0 %v9262
    %9264 = vmatprep.subr.mxu0 0.0
    %v9265 = vand.u32 %v7874, 4294901760
    %v9266 = vsub.f32 %v7874, %v9265
    %v9267 = vand.u32 %v9266, 4294901760
    %9268 = vmatpush1.msra.mxu0 %v9267
    %9269 = vmatprep.subr.mxu0 0.0
    %v9270 = vand.u32 %v7875, 4294901760
    %v9271 = vsub.f32 %v7875, %v9270
    %v9272 = vand.u32 %v9271, 4294901760
    %9273 = vmatpush1.msra.mxu0 %v9272
    %9274 = vmatprep.subr.mxu0 0.0
    %v9275 = vand.u32 %v7876, 4294901760
    %v9276 = vsub.f32 %v7876, %v9275
    %v9277 = vand.u32 %v9276, 4294901760
    %9278 = vmatpush1.msra.mxu0 %v9277
    %9279 = vmatprep.subr.mxu0 0.0
    %v9280 = vand.u32 %v7877, 4294901760
    %v9281 = vsub.f32 %v7877, %v9280
    %v9282 = vand.u32 %v9281, 4294901760
    %9283 = vmatpush1.msra.mxu0 %v9282
    %9284 = vmatprep.subr.mxu0 0.0
    %9285 = vmatpush1.msra.mxu0 0.0
    %9286 = vmatprep.subr.mxu0 0.0
    %9287 = vmatpush1.msra.mxu0 0.0
    %9288 = vmatprep.subr.mxu0 0.0
    %9289 = vmatpush1.msra.mxu0 0.0
    %9290 = vmatprep.subr.mxu0 0.0
    %9291 = vmatpush1.msra.mxu0 0.0
    %9292 = vmatprep.subr.mxu0 0.0
    %9293 = vmatpush1.msra.mxu0 0.0
    %9294 = vmatprep.subr.mxu0 0.0
    %9295 = vmatpush1.msra.mxu0 0.0
    %9296 = vmatprep.subr.mxu0 0.0
    %9297 = vmatpush1.msra.mxu0 0.0
    %9298 = vmatprep.subr.mxu0 0.0
    %9299 = vmatpush1.msra.mxu0 0.0
    %9300 = vmatprep.subr.mxu0 0.0
    %9301 = vmatpush1.msra.mxu0 0.0
    %9302 = vmatprep.subr.mxu0 0.0
    %9303 = vmatpush1.msra.mxu0 0.0
    %9304 = vmatprep.subr.mxu0 0.0
    %9305 = vmatpush1.msra.mxu0 0.0
    %9306 = vmatprep.subr.mxu0 0.0
    %9307 = vmatpush1.msra.mxu0 0.0
    %9308 = vmatprep.subr.mxu0 0.0
    %9309 = vmatpush1.msra.mxu0 0.0
    %9310 = vmatprep.subr.mxu0 0.0
    %9311 = vmatpush1.msra.mxu0 0.0
    %9312 = vmatprep.subr.mxu0 0.0
    %9313 = vmatpush1.msra.mxu0 0.0
    %9314 = vmatprep.subr.mxu0 0.0
    %9315 = vmatpush1.msra.mxu0 0.0
    %9316 = vmatprep.subr.mxu0 0.0
    %9317 = vmatpush1.msra.mxu0 0.0
    %9318 = vmatprep.subr.mxu0 0.0
    %9319 = vmatpush1.msra.mxu0 0.0
    %9320 = vmatprep.subr.mxu0 0.0
    %9321 = vmatpush1.msra.mxu0 0.0
    %9322 = vmatprep.subr.mxu0 0.0
    %9323 = vmatpush1.msra.mxu0 0.0
    %9324 = vmatprep.subr.mxu0 0.0
    %9325 = vmatpush1.msra.mxu0 0.0
    %9326 = vmatprep.subr.mxu0 0.0
    %9327 = vmatpush1.msra.mxu0 0.0
    %9328 = vmatprep.subr.mxu0 0.0
    %9329 = vmatpush1.msra.mxu0 0.0
    %9330 = vmatprep.subr.mxu0 0.0
    %9331 = vmatpush1.msra.mxu0 0.0
    %9332 = vmatprep.mubr.f32.mxu0 0.0
    %v9333 = vand.u32 %v8879, 4294901760
    %9334 = vmatmul.mubr.f32.gmra.mrb[0].mxu0 %v9333
    %v9335 = vpop.f32.mrb[0].mxu0
    %v9336 = vadd.f32 %v9241, %v9335
    %v9337 = vpop.f32.mrb[0].mxu0
    %9338 = vdwg.mxu0
    %9339 = vmatprep.subr.mxu0 0.0
    %v9340 = vand.u32 %v7870, 4294901760
    %9341 = vmatpush1.msra.mxu0 %v9340
    %9342 = vmatprep.subr.mxu0 0.0
    %v9343 = vand.u32 %v7871, 4294901760
    %9344 = vmatpush1.msra.mxu0 %v9343
    %9345 = vmatprep.subr.mxu0 0.0
    %v9346 = vand.u32 %v7872, 4294901760
    %9347 = vmatpush1.msra.mxu0 %v9346
    %9348 = vmatprep.subr.mxu0 0.0
    %v9349 = vand.u32 %v7873, 4294901760
    %9350 = vmatpush1.msra.mxu0 %v9349
    %9351 = vmatprep.subr.mxu0 0.0
    %v9352 = vand.u32 %v7874, 4294901760
    %9353 = vmatpush1.msra.mxu0 %v9352
    %9354 = vmatprep.subr.mxu0 0.0
    %v9355 = vand.u32 %v7875, 4294901760
    %9356 = vmatpush1.msra.mxu0 %v9355
    %9357 = vmatprep.subr.mxu0 0.0
    %v9358 = vand.u32 %v7876, 4294901760
    %9359 = vmatpush1.msra.mxu0 %v9358
    %9360 = vmatprep.subr.mxu0 0.0
    %v9361 = vand.u32 %v7877, 4294901760
    %9362 = vmatpush1.msra.mxu0 %v9361
    %9363 = vmatprep.subr.mxu0 0.0
    %9364 = vmatpush1.msra.mxu0 0.0
    %9365 = vmatprep.subr.mxu0 0.0
    %9366 = vmatpush1.msra.mxu0 0.0
    %9367 = vmatprep.subr.mxu0 0.0
    %9368 = vmatpush1.msra.mxu0 0.0
    %9369 = vmatprep.subr.mxu0 0.0
    %9370 = vmatpush1.msra.mxu0 0.0
    %9371 = vmatprep.subr.mxu0 0.0
    %9372 = vmatpush1.msra.mxu0 0.0
    %9373 = vmatprep.subr.mxu0 0.0
    %9374 = vmatpush1.msra.mxu0 0.0
    %9375 = vmatprep.subr.mxu0 0.0
    %9376 = vmatpush1.msra.mxu0 0.0
    %9377 = vmatprep.subr.mxu0 0.0
    %9378 = vmatpush1.msra.mxu0 0.0
    %9379 = vmatprep.subr.mxu0 0.0
    %9380 = vmatpush1.msra.mxu0 0.0
    %9381 = vmatprep.subr.mxu0 0.0
    %9382 = vmatpush1.msra.mxu0 0.0
    %9383 = vmatprep.subr.mxu0 0.0
    %9384 = vmatpush1.msra.mxu0 0.0
    %9385 = vmatprep.subr.mxu0 0.0
    %9386 = vmatpush1.msra.mxu0 0.0
    %9387 = vmatprep.subr.mxu0 0.0
    %9388 = vmatpush1.msra.mxu0 0.0
    %9389 = vmatprep.subr.mxu0 0.0
    %9390 = vmatpush1.msra.mxu0 0.0
    %9391 = vmatprep.subr.mxu0 0.0
    %9392 = vmatpush1.msra.mxu0 0.0
    %9393 = vmatprep.subr.mxu0 0.0
    %9394 = vmatpush1.msra.mxu0 0.0
    %9395 = vmatprep.subr.mxu0 0.0
    %9396 = vmatpush1.msra.mxu0 0.0
    %9397 = vmatprep.subr.mxu0 0.0
    %9398 = vmatpush1.msra.mxu0 0.0
    %9399 = vmatprep.subr.mxu0 0.0
    %9400 = vmatpush1.msra.mxu0 0.0
    %9401 = vmatprep.subr.mxu0 0.0
    %9402 = vmatpush1.msra.mxu0 0.0
    %9403 = vmatprep.subr.mxu0 0.0
    %9404 = vmatpush1.msra.mxu0 0.0
    %9405 = vmatprep.subr.mxu0 0.0
    %9406 = vmatpush1.msra.mxu0 0.0
    %9407 = vmatprep.subr.mxu0 0.0
    %9408 = vmatpush1.msra.mxu0 0.0
    %9409 = vmatprep.subr.mxu0 0.0
    %9410 = vmatpush1.msra.mxu0 0.0
    %9411 = vmatprep.mubr.f32.mxu0 0.0
    %v9412 = vand.u32 %v8879, 4294901760
    %9413 = vmatmul.mubr.f32.gmra.mrb[0].mxu0 %v9412
    %v9414 = vpop.f32.mrb[0].mxu0
    %v9415 = vadd.f32 %v9336, %v9414
    %v9416 = vpop.f32.mrb[0].mxu0
    %9417 = vdwg.mxu0
    %v9418 = vld [vmem:[%s10] sm:$0x1]
    %v9420 = vlaneseq
    %v9421 = vshrl.u32 %v9420, 7
    %v9422 = vsub.s32 0, %v9421
    %v9423 = vrot.slane %v9418, %v9422
    %v9425 = vadd.f32 %v9415, %v9423
    %v9426 = vmax.f32 %v9425, 0.0
    %vm9427 = vcmask 123904
    %9428 = vst.msk [vmem:[#allocation2] sm:$0x3] %vm9427, %v9426
    // Predicated region
    $region66: #{tpu_custom_call.1} parent=1 // pred_check
      _
    $region67: #{tpu_custom_call.1} parent=1 // pred_check_branch
      %9430 = sbr.rel (0) target = $region69
    $region68: #{tpu_custom_call.1} parent=1 // pred_region
      %s9432 = ssub.s32 32, 32
      %9433 = vsyncadd [#allocation3], %s9432
      %s9435 = sshll.u32 [#allocation2], 4
      %s9436 = int_to_ptr.vmem [resolvable:$true] %s9435
      %9438 = dma.vmem_to_hbm [thread:$0]  %s9436, 32, %s16, [#allocation3]
    $region69: #{tpu_custom_call.1} parent=1 // pred_fallthru
      _
    // Predicated region
    $region70: #{tpu_custom_call.1} parent=1 // pred_check
      _
    $region71: #{tpu_custom_call.1} parent=1 // pred_check_branch
      %9440 = sbr.rel (0) target = $region73
    $region72: #{tpu_custom_call.1} parent=1 // pred_region
      %9441 = dma.done [#allocation3], 32
    $region73: #{tpu_custom_call.1} parent=1 // pred_fallthru
      _
    %9442 = vsyncpa [#allocation3], 1

</llo_original>
